<compile_context>
chip_gen: v7x
topology: tpu7x:2x2x1
jax: 0.10.0
libtpu: 0.0.40
codegen_flags: <defaults>
</compile_context>

<pallas_src>
import jax
import jax.numpy as jnp
from jax.experimental import pallas as pl
from jax.experimental.pallas import tpu as pltpu


_VMEM_LIMIT = 32 * 1024 * 1024   # explicit scoped-VMEM budget (safe on v5e/v6e/v7x)
_FC2_PAD = 256                   # lane-dense feat store + fills MXU N (extra cols are 0)
_HEAD_PAD = 128                  # lane-dense logits; real logits live in columns [0, 10)


def _pick_tile(n, target):
    """Largest divisor of n that is <= target and sublane-friendly (multiple of 8,
    or n itself).  Keeps BlockSpec second-minor dims legal for any batch size."""
    for d in range(min(n, target), 0, -1):
        if n % d == 0 and (d % 8 == 0 or d == n):
            return d
    return n


# ----------------------------- Pallas kernels ------------------------------ #

def _conv_relu_pool_kernel(a_ref, w_ref, b_ref, o_ref):
    """Fused conv(im2col matmul) + bias + ReLU + 2x2 maxpool for a batch tile.

    a_ref: (Bt, 4, Mp, K)  im2col rows grouped by 2x2 pool position (Mp = M padded to 8)
    w_ref: (K, C)          weights, rows in (kh, kw, cin) order
    b_ref: (1, C)          bias
    o_ref: (Bt, Mp, C)     pooled output, rows in (out_h, out_w) order

    relu(max_p(a[p] @ w) + b) == maxpool2(relu(conv + b)) exactly (monotonicity).
    Batch, pool-position and output-pixel dims are folded into ONE matmul M dim.
    """
    bt, _, mp, k = a_ref.shape
    cout = w_ref.shape[1]
    r = jnp.dot(a_ref[...].reshape(bt * 4 * mp, k), w_ref[...],
                preferred_element_type=jnp.float32)
    r = r.reshape(bt, 4, mp, cout)
    r = jnp.maximum(jnp.maximum(r[:, 0], r[:, 1]),
                    jnp.maximum(r[:, 2], r[:, 3]))            # 2x2 max pool
    b = b_ref[...].reshape(1, 1, cout)
    o_ref[...] = jnp.maximum(r + b, 0.0).astype(o_ref.dtype)


def _mlp_head_kernel(x_ref, w1_ref, b1_ref, w2_ref, b2_ref, w3_ref, b3_ref,
                     feat_ref, logit_ref):
    """fc1+ReLU, fc2+ReLU, head fused; weights stay VMEM-resident across the
    batch grid (constant index_maps).  fc2/head are zero-padded to 256/128 cols,
    so the extra feat columns are exactly 0 and the caller slices them off."""
    h = jnp.dot(x_ref[...], w1_ref[...], preferred_element_type=jnp.float32)
    h = jnp.maximum(h + b1_ref[...], 0.0)
    h = jnp.dot(h, w2_ref[...], preferred_element_type=jnp.float32)
    h = jnp.maximum(h + b2_ref[...], 0.0)
    feat_ref[...] = h
    logit_ref[...] = (jnp.dot(h, w3_ref[...], preferred_element_type=jnp.float32)
                      + b3_ref[...])


# ------------------------------- JAX glue ---------------------------------- #

def _im2col(x, k):
    """x: (B,H,W,C) NHWC -> (B, OH, OW, k*k*C), columns ordered (kh, kw, cin)."""
    B, H, W, C = x.shape
    OH, OW = H - k + 1, W - k + 1
    cols = [x[:, i:i + OH, j:j + OW, :] for i in range(k) for j in range(k)]
    return jnp.concatenate(cols, axis=-1)


def _pool_group(patches, m_pad):
    """(B, OH, OW, K) -> (B, 4, m_pad, K): group im2col rows by 2x2 pool position
    and zero-pad the row count to a sublane multiple (8).  No K padding."""
    B, OH, OW, K = patches.shape
    M = (OH // 2) * (OW // 2)
    parts = [patches[:, di::2, dj::2, :] for di in (0, 1) for dj in (0, 1)]
    a = jnp.stack(parts, axis=1).reshape(B, 4, M, K)
    if m_pad > M:
        a = jnp.pad(a, ((0, 0), (0, 0), (0, m_pad - M), (0, 0)))
    return a


def conv_relu_pool(x, wmat, b, bt):
    """Fused Conv2d(5x5, valid, stride 1) + bias + ReLU + MaxPool2d(2) on NHWC input.
    wmat is the pre-laid-out (K, Cout) weight; b is (1, Cout)."""
    B, H, W, Cin = x.shape
    K, Cout = wmat.shape
    kh = 5
    OH, OW = H - kh + 1, W - kh + 1
    PH, PW = OH // 2, OW // 2
    M = PH * PW
    m_pad = ((M + 7) // 8) * 8
    assert K == kh * kh * Cin and B % bt == 0

    a = _pool_group(_im2col(x, kh), m_pad)                      # (B, 4, m_pad, K)

    out = pl.pallas_call(
        _conv_relu_pool_kernel,
        grid=(B // bt,),
        in_specs=[
            pl.BlockSpec((bt, 4, m_pad, K), lambda i: (i, 0, 0, 0)),
            pl.BlockSpec((K, Cout), lambda i: (0, 0)),
            pl.BlockSpec((1, Cout), lambda i: (0, 0)),
        ],
        out_specs=pl.BlockSpec((bt, m_pad, Cout), lambda i: (i, 0, 0)),
        out_shape=jax.ShapeDtypeStruct((B, m_pad, Cout), jnp.float32),
        compiler_params=pltpu.CompilerParams(
            dimension_semantics=("parallel",),
            vmem_limit_bytes=_VMEM_LIMIT),
    )(a, wmat, b)
    return out[:, :M, :].reshape(B, PH, PW, Cout)


def mlp_head(feat, kp, bt):
    """Fused fc1+ReLU, fc2+ReLU, head; gridded over batch tiles, weights resident."""
    B = feat.shape[0]
    assert B % bt == 0
    h_pad, logits_pad = pl.pallas_call(
        _mlp_head_kernel,
        grid=(B // bt,),
        in_specs=[
            pl.BlockSpec((bt, 1600), lambda i: (i, 0)),
            pl.BlockSpec((1600, 384), lambda i: (0, 0)),
            pl.BlockSpec((1, 384), lambda i: (0, 0)),
            pl.BlockSpec((384, _FC2_PAD), lambda i: (0, 0)),
            pl.BlockSpec((1, _FC2_PAD), lambda i: (0, 0)),
            pl.BlockSpec((_FC2_PAD, _HEAD_PAD), lambda i: (0, 0)),
            pl.BlockSpec((1, _HEAD_PAD), lambda i: (0, 0)),
        ],
        out_specs=(pl.BlockSpec((bt, _FC2_PAD), lambda i: (i, 0)),
                   pl.BlockSpec((bt, _HEAD_PAD), lambda i: (i, 0))),
        out_shape=(jax.ShapeDtypeStruct((B, _FC2_PAD), jnp.float32),
                   jax.ShapeDtypeStruct((B, _HEAD_PAD), jnp.float32)),
        compiler_params=pltpu.CompilerParams(
            dimension_semantics=("parallel",),
            vmem_limit_bytes=_VMEM_LIMIT),
    )(feat, kp["w1"], kp["b1"], kp["w2"], kp["b2"], kp["w3"], kp["b3"])
    return logits_pad[:, :10], h_pad[:, :192]


def prepare_params(p):
    """One-time relayout of PyTorch-format weights into kernel-ready arrays.
    Hoisted out of the jitted forward so no transpose/pad runs per step.
    fc1's columns are permuted to match PyTorch's NCHW Flatten against our
    (h, w, c) activation order, so no activation transpose is needed."""
    w1 = (p["fc1_w"].reshape(384, 64, 5, 5)          # (out, c, h, w)
          .transpose(2, 3, 1, 0).reshape(1600, 384))  # row index = (h*5+w)*64 + c
    w2 = jnp.pad(p["fc2_w"].T, ((0, 0), (0, _FC2_PAD - 192)))
    b2 = jnp.pad(p["fc2_b"], (0, _FC2_PAD - 192))
    w3 = jnp.pad(p["head_w"].T, ((0, _FC2_PAD - 192), (0, _HEAD_PAD - 10)))
    b3 = jnp.pad(p["head_b"], (0, _HEAD_PAD - 10))
    return {
        "conv1_w": p["conv1_w"].transpose(2, 3, 1, 0).reshape(75, 64),
        "conv1_b": p["conv1_b"].reshape(1, 64),
        "conv2_w": p["conv2_w"].transpose(2, 3, 1, 0).reshape(1600, 64),
        "conv2_b": p["conv2_b"].reshape(1, 64),
        "w1": w1, "b1": p["fc1_b"].reshape(1, 384),
        "w2": w2, "b2": b2.reshape(1, _FC2_PAD),
        "w3": w3, "b3": b3.reshape(1, _HEAD_PAD),
    }


def init_params(key):
    """Deterministic synthetic init (PyTorch-style uniform(-1/sqrt(fan_in), ...)),
    stored in PyTorch layouts."""
    ks = jax.random.split(key, 10)

    def u(k, shape, fan_in):
        bound = 1.0 / jnp.sqrt(jnp.float32(fan_in))
        return jax.random.uniform(k, shape, jnp.float32, -bound, bound)

    return {
        "conv1_w": u(ks[0], (64, 3, 5, 5), 3 * 5 * 5),
        "conv1_b": u(ks[1], (64,), 3 * 5 * 5),
        "conv2_w": u(ks[2], (64, 64, 5, 5), 64 * 5 * 5),
        "conv2_b": u(ks[3], (64,), 64 * 5 * 5),
        "fc1_w": u(ks[4], (384, 1600), 1600),
        "fc1_b": u(ks[5], (384,), 1600),
        "fc2_w": u(ks[6], (192, 384), 384),
        "fc2_b": u(ks[7], (384,) if False else (192,), 384),
        "head_w": u(ks[8], (10, 192), 192),
        "head_b": u(ks[9], (10,), 192),
    }


def cnn_forward(x_nchw, kp, feature=False):
    """Pallas implementation of CNN.forward (x is NCHW, like PyTorch).
    kp is the prepare_params() output (kernel-ready weight layouts)."""
    B = x_nchw.shape[0]
    x = jnp.transpose(x_nchw, (0, 2, 3, 1))                      # NHWC (B,32,32,3)

    # bt <= 8 keeps the double-buffered conv2 LHS (~1.6 MiB/img) under ~14 MiB.
    bt_conv = _pick_tile(B, 8)
    # Conv2d(3,64,5) + ReLU + MaxPool2d(2)   -> (B,14,14,64)
    y = conv_relu_pool(x, kp["conv1_w"], kp["conv1_b"], bt_conv)
    # Conv2d(64,64,5) + ReLU + MaxPool2d(2)  -> (B,5,5,64)
    y = conv_relu_pool(y, kp["conv2_w"], kp["conv2_b"], bt_conv)

    # Flatten in (h, w, c) order; fc1's columns were pre-permuted to match
    # PyTorch's NCHW flatten, so no activation transpose is needed.
    feat_in = y.reshape(B, 1600)
    bt_mlp = _pick_tile(B, 256)
    logits, h = mlp_head(feat_in, kp, bt_mlp)
    if feature:
        return logits, h
    return logits


def reference_forward(x_nchw, p):
    """Pure-JAX reference for correctness checking (takes PyTorch-layout params)."""
    def conv(x_nhwc, w_pt, b):
        w = jnp.transpose(w_pt, (2, 3, 1, 0))  # HWIO
        y = jax.lax.conv_general_dilated(
            x_nhwc, w, (1, 1), "VALID",
            dimension_numbers=("NHWC", "HWIO", "NHWC"))
        return y + b

    def pool(x):
        return jax.lax.reduce_window(x, -jnp.inf, jax.lax.max,
                                     (1, 2, 2, 1), (1, 2, 2, 1), "VALID")

    h = jnp.transpose(x_nchw, (0, 2, 3, 1))
    h = pool(jax.nn.relu(conv(h, p["conv1_w"], p["conv1_b"])))
    h = pool(jax.nn.relu(conv(h, p["conv2_w"], p["conv2_b"])))
    h = jnp.transpose(h, (0, 3, 1, 2)).reshape(h.shape[0], -1)
    h = jax.nn.relu(h @ p["fc1_w"].T + p["fc1_b"])
    h = jax.nn.relu(h @ p["fc2_w"].T + p["fc2_b"])
    return h @ p["head_w"].T + p["head_b"]


if __name__ == "__main__":
    key = jax.random.PRNGKey(0)
    k_x, k_p = jax.random.split(key)
    # CIFAR-10 geometry: 32x32x3 is forced by Linear(1600, 384); batch kept small.
    x = jax.random.normal(k_x, (2, 3, 32, 32), jnp.float32)
    params = init_params(k_p)
    kparams = prepare_params(params)          # one-time weight relayout, outside jit

    fwd = jax.jit(lambda xx, pp: cnn_forward(xx, pp, feature=False))
    fwd_feat = jax.jit(lambda xx, pp: cnn_forward(xx, pp, feature=True))

    logits = jax.block_until_ready(fwd(x, kparams))
    assert logits.shape == (2, 10), logits.shape

    logits2, feat = jax.block_until_ready(fwd_feat(x, kparams))
    assert feat.shape == (2, 192), feat.shape

    ref = jax.block_until_ready(reference_forward(x, params))
    err = float(jnp.max(jnp.abs(logits - ref)))
    assert jnp.allclose(logits, ref, atol=1e-3, rtol=1e-3), err

    print("KERNEL_OK")
</pallas_src>

<mosaic_0001>
module attributes {stable_mosaic.version = 11 : i64} {
  func.func @_conv_relu_pool_kernel(%arg0: i32, %arg1: memref<2x4x200x75xf32, #tpu.memory_space<vmem>>, %arg2: memref<75x64xf32, #tpu.memory_space<vmem>>, %arg3: memref<1x64xf32, #tpu.memory_space<vmem>>, %arg4: memref<2x200x64xf32, #tpu.memory_space<vmem>>) attributes {dimension_semantics = [#tpu.dimension_semantics<parallel>], iteration_bounds = array<i64: 1>, scalar_prefetch = 0 : i64, scratch_operands = 0 : i64, tpu.core_type = #tpu.core_type<tc>, window_params = [{transform_indices = @transform_0, window_bounds = array<i64: 2, 4, 200, 75>}, {pipeline_mode = #tpu.pipeline_mode<synchronous>, transform_indices = @transform_1, window_bounds = array<i64: 75, 64>}, {pipeline_mode = #tpu.pipeline_mode<synchronous>, transform_indices = @transform_2, window_bounds = array<i64: 1, 64>}, {transform_indices = @transform_3, window_bounds = array<i64: 2, 200, 64>}]} {
    %c0 = arith.constant 0 : index
    %c0_0 = arith.constant 0 : index
    %c0_1 = arith.constant 0 : index
    %c0_2 = arith.constant 0 : index
    %0 = vector.load %arg1[%c0, %c0_0, %c0_1, %c0_2] : memref<2x4x200x75xf32, #tpu.memory_space<vmem>>, vector<2x4x200x75xf32>
    %1 = vector.shape_cast %0 : vector<2x4x200x75xf32> to vector<1600x75xf32>
    %c0_3 = arith.constant 0 : index
    %c0_4 = arith.constant 0 : index
    %2 = vector.load %arg2[%c0_3, %c0_4] : memref<75x64xf32, #tpu.memory_space<vmem>>, vector<75x64xf32>
    %cst = arith.constant dense<0.000000e+00> : vector<1600x64xf32>
    %3 = tpu.matmul %1, %2, %cst {dimension_numbers = #tpu.dot_dimension_numbers<[1], [0], [0], [1], [0, 0, 1, 1], [], []>} : vector<1600x75xf32>, vector<75x64xf32>, vector<1600x64xf32> -> vector<1600x64xf32>
    %4 = vector.shape_cast %3 : vector<1600x64xf32> to vector<2x4x200x64xf32>
    %5 = vector.extract_strided_slice %4 {offsets = [0, 0, 0, 0], sizes = [2, 1, 200, 64], strides = [1, 1, 1, 1]} : vector<2x4x200x64xf32> to vector<2x1x200x64xf32>
    %6 = vector.shape_cast %5 : vector<2x1x200x64xf32> to vector<2x200x64xf32>
    %7 = vector.extract_strided_slice %4 {offsets = [0, 1, 0, 0], sizes = [2, 1, 200, 64], strides = [1, 1, 1, 1]} : vector<2x4x200x64xf32> to vector<2x1x200x64xf32>
    %8 = vector.shape_cast %7 : vector<2x1x200x64xf32> to vector<2x200x64xf32>
    %9 = arith.maximumf %6, %8 : vector<2x200x64xf32>
    %10 = vector.extract_strided_slice %4 {offsets = [0, 2, 0, 0], sizes = [2, 1, 200, 64], strides = [1, 1, 1, 1]} : vector<2x4x200x64xf32> to vector<2x1x200x64xf32>
    %11 = vector.shape_cast %10 : vector<2x1x200x64xf32> to vector<2x200x64xf32>
    %12 = vector.extract_strided_slice %4 {offsets = [0, 3, 0, 0], sizes = [2, 1, 200, 64], strides = [1, 1, 1, 1]} : vector<2x4x200x64xf32> to vector<2x1x200x64xf32>
    %13 = vector.shape_cast %12 : vector<2x1x200x64xf32> to vector<2x200x64xf32>
    %14 = arith.maximumf %11, %13 : vector<2x200x64xf32>
    %15 = arith.maximumf %9, %14 : vector<2x200x64xf32>
    %c0_5 = arith.constant 0 : index
    %c0_6 = arith.constant 0 : index
    %16 = vector.load %arg3[%c0_5, %c0_6] : memref<1x64xf32, #tpu.memory_space<vmem>>, vector<1x64xf32>
    %17 = vector.shape_cast %16 : vector<1x64xf32> to vector<1x1x64xf32>
    %18 = vector.broadcast %17 : vector<1x1x64xf32> to vector<2x200x64xf32>
    %19 = arith.addf %15, %18 : vector<2x200x64xf32>
    %cst_7 = arith.constant 0.000000e+00 : f32
    %20 = vector.broadcast %cst_7 : f32 to vector<2x200x64xf32>
    %21 = arith.maximumf %19, %20 : vector<2x200x64xf32>
    %c0_8 = arith.constant 0 : index
    %c0_9 = arith.constant 0 : index
    %c0_10 = arith.constant 0 : index
    %22 = vector.load %arg4[%c0_8, %c0_9, %c0_10] : memref<2x200x64xf32, #tpu.memory_space<vmem>>, vector<2x200x64xf32>
    tpu.vector_store %arg4[%c0_8, %c0_9, %c0_10], %21 {strides = array<i32>} : memref<2x200x64xf32, #tpu.memory_space<vmem>>, vector<2x200x64xf32>,
    return
  }
  func.func @transform_0(%arg0: i32) -> (i32, i32, i32, i32) {
    %c0_i32 = arith.constant 0 : i32
    %c0_i32_0 = arith.constant 0 : i32
    %c0_i32_1 = arith.constant 0 : i32
    %c0_i32_2 = arith.constant 0 : i32
    return %arg0, %c0_i32, %c0_i32_0, %c0_i32_1 : i32, i32, i32, i32
  }
  func.func @transform_1(%arg0: i32) -> (i32, i32) {
    %c0_i32 = arith.constant 0 : i32
    %c0_i32_0 = arith.constant 0 : i32
    %c0_i32_1 = arith.constant 0 : i32
    return %c0_i32, %c0_i32_0 : i32, i32
  }
  func.func @transform_2(%arg0: i32) -> (i32, i32) {
    %c0_i32 = arith.constant 0 : i32
    %c0_i32_0 = arith.constant 0 : i32
    %c0_i32_1 = arith.constant 0 : i32
    return %c0_i32, %c0_i32_0 : i32, i32
  }
  func.func @transform_3(%arg0: i32) -> (i32, i32, i32) {
    %c0_i32 = arith.constant 0 : i32
    %c0_i32_0 = arith.constant 0 : i32
    %c0_i32_1 = arith.constant 0 : i32
    return %arg0, %c0_i32, %c0_i32_0 : i32, i32, i32
  }
}

module attributes {stable_mosaic.version = 11 : i64} {
  func.func @_conv_relu_pool_kernel(%arg0: i32, %arg1: memref<2x4x32x1600xf32, #tpu.memory_space<vmem>>, %arg2: memref<1600x64xf32, #tpu.memory_space<vmem>>, %arg3: memref<1x64xf32, #tpu.memory_space<vmem>>, %arg4: memref<2x32x64xf32, #tpu.memory_space<vmem>>) attributes {dimension_semantics = [#tpu.dimension_semantics<parallel>], iteration_bounds = array<i64: 1>, scalar_prefetch = 0 : i64, scratch_operands = 0 : i64, tpu.core_type = #tpu.core_type<tc>, window_params = [{transform_indices = @transform_0, window_bounds = array<i64: 2, 4, 32, 1600>}, {pipeline_mode = #tpu.pipeline_mode<synchronous>, transform_indices = @transform_1, window_bounds = array<i64: 1600, 64>}, {pipeline_mode = #tpu.pipeline_mode<synchronous>, transform_indices = @transform_2, window_bounds = array<i64: 1, 64>}, {transform_indices = @transform_3, window_bounds = array<i64: 2, 32, 64>}]} {
    %c0 = arith.constant 0 : index
    %c0_0 = arith.constant 0 : index
    %c0_1 = arith.constant 0 : index
    %c0_2 = arith.constant 0 : index
    %0 = vector.load %arg1[%c0, %c0_0, %c0_1, %c0_2] : memref<2x4x32x1600xf32, #tpu.memory_space<vmem>>, vector<2x4x32x1600xf32>
    %1 = vector.shape_cast %0 : vector<2x4x32x1600xf32> to vector<256x1600xf32>
    %c0_3 = arith.constant 0 : index
    %c0_4 = arith.constant 0 : index
    %2 = vector.load %arg2[%c0_3, %c0_4] : memref<1600x64xf32, #tpu.memory_space<vmem>>, vector<1600x64xf32>
    %cst = arith.constant dense<0.000000e+00> : vector<256x64xf32>
    %3 = tpu.matmul %1, %2, %cst {dimension_numbers = #tpu.dot_dimension_numbers<[1], [0], [0], [1], [0, 0, 1, 1], [], []>} : vector<256x1600xf32>, vector<1600x64xf32>, vector<256x64xf32> -> vector<256x64xf32>
    %4 = vector.shape_cast %3 : vector<256x64xf32> to vector<2x4x32x64xf32>
    %5 = vector.extract_strided_slice %4 {offsets = [0, 0, 0, 0], sizes = [2, 1, 32, 64], strides = [1, 1, 1, 1]} : vector<2x4x32x64xf32> to vector<2x1x32x64xf32>
    %6 = vector.shape_cast %5 : vector<2x1x32x64xf32> to vector<2x32x64xf32>
    %7 = vector.extract_strided_slice %4 {offsets = [0, 1, 0, 0], sizes = [2, 1, 32, 64], strides = [1, 1, 1, 1]} : vector<2x4x32x64xf32> to vector<2x1x32x64xf32>
    %8 = vector.shape_cast %7 : vector<2x1x32x64xf32> to vector<2x32x64xf32>
    %9 = arith.maximumf %6, %8 : vector<2x32x64xf32>
    %10 = vector.extract_strided_slice %4 {offsets = [0, 2, 0, 0], sizes = [2, 1, 32, 64], strides = [1, 1, 1, 1]} : vector<2x4x32x64xf32> to vector<2x1x32x64xf32>
    %11 = vector.shape_cast %10 : vector<2x1x32x64xf32> to vector<2x32x64xf32>
    %12 = vector.extract_strided_slice %4 {offsets = [0, 3, 0, 0], sizes = [2, 1, 32, 64], strides = [1, 1, 1, 1]} : vector<2x4x32x64xf32> to vector<2x1x32x64xf32>
    %13 = vector.shape_cast %12 : vector<2x1x32x64xf32> to vector<2x32x64xf32>
    %14 = arith.maximumf %11, %13 : vector<2x32x64xf32>
    %15 = arith.maximumf %9, %14 : vector<2x32x64xf32>
    %c0_5 = arith.constant 0 : index
    %c0_6 = arith.constant 0 : index
    %16 = vector.load %arg3[%c0_5, %c0_6] : memref<1x64xf32, #tpu.memory_space<vmem>>, vector<1x64xf32>
    %17 = vector.shape_cast %16 : vector<1x64xf32> to vector<1x1x64xf32>
    %18 = vector.broadcast %17 : vector<1x1x64xf32> to vector<2x32x64xf32>
    %19 = arith.addf %15, %18 : vector<2x32x64xf32>
    %cst_7 = arith.constant 0.000000e+00 : f32
    %20 = vector.broadcast %cst_7 : f32 to vector<2x32x64xf32>
    %21 = arith.maximumf %19, %20 : vector<2x32x64xf32>
    %c0_8 = arith.constant 0 : index
    %c0_9 = arith.constant 0 : index
    %c0_10 = arith.constant 0 : index
    %22 = vector.load %arg4[%c0_8, %c0_9, %c0_10] : memref<2x32x64xf32, #tpu.memory_space<vmem>>, vector<2x32x64xf32>
    tpu.vector_store %arg4[%c0_8, %c0_9, %c0_10], %21 {strides = array<i32>} : memref<2x32x64xf32, #tpu.memory_space<vmem>>, vector<2x32x64xf32>,
    return
  }
  func.func @transform_0(%arg0: i32) -> (i32, i32, i32, i32) {
    %c0_i32 = arith.constant 0 : i32
    %c0_i32_0 = arith.constant 0 : i32
    %c0_i32_1 = arith.constant 0 : i32
    %c0_i32_2 = arith.constant 0 : i32
    return %arg0, %c0_i32, %c0_i32_0, %c0_i32_1 : i32, i32, i32, i32
  }
  func.func @transform_1(%arg0: i32) -> (i32, i32) {
    %c0_i32 = arith.constant 0 : i32
    %c0_i32_0 = arith.constant 0 : i32
    %c0_i32_1 = arith.constant 0 : i32
    return %c0_i32, %c0_i32_0 : i32, i32
  }
  func.func @transform_2(%arg0: i32) -> (i32, i32) {
    %c0_i32 = arith.constant 0 : i32
    %c0_i32_0 = arith.constant 0 : i32
    %c0_i32_1 = arith.constant 0 : i32
    return %c0_i32, %c0_i32_0 : i32, i32
  }
  func.func @transform_3(%arg0: i32) -> (i32, i32, i32) {
    %c0_i32 = arith.constant 0 : i32
    %c0_i32_0 = arith.constant 0 : i32
    %c0_i32_1 = arith.constant 0 : i32
    return %arg0, %c0_i32, %c0_i32_0 : i32, i32, i32
  }
}

module attributes {stable_mosaic.version = 11 : i64} {
  func.func @_mlp_head_kernel(%arg0: i32, %arg1: memref<2x1600xf32, #tpu.memory_space<vmem>>, %arg2: memref<1600x384xf32, #tpu.memory_space<vmem>>, %arg3: memref<1x384xf32, #tpu.memory_space<vmem>>, %arg4: memref<384x256xf32, #tpu.memory_space<vmem>>, %arg5: memref<1x256xf32, #tpu.memory_space<vmem>>, %arg6: memref<256x128xf32, #tpu.memory_space<vmem>>, %arg7: memref<1x128xf32, #tpu.memory_space<vmem>>, %arg8: memref<2x256xf32, #tpu.memory_space<vmem>>, %arg9: memref<2x128xf32, #tpu.memory_space<vmem>>) attributes {dimension_semantics = [#tpu.dimension_semantics<parallel>], iteration_bounds = array<i64: 1>, scalar_prefetch = 0 : i64, scratch_operands = 0 : i64, tpu.core_type = #tpu.core_type<tc>, window_params = [{transform_indices = @transform_0, window_bounds = array<i64: 2, 1600>}, {pipeline_mode = #tpu.pipeline_mode<synchronous>, transform_indices = @transform_1, window_bounds = array<i64: 1600, 384>}, {pipeline_mode = #tpu.pipeline_mode<synchronous>, transform_indices = @transform_2, window_bounds = array<i64: 1, 384>}, {pipeline_mode = #tpu.pipeline_mode<synchronous>, transform_indices = @transform_3, window_bounds = array<i64: 384, 256>}, {pipeline_mode = #tpu.pipeline_mode<synchronous>, transform_indices = @transform_4, window_bounds = array<i64: 1, 256>}, {pipeline_mode = #tpu.pipeline_mode<synchronous>, transform_indices = @transform_5, window_bounds = array<i64: 256, 128>}, {pipeline_mode = #tpu.pipeline_mode<synchronous>, transform_indices = @transform_6, window_bounds = array<i64: 1, 128>}, {transform_indices = @transform_7, window_bounds = array<i64: 2, 256>}, {transform_indices = @transform_8, window_bounds = array<i64: 2, 128>}]} {
    %c0 = arith.constant 0 : index
    %c0_0 = arith.constant 0 : index
    %0 = vector.load %arg1[%c0, %c0_0] : memref<2x1600xf32, #tpu.memory_space<vmem>>, vector<2x1600xf32>
    %c0_1 = arith.constant 0 : index
    %c0_2 = arith.constant 0 : index
    %1 = vector.load %arg2[%c0_1, %c0_2] : memref<1600x384xf32, #tpu.memory_space<vmem>>, vector<1600x384xf32>
    %cst = arith.constant dense<0.000000e+00> : vector<2x384xf32>
    %2 = tpu.matmul %0, %1, %cst {dimension_numbers = #tpu.dot_dimension_numbers<[1], [0], [0], [1], [0, 0, 1, 1], [], []>} : vector<2x1600xf32>, vector<1600x384xf32>, vector<2x384xf32> -> vector<2x384xf32>
    %c0_3 = arith.constant 0 : index
    %c0_4 = arith.constant 0 : index
    %3 = vector.load %arg3[%c0_3, %c0_4] : memref<1x384xf32, #tpu.memory_space<vmem>>, vector<1x384xf32>
    %4 = vector.broadcast %3 : vector<1x384xf32> to vector<2x384xf32>
    %5 = arith.addf %2, %4 : vector<2x384xf32>
    %cst_5 = arith.constant 0.000000e+00 : f32
    %6 = vector.broadcast %cst_5 : f32 to vector<2x384xf32>
    %7 = arith.maximumf %5, %6 : vector<2x384xf32>
    %c0_6 = arith.constant 0 : index
    %c0_7 = arith.constant 0 : index
    %8 = vector.load %arg4[%c0_6, %c0_7] : memref<384x256xf32, #tpu.memory_space<vmem>>, vector<384x256xf32>
    %cst_8 = arith.constant dense<0.000000e+00> : vector<2x256xf32>
    %9 = tpu.matmul %7, %8, %cst_8 {dimension_numbers = #tpu.dot_dimension_numbers<[1], [0], [0], [1], [0, 0, 1, 1], [], []>} : vector<2x384xf32>, vector<384x256xf32>, vector<2x256xf32> -> vector<2x256xf32>
    %c0_9 = arith.constant 0 : index
    %c0_10 = arith.constant 0 : index
    %10 = vector.load %arg5[%c0_9, %c0_10] : memref<1x256xf32, #tpu.memory_space<vmem>>, vector<1x256xf32>
    %11 = vector.broadcast %10 : vector<1x256xf32> to vector<2x256xf32>
    %12 = arith.addf %9, %11 : vector<2x256xf32>
    %cst_11 = arith.constant 0.000000e+00 : f32
    %13 = vector.broadcast %cst_11 : f32 to vector<2x256xf32>
    %14 = arith.maximumf %12, %13 : vector<2x256xf32>
    %c0_12 = arith.constant 0 : index
    %c0_13 = arith.constant 0 : index
    %15 = vector.load %arg8[%c0_12, %c0_13] : memref<2x256xf32, #tpu.memory_space<vmem>>, vector<2x256xf32>
    tpu.vector_store %arg8[%c0_12, %c0_13], %14 {strides = array<i32>} : memref<2x256xf32, #tpu.memory_space<vmem>>, vector<2x256xf32>,
    %c0_14 = arith.constant 0 : index
    %c0_15 = arith.constant 0 : index
    %16 = vector.load %arg6[%c0_14, %c0_15] : memref<256x128xf32, #tpu.memory_space<vmem>>, vector<256x128xf32>
    %cst_16 = arith.constant dense<0.000000e+00> : vector<2x128xf32>
    %17 = tpu.matmul %14, %16, %cst_16 {dimension_numbers = #tpu.dot_dimension_numbers<[1], [0], [0], [1], [0, 0, 1, 1], [], []>} : vector<2x256xf32>, vector<256x128xf32>, vector<2x128xf32> -> vector<2x128xf32>
    %c0_17 = arith.constant 0 : index
    %c0_18 = arith.constant 0 : index
    %18 = vector.load %arg7[%c0_17, %c0_18] : memref<1x128xf32, #tpu.memory_space<vmem>>, vector<1x128xf32>
    %19 = vector.broadcast %18 : vector<1x128xf32> to vector<2x128xf32>
    %20 = arith.addf %17, %19 : vector<2x128xf32>
    %c0_19 = arith.constant 0 : index
    %c0_20 = arith.constant 0 : index
    %21 = vector.load %arg9[%c0_19, %c0_20] : memref<2x128xf32, #tpu.memory_space<vmem>>, vector<2x128xf32>
    tpu.vector_store %arg9[%c0_19, %c0_20], %20 {strides = array<i32>} : memref<2x128xf32, #tpu.memory_space<vmem>>, vector<2x128xf32>,
    return
  }
  func.func @transform_0(%arg0: i32) -> (i32, i32) {
    %c0_i32 = arith.constant 0 : i32
    %c0_i32_0 = arith.constant 0 : i32
    return %arg0, %c0_i32 : i32, i32
  }
  func.func @transform_1(%arg0: i32) -> (i32, i32) {
    %c0_i32 = arith.constant 0 : i32
    %c0_i32_0 = arith.constant 0 : i32
    %c0_i32_1 = arith.constant 0 : i32
    return %c0_i32, %c0_i32_0 : i32, i32
  }
  func.func @transform_2(%arg0: i32) -> (i32, i32) {
    %c0_i32 = arith.constant 0 : i32
    %c0_i32_0 = arith.constant 0 : i32
    %c0_i32_1 = arith.constant 0 : i32
    return %c0_i32, %c0_i32_0 : i32, i32
  }
  func.func @transform_3(%arg0: i32) -> (i32, i32) {
    %c0_i32 = arith.constant 0 : i32
    %c0_i32_0 = arith.constant 0 : i32
    %c0_i32_1 = arith.constant 0 : i32
    return %c0_i32, %c0_i32_0 : i32, i32
  }
  func.func @transform_4(%arg0: i32) -> (i32, i32) {
    %c0_i32 = arith.constant 0 : i32
    %c0_i32_0 = arith.constant 0 : i32
    %c0_i32_1 = arith.constant 0 : i32
    return %c0_i32, %c0_i32_0 : i32, i32
  }
  func.func @transform_5(%arg0: i32) -> (i32, i32) {
    %c0_i32 = arith.constant 0 : i32
    %c0_i32_0 = arith.constant 0 : i32
    %c0_i32_1 = arith.constant 0 : i32
    return %c0_i32, %c0_i32_0 : i32, i32
  }
  func.func @transform_6(%arg0: i32) -> (i32, i32) {
    %c0_i32 = arith.constant 0 : i32
    %c0_i32_0 = arith.constant 0 : i32
    %c0_i32_1 = arith.constant 0 : i32
    return %c0_i32, %c0_i32_0 : i32, i32
  }
  func.func @transform_7(%arg0: i32) -> (i32, i32) {
    %c0_i32 = arith.constant 0 : i32
    %c0_i32_0 = arith.constant 0 : i32
    return %arg0, %c0_i32 : i32, i32
  }
  func.func @transform_8(%arg0: i32) -> (i32, i32) {
    %c0_i32 = arith.constant 0 : i32
    %c0_i32_0 = arith.constant 0 : i32
    return %arg0, %c0_i32 : i32, i32
  }
}

</mosaic_0001>

<llo_original>
// kernel: _lambda_.3
$region0: #{_lambda_.3}
  #allocation0 [shape = 'u32[]', space=smem, size = 0x4, offset = 0x4, fixed_abs, tag = 'smem constant byte address 0x4 - core index']
  #allocation1 [shape = 'u32[144,128]{1,0:T(1,128)}', space=vmem, size = 0x12000, scoped, tag = 'internal scratch']
  %s0 = inlined_call_operand.vmem [shape: f32[2,4,200,75], index: 0, kind: input, shape index: {}]
  %s1 = inlined_call_operand.vmem [shape: f32[75,64], index: 1, kind: input, shape index: {}]
  %s2 = inlined_call_operand.vmem [shape: f32[1,64], index: 2, kind: input, shape index: {}]
  %s3 = inlined_call_operand.vmem [shape: f32[2,200,64], index: 3, kind: output, shape index: {}]
  %s4 = sld [smem:[#allocation0]]
  $region22: #{_lambda_.3} parent=0
    _
  %s6 = ssub.s32 1, %s4
  %s7 = scalar_select 0, %s6, %s4
  // Predicated region
  $region2: #{_lambda_.3} parent=0 // pred_check
    _
  $region3: #{_lambda_.3} parent=0 // pred_check_branch
    %9 = sbr.rel (0) target = $region5
  $region4: #{_lambda_.3} parent=0 // pred_region
    _
  $region5: #{_lambda_.3} parent=0 // pred_fallthru
    _
  // Predicated region
  $region6: #{_lambda_.3} parent=0 // pred_check
    _
  $region7: #{_lambda_.3} parent=0 // pred_check_branch
    %11 = sbr.rel (0) target = $region9
  $region8: #{_lambda_.3} parent=0 // pred_region
    _
  $region9: #{_lambda_.3} parent=0 // pred_fallthru
    _
  // Predicated region
  $region10: #{_lambda_.3} parent=0 // pred_check
    _
  $region11: #{_lambda_.3} parent=0 // pred_check_branch
    %13 = sbr.rel (0) target = $region13
  $region12: #{_lambda_.3} parent=0 // pred_region
    _
  $region13: #{_lambda_.3} parent=0 // pred_fallthru
    _
  %v14 = vld [vmem:[%s0] sm:$0xff]
  %v15 = vld [vmem:[%s0 + $0x8] sm:$0xff]
  %v16 = vld [vmem:[%s0 + $0x10] sm:$0xff]
  %v17 = vld [vmem:[%s0 + $0x18] sm:$0xff]
  %v18 = vld [vmem:[%s0 + $0x20] sm:$0xff]
  %v19 = vld [vmem:[%s0 + $0x28] sm:$0xff]
  %v20 = vld [vmem:[%s0 + $0x30] sm:$0xff]
  %v21 = vld [vmem:[%s0 + $0x38] sm:$0xff]
  %v22 = vld [vmem:[%s0 + $0x40] sm:$0xff]
  %v23 = vld [vmem:[%s0 + $0x48] sm:$0xff]
  %v24 = vld [vmem:[%s0 + $0x50] sm:$0xff]
  %v25 = vld [vmem:[%s0 + $0x58] sm:$0xff]
  %v26 = vld [vmem:[%s0 + $0x60] sm:$0xff]
  %v27 = vld [vmem:[%s0 + $0x68] sm:$0xff]
  %v28 = vld [vmem:[%s0 + $0x70] sm:$0xff]
  %v29 = vld [vmem:[%s0 + $0x78] sm:$0xff]
  %v30 = vld [vmem:[%s0 + $0x80] sm:$0xff]
  %v31 = vld [vmem:[%s0 + $0x88] sm:$0xff]
  %v32 = vld [vmem:[%s0 + $0x90] sm:$0xff]
  %v33 = vld [vmem:[%s0 + $0x98] sm:$0xff]
  %v34 = vld [vmem:[%s0 + $0xa0] sm:$0xff]
  %v35 = vld [vmem:[%s0 + $0xa8] sm:$0xff]
  %v36 = vld [vmem:[%s0 + $0xb0] sm:$0xff]
  %v37 = vld [vmem:[%s0 + $0xb8] sm:$0xff]
  %v38 = vld [vmem:[%s0 + $0xc0] sm:$0xff]
  %v39 = vld [vmem:[%s0 + $0xc8] sm:$0xff]
  %v40 = vld [vmem:[%s0 + $0xd0] sm:$0xff]
  %v41 = vld [vmem:[%s0 + $0xd8] sm:$0xff]
  %v42 = vld [vmem:[%s0 + $0xe0] sm:$0xff]
  %v43 = vld [vmem:[%s0 + $0xe8] sm:$0xff]
  %v44 = vld [vmem:[%s0 + $0xf0] sm:$0xff]
  %v45 = vld [vmem:[%s0 + $0xf8] sm:$0xff]
  %v46 = vld [vmem:[%s0 + $0x100] sm:$0xff]
  %v47 = vld [vmem:[%s0 + $0x108] sm:$0xff]
  %v48 = vld [vmem:[%s0 + $0x110] sm:$0xff]
  %v49 = vld [vmem:[%s0 + $0x118] sm:$0xff]
  %v50 = vld [vmem:[%s0 + $0x120] sm:$0xff]
  %v51 = vld [vmem:[%s0 + $0x128] sm:$0xff]
  %v52 = vld [vmem:[%s0 + $0x130] sm:$0xff]
  %v53 = vld [vmem:[%s0 + $0x138] sm:$0xff]
  %v54 = vld [vmem:[%s0 + $0x140] sm:$0xff]
  %v55 = vld [vmem:[%s0 + $0x148] sm:$0xff]
  %v56 = vld [vmem:[%s0 + $0x150] sm:$0xff]
  %v57 = vld [vmem:[%s0 + $0x158] sm:$0xff]
  %v58 = vld [vmem:[%s0 + $0x160] sm:$0xff]
  %v59 = vld [vmem:[%s0 + $0x168] sm:$0xff]
  %v60 = vld [vmem:[%s0 + $0x170] sm:$0xff]
  %v61 = vld [vmem:[%s0 + $0x178] sm:$0xff]
  %v62 = vld [vmem:[%s0 + $0x180] sm:$0xff]
  %v63 = vld [vmem:[%s0 + $0x188] sm:$0xff]
  %v64 = vld [vmem:[%s0 + $0x190] sm:$0xff]
  %v65 = vld [vmem:[%s0 + $0x198] sm:$0xff]
  %v66 = vld [vmem:[%s0 + $0x1a0] sm:$0xff]
  %v67 = vld [vmem:[%s0 + $0x1a8] sm:$0xff]
  %v68 = vld [vmem:[%s0 + $0x1b0] sm:$0xff]
  %v69 = vld [vmem:[%s0 + $0x1b8] sm:$0xff]
  %v70 = vld [vmem:[%s0 + $0x1c0] sm:$0xff]
  %v71 = vld [vmem:[%s0 + $0x1c8] sm:$0xff]
  %v72 = vld [vmem:[%s0 + $0x1d0] sm:$0xff]
  %v73 = vld [vmem:[%s0 + $0x1d8] sm:$0xff]
  %v74 = vld [vmem:[%s0 + $0x1e0] sm:$0xff]
  %v75 = vld [vmem:[%s0 + $0x1e8] sm:$0xff]
  %v76 = vld [vmem:[%s0 + $0x1f0] sm:$0xff]
  %v77 = vld [vmem:[%s0 + $0x1f8] sm:$0xff]
  %v78 = vld [vmem:[%s0 + $0x200] sm:$0xff]
  %v79 = vld [vmem:[%s0 + $0x208] sm:$0xff]
  %v80 = vld [vmem:[%s0 + $0x210] sm:$0xff]
  %v81 = vld [vmem:[%s0 + $0x218] sm:$0xff]
  %v82 = vld [vmem:[%s0 + $0x220] sm:$0xff]
  %v83 = vld [vmem:[%s0 + $0x228] sm:$0xff]
  %v84 = vld [vmem:[%s0 + $0x230] sm:$0xff]
  %v85 = vld [vmem:[%s0 + $0x238] sm:$0xff]
  %v86 = vld [vmem:[%s0 + $0x240] sm:$0xff]
  %v87 = vld [vmem:[%s0 + $0x248] sm:$0xff]
  %v88 = vld [vmem:[%s0 + $0x250] sm:$0xff]
  %v89 = vld [vmem:[%s0 + $0x258] sm:$0xff]
  %v90 = vld [vmem:[%s0 + $0x260] sm:$0xff]
  %v91 = vld [vmem:[%s0 + $0x268] sm:$0xff]
  %v92 = vld [vmem:[%s0 + $0x270] sm:$0xff]
  %v93 = vld [vmem:[%s0 + $0x278] sm:$0xff]
  %v94 = vld [vmem:[%s0 + $0x280] sm:$0xff]
  %v95 = vld [vmem:[%s0 + $0x288] sm:$0xff]
  %v96 = vld [vmem:[%s0 + $0x290] sm:$0xff]
  %v97 = vld [vmem:[%s0 + $0x298] sm:$0xff]
  %v98 = vld [vmem:[%s0 + $0x2a0] sm:$0xff]
  %v99 = vld [vmem:[%s0 + $0x2a8] sm:$0xff]
  %v100 = vld [vmem:[%s0 + $0x2b0] sm:$0xff]
  %v101 = vld [vmem:[%s0 + $0x2b8] sm:$0xff]
  %v102 = vld [vmem:[%s0 + $0x2c0] sm:$0xff]
  %v103 = vld [vmem:[%s0 + $0x2c8] sm:$0xff]
  %v104 = vld [vmem:[%s0 + $0x2d0] sm:$0xff]
  %v105 = vld [vmem:[%s0 + $0x2d8] sm:$0xff]
  %v106 = vld [vmem:[%s0 + $0x2e0] sm:$0xff]
  %v107 = vld [vmem:[%s0 + $0x2e8] sm:$0xff]
  %v108 = vld [vmem:[%s0 + $0x2f0] sm:$0xff]
  %v109 = vld [vmem:[%s0 + $0x2f8] sm:$0xff]
  %v110 = vld [vmem:[%s0 + $0x300] sm:$0xff]
  %v111 = vld [vmem:[%s0 + $0x308] sm:$0xff]
  %v112 = vld [vmem:[%s0 + $0x310] sm:$0xff]
  %v113 = vld [vmem:[%s0 + $0x318] sm:$0xff]
  %v114 = vld [vmem:[%s0 + $0x320] sm:$0xff]
  %v115 = vld [vmem:[%s0 + $0x328] sm:$0xff]
  %v116 = vld [vmem:[%s0 + $0x330] sm:$0xff]
  %v117 = vld [vmem:[%s0 + $0x338] sm:$0xff]
  %v118 = vld [vmem:[%s0 + $0x340] sm:$0xff]
  %v119 = vld [vmem:[%s0 + $0x348] sm:$0xff]
  %v120 = vld [vmem:[%s0 + $0x350] sm:$0xff]
  %v121 = vld [vmem:[%s0 + $0x358] sm:$0xff]
  %v122 = vld [vmem:[%s0 + $0x360] sm:$0xff]
  %v123 = vld [vmem:[%s0 + $0x368] sm:$0xff]
  %v124 = vld [vmem:[%s0 + $0x370] sm:$0xff]
  %v125 = vld [vmem:[%s0 + $0x378] sm:$0xff]
  %v126 = vld [vmem:[%s0 + $0x380] sm:$0xff]
  %v127 = vld [vmem:[%s0 + $0x388] sm:$0xff]
  %v128 = vld [vmem:[%s0 + $0x390] sm:$0xff]
  %v129 = vld [vmem:[%s0 + $0x398] sm:$0xff]
  %v130 = vld [vmem:[%s0 + $0x3a0] sm:$0xff]
  %v131 = vld [vmem:[%s0 + $0x3a8] sm:$0xff]
  %v132 = vld [vmem:[%s0 + $0x3b0] sm:$0xff]
  %v133 = vld [vmem:[%s0 + $0x3b8] sm:$0xff]
  %v134 = vld [vmem:[%s0 + $0x3c0] sm:$0xff]
  %v135 = vld [vmem:[%s0 + $0x3c8] sm:$0xff]
  %v136 = vld [vmem:[%s0 + $0x3d0] sm:$0xff]
  %v137 = vld [vmem:[%s0 + $0x3d8] sm:$0xff]
  %v138 = vld [vmem:[%s0 + $0x3e0] sm:$0xff]
  %v139 = vld [vmem:[%s0 + $0x3e8] sm:$0xff]
  %v140 = vld [vmem:[%s0 + $0x3f0] sm:$0xff]
  %v141 = vld [vmem:[%s0 + $0x3f8] sm:$0xff]
  %v142 = vld [vmem:[%s0 + $0x400] sm:$0xff]
  %v143 = vld [vmem:[%s0 + $0x408] sm:$0xff]
  %v144 = vld [vmem:[%s0 + $0x410] sm:$0xff]
  %v145 = vld [vmem:[%s0 + $0x418] sm:$0xff]
  %v146 = vld [vmem:[%s0 + $0x420] sm:$0xff]
  %v147 = vld [vmem:[%s0 + $0x428] sm:$0xff]
  %v148 = vld [vmem:[%s0 + $0x430] sm:$0xff]
  %v149 = vld [vmem:[%s0 + $0x438] sm:$0xff]
  %v150 = vld [vmem:[%s0 + $0x440] sm:$0xff]
  %v151 = vld [vmem:[%s0 + $0x448] sm:$0xff]
  %v152 = vld [vmem:[%s0 + $0x450] sm:$0xff]
  %v153 = vld [vmem:[%s0 + $0x458] sm:$0xff]
  %v154 = vld [vmem:[%s0 + $0x460] sm:$0xff]
  %v155 = vld [vmem:[%s0 + $0x468] sm:$0xff]
  %v156 = vld [vmem:[%s0 + $0x470] sm:$0xff]
  %v157 = vld [vmem:[%s0 + $0x478] sm:$0xff]
  %v158 = vld [vmem:[%s0 + $0x480] sm:$0xff]
  %v159 = vld [vmem:[%s0 + $0x488] sm:$0xff]
  %v160 = vld [vmem:[%s0 + $0x490] sm:$0xff]
  %v161 = vld [vmem:[%s0 + $0x498] sm:$0xff]
  %v162 = vld [vmem:[%s0 + $0x4a0] sm:$0xff]
  %v163 = vld [vmem:[%s0 + $0x4a8] sm:$0xff]
  %v164 = vld [vmem:[%s0 + $0x4b0] sm:$0xff]
  %v165 = vld [vmem:[%s0 + $0x4b8] sm:$0xff]
  %v166 = vld [vmem:[%s0 + $0x4c0] sm:$0xff]
  %v167 = vld [vmem:[%s0 + $0x4c8] sm:$0xff]
  %v168 = vld [vmem:[%s0 + $0x4d0] sm:$0xff]
  %v169 = vld [vmem:[%s0 + $0x4d8] sm:$0xff]
  %v170 = vld [vmem:[%s0 + $0x4e0] sm:$0xff]
  %v171 = vld [vmem:[%s0 + $0x4e8] sm:$0xff]
  %v172 = vld [vmem:[%s0 + $0x4f0] sm:$0xff]
  %v173 = vld [vmem:[%s0 + $0x4f8] sm:$0xff]
  %v174 = vld [vmem:[%s0 + $0x500] sm:$0xff]
  %v175 = vld [vmem:[%s0 + $0x508] sm:$0xff]
  %v176 = vld [vmem:[%s0 + $0x510] sm:$0xff]
  %v177 = vld [vmem:[%s0 + $0x518] sm:$0xff]
  %v178 = vld [vmem:[%s0 + $0x520] sm:$0xff]
  %v179 = vld [vmem:[%s0 + $0x528] sm:$0xff]
  %v180 = vld [vmem:[%s0 + $0x530] sm:$0xff]
  %v181 = vld [vmem:[%s0 + $0x538] sm:$0xff]
  %v182 = vld [vmem:[%s0 + $0x540] sm:$0xff]
  %v183 = vld [vmem:[%s0 + $0x548] sm:$0xff]
  %v184 = vld [vmem:[%s0 + $0x550] sm:$0xff]
  %v185 = vld [vmem:[%s0 + $0x558] sm:$0xff]
  %v186 = vld [vmem:[%s0 + $0x560] sm:$0xff]
  %v187 = vld [vmem:[%s0 + $0x568] sm:$0xff]
  %v188 = vld [vmem:[%s0 + $0x570] sm:$0xff]
  %v189 = vld [vmem:[%s0 + $0x578] sm:$0xff]
  %v190 = vld [vmem:[%s0 + $0x580] sm:$0xff]
  %v191 = vld [vmem:[%s0 + $0x588] sm:$0xff]
  %v192 = vld [vmem:[%s0 + $0x590] sm:$0xff]
  %v193 = vld [vmem:[%s0 + $0x598] sm:$0xff]
  %v194 = vld [vmem:[%s0 + $0x5a0] sm:$0xff]
  %v195 = vld [vmem:[%s0 + $0x5a8] sm:$0xff]
  %v196 = vld [vmem:[%s0 + $0x5b0] sm:$0xff]
  %v197 = vld [vmem:[%s0 + $0x5b8] sm:$0xff]
  %v198 = vld [vmem:[%s0 + $0x5c0] sm:$0xff]
  %v199 = vld [vmem:[%s0 + $0x5c8] sm:$0xff]
  %v200 = vld [vmem:[%s0 + $0x5d0] sm:$0xff]
  %v201 = vld [vmem:[%s0 + $0x5d8] sm:$0xff]
  %v202 = vld [vmem:[%s0 + $0x5e0] sm:$0xff]
  %v203 = vld [vmem:[%s0 + $0x5e8] sm:$0xff]
  %v204 = vld [vmem:[%s0 + $0x5f0] sm:$0xff]
  %v205 = vld [vmem:[%s0 + $0x5f8] sm:$0xff]
  %v206 = vld [vmem:[%s0 + $0x600] sm:$0xff]
  %v207 = vld [vmem:[%s0 + $0x608] sm:$0xff]
  %v208 = vld [vmem:[%s0 + $0x610] sm:$0xff]
  %v209 = vld [vmem:[%s0 + $0x618] sm:$0xff]
  %v210 = vld [vmem:[%s0 + $0x620] sm:$0xff]
  %v211 = vld [vmem:[%s0 + $0x628] sm:$0xff]
  %v212 = vld [vmem:[%s0 + $0x630] sm:$0xff]
  %v213 = vld [vmem:[%s0 + $0x638] sm:$0xff]
  %v214 = vld [vmem:[%s1] sm:$0xff]
  %v215 = vld [vmem:[%s1 + $0x8] sm:$0xff]
  %v216 = vld [vmem:[%s1 + $0x10] sm:$0xff]
  %v217 = vld [vmem:[%s1 + $0x18] sm:$0xff]
  %v218 = vld [vmem:[%s1 + $0x20] sm:$0xff]
  %v219 = vld [vmem:[%s1 + $0x28] sm:$0xff]
  %v220 = vld [vmem:[%s1 + $0x30] sm:$0xff]
  %v221 = vld [vmem:[%s1 + $0x38] sm:$0xff]
  %v222 = vld [vmem:[%s1 + $0x40] sm:$0xff]
  %v223 = vld [vmem:[%s1 + $0x48] sm:$0x7]
  %vm224 = vcmask 613376
  %v226 = vsel %vm224, %v14, 0
  %v229 = vsel %vm224, %v15, 0
  %v232 = vsel %vm224, %v16, 0
  %v235 = vsel %vm224, %v17, 0
  %v238 = vsel %vm224, %v18, 0
  %v241 = vsel %vm224, %v19, 0
  %v244 = vsel %vm224, %v20, 0
  %v247 = vsel %vm224, %v21, 0
  %v250 = vsel %vm224, %v22, 0
  %v253 = vsel %vm224, %v23, 0
  %v256 = vsel %vm224, %v24, 0
  %v259 = vsel %vm224, %v25, 0
  %v262 = vsel %vm224, %v26, 0
  %v265 = vsel %vm224, %v27, 0
  %v268 = vsel %vm224, %v28, 0
  %v271 = vsel %vm224, %v29, 0
  %v274 = vsel %vm224, %v30, 0
  %v277 = vsel %vm224, %v31, 0
  %v280 = vsel %vm224, %v32, 0
  %v283 = vsel %vm224, %v33, 0
  %v286 = vsel %vm224, %v34, 0
  %v289 = vsel %vm224, %v35, 0
  %v292 = vsel %vm224, %v36, 0
  %v295 = vsel %vm224, %v37, 0
  %v298 = vsel %vm224, %v38, 0
  %v301 = vsel %vm224, %v39, 0
  %v304 = vsel %vm224, %v40, 0
  %v307 = vsel %vm224, %v41, 0
  %v310 = vsel %vm224, %v42, 0
  %v313 = vsel %vm224, %v43, 0
  %v316 = vsel %vm224, %v44, 0
  %v319 = vsel %vm224, %v45, 0
  %v322 = vsel %vm224, %v46, 0
  %v325 = vsel %vm224, %v47, 0
  %v328 = vsel %vm224, %v48, 0
  %v331 = vsel %vm224, %v49, 0
  %v334 = vsel %vm224, %v50, 0
  %v337 = vsel %vm224, %v51, 0
  %v340 = vsel %vm224, %v52, 0
  %v343 = vsel %vm224, %v53, 0
  %v346 = vsel %vm224, %v54, 0
  %v349 = vsel %vm224, %v55, 0
  %v352 = vsel %vm224, %v56, 0
  %v355 = vsel %vm224, %v57, 0
  %v358 = vsel %vm224, %v58, 0
  %v361 = vsel %vm224, %v59, 0
  %v364 = vsel %vm224, %v60, 0
  %v367 = vsel %vm224, %v61, 0
  %v370 = vsel %vm224, %v62, 0
  %v373 = vsel %vm224, %v63, 0
  %v376 = vsel %vm224, %v64, 0
  %v379 = vsel %vm224, %v65, 0
  %v382 = vsel %vm224, %v66, 0
  %v385 = vsel %vm224, %v67, 0
  %v388 = vsel %vm224, %v68, 0
  %v391 = vsel %vm224, %v69, 0
  %v394 = vsel %vm224, %v70, 0
  %v397 = vsel %vm224, %v71, 0
  %v400 = vsel %vm224, %v72, 0
  %v403 = vsel %vm224, %v73, 0
  %v406 = vsel %vm224, %v74, 0
  %v409 = vsel %vm224, %v75, 0
  %v412 = vsel %vm224, %v76, 0
  %v415 = vsel %vm224, %v77, 0
  %v418 = vsel %vm224, %v78, 0
  %v421 = vsel %vm224, %v79, 0
  %v424 = vsel %vm224, %v80, 0
  %v427 = vsel %vm224, %v81, 0
  %v430 = vsel %vm224, %v82, 0
  %v433 = vsel %vm224, %v83, 0
  %v436 = vsel %vm224, %v84, 0
  %v439 = vsel %vm224, %v85, 0
  %v442 = vsel %vm224, %v86, 0
  %v445 = vsel %vm224, %v87, 0
  %v448 = vsel %vm224, %v88, 0
  %v451 = vsel %vm224, %v89, 0
  %v454 = vsel %vm224, %v90, 0
  %v457 = vsel %vm224, %v91, 0
  %v460 = vsel %vm224, %v92, 0
  %v463 = vsel %vm224, %v93, 0
  %v466 = vsel %vm224, %v94, 0
  %v469 = vsel %vm224, %v95, 0
  %v472 = vsel %vm224, %v96, 0
  %v475 = vsel %vm224, %v97, 0
  %v478 = vsel %vm224, %v98, 0
  %v481 = vsel %vm224, %v99, 0
  %v484 = vsel %vm224, %v100, 0
  %v487 = vsel %vm224, %v101, 0
  %v490 = vsel %vm224, %v102, 0
  %v493 = vsel %vm224, %v103, 0
  %v496 = vsel %vm224, %v104, 0
  %v499 = vsel %vm224, %v105, 0
  %v502 = vsel %vm224, %v106, 0
  %v505 = vsel %vm224, %v107, 0
  %v508 = vsel %vm224, %v108, 0
  %v511 = vsel %vm224, %v109, 0
  %v514 = vsel %vm224, %v110, 0
  %v517 = vsel %vm224, %v111, 0
  %v520 = vsel %vm224, %v112, 0
  %v523 = vsel %vm224, %v113, 0
  %v526 = vsel %vm224, %v114, 0
  %v529 = vsel %vm224, %v115, 0
  %v532 = vsel %vm224, %v116, 0
  %v535 = vsel %vm224, %v117, 0
  %v538 = vsel %vm224, %v118, 0
  %v541 = vsel %vm224, %v119, 0
  %v544 = vsel %vm224, %v120, 0
  %v547 = vsel %vm224, %v121, 0
  %v550 = vsel %vm224, %v122, 0
  %v553 = vsel %vm224, %v123, 0
  %v556 = vsel %vm224, %v124, 0
  %v559 = vsel %vm224, %v125, 0
  %v562 = vsel %vm224, %v126, 0
  %v565 = vsel %vm224, %v127, 0
  %v568 = vsel %vm224, %v128, 0
  %v571 = vsel %vm224, %v129, 0
  %v574 = vsel %vm224, %v130, 0
  %v577 = vsel %vm224, %v131, 0
  %v580 = vsel %vm224, %v132, 0
  %v583 = vsel %vm224, %v133, 0
  %v586 = vsel %vm224, %v134, 0
  %v589 = vsel %vm224, %v135, 0
  %v592 = vsel %vm224, %v136, 0
  %v595 = vsel %vm224, %v137, 0
  %v598 = vsel %vm224, %v138, 0
  %v601 = vsel %vm224, %v139, 0
  %v604 = vsel %vm224, %v140, 0
  %v607 = vsel %vm224, %v141, 0
  %v610 = vsel %vm224, %v142, 0
  %v613 = vsel %vm224, %v143, 0
  %v616 = vsel %vm224, %v144, 0
  %v619 = vsel %vm224, %v145, 0
  %v622 = vsel %vm224, %v146, 0
  %v625 = vsel %vm224, %v147, 0
  %v628 = vsel %vm224, %v148, 0
  %v631 = vsel %vm224, %v149, 0
  %v634 = vsel %vm224, %v150, 0
  %v637 = vsel %vm224, %v151, 0
  %v640 = vsel %vm224, %v152, 0
  %v643 = vsel %vm224, %v153, 0
  %v646 = vsel %vm224, %v154, 0
  %v649 = vsel %vm224, %v155, 0
  %v652 = vsel %vm224, %v156, 0
  %v655 = vsel %vm224, %v157, 0
  %v658 = vsel %vm224, %v158, 0
  %v661 = vsel %vm224, %v159, 0
  %v664 = vsel %vm224, %v160, 0
  %v667 = vsel %vm224, %v161, 0
  %v670 = vsel %vm224, %v162, 0
  %v673 = vsel %vm224, %v163, 0
  %v676 = vsel %vm224, %v164, 0
  %v679 = vsel %vm224, %v165, 0
  %v682 = vsel %vm224, %v166, 0
  %v685 = vsel %vm224, %v167, 0
  %v688 = vsel %vm224, %v168, 0
  %v691 = vsel %vm224, %v169, 0
  %v694 = vsel %vm224, %v170, 0
  %v697 = vsel %vm224, %v171, 0
  %v700 = vsel %vm224, %v172, 0
  %v703 = vsel %vm224, %v173, 0
  %v706 = vsel %vm224, %v174, 0
  %v709 = vsel %vm224, %v175, 0
  %v712 = vsel %vm224, %v176, 0
  %v715 = vsel %vm224, %v177, 0
  %v718 = vsel %vm224, %v178, 0
  %v721 = vsel %vm224, %v179, 0
  %v724 = vsel %vm224, %v180, 0
  %v727 = vsel %vm224, %v181, 0
  %v730 = vsel %vm224, %v182, 0
  %v733 = vsel %vm224, %v183, 0
  %v736 = vsel %vm224, %v184, 0
  %v739 = vsel %vm224, %v185, 0
  %v742 = vsel %vm224, %v186, 0
  %v745 = vsel %vm224, %v187, 0
  %v748 = vsel %vm224, %v188, 0
  %v751 = vsel %vm224, %v189, 0
  %v754 = vsel %vm224, %v190, 0
  %v757 = vsel %vm224, %v191, 0
  %v760 = vsel %vm224, %v192, 0
  %v763 = vsel %vm224, %v193, 0
  %v766 = vsel %vm224, %v194, 0
  %v769 = vsel %vm224, %v195, 0
  %v772 = vsel %vm224, %v196, 0
  %v775 = vsel %vm224, %v197, 0
  %v778 = vsel %vm224, %v198, 0
  %v781 = vsel %vm224, %v199, 0
  %v784 = vsel %vm224, %v200, 0
  %v787 = vsel %vm224, %v201, 0
  %v790 = vsel %vm224, %v202, 0
  %v793 = vsel %vm224, %v203, 0
  %v796 = vsel %vm224, %v204, 0
  %v799 = vsel %vm224, %v205, 0
  %v802 = vsel %vm224, %v206, 0
  %v805 = vsel %vm224, %v207, 0
  %v808 = vsel %vm224, %v208, 0
  %v811 = vsel %vm224, %v209, 0
  %v814 = vsel %vm224, %v210, 0
  %v817 = vsel %vm224, %v211, 0
  %v820 = vsel %vm224, %v212, 0
  %v823 = vsel %vm224, %v213, 0
  %vm825 = vcmask 1042432
  %v827 = vsel %vm825, %v223, 0
  %829 = vmatprep.subr.mxu0 0.0
  %830 = vmatpush1.msra.mxu0 %v214
  %831 = vmatprep.subr.mxu0 0.0
  %832 = vmatpush1.msra.mxu0 %v215
  %833 = vmatprep.subr.mxu0 0.0
  %834 = vmatpush1.msra.mxu0 %v216
  %835 = vmatprep.subr.mxu0 0.0
  %836 = vmatpush1.msra.mxu0 %v217
  %837 = vmatprep.subr.mxu0 0.0
  %838 = vmatpush1.msra.mxu0 %v218
  %839 = vmatprep.subr.mxu0 0.0
  %840 = vmatpush1.msra.mxu0 %v219
  %841 = vmatprep.subr.mxu0 0.0
  %842 = vmatpush1.msra.mxu0 %v220
  %843 = vmatprep.subr.mxu0 0.0
  %844 = vmatpush1.msra.mxu0 %v221
  %845 = vmatprep.subr.mxu0 0.0
  %846 = vmatpush1.msra.mxu0 %v222
  %847 = vmatprep.subr.mxu0 0.0
  %848 = vmatpush1.msra.mxu0 %v827
  %849 = vmatprep.subr.mxu0 0.0
  %850 = vmatpush1.msra.mxu0 0.0
  %851 = vmatprep.subr.mxu0 0.0
  %852 = vmatpush1.msra.mxu0 0.0
  %853 = vmatprep.subr.mxu0 0.0
  %854 = vmatpush1.msra.mxu0 0.0
  %855 = vmatprep.subr.mxu0 0.0
  %856 = vmatpush1.msra.mxu0 0.0
  %857 = vmatprep.subr.mxu0 0.0
  %858 = vmatpush1.msra.mxu0 0.0
  %859 = vmatprep.subr.mxu0 0.0
  %860 = vmatpush1.msra.mxu0 0.0
  %861 = vmatprep.subr.mxu0 0.0
  %862 = vmatpush1.msra.mxu0 0.0
  %863 = vmatprep.subr.mxu0 0.0
  %864 = vmatpush1.msra.mxu0 0.0
  %865 = vmatprep.subr.mxu0 0.0
  %866 = vmatpush1.msra.mxu0 0.0
  %867 = vmatprep.subr.mxu0 0.0
  %868 = vmatpush1.msra.mxu0 0.0
  %869 = vmatprep.subr.mxu0 0.0
  %870 = vmatpush1.msra.mxu0 0.0
  %871 = vmatprep.subr.mxu0 0.0
  %872 = vmatpush1.msra.mxu0 0.0
  %873 = vmatprep.subr.mxu0 0.0
  %874 = vmatpush1.msra.mxu0 0.0
  %875 = vmatprep.subr.mxu0 0.0
  %876 = vmatpush1.msra.mxu0 0.0
  %877 = vmatprep.subr.mxu0 0.0
  %878 = vmatpush1.msra.mxu0 0.0
  %879 = vmatprep.subr.mxu0 0.0
  %880 = vmatpush1.msra.mxu0 0.0
  %881 = vmatprep.subr.mxu0 0.0
  %882 = vmatpush1.msra.mxu0 0.0
  %883 = vmatprep.subr.mxu0 0.0
  %884 = vmatpush1.msra.mxu0 0.0
  %885 = vmatprep.subr.mxu0 0.0
  %886 = vmatpush1.msra.mxu0 0.0
  %887 = vmatprep.subr.mxu0 0.0
  %888 = vmatpush1.msra.mxu0 0.0
  %889 = vmatprep.subr.mxu0 0.0
  %890 = vmatpush1.msra.mxu0 0.0
  %891 = vmatprep.subr.mxu0 0.0
  %892 = vmatpush1.msra.mxu0 0.0
  %893 = vmatprep.mubr.f32.mxu0 0.0
  %894 = vmatmul.mubr.f32.gmra.mrb[0].mxu0 %v226
  %v895 = vpop.f32.mrb[0].mxu0
  %v896 = vadd.f32 0.0, %v895
  %v897 = vpop.f32.mrb[0].mxu0
  %898 = vmatprep.mubr.f32.mxu0 0.0
  %899 = vmatmul.mubr.f32.gmra.mrb[0].mxu0 %v229
  %v900 = vpop.f32.mrb[0].mxu0
  %v901 = vadd.f32 0.0, %v900
  %v902 = vpop.f32.mrb[0].mxu0
  %903 = vmatprep.mubr.f32.mxu0 0.0
  %904 = vmatmul.mubr.f32.gmra.mrb[0].mxu0 %v232
  %v905 = vpop.f32.mrb[0].mxu0
  %v906 = vadd.f32 0.0, %v905
  %v907 = vpop.f32.mrb[0].mxu0
  %908 = vmatprep.mubr.f32.mxu0 0.0
  %909 = vmatmul.mubr.f32.gmra.mrb[0].mxu0 %v235
  %v910 = vpop.f32.mrb[0].mxu0
  %v911 = vadd.f32 0.0, %v910
  %v912 = vpop.f32.mrb[0].mxu0
  %913 = vmatprep.mubr.f32.mxu0 0.0
  %914 = vmatmul.mubr.f32.gmra.mrb[0].mxu0 %v238
  %v915 = vpop.f32.mrb[0].mxu0
  %v916 = vadd.f32 0.0, %v915
  %v917 = vpop.f32.mrb[0].mxu0
  %918 = vmatprep.mubr.f32.mxu0 0.0
  %919 = vmatmul.mubr.f32.gmra.mrb[0].mxu0 %v241
  %v920 = vpop.f32.mrb[0].mxu0
  %v921 = vadd.f32 0.0, %v920
  %v922 = vpop.f32.mrb[0].mxu0
  %923 = vmatprep.mubr.f32.mxu0 0.0
  %924 = vmatmul.mubr.f32.gmra.mrb[0].mxu0 %v244
  %v925 = vpop.f32.mrb[0].mxu0
  %v926 = vadd.f32 0.0, %v925
  %v927 = vpop.f32.mrb[0].mxu0
  %928 = vmatprep.mubr.f32.mxu0 0.0
  %929 = vmatmul.mubr.f32.gmra.mrb[0].mxu0 %v247
  %v930 = vpop.f32.mrb[0].mxu0
  %v931 = vadd.f32 0.0, %v930
  %v932 = vpop.f32.mrb[0].mxu0
  %933 = vmatprep.mubr.f32.mxu0 0.0
  %934 = vmatmul.mubr.f32.gmra.mrb[0].mxu0 %v250
  %v935 = vpop.f32.mrb[0].mxu0
  %v936 = vadd.f32 0.0, %v935
  %v937 = vpop.f32.mrb[0].mxu0
  %938 = vmatprep.mubr.f32.mxu0 0.0
  %939 = vmatmul.mubr.f32.gmra.mrb[0].mxu0 %v253
  %v940 = vpop.f32.mrb[0].mxu0
  %v941 = vadd.f32 0.0, %v940
  %v942 = vpop.f32.mrb[0].mxu0
  %943 = vmatprep.mubr.f32.mxu0 0.0
  %944 = vmatmul.mubr.f32.gmra.mrb[0].mxu0 %v256
  %v945 = vpop.f32.mrb[0].mxu0
  %v946 = vadd.f32 0.0, %v945
  %v947 = vpop.f32.mrb[0].mxu0
  %948 = vmatprep.mubr.f32.mxu0 0.0
  %949 = vmatmul.mubr.f32.gmra.mrb[0].mxu0 %v259
  %v950 = vpop.f32.mrb[0].mxu0
  %v951 = vadd.f32 0.0, %v950
  %v952 = vpop.f32.mrb[0].mxu0
  %953 = vmatprep.mubr.f32.mxu0 0.0
  %954 = vmatmul.mubr.f32.gmra.mrb[0].mxu0 %v262
  %v955 = vpop.f32.mrb[0].mxu0
  %v956 = vadd.f32 0.0, %v955
  %v957 = vpop.f32.mrb[0].mxu0
  %958 = vmatprep.mubr.f32.mxu0 0.0
  %959 = vmatmul.mubr.f32.gmra.mrb[0].mxu0 %v265
  %v960 = vpop.f32.mrb[0].mxu0
  %v961 = vadd.f32 0.0, %v960
  %v962 = vpop.f32.mrb[0].mxu0
  %963 = vmatprep.mubr.f32.mxu0 0.0
  %964 = vmatmul.mubr.f32.gmra.mrb[0].mxu0 %v268
  %v965 = vpop.f32.mrb[0].mxu0
  %v966 = vadd.f32 0.0, %v965
  %v967 = vpop.f32.mrb[0].mxu0
  %968 = vmatprep.mubr.f32.mxu0 0.0
  %969 = vmatmul.mubr.f32.gmra.mrb[0].mxu0 %v271
  %v970 = vpop.f32.mrb[0].mxu0
  %v971 = vadd.f32 0.0, %v970
  %v972 = vpop.f32.mrb[0].mxu0
  %973 = vmatprep.mubr.f32.mxu0 0.0
  %974 = vmatmul.mubr.f32.gmra.mrb[0].mxu0 %v274
  %v975 = vpop.f32.mrb[0].mxu0
  %v976 = vadd.f32 0.0, %v975
  %v977 = vpop.f32.mrb[0].mxu0
  %978 = vmatprep.mubr.f32.mxu0 0.0
  %979 = vmatmul.mubr.f32.gmra.mrb[0].mxu0 %v277
  %v980 = vpop.f32.mrb[0].mxu0
  %v981 = vadd.f32 0.0, %v980
  %v982 = vpop.f32.mrb[0].mxu0
  %983 = vmatprep.mubr.f32.mxu0 0.0
  %984 = vmatmul.mubr.f32.gmra.mrb[0].mxu0 %v280
  %v985 = vpop.f32.mrb[0].mxu0
  %v986 = vadd.f32 0.0, %v985
  %v987 = vpop.f32.mrb[0].mxu0
  %988 = vmatprep.mubr.f32.mxu0 0.0
  %989 = vmatmul.mubr.f32.gmra.mrb[0].mxu0 %v283
  %v990 = vpop.f32.mrb[0].mxu0
  %v991 = vadd.f32 0.0, %v990
  %v992 = vpop.f32.mrb[0].mxu0
  %993 = vmatprep.mubr.f32.mxu0 0.0
  %994 = vmatmul.mubr.f32.gmra.mrb[0].mxu0 %v286
  %v995 = vpop.f32.mrb[0].mxu0
  %v996 = vadd.f32 0.0, %v995
  %v997 = vpop.f32.mrb[0].mxu0
  %998 = vmatprep.mubr.f32.mxu0 0.0
  %999 = vmatmul.mubr.f32.gmra.mrb[0].mxu0 %v289
  %v1000 = vpop.f32.mrb[0].mxu0
  %v1001 = vadd.f32 0.0, %v1000
  %v1002 = vpop.f32.mrb[0].mxu0
  %1003 = vmatprep.mubr.f32.mxu0 0.0
  %1004 = vmatmul.mubr.f32.gmra.mrb[0].mxu0 %v292
  %v1005 = vpop.f32.mrb[0].mxu0
  %v1006 = vadd.f32 0.0, %v1005
  %v1007 = vpop.f32.mrb[0].mxu0
  %1008 = vmatprep.mubr.f32.mxu0 0.0
  %1009 = vmatmul.mubr.f32.gmra.mrb[0].mxu0 %v295
  %v1010 = vpop.f32.mrb[0].mxu0
  %v1011 = vadd.f32 0.0, %v1010
  %v1012 = vpop.f32.mrb[0].mxu0
  %1013 = vmatprep.mubr.f32.mxu0 0.0
  %1014 = vmatmul.mubr.f32.gmra.mrb[0].mxu0 %v298
  %v1015 = vpop.f32.mrb[0].mxu0
  %v1016 = vadd.f32 0.0, %v1015
  %v1017 = vpop.f32.mrb[0].mxu0
  %1018 = vmatprep.mubr.f32.mxu0 0.0
  %1019 = vmatmul.mubr.f32.gmra.mrb[0].mxu0 %v301
  %v1020 = vpop.f32.mrb[0].mxu0
  %v1021 = vadd.f32 0.0, %v1020
  %v1022 = vpop.f32.mrb[0].mxu0
  %1023 = vmatprep.mubr.f32.mxu0 0.0
  %1024 = vmatmul.mubr.f32.gmra.mrb[0].mxu0 %v304
  %v1025 = vpop.f32.mrb[0].mxu0
  %v1026 = vadd.f32 0.0, %v1025
  %v1027 = vpop.f32.mrb[0].mxu0
  %1028 = vmatprep.mubr.f32.mxu0 0.0
  %1029 = vmatmul.mubr.f32.gmra.mrb[0].mxu0 %v307
  %v1030 = vpop.f32.mrb[0].mxu0
  %v1031 = vadd.f32 0.0, %v1030
  %v1032 = vpop.f32.mrb[0].mxu0
  %1033 = vmatprep.mubr.f32.mxu0 0.0
  %1034 = vmatmul.mubr.f32.gmra.mrb[0].mxu0 %v310
  %v1035 = vpop.f32.mrb[0].mxu0
  %v1036 = vadd.f32 0.0, %v1035
  %v1037 = vpop.f32.mrb[0].mxu0
  %1038 = vmatprep.mubr.f32.mxu0 0.0
  %1039 = vmatmul.mubr.f32.gmra.mrb[0].mxu0 %v313
  %v1040 = vpop.f32.mrb[0].mxu0
  %v1041 = vadd.f32 0.0, %v1040
  %v1042 = vpop.f32.mrb[0].mxu0
  %1043 = vmatprep.mubr.f32.mxu0 0.0
  %1044 = vmatmul.mubr.f32.gmra.mrb[0].mxu0 %v316
  %v1045 = vpop.f32.mrb[0].mxu0
  %v1046 = vadd.f32 0.0, %v1045
  %v1047 = vpop.f32.mrb[0].mxu0
  %1048 = vmatprep.mubr.f32.mxu0 0.0
  %1049 = vmatmul.mubr.f32.gmra.mrb[0].mxu0 %v319
  %v1050 = vpop.f32.mrb[0].mxu0
  %v1051 = vadd.f32 0.0, %v1050
  %v1052 = vpop.f32.mrb[0].mxu0
  %1053 = vmatprep.mubr.f32.mxu0 0.0
  %1054 = vmatmul.mubr.f32.gmra.mrb[0].mxu0 %v322
  %v1055 = vpop.f32.mrb[0].mxu0
  %v1056 = vadd.f32 0.0, %v1055
  %v1057 = vpop.f32.mrb[0].mxu0
  %1058 = vmatprep.mubr.f32.mxu0 0.0
  %1059 = vmatmul.mubr.f32.gmra.mrb[0].mxu0 %v325
  %v1060 = vpop.f32.mrb[0].mxu0
  %v1061 = vadd.f32 0.0, %v1060
  %v1062 = vpop.f32.mrb[0].mxu0
  %1063 = vmatprep.mubr.f32.mxu0 0.0
  %1064 = vmatmul.mubr.f32.gmra.mrb[0].mxu0 %v328
  %v1065 = vpop.f32.mrb[0].mxu0
  %v1066 = vadd.f32 0.0, %v1065
  %v1067 = vpop.f32.mrb[0].mxu0
  %1068 = vmatprep.mubr.f32.mxu0 0.0
  %1069 = vmatmul.mubr.f32.gmra.mrb[0].mxu0 %v331
  %v1070 = vpop.f32.mrb[0].mxu0
  %v1071 = vadd.f32 0.0, %v1070
  %v1072 = vpop.f32.mrb[0].mxu0
  %1073 = vmatprep.mubr.f32.mxu0 0.0
  %1074 = vmatmul.mubr.f32.gmra.mrb[0].mxu0 %v334
  %v1075 = vpop.f32.mrb[0].mxu0
  %v1076 = vadd.f32 0.0, %v1075
  %v1077 = vpop.f32.mrb[0].mxu0
  %1078 = vmatprep.mubr.f32.mxu0 0.0
  %1079 = vmatmul.mubr.f32.gmra.mrb[0].mxu0 %v337
  %v1080 = vpop.f32.mrb[0].mxu0
  %v1081 = vadd.f32 0.0, %v1080
  %v1082 = vpop.f32.mrb[0].mxu0
  %1083 = vmatprep.mubr.f32.mxu0 0.0
  %1084 = vmatmul.mubr.f32.gmra.mrb[0].mxu0 %v340
  %v1085 = vpop.f32.mrb[0].mxu0
  %v1086 = vadd.f32 0.0, %v1085
  %v1087 = vpop.f32.mrb[0].mxu0
  %1088 = vmatprep.mubr.f32.mxu0 0.0
  %1089 = vmatmul.mubr.f32.gmra.mrb[0].mxu0 %v343
  %v1090 = vpop.f32.mrb[0].mxu0
  %v1091 = vadd.f32 0.0, %v1090
  %v1092 = vpop.f32.mrb[0].mxu0
  %1093 = vmatprep.mubr.f32.mxu0 0.0
  %1094 = vmatmul.mubr.f32.gmra.mrb[0].mxu0 %v346
  %v1095 = vpop.f32.mrb[0].mxu0
  %v1096 = vadd.f32 0.0, %v1095
  %v1097 = vpop.f32.mrb[0].mxu0
  %1098 = vmatprep.mubr.f32.mxu0 0.0
  %1099 = vmatmul.mubr.f32.gmra.mrb[0].mxu0 %v349
  %v1100 = vpop.f32.mrb[0].mxu0
  %v1101 = vadd.f32 0.0, %v1100
  %v1102 = vpop.f32.mrb[0].mxu0
  %1103 = vmatprep.mubr.f32.mxu0 0.0
  %1104 = vmatmul.mubr.f32.gmra.mrb[0].mxu0 %v352
  %v1105 = vpop.f32.mrb[0].mxu0
  %v1106 = vadd.f32 0.0, %v1105
  %v1107 = vpop.f32.mrb[0].mxu0
  %1108 = vmatprep.mubr.f32.mxu0 0.0
  %1109 = vmatmul.mubr.f32.gmra.mrb[0].mxu0 %v355
  %v1110 = vpop.f32.mrb[0].mxu0
  %v1111 = vadd.f32 0.0, %v1110
  %v1112 = vpop.f32.mrb[0].mxu0
  %1113 = vmatprep.mubr.f32.mxu0 0.0
  %1114 = vmatmul.mubr.f32.gmra.mrb[0].mxu0 %v358
  %v1115 = vpop.f32.mrb[0].mxu0
  %v1116 = vadd.f32 0.0, %v1115
  %v1117 = vpop.f32.mrb[0].mxu0
  %1118 = vmatprep.mubr.f32.mxu0 0.0
  %1119 = vmatmul.mubr.f32.gmra.mrb[0].mxu0 %v361
  %v1120 = vpop.f32.mrb[0].mxu0
  %v1121 = vadd.f32 0.0, %v1120
  %v1122 = vpop.f32.mrb[0].mxu0
  %1123 = vmatprep.mubr.f32.mxu0 0.0
  %1124 = vmatmul.mubr.f32.gmra.mrb[0].mxu0 %v364
  %v1125 = vpop.f32.mrb[0].mxu0
  %v1126 = vadd.f32 0.0, %v1125
  %v1127 = vpop.f32.mrb[0].mxu0
  %1128 = vmatprep.mubr.f32.mxu0 0.0
  %1129 = vmatmul.mubr.f32.gmra.mrb[0].mxu0 %v367
  %v1130 = vpop.f32.mrb[0].mxu0
  %v1131 = vadd.f32 0.0, %v1130
  %v1132 = vpop.f32.mrb[0].mxu0
  %1133 = vmatprep.mubr.f32.mxu0 0.0
  %1134 = vmatmul.mubr.f32.gmra.mrb[0].mxu0 %v370
  %v1135 = vpop.f32.mrb[0].mxu0
  %v1136 = vadd.f32 0.0, %v1135
  %v1137 = vpop.f32.mrb[0].mxu0
  %1138 = vmatprep.mubr.f32.mxu0 0.0
  %1139 = vmatmul.mubr.f32.gmra.mrb[0].mxu0 %v373
  %v1140 = vpop.f32.mrb[0].mxu0
  %v1141 = vadd.f32 0.0, %v1140
  %v1142 = vpop.f32.mrb[0].mxu0
  %1143 = vmatprep.mubr.f32.mxu0 0.0
  %1144 = vmatmul.mubr.f32.gmra.mrb[0].mxu0 %v376
  %v1145 = vpop.f32.mrb[0].mxu0
  %v1146 = vadd.f32 0.0, %v1145
  %v1147 = vpop.f32.mrb[0].mxu0
  %1148 = vmatprep.mubr.f32.mxu0 0.0
  %1149 = vmatmul.mubr.f32.gmra.mrb[0].mxu0 %v379
  %v1150 = vpop.f32.mrb[0].mxu0
  %v1151 = vadd.f32 0.0, %v1150
  %v1152 = vpop.f32.mrb[0].mxu0
  %1153 = vmatprep.mubr.f32.mxu0 0.0
  %1154 = vmatmul.mubr.f32.gmra.mrb[0].mxu0 %v382
  %v1155 = vpop.f32.mrb[0].mxu0
  %v1156 = vadd.f32 0.0, %v1155
  %v1157 = vpop.f32.mrb[0].mxu0
  %1158 = vmatprep.mubr.f32.mxu0 0.0
  %1159 = vmatmul.mubr.f32.gmra.mrb[0].mxu0 %v385
  %v1160 = vpop.f32.mrb[0].mxu0
  %v1161 = vadd.f32 0.0, %v1160
  %v1162 = vpop.f32.mrb[0].mxu0
  %1163 = vmatprep.mubr.f32.mxu0 0.0
  %1164 = vmatmul.mubr.f32.gmra.mrb[0].mxu0 %v388
  %v1165 = vpop.f32.mrb[0].mxu0
  %v1166 = vadd.f32 0.0, %v1165
  %v1167 = vpop.f32.mrb[0].mxu0
  %1168 = vmatprep.mubr.f32.mxu0 0.0
  %1169 = vmatmul.mubr.f32.gmra.mrb[0].mxu0 %v391
  %v1170 = vpop.f32.mrb[0].mxu0
  %v1171 = vadd.f32 0.0, %v1170
  %v1172 = vpop.f32.mrb[0].mxu0
  %1173 = vmatprep.mubr.f32.mxu0 0.0
  %1174 = vmatmul.mubr.f32.gmra.mrb[0].mxu0 %v394
  %v1175 = vpop.f32.mrb[0].mxu0
  %v1176 = vadd.f32 0.0, %v1175
  %v1177 = vpop.f32.mrb[0].mxu0
  %1178 = vmatprep.mubr.f32.mxu0 0.0
  %1179 = vmatmul.mubr.f32.gmra.mrb[0].mxu0 %v397
  %v1180 = vpop.f32.mrb[0].mxu0
  %v1181 = vadd.f32 0.0, %v1180
  %v1182 = vpop.f32.mrb[0].mxu0
  %1183 = vmatprep.mubr.f32.mxu0 0.0
  %1184 = vmatmul.mubr.f32.gmra.mrb[0].mxu0 %v400
  %v1185 = vpop.f32.mrb[0].mxu0
  %v1186 = vadd.f32 0.0, %v1185
  %v1187 = vpop.f32.mrb[0].mxu0
  %1188 = vmatprep.mubr.f32.mxu0 0.0
  %1189 = vmatmul.mubr.f32.gmra.mrb[0].mxu0 %v403
  %v1190 = vpop.f32.mrb[0].mxu0
  %v1191 = vadd.f32 0.0, %v1190
  %v1192 = vpop.f32.mrb[0].mxu0
  %1193 = vmatprep.mubr.f32.mxu0 0.0
  %1194 = vmatmul.mubr.f32.gmra.mrb[0].mxu0 %v406
  %v1195 = vpop.f32.mrb[0].mxu0
  %v1196 = vadd.f32 0.0, %v1195
  %v1197 = vpop.f32.mrb[0].mxu0
  %1198 = vmatprep.mubr.f32.mxu0 0.0
  %1199 = vmatmul.mubr.f32.gmra.mrb[0].mxu0 %v409
  %v1200 = vpop.f32.mrb[0].mxu0
  %v1201 = vadd.f32 0.0, %v1200
  %v1202 = vpop.f32.mrb[0].mxu0
  %1203 = vmatprep.mubr.f32.mxu0 0.0
  %1204 = vmatmul.mubr.f32.gmra.mrb[0].mxu0 %v412
  %v1205 = vpop.f32.mrb[0].mxu0
  %v1206 = vadd.f32 0.0, %v1205
  %v1207 = vpop.f32.mrb[0].mxu0
  %1208 = vmatprep.mubr.f32.mxu0 0.0
  %1209 = vmatmul.mubr.f32.gmra.mrb[0].mxu0 %v415
  %v1210 = vpop.f32.mrb[0].mxu0
  %v1211 = vadd.f32 0.0, %v1210
  %v1212 = vpop.f32.mrb[0].mxu0
  %1213 = vmatprep.mubr.f32.mxu0 0.0
  %1214 = vmatmul.mubr.f32.gmra.mrb[0].mxu0 %v418
  %v1215 = vpop.f32.mrb[0].mxu0
  %v1216 = vadd.f32 0.0, %v1215
  %v1217 = vpop.f32.mrb[0].mxu0
  %1218 = vmatprep.mubr.f32.mxu0 0.0
  %1219 = vmatmul.mubr.f32.gmra.mrb[0].mxu0 %v421
  %v1220 = vpop.f32.mrb[0].mxu0
  %v1221 = vadd.f32 0.0, %v1220
  %v1222 = vpop.f32.mrb[0].mxu0
  %1223 = vmatprep.mubr.f32.mxu0 0.0
  %1224 = vmatmul.mubr.f32.gmra.mrb[0].mxu0 %v424
  %v1225 = vpop.f32.mrb[0].mxu0
  %v1226 = vadd.f32 0.0, %v1225
  %v1227 = vpop.f32.mrb[0].mxu0
  %1228 = vmatprep.mubr.f32.mxu0 0.0
  %1229 = vmatmul.mubr.f32.gmra.mrb[0].mxu0 %v427
  %v1230 = vpop.f32.mrb[0].mxu0
  %v1231 = vadd.f32 0.0, %v1230
  %v1232 = vpop.f32.mrb[0].mxu0
  %1233 = vmatprep.mubr.f32.mxu0 0.0
  %1234 = vmatmul.mubr.f32.gmra.mrb[0].mxu0 %v430
  %v1235 = vpop.f32.mrb[0].mxu0
  %v1236 = vadd.f32 0.0, %v1235
  %v1237 = vpop.f32.mrb[0].mxu0
  %1238 = vmatprep.mubr.f32.mxu0 0.0
  %1239 = vmatmul.mubr.f32.gmra.mrb[0].mxu0 %v433
  %v1240 = vpop.f32.mrb[0].mxu0
  %v1241 = vadd.f32 0.0, %v1240
  %v1242 = vpop.f32.mrb[0].mxu0
  %1243 = vmatprep.mubr.f32.mxu0 0.0
  %1244 = vmatmul.mubr.f32.gmra.mrb[0].mxu0 %v436
  %v1245 = vpop.f32.mrb[0].mxu0
  %v1246 = vadd.f32 0.0, %v1245
  %v1247 = vpop.f32.mrb[0].mxu0
  %1248 = vmatprep.mubr.f32.mxu0 0.0
  %1249 = vmatmul.mubr.f32.gmra.mrb[0].mxu0 %v439
  %v1250 = vpop.f32.mrb[0].mxu0
  %v1251 = vadd.f32 0.0, %v1250
  %v1252 = vpop.f32.mrb[0].mxu0
  %1253 = vmatprep.mubr.f32.mxu0 0.0
  %1254 = vmatmul.mubr.f32.gmra.mrb[0].mxu0 %v442
  %v1255 = vpop.f32.mrb[0].mxu0
  %v1256 = vadd.f32 0.0, %v1255
  %v1257 = vpop.f32.mrb[0].mxu0
  %1258 = vmatprep.mubr.f32.mxu0 0.0
  %1259 = vmatmul.mubr.f32.gmra.mrb[0].mxu0 %v445
  %v1260 = vpop.f32.mrb[0].mxu0
  %v1261 = vadd.f32 0.0, %v1260
  %v1262 = vpop.f32.mrb[0].mxu0
  %1263 = vmatprep.mubr.f32.mxu0 0.0
  %1264 = vmatmul.mubr.f32.gmra.mrb[0].mxu0 %v448
  %v1265 = vpop.f32.mrb[0].mxu0
  %v1266 = vadd.f32 0.0, %v1265
  %v1267 = vpop.f32.mrb[0].mxu0
  %1268 = vmatprep.mubr.f32.mxu0 0.0
  %1269 = vmatmul.mubr.f32.gmra.mrb[0].mxu0 %v451
  %v1270 = vpop.f32.mrb[0].mxu0
  %v1271 = vadd.f32 0.0, %v1270
  %v1272 = vpop.f32.mrb[0].mxu0
  %1273 = vmatprep.mubr.f32.mxu0 0.0
  %1274 = vmatmul.mubr.f32.gmra.mrb[0].mxu0 %v454
  %v1275 = vpop.f32.mrb[0].mxu0
  %v1276 = vadd.f32 0.0, %v1275
  %v1277 = vpop.f32.mrb[0].mxu0
  %1278 = vmatprep.mubr.f32.mxu0 0.0
  %1279 = vmatmul.mubr.f32.gmra.mrb[0].mxu0 %v457
  %v1280 = vpop.f32.mrb[0].mxu0
  %v1281 = vadd.f32 0.0, %v1280
  %v1282 = vpop.f32.mrb[0].mxu0
  %1283 = vmatprep.mubr.f32.mxu0 0.0
  %1284 = vmatmul.mubr.f32.gmra.mrb[0].mxu0 %v460
  %v1285 = vpop.f32.mrb[0].mxu0
  %v1286 = vadd.f32 0.0, %v1285
  %v1287 = vpop.f32.mrb[0].mxu0
  %1288 = vmatprep.mubr.f32.mxu0 0.0
  %1289 = vmatmul.mubr.f32.gmra.mrb[0].mxu0 %v463
  %v1290 = vpop.f32.mrb[0].mxu0
  %v1291 = vadd.f32 0.0, %v1290
  %v1292 = vpop.f32.mrb[0].mxu0
  %1293 = vmatprep.mubr.f32.mxu0 0.0
  %1294 = vmatmul.mubr.f32.gmra.mrb[0].mxu0 %v466
  %v1295 = vpop.f32.mrb[0].mxu0
  %v1296 = vadd.f32 0.0, %v1295
  %v1297 = vpop.f32.mrb[0].mxu0
  %1298 = vmatprep.mubr.f32.mxu0 0.0
  %1299 = vmatmul.mubr.f32.gmra.mrb[0].mxu0 %v469
  %v1300 = vpop.f32.mrb[0].mxu0
  %v1301 = vadd.f32 0.0, %v1300
  %v1302 = vpop.f32.mrb[0].mxu0
  %1303 = vmatprep.mubr.f32.mxu0 0.0
  %1304 = vmatmul.mubr.f32.gmra.mrb[0].mxu0 %v472
  %v1305 = vpop.f32.mrb[0].mxu0
  %v1306 = vadd.f32 0.0, %v1305
  %v1307 = vpop.f32.mrb[0].mxu0
  %1308 = vmatprep.mubr.f32.mxu0 0.0
  %1309 = vmatmul.mubr.f32.gmra.mrb[0].mxu0 %v475
  %v1310 = vpop.f32.mrb[0].mxu0
  %v1311 = vadd.f32 0.0, %v1310
  %v1312 = vpop.f32.mrb[0].mxu0
  %1313 = vmatprep.mubr.f32.mxu0 0.0
  %1314 = vmatmul.mubr.f32.gmra.mrb[0].mxu0 %v478
  %v1315 = vpop.f32.mrb[0].mxu0
  %v1316 = vadd.f32 0.0, %v1315
  %v1317 = vpop.f32.mrb[0].mxu0
  %1318 = vmatprep.mubr.f32.mxu0 0.0
  %1319 = vmatmul.mubr.f32.gmra.mrb[0].mxu0 %v481
  %v1320 = vpop.f32.mrb[0].mxu0
  %v1321 = vadd.f32 0.0, %v1320
  %v1322 = vpop.f32.mrb[0].mxu0
  %1323 = vmatprep.mubr.f32.mxu0 0.0
  %1324 = vmatmul.mubr.f32.gmra.mrb[0].mxu0 %v484
  %v1325 = vpop.f32.mrb[0].mxu0
  %v1326 = vadd.f32 0.0, %v1325
  %v1327 = vpop.f32.mrb[0].mxu0
  %1328 = vmatprep.mubr.f32.mxu0 0.0
  %1329 = vmatmul.mubr.f32.gmra.mrb[0].mxu0 %v487
  %v1330 = vpop.f32.mrb[0].mxu0
  %v1331 = vadd.f32 0.0, %v1330
  %v1332 = vpop.f32.mrb[0].mxu0
  %1333 = vmatprep.mubr.f32.mxu0 0.0
  %1334 = vmatmul.mubr.f32.gmra.mrb[0].mxu0 %v490
  %v1335 = vpop.f32.mrb[0].mxu0
  %v1336 = vadd.f32 0.0, %v1335
  %v1337 = vpop.f32.mrb[0].mxu0
  %1338 = vmatprep.mubr.f32.mxu0 0.0
  %1339 = vmatmul.mubr.f32.gmra.mrb[0].mxu0 %v493
  %v1340 = vpop.f32.mrb[0].mxu0
  %v1341 = vadd.f32 0.0, %v1340
  %v1342 = vpop.f32.mrb[0].mxu0
  %1343 = vmatprep.mubr.f32.mxu0 0.0
  %1344 = vmatmul.mubr.f32.gmra.mrb[0].mxu0 %v496
  %v1345 = vpop.f32.mrb[0].mxu0
  %v1346 = vadd.f32 0.0, %v1345
  %v1347 = vpop.f32.mrb[0].mxu0
  %1348 = vmatprep.mubr.f32.mxu0 0.0
  %1349 = vmatmul.mubr.f32.gmra.mrb[0].mxu0 %v499
  %v1350 = vpop.f32.mrb[0].mxu0
  %v1351 = vadd.f32 0.0, %v1350
  %v1352 = vpop.f32.mrb[0].mxu0
  %1353 = vmatprep.mubr.f32.mxu0 0.0
  %1354 = vmatmul.mubr.f32.gmra.mrb[0].mxu0 %v502
  %v1355 = vpop.f32.mrb[0].mxu0
  %v1356 = vadd.f32 0.0, %v1355
  %v1357 = vpop.f32.mrb[0].mxu0
  %1358 = vmatprep.mubr.f32.mxu0 0.0
  %1359 = vmatmul.mubr.f32.gmra.mrb[0].mxu0 %v505
  %v1360 = vpop.f32.mrb[0].mxu0
  %v1361 = vadd.f32 0.0, %v1360
  %v1362 = vpop.f32.mrb[0].mxu0
  %1363 = vmatprep.mubr.f32.mxu0 0.0
  %1364 = vmatmul.mubr.f32.gmra.mrb[0].mxu0 %v508
  %v1365 = vpop.f32.mrb[0].mxu0
  %v1366 = vadd.f32 0.0, %v1365
  %v1367 = vpop.f32.mrb[0].mxu0
  %1368 = vmatprep.mubr.f32.mxu0 0.0
  %1369 = vmatmul.mubr.f32.gmra.mrb[0].mxu0 %v511
  %v1370 = vpop.f32.mrb[0].mxu0
  %v1371 = vadd.f32 0.0, %v1370
  %v1372 = vpop.f32.mrb[0].mxu0
  %1373 = vmatprep.mubr.f32.mxu0 0.0
  %1374 = vmatmul.mubr.f32.gmra.mrb[0].mxu0 %v514
  %v1375 = vpop.f32.mrb[0].mxu0
  %v1376 = vadd.f32 0.0, %v1375
  %v1377 = vpop.f32.mrb[0].mxu0
  %1378 = vmatprep.mubr.f32.mxu0 0.0
  %1379 = vmatmul.mubr.f32.gmra.mrb[0].mxu0 %v517
  %v1380 = vpop.f32.mrb[0].mxu0
  %v1381 = vadd.f32 0.0, %v1380
  %v1382 = vpop.f32.mrb[0].mxu0
  %1383 = vmatprep.mubr.f32.mxu0 0.0
  %1384 = vmatmul.mubr.f32.gmra.mrb[0].mxu0 %v520
  %v1385 = vpop.f32.mrb[0].mxu0
  %v1386 = vadd.f32 0.0, %v1385
  %v1387 = vpop.f32.mrb[0].mxu0
  %1388 = vmatprep.mubr.f32.mxu0 0.0
  %1389 = vmatmul.mubr.f32.gmra.mrb[0].mxu0 %v523
  %v1390 = vpop.f32.mrb[0].mxu0
  %v1391 = vadd.f32 0.0, %v1390
  %v1392 = vpop.f32.mrb[0].mxu0
  %1393 = vmatprep.mubr.f32.mxu0 0.0
  %1394 = vmatmul.mubr.f32.gmra.mrb[0].mxu0 %v526
  %v1395 = vpop.f32.mrb[0].mxu0
  %v1396 = vadd.f32 0.0, %v1395
  %v1397 = vpop.f32.mrb[0].mxu0
  %1398 = vmatprep.mubr.f32.mxu0 0.0
  %1399 = vmatmul.mubr.f32.gmra.mrb[0].mxu0 %v529
  %v1400 = vpop.f32.mrb[0].mxu0
  %v1401 = vadd.f32 0.0, %v1400
  %v1402 = vpop.f32.mrb[0].mxu0
  %1403 = vmatprep.mubr.f32.mxu0 0.0
  %1404 = vmatmul.mubr.f32.gmra.mrb[0].mxu0 %v532
  %v1405 = vpop.f32.mrb[0].mxu0
  %v1406 = vadd.f32 0.0, %v1405
  %v1407 = vpop.f32.mrb[0].mxu0
  %1408 = vmatprep.mubr.f32.mxu0 0.0
  %1409 = vmatmul.mubr.f32.gmra.mrb[0].mxu0 %v535
  %v1410 = vpop.f32.mrb[0].mxu0
  %v1411 = vadd.f32 0.0, %v1410
  %v1412 = vpop.f32.mrb[0].mxu0
  %1413 = vmatprep.mubr.f32.mxu0 0.0
  %1414 = vmatmul.mubr.f32.gmra.mrb[0].mxu0 %v538
  %v1415 = vpop.f32.mrb[0].mxu0
  %v1416 = vadd.f32 0.0, %v1415
  %v1417 = vpop.f32.mrb[0].mxu0
  %1418 = vmatprep.mubr.f32.mxu0 0.0
  %1419 = vmatmul.mubr.f32.gmra.mrb[0].mxu0 %v541
  %v1420 = vpop.f32.mrb[0].mxu0
  %v1421 = vadd.f32 0.0, %v1420
  %v1422 = vpop.f32.mrb[0].mxu0
  %1423 = vmatprep.mubr.f32.mxu0 0.0
  %1424 = vmatmul.mubr.f32.gmra.mrb[0].mxu0 %v544
  %v1425 = vpop.f32.mrb[0].mxu0
  %v1426 = vadd.f32 0.0, %v1425
  %v1427 = vpop.f32.mrb[0].mxu0
  %1428 = vmatprep.mubr.f32.mxu0 0.0
  %1429 = vmatmul.mubr.f32.gmra.mrb[0].mxu0 %v547
  %v1430 = vpop.f32.mrb[0].mxu0
  %v1431 = vadd.f32 0.0, %v1430
  %v1432 = vpop.f32.mrb[0].mxu0
  %1433 = vmatprep.mubr.f32.mxu0 0.0
  %1434 = vmatmul.mubr.f32.gmra.mrb[0].mxu0 %v550
  %v1435 = vpop.f32.mrb[0].mxu0
  %v1436 = vadd.f32 0.0, %v1435
  %v1437 = vpop.f32.mrb[0].mxu0
  %1438 = vmatprep.mubr.f32.mxu0 0.0
  %1439 = vmatmul.mubr.f32.gmra.mrb[0].mxu0 %v553
  %v1440 = vpop.f32.mrb[0].mxu0
  %v1441 = vadd.f32 0.0, %v1440
  %v1442 = vpop.f32.mrb[0].mxu0
  %1443 = vmatprep.mubr.f32.mxu0 0.0
  %1444 = vmatmul.mubr.f32.gmra.mrb[0].mxu0 %v556
  %v1445 = vpop.f32.mrb[0].mxu0
  %v1446 = vadd.f32 0.0, %v1445
  %v1447 = vpop.f32.mrb[0].mxu0
  %1448 = vmatprep.mubr.f32.mxu0 0.0
  %1449 = vmatmul.mubr.f32.gmra.mrb[0].mxu0 %v559
  %v1450 = vpop.f32.mrb[0].mxu0
  %v1451 = vadd.f32 0.0, %v1450
  %v1452 = vpop.f32.mrb[0].mxu0
  %1453 = vmatprep.mubr.f32.mxu0 0.0
  %1454 = vmatmul.mubr.f32.gmra.mrb[0].mxu0 %v562
  %v1455 = vpop.f32.mrb[0].mxu0
  %v1456 = vadd.f32 0.0, %v1455
  %v1457 = vpop.f32.mrb[0].mxu0
  %1458 = vmatprep.mubr.f32.mxu0 0.0
  %1459 = vmatmul.mubr.f32.gmra.mrb[0].mxu0 %v565
  %v1460 = vpop.f32.mrb[0].mxu0
  %v1461 = vadd.f32 0.0, %v1460
  %v1462 = vpop.f32.mrb[0].mxu0
  %1463 = vmatprep.mubr.f32.mxu0 0.0
  %1464 = vmatmul.mubr.f32.gmra.mrb[0].mxu0 %v568
  %v1465 = vpop.f32.mrb[0].mxu0
  %v1466 = vadd.f32 0.0, %v1465
  %v1467 = vpop.f32.mrb[0].mxu0
  %1468 = vmatprep.mubr.f32.mxu0 0.0
  %1469 = vmatmul.mubr.f32.gmra.mrb[0].mxu0 %v571
  %v1470 = vpop.f32.mrb[0].mxu0
  %v1471 = vadd.f32 0.0, %v1470
  %v1472 = vpop.f32.mrb[0].mxu0
  %1473 = vmatprep.mubr.f32.mxu0 0.0
  %1474 = vmatmul.mubr.f32.gmra.mrb[0].mxu0 %v574
  %v1475 = vpop.f32.mrb[0].mxu0
  %v1476 = vadd.f32 0.0, %v1475
  %v1477 = vpop.f32.mrb[0].mxu0
  %1478 = vmatprep.mubr.f32.mxu0 0.0
  %1479 = vmatmul.mubr.f32.gmra.mrb[0].mxu0 %v577
  %v1480 = vpop.f32.mrb[0].mxu0
  %v1481 = vadd.f32 0.0, %v1480
  %v1482 = vpop.f32.mrb[0].mxu0
  %1483 = vmatprep.mubr.f32.mxu0 0.0
  %1484 = vmatmul.mubr.f32.gmra.mrb[0].mxu0 %v580
  %v1485 = vpop.f32.mrb[0].mxu0
  %v1486 = vadd.f32 0.0, %v1485
  %v1487 = vpop.f32.mrb[0].mxu0
  %1488 = vmatprep.mubr.f32.mxu0 0.0
  %1489 = vmatmul.mubr.f32.gmra.mrb[0].mxu0 %v583
  %v1490 = vpop.f32.mrb[0].mxu0
  %v1491 = vadd.f32 0.0, %v1490
  %v1492 = vpop.f32.mrb[0].mxu0
  %1493 = vmatprep.mubr.f32.mxu0 0.0
  %1494 = vmatmul.mubr.f32.gmra.mrb[0].mxu0 %v586
  %v1495 = vpop.f32.mrb[0].mxu0
  %v1496 = vadd.f32 0.0, %v1495
  %v1497 = vpop.f32.mrb[0].mxu0
  %1498 = vmatprep.mubr.f32.mxu0 0.0
  %1499 = vmatmul.mubr.f32.gmra.mrb[0].mxu0 %v589
  %v1500 = vpop.f32.mrb[0].mxu0
  %v1501 = vadd.f32 0.0, %v1500
  %v1502 = vpop.f32.mrb[0].mxu0
  %1503 = vmatprep.mubr.f32.mxu0 0.0
  %1504 = vmatmul.mubr.f32.gmra.mrb[0].mxu0 %v592
  %v1505 = vpop.f32.mrb[0].mxu0
  %v1506 = vadd.f32 0.0, %v1505
  %v1507 = vpop.f32.mrb[0].mxu0
  %1508 = vmatprep.mubr.f32.mxu0 0.0
  %1509 = vmatmul.mubr.f32.gmra.mrb[0].mxu0 %v595
  %v1510 = vpop.f32.mrb[0].mxu0
  %v1511 = vadd.f32 0.0, %v1510
  %v1512 = vpop.f32.mrb[0].mxu0
  %1513 = vmatprep.mubr.f32.mxu0 0.0
  %1514 = vmatmul.mubr.f32.gmra.mrb[0].mxu0 %v598
  %v1515 = vpop.f32.mrb[0].mxu0
  %v1516 = vadd.f32 0.0, %v1515
  %v1517 = vpop.f32.mrb[0].mxu0
  %1518 = vmatprep.mubr.f32.mxu0 0.0
  %1519 = vmatmul.mubr.f32.gmra.mrb[0].mxu0 %v601
  %v1520 = vpop.f32.mrb[0].mxu0
  %v1521 = vadd.f32 0.0, %v1520
  %v1522 = vpop.f32.mrb[0].mxu0
  %1523 = vmatprep.mubr.f32.mxu0 0.0
  %1524 = vmatmul.mubr.f32.gmra.mrb[0].mxu0 %v604
  %v1525 = vpop.f32.mrb[0].mxu0
  %v1526 = vadd.f32 0.0, %v1525
  %v1527 = vpop.f32.mrb[0].mxu0
  %1528 = vmatprep.mubr.f32.mxu0 0.0
  %1529 = vmatmul.mubr.f32.gmra.mrb[0].mxu0 %v607
  %v1530 = vpop.f32.mrb[0].mxu0
  %v1531 = vadd.f32 0.0, %v1530
  %v1532 = vpop.f32.mrb[0].mxu0
  %1533 = vmatprep.mubr.f32.mxu0 0.0
  %1534 = vmatmul.mubr.f32.gmra.mrb[0].mxu0 %v610
  %v1535 = vpop.f32.mrb[0].mxu0
  %v1536 = vadd.f32 0.0, %v1535
  %v1537 = vpop.f32.mrb[0].mxu0
  %1538 = vmatprep.mubr.f32.mxu0 0.0
  %1539 = vmatmul.mubr.f32.gmra.mrb[0].mxu0 %v613
  %v1540 = vpop.f32.mrb[0].mxu0
  %v1541 = vadd.f32 0.0, %v1540
  %v1542 = vpop.f32.mrb[0].mxu0
  %1543 = vmatprep.mubr.f32.mxu0 0.0
  %1544 = vmatmul.mubr.f32.gmra.mrb[0].mxu0 %v616
  %v1545 = vpop.f32.mrb[0].mxu0
  %v1546 = vadd.f32 0.0, %v1545
  %v1547 = vpop.f32.mrb[0].mxu0
  %1548 = vmatprep.mubr.f32.mxu0 0.0
  %1549 = vmatmul.mubr.f32.gmra.mrb[0].mxu0 %v619
  %v1550 = vpop.f32.mrb[0].mxu0
  %v1551 = vadd.f32 0.0, %v1550
  %v1552 = vpop.f32.mrb[0].mxu0
  %1553 = vmatprep.mubr.f32.mxu0 0.0
  %1554 = vmatmul.mubr.f32.gmra.mrb[0].mxu0 %v622
  %v1555 = vpop.f32.mrb[0].mxu0
  %v1556 = vadd.f32 0.0, %v1555
  %v1557 = vpop.f32.mrb[0].mxu0
  %1558 = vmatprep.mubr.f32.mxu0 0.0
  %1559 = vmatmul.mubr.f32.gmra.mrb[0].mxu0 %v625
  %v1560 = vpop.f32.mrb[0].mxu0
  %v1561 = vadd.f32 0.0, %v1560
  %v1562 = vpop.f32.mrb[0].mxu0
  %1563 = vmatprep.mubr.f32.mxu0 0.0
  %1564 = vmatmul.mubr.f32.gmra.mrb[0].mxu0 %v628
  %v1565 = vpop.f32.mrb[0].mxu0
  %v1566 = vadd.f32 0.0, %v1565
  %v1567 = vpop.f32.mrb[0].mxu0
  %1568 = vmatprep.mubr.f32.mxu0 0.0
  %1569 = vmatmul.mubr.f32.gmra.mrb[0].mxu0 %v631
  %v1570 = vpop.f32.mrb[0].mxu0
  %v1571 = vadd.f32 0.0, %v1570
  %v1572 = vpop.f32.mrb[0].mxu0
  %1573 = vmatprep.mubr.f32.mxu0 0.0
  %1574 = vmatmul.mubr.f32.gmra.mrb[0].mxu0 %v634
  %v1575 = vpop.f32.mrb[0].mxu0
  %v1576 = vadd.f32 0.0, %v1575
  %v1577 = vpop.f32.mrb[0].mxu0
  %1578 = vmatprep.mubr.f32.mxu0 0.0
  %1579 = vmatmul.mubr.f32.gmra.mrb[0].mxu0 %v637
  %v1580 = vpop.f32.mrb[0].mxu0
  %v1581 = vadd.f32 0.0, %v1580
  %v1582 = vpop.f32.mrb[0].mxu0
  %1583 = vmatprep.mubr.f32.mxu0 0.0
  %1584 = vmatmul.mubr.f32.gmra.mrb[0].mxu0 %v640
  %v1585 = vpop.f32.mrb[0].mxu0
  %v1586 = vadd.f32 0.0, %v1585
  %v1587 = vpop.f32.mrb[0].mxu0
  %1588 = vmatprep.mubr.f32.mxu0 0.0
  %1589 = vmatmul.mubr.f32.gmra.mrb[0].mxu0 %v643
  %v1590 = vpop.f32.mrb[0].mxu0
  %v1591 = vadd.f32 0.0, %v1590
  %v1592 = vpop.f32.mrb[0].mxu0
  %1593 = vmatprep.mubr.f32.mxu0 0.0
  %1594 = vmatmul.mubr.f32.gmra.mrb[0].mxu0 %v646
  %v1595 = vpop.f32.mrb[0].mxu0
  %v1596 = vadd.f32 0.0, %v1595
  %v1597 = vpop.f32.mrb[0].mxu0
  %1598 = vmatprep.mubr.f32.mxu0 0.0
  %1599 = vmatmul.mubr.f32.gmra.mrb[0].mxu0 %v649
  %v1600 = vpop.f32.mrb[0].mxu0
  %v1601 = vadd.f32 0.0, %v1600
  %v1602 = vpop.f32.mrb[0].mxu0
  %1603 = vmatprep.mubr.f32.mxu0 0.0
  %1604 = vmatmul.mubr.f32.gmra.mrb[0].mxu0 %v652
  %v1605 = vpop.f32.mrb[0].mxu0
  %v1606 = vadd.f32 0.0, %v1605
  %v1607 = vpop.f32.mrb[0].mxu0
  %1608 = vmatprep.mubr.f32.mxu0 0.0
  %1609 = vmatmul.mubr.f32.gmra.mrb[0].mxu0 %v655
  %v1610 = vpop.f32.mrb[0].mxu0
  %v1611 = vadd.f32 0.0, %v1610
  %v1612 = vpop.f32.mrb[0].mxu0
  %1613 = vmatprep.mubr.f32.mxu0 0.0
  %1614 = vmatmul.mubr.f32.gmra.mrb[0].mxu0 %v658
  %v1615 = vpop.f32.mrb[0].mxu0
  %v1616 = vadd.f32 0.0, %v1615
  %v1617 = vpop.f32.mrb[0].mxu0
  %1618 = vmatprep.mubr.f32.mxu0 0.0
  %1619 = vmatmul.mubr.f32.gmra.mrb[0].mxu0 %v661
  %v1620 = vpop.f32.mrb[0].mxu0
  %v1621 = vadd.f32 0.0, %v1620
  %v1622 = vpop.f32.mrb[0].mxu0
  %1623 = vmatprep.mubr.f32.mxu0 0.0
  %1624 = vmatmul.mubr.f32.gmra.mrb[0].mxu0 %v664
  %v1625 = vpop.f32.mrb[0].mxu0
  %v1626 = vadd.f32 0.0, %v1625
  %v1627 = vpop.f32.mrb[0].mxu0
  %1628 = vmatprep.mubr.f32.mxu0 0.0
  %1629 = vmatmul.mubr.f32.gmra.mrb[0].mxu0 %v667
  %v1630 = vpop.f32.mrb[0].mxu0
  %v1631 = vadd.f32 0.0, %v1630
  %v1632 = vpop.f32.mrb[0].mxu0
  %1633 = vmatprep.mubr.f32.mxu0 0.0
  %1634 = vmatmul.mubr.f32.gmra.mrb[0].mxu0 %v670
  %v1635 = vpop.f32.mrb[0].mxu0
  %v1636 = vadd.f32 0.0, %v1635
  %v1637 = vpop.f32.mrb[0].mxu0
  %1638 = vmatprep.mubr.f32.mxu0 0.0
  %1639 = vmatmul.mubr.f32.gmra.mrb[0].mxu0 %v673
  %v1640 = vpop.f32.mrb[0].mxu0
  %v1641 = vadd.f32 0.0, %v1640
  %v1642 = vpop.f32.mrb[0].mxu0
  %1643 = vmatprep.mubr.f32.mxu0 0.0
  %1644 = vmatmul.mubr.f32.gmra.mrb[0].mxu0 %v676
  %v1645 = vpop.f32.mrb[0].mxu0
  %v1646 = vadd.f32 0.0, %v1645
  %v1647 = vpop.f32.mrb[0].mxu0
  %1648 = vmatprep.mubr.f32.mxu0 0.0
  %1649 = vmatmul.mubr.f32.gmra.mrb[0].mxu0 %v679
  %v1650 = vpop.f32.mrb[0].mxu0
  %v1651 = vadd.f32 0.0, %v1650
  %v1652 = vpop.f32.mrb[0].mxu0
  %1653 = vmatprep.mubr.f32.mxu0 0.0
  %1654 = vmatmul.mubr.f32.gmra.mrb[0].mxu0 %v682
  %v1655 = vpop.f32.mrb[0].mxu0
  %v1656 = vadd.f32 0.0, %v1655
  %v1657 = vpop.f32.mrb[0].mxu0
  %1658 = vmatprep.mubr.f32.mxu0 0.0
  %1659 = vmatmul.mubr.f32.gmra.mrb[0].mxu0 %v685
  %v1660 = vpop.f32.mrb[0].mxu0
  %v1661 = vadd.f32 0.0, %v1660
  %v1662 = vpop.f32.mrb[0].mxu0
  %1663 = vmatprep.mubr.f32.mxu0 0.0
  %1664 = vmatmul.mubr.f32.gmra.mrb[0].mxu0 %v688
  %v1665 = vpop.f32.mrb[0].mxu0
  %v1666 = vadd.f32 0.0, %v1665
  %v1667 = vpop.f32.mrb[0].mxu0
  %1668 = vmatprep.mubr.f32.mxu0 0.0
  %1669 = vmatmul.mubr.f32.gmra.mrb[0].mxu0 %v691
  %v1670 = vpop.f32.mrb[0].mxu0
  %v1671 = vadd.f32 0.0, %v1670
  %v1672 = vpop.f32.mrb[0].mxu0
  %1673 = vmatprep.mubr.f32.mxu0 0.0
  %1674 = vmatmul.mubr.f32.gmra.mrb[0].mxu0 %v694
  %v1675 = vpop.f32.mrb[0].mxu0
  %v1676 = vadd.f32 0.0, %v1675
  %v1677 = vpop.f32.mrb[0].mxu0
  %1678 = vmatprep.mubr.f32.mxu0 0.0
  %1679 = vmatmul.mubr.f32.gmra.mrb[0].mxu0 %v697
  %v1680 = vpop.f32.mrb[0].mxu0
  %v1681 = vadd.f32 0.0, %v1680
  %v1682 = vpop.f32.mrb[0].mxu0
  %1683 = vmatprep.mubr.f32.mxu0 0.0
  %1684 = vmatmul.mubr.f32.gmra.mrb[0].mxu0 %v700
  %v1685 = vpop.f32.mrb[0].mxu0
  %v1686 = vadd.f32 0.0, %v1685
  %v1687 = vpop.f32.mrb[0].mxu0
  %1688 = vmatprep.mubr.f32.mxu0 0.0
  %1689 = vmatmul.mubr.f32.gmra.mrb[0].mxu0 %v703
  %v1690 = vpop.f32.mrb[0].mxu0
  %v1691 = vadd.f32 0.0, %v1690
  %v1692 = vpop.f32.mrb[0].mxu0
  %1693 = vmatprep.mubr.f32.mxu0 0.0
  %1694 = vmatmul.mubr.f32.gmra.mrb[0].mxu0 %v706
  %v1695 = vpop.f32.mrb[0].mxu0
  %v1696 = vadd.f32 0.0, %v1695
  %v1697 = vpop.f32.mrb[0].mxu0
  %1698 = vmatprep.mubr.f32.mxu0 0.0
  %1699 = vmatmul.mubr.f32.gmra.mrb[0].mxu0 %v709
  %v1700 = vpop.f32.mrb[0].mxu0
  %v1701 = vadd.f32 0.0, %v1700
  %v1702 = vpop.f32.mrb[0].mxu0
  %1703 = vmatprep.mubr.f32.mxu0 0.0
  %1704 = vmatmul.mubr.f32.gmra.mrb[0].mxu0 %v712
  %v1705 = vpop.f32.mrb[0].mxu0
  %v1706 = vadd.f32 0.0, %v1705
  %v1707 = vpop.f32.mrb[0].mxu0
  %1708 = vmatprep.mubr.f32.mxu0 0.0
  %1709 = vmatmul.mubr.f32.gmra.mrb[0].mxu0 %v715
  %v1710 = vpop.f32.mrb[0].mxu0
  %v1711 = vadd.f32 0.0, %v1710
  %v1712 = vpop.f32.mrb[0].mxu0
  %1713 = vmatprep.mubr.f32.mxu0 0.0
  %1714 = vmatmul.mubr.f32.gmra.mrb[0].mxu0 %v718
  %v1715 = vpop.f32.mrb[0].mxu0
  %v1716 = vadd.f32 0.0, %v1715
  %v1717 = vpop.f32.mrb[0].mxu0
  %1718 = vmatprep.mubr.f32.mxu0 0.0
  %1719 = vmatmul.mubr.f32.gmra.mrb[0].mxu0 %v721
  %v1720 = vpop.f32.mrb[0].mxu0
  %v1721 = vadd.f32 0.0, %v1720
  %v1722 = vpop.f32.mrb[0].mxu0
  %1723 = vmatprep.mubr.f32.mxu0 0.0
  %1724 = vmatmul.mubr.f32.gmra.mrb[0].mxu0 %v724
  %v1725 = vpop.f32.mrb[0].mxu0
  %v1726 = vadd.f32 0.0, %v1725
  %v1727 = vpop.f32.mrb[0].mxu0
  %1728 = vmatprep.mubr.f32.mxu0 0.0
  %1729 = vmatmul.mubr.f32.gmra.mrb[0].mxu0 %v727
  %v1730 = vpop.f32.mrb[0].mxu0
  %v1731 = vadd.f32 0.0, %v1730
  %v1732 = vpop.f32.mrb[0].mxu0
  %1733 = vmatprep.mubr.f32.mxu0 0.0
  %1734 = vmatmul.mubr.f32.gmra.mrb[0].mxu0 %v730
  %v1735 = vpop.f32.mrb[0].mxu0
  %v1736 = vadd.f32 0.0, %v1735
  %v1737 = vpop.f32.mrb[0].mxu0
  %1738 = vmatprep.mubr.f32.mxu0 0.0
  %1739 = vmatmul.mubr.f32.gmra.mrb[0].mxu0 %v733
  %v1740 = vpop.f32.mrb[0].mxu0
  %v1741 = vadd.f32 0.0, %v1740
  %v1742 = vpop.f32.mrb[0].mxu0
  %1743 = vmatprep.mubr.f32.mxu0 0.0
  %1744 = vmatmul.mubr.f32.gmra.mrb[0].mxu0 %v736
  %v1745 = vpop.f32.mrb[0].mxu0
  %v1746 = vadd.f32 0.0, %v1745
  %v1747 = vpop.f32.mrb[0].mxu0
  %1748 = vmatprep.mubr.f32.mxu0 0.0
  %1749 = vmatmul.mubr.f32.gmra.mrb[0].mxu0 %v739
  %v1750 = vpop.f32.mrb[0].mxu0
  %v1751 = vadd.f32 0.0, %v1750
  %v1752 = vpop.f32.mrb[0].mxu0
  %1753 = vmatprep.mubr.f32.mxu0 0.0
  %1754 = vmatmul.mubr.f32.gmra.mrb[0].mxu0 %v742
  %v1755 = vpop.f32.mrb[0].mxu0
  %v1756 = vadd.f32 0.0, %v1755
  %v1757 = vpop.f32.mrb[0].mxu0
  %1758 = vmatprep.mubr.f32.mxu0 0.0
  %1759 = vmatmul.mubr.f32.gmra.mrb[0].mxu0 %v745
  %v1760 = vpop.f32.mrb[0].mxu0
  %v1761 = vadd.f32 0.0, %v1760
  %v1762 = vpop.f32.mrb[0].mxu0
  %1763 = vmatprep.mubr.f32.mxu0 0.0
  %1764 = vmatmul.mubr.f32.gmra.mrb[0].mxu0 %v748
  %v1765 = vpop.f32.mrb[0].mxu0
  %v1766 = vadd.f32 0.0, %v1765
  %v1767 = vpop.f32.mrb[0].mxu0
  %1768 = vmatprep.mubr.f32.mxu0 0.0
  %1769 = vmatmul.mubr.f32.gmra.mrb[0].mxu0 %v751
  %v1770 = vpop.f32.mrb[0].mxu0
  %v1771 = vadd.f32 0.0, %v1770
  %v1772 = vpop.f32.mrb[0].mxu0
  %1773 = vmatprep.mubr.f32.mxu0 0.0
  %1774 = vmatmul.mubr.f32.gmra.mrb[0].mxu0 %v754
  %v1775 = vpop.f32.mrb[0].mxu0
  %v1776 = vadd.f32 0.0, %v1775
  %v1777 = vpop.f32.mrb[0].mxu0
  %1778 = vmatprep.mubr.f32.mxu0 0.0
  %1779 = vmatmul.mubr.f32.gmra.mrb[0].mxu0 %v757
  %v1780 = vpop.f32.mrb[0].mxu0
  %v1781 = vadd.f32 0.0, %v1780
  %v1782 = vpop.f32.mrb[0].mxu0
  %1783 = vmatprep.mubr.f32.mxu0 0.0
  %1784 = vmatmul.mubr.f32.gmra.mrb[0].mxu0 %v760
  %v1785 = vpop.f32.mrb[0].mxu0
  %v1786 = vadd.f32 0.0, %v1785
  %v1787 = vpop.f32.mrb[0].mxu0
  %1788 = vmatprep.mubr.f32.mxu0 0.0
  %1789 = vmatmul.mubr.f32.gmra.mrb[0].mxu0 %v763
  %v1790 = vpop.f32.mrb[0].mxu0
  %v1791 = vadd.f32 0.0, %v1790
  %v1792 = vpop.f32.mrb[0].mxu0
  %1793 = vmatprep.mubr.f32.mxu0 0.0
  %1794 = vmatmul.mubr.f32.gmra.mrb[0].mxu0 %v766
  %v1795 = vpop.f32.mrb[0].mxu0
  %v1796 = vadd.f32 0.0, %v1795
  %v1797 = vpop.f32.mrb[0].mxu0
  %1798 = vmatprep.mubr.f32.mxu0 0.0
  %1799 = vmatmul.mubr.f32.gmra.mrb[0].mxu0 %v769
  %v1800 = vpop.f32.mrb[0].mxu0
  %v1801 = vadd.f32 0.0, %v1800
  %v1802 = vpop.f32.mrb[0].mxu0
  %1803 = vmatprep.mubr.f32.mxu0 0.0
  %1804 = vmatmul.mubr.f32.gmra.mrb[0].mxu0 %v772
  %v1805 = vpop.f32.mrb[0].mxu0
  %v1806 = vadd.f32 0.0, %v1805
  %v1807 = vpop.f32.mrb[0].mxu0
  %1808 = vmatprep.mubr.f32.mxu0 0.0
  %1809 = vmatmul.mubr.f32.gmra.mrb[0].mxu0 %v775
  %v1810 = vpop.f32.mrb[0].mxu0
  %v1811 = vadd.f32 0.0, %v1810
  %v1812 = vpop.f32.mrb[0].mxu0
  %1813 = vmatprep.mubr.f32.mxu0 0.0
  %1814 = vmatmul.mubr.f32.gmra.mrb[0].mxu0 %v778
  %v1815 = vpop.f32.mrb[0].mxu0
  %v1816 = vadd.f32 0.0, %v1815
  %v1817 = vpop.f32.mrb[0].mxu0
  %1818 = vmatprep.mubr.f32.mxu0 0.0
  %1819 = vmatmul.mubr.f32.gmra.mrb[0].mxu0 %v781
  %v1820 = vpop.f32.mrb[0].mxu0
  %v1821 = vadd.f32 0.0, %v1820
  %v1822 = vpop.f32.mrb[0].mxu0
  %1823 = vmatprep.mubr.f32.mxu0 0.0
  %1824 = vmatmul.mubr.f32.gmra.mrb[0].mxu0 %v784
  %v1825 = vpop.f32.mrb[0].mxu0
  %v1826 = vadd.f32 0.0, %v1825
  %v1827 = vpop.f32.mrb[0].mxu0
  %1828 = vmatprep.mubr.f32.mxu0 0.0
  %1829 = vmatmul.mubr.f32.gmra.mrb[0].mxu0 %v787
  %v1830 = vpop.f32.mrb[0].mxu0
  %v1831 = vadd.f32 0.0, %v1830
  %v1832 = vpop.f32.mrb[0].mxu0
  %1833 = vmatprep.mubr.f32.mxu0 0.0
  %1834 = vmatmul.mubr.f32.gmra.mrb[0].mxu0 %v790
  %v1835 = vpop.f32.mrb[0].mxu0
  %v1836 = vadd.f32 0.0, %v1835
  %v1837 = vpop.f32.mrb[0].mxu0
  %1838 = vmatprep.mubr.f32.mxu0 0.0
  %1839 = vmatmul.mubr.f32.gmra.mrb[0].mxu0 %v793
  %v1840 = vpop.f32.mrb[0].mxu0
  %v1841 = vadd.f32 0.0, %v1840
  %v1842 = vpop.f32.mrb[0].mxu0
  %1843 = vmatprep.mubr.f32.mxu0 0.0
  %1844 = vmatmul.mubr.f32.gmra.mrb[0].mxu0 %v796
  %v1845 = vpop.f32.mrb[0].mxu0
  %v1846 = vadd.f32 0.0, %v1845
  %v1847 = vpop.f32.mrb[0].mxu0
  %1848 = vmatprep.mubr.f32.mxu0 0.0
  %1849 = vmatmul.mubr.f32.gmra.mrb[0].mxu0 %v799
  %v1850 = vpop.f32.mrb[0].mxu0
  %v1851 = vadd.f32 0.0, %v1850
  %v1852 = vpop.f32.mrb[0].mxu0
  %1853 = vmatprep.mubr.f32.mxu0 0.0
  %1854 = vmatmul.mubr.f32.gmra.mrb[0].mxu0 %v802
  %v1855 = vpop.f32.mrb[0].mxu0
  %v1856 = vadd.f32 0.0, %v1855
  %v1857 = vpop.f32.mrb[0].mxu0
  %1858 = vmatprep.mubr.f32.mxu0 0.0
  %1859 = vmatmul.mubr.f32.gmra.mrb[0].mxu0 %v805
  %v1860 = vpop.f32.mrb[0].mxu0
  %v1861 = vadd.f32 0.0, %v1860
  %v1862 = vpop.f32.mrb[0].mxu0
  %1863 = vmatprep.mubr.f32.mxu0 0.0
  %1864 = vmatmul.mubr.f32.gmra.mrb[0].mxu0 %v808
  %v1865 = vpop.f32.mrb[0].mxu0
  %v1866 = vadd.f32 0.0, %v1865
  %v1867 = vpop.f32.mrb[0].mxu0
  %1868 = vmatprep.mubr.f32.mxu0 0.0
  %1869 = vmatmul.mubr.f32.gmra.mrb[0].mxu0 %v811
  %v1870 = vpop.f32.mrb[0].mxu0
  %v1871 = vadd.f32 0.0, %v1870
  %v1872 = vpop.f32.mrb[0].mxu0
  %1873 = vmatprep.mubr.f32.mxu0 0.0
  %1874 = vmatmul.mubr.f32.gmra.mrb[0].mxu0 %v814
  %v1875 = vpop.f32.mrb[0].mxu0
  %v1876 = vadd.f32 0.0, %v1875
  %v1877 = vpop.f32.mrb[0].mxu0
  %1878 = vmatprep.mubr.f32.mxu0 0.0
  %1879 = vmatmul.mubr.f32.gmra.mrb[0].mxu0 %v817
  %v1880 = vpop.f32.mrb[0].mxu0
  %v1881 = vadd.f32 0.0, %v1880
  %v1882 = vpop.f32.mrb[0].mxu0
  %1883 = vmatprep.mubr.f32.mxu0 0.0
  %1884 = vmatmul.mubr.f32.gmra.mrb[0].mxu0 %v820
  %v1885 = vpop.f32.mrb[0].mxu0
  %v1886 = vadd.f32 0.0, %v1885
  %v1887 = vpop.f32.mrb[0].mxu0
  %1888 = vmatprep.mubr.f32.mxu0 0.0
  %1889 = vmatmul.mubr.f32.gmra.mrb[0].mxu0 %v823
  %v1890 = vpop.f32.mrb[0].mxu0
  %v1891 = vadd.f32 0.0, %v1890
  %v1892 = vpop.f32.mrb[0].mxu0
  %1893 = vdwg.mxu0
  %v1894 = vmax.f32 %v896, %v1021
  %v1895 = vmax.f32 %v901, %v1026
  %v1896 = vmax.f32 %v906, %v1031
  %v1897 = vmax.f32 %v911, %v1036
  %v1898 = vmax.f32 %v916, %v1041
  %v1899 = vmax.f32 %v921, %v1046
  %v1900 = vmax.f32 %v926, %v1051
  %v1901 = vmax.f32 %v931, %v1056
  %v1902 = vmax.f32 %v936, %v1061
  %v1903 = vmax.f32 %v941, %v1066
  %v1904 = vmax.f32 %v946, %v1071
  %v1905 = vmax.f32 %v951, %v1076
  %v1906 = vmax.f32 %v956, %v1081
  %v1907 = vmax.f32 %v961, %v1086
  %v1908 = vmax.f32 %v966, %v1091
  %v1909 = vmax.f32 %v971, %v1096
  %v1910 = vmax.f32 %v976, %v1101
  %v1911 = vmax.f32 %v981, %v1106
  %v1912 = vmax.f32 %v986, %v1111
  %v1913 = vmax.f32 %v991, %v1116
  %v1914 = vmax.f32 %v996, %v1121
  %v1915 = vmax.f32 %v1001, %v1126
  %v1916 = vmax.f32 %v1006, %v1131
  %v1917 = vmax.f32 %v1011, %v1136
  %v1918 = vmax.f32 %v1016, %v1141
  %v1919 = vmax.f32 %v1396, %v1521
  %v1920 = vmax.f32 %v1401, %v1526
  %v1921 = vmax.f32 %v1406, %v1531
  %v1922 = vmax.f32 %v1411, %v1536
  %v1923 = vmax.f32 %v1416, %v1541
  %v1924 = vmax.f32 %v1421, %v1546
  %v1925 = vmax.f32 %v1426, %v1551
  %v1926 = vmax.f32 %v1431, %v1556
  %v1927 = vmax.f32 %v1436, %v1561
  %v1928 = vmax.f32 %v1441, %v1566
  %v1929 = vmax.f32 %v1446, %v1571
  %v1930 = vmax.f32 %v1451, %v1576
  %v1931 = vmax.f32 %v1456, %v1581
  %v1932 = vmax.f32 %v1461, %v1586
  %v1933 = vmax.f32 %v1466, %v1591
  %v1934 = vmax.f32 %v1471, %v1596
  %v1935 = vmax.f32 %v1476, %v1601
  %v1936 = vmax.f32 %v1481, %v1606
  %v1937 = vmax.f32 %v1486, %v1611
  %v1938 = vmax.f32 %v1491, %v1616
  %v1939 = vmax.f32 %v1496, %v1621
  %v1940 = vmax.f32 %v1501, %v1626
  %v1941 = vmax.f32 %v1506, %v1631
  %v1942 = vmax.f32 %v1511, %v1636
  %v1943 = vmax.f32 %v1516, %v1641
  %v1944 = vmax.f32 %v1146, %v1271
  %v1945 = vmax.f32 %v1151, %v1276
  %v1946 = vmax.f32 %v1156, %v1281
  %v1947 = vmax.f32 %v1161, %v1286
  %v1948 = vmax.f32 %v1166, %v1291
  %v1949 = vmax.f32 %v1171, %v1296
  %v1950 = vmax.f32 %v1176, %v1301
  %v1951 = vmax.f32 %v1181, %v1306
  %v1952 = vmax.f32 %v1186, %v1311
  %v1953 = vmax.f32 %v1191, %v1316
  %v1954 = vmax.f32 %v1196, %v1321
  %v1955 = vmax.f32 %v1201, %v1326
  %v1956 = vmax.f32 %v1206, %v1331
  %v1957 = vmax.f32 %v1211, %v1336
  %v1958 = vmax.f32 %v1216, %v1341
  %v1959 = vmax.f32 %v1221, %v1346
  %v1960 = vmax.f32 %v1226, %v1351
  %v1961 = vmax.f32 %v1231, %v1356
  %v1962 = vmax.f32 %v1236, %v1361
  %v1963 = vmax.f32 %v1241, %v1366
  %v1964 = vmax.f32 %v1246, %v1371
  %v1965 = vmax.f32 %v1251, %v1376
  %v1966 = vmax.f32 %v1256, %v1381
  %v1967 = vmax.f32 %v1261, %v1386
  %v1968 = vmax.f32 %v1266, %v1391
  %v1969 = vmax.f32 %v1646, %v1771
  %v1970 = vmax.f32 %v1651, %v1776
  %v1971 = vmax.f32 %v1656, %v1781
  %v1972 = vmax.f32 %v1661, %v1786
  %v1973 = vmax.f32 %v1666, %v1791
  %v1974 = vmax.f32 %v1671, %v1796
  %v1975 = vmax.f32 %v1676, %v1801
  %v1976 = vmax.f32 %v1681, %v1806
  %v1977 = vmax.f32 %v1686, %v1811
  %v1978 = vmax.f32 %v1691, %v1816
  %v1979 = vmax.f32 %v1696, %v1821
  %v1980 = vmax.f32 %v1701, %v1826
  %v1981 = vmax.f32 %v1706, %v1831
  %v1982 = vmax.f32 %v1711, %v1836
  %v1983 = vmax.f32 %v1716, %v1841
  %v1984 = vmax.f32 %v1721, %v1846
  %v1985 = vmax.f32 %v1726, %v1851
  %v1986 = vmax.f32 %v1731, %v1856
  %v1987 = vmax.f32 %v1736, %v1861
  %v1988 = vmax.f32 %v1741, %v1866
  %v1989 = vmax.f32 %v1746, %v1871
  %v1990 = vmax.f32 %v1751, %v1876
  %v1991 = vmax.f32 %v1756, %v1881
  %v1992 = vmax.f32 %v1761, %v1886
  %v1993 = vmax.f32 %v1766, %v1891
  %v1994 = vmax.f32 %v1894, %v1944
  %v1995 = vmax.f32 %v1895, %v1945
  %v1996 = vmax.f32 %v1896, %v1946
  %v1997 = vmax.f32 %v1897, %v1947
  %v1998 = vmax.f32 %v1898, %v1948
  %v1999 = vmax.f32 %v1899, %v1949
  %v2000 = vmax.f32 %v1900, %v1950
  %v2001 = vmax.f32 %v1901, %v1951
  %v2002 = vmax.f32 %v1902, %v1952
  %v2003 = vmax.f32 %v1903, %v1953
  %v2004 = vmax.f32 %v1904, %v1954
  %v2005 = vmax.f32 %v1905, %v1955
  %v2006 = vmax.f32 %v1906, %v1956
  %v2007 = vmax.f32 %v1907, %v1957
  %v2008 = vmax.f32 %v1908, %v1958
  %v2009 = vmax.f32 %v1909, %v1959
  %v2010 = vmax.f32 %v1910, %v1960
  %v2011 = vmax.f32 %v1911, %v1961
  %v2012 = vmax.f32 %v1912, %v1962
  %v2013 = vmax.f32 %v1913, %v1963
  %v2014 = vmax.f32 %v1914, %v1964
  %v2015 = vmax.f32 %v1915, %v1965
  %v2016 = vmax.f32 %v1916, %v1966
  %v2017 = vmax.f32 %v1917, %v1967
  %v2018 = vmax.f32 %v1918, %v1968
  %v2019 = vmax.f32 %v1919, %v1969
  %v2020 = vmax.f32 %v1920, %v1970
  %v2021 = vmax.f32 %v1921, %v1971
  %v2022 = vmax.f32 %v1922, %v1972
  %v2023 = vmax.f32 %v1923, %v1973
  %v2024 = vmax.f32 %v1924, %v1974
  %v2025 = vmax.f32 %v1925, %v1975
  %v2026 = vmax.f32 %v1926, %v1976
  %v2027 = vmax.f32 %v1927, %v1977
  %v2028 = vmax.f32 %v1928, %v1978
  %v2029 = vmax.f32 %v1929, %v1979
  %v2030 = vmax.f32 %v1930, %v1980
  %v2031 = vmax.f32 %v1931, %v1981
  %v2032 = vmax.f32 %v1932, %v1982
  %v2033 = vmax.f32 %v1933, %v1983
  %v2034 = vmax.f32 %v1934, %v1984
  %v2035 = vmax.f32 %v1935, %v1985
  %v2036 = vmax.f32 %v1936, %v1986
  %v2037 = vmax.f32 %v1937, %v1987
  %v2038 = vmax.f32 %v1938, %v1988
  %v2039 = vmax.f32 %v1939, %v1989
  %v2040 = vmax.f32 %v1940, %v1990
  %v2041 = vmax.f32 %v1941, %v1991
  %v2042 = vmax.f32 %v1942, %v1992
  %v2043 = vmax.f32 %v1943, %v1993
  %v2044 = vld [vmem:[%s2] sm:$0x1]
  %v2046 = vlaneseq
  %v2047 = vshrl.u32 %v2046, 7
  %v2048 = vsub.s32 0, %v2047
  %v2049 = vrot.slane %v2044, %v2048
  %v2051 = vadd.f32 %v1994, %v2049
  %v2052 = vadd.f32 %v1995, %v2049
  %v2053 = vadd.f32 %v1996, %v2049
  %v2054 = vadd.f32 %v1997, %v2049
  %v2055 = vadd.f32 %v1998, %v2049
  %v2056 = vadd.f32 %v1999, %v2049
  %v2057 = vadd.f32 %v2000, %v2049
  %v2058 = vadd.f32 %v2001, %v2049
  %v2059 = vadd.f32 %v2002, %v2049
  %v2060 = vadd.f32 %v2003, %v2049
  %v2061 = vadd.f32 %v2004, %v2049
  %v2062 = vadd.f32 %v2005, %v2049
  %v2063 = vadd.f32 %v2006, %v2049
  %v2064 = vadd.f32 %v2007, %v2049
  %v2065 = vadd.f32 %v2008, %v2049
  %v2066 = vadd.f32 %v2009, %v2049
  %v2067 = vadd.f32 %v2010, %v2049
  %v2068 = vadd.f32 %v2011, %v2049
  %v2069 = vadd.f32 %v2012, %v2049
  %v2070 = vadd.f32 %v2013, %v2049
  %v2071 = vadd.f32 %v2014, %v2049
  %v2072 = vadd.f32 %v2015, %v2049
  %v2073 = vadd.f32 %v2016, %v2049
  %v2074 = vadd.f32 %v2017, %v2049
  %v2075 = vadd.f32 %v2018, %v2049
  %v2076 = vadd.f32 %v2019, %v2049
  %v2077 = vadd.f32 %v2020, %v2049
  %v2078 = vadd.f32 %v2021, %v2049
  %v2079 = vadd.f32 %v2022, %v2049
  %v2080 = vadd.f32 %v2023, %v2049
  %v2081 = vadd.f32 %v2024, %v2049
  %v2082 = vadd.f32 %v2025, %v2049
  %v2083 = vadd.f32 %v2026, %v2049
  %v2084 = vadd.f32 %v2027, %v2049
  %v2085 = vadd.f32 %v2028, %v2049
  %v2086 = vadd.f32 %v2029, %v2049
  %v2087 = vadd.f32 %v2030, %v2049
  %v2088 = vadd.f32 %v2031, %v2049
  %v2089 = vadd.f32 %v2032, %v2049
  %v2090 = vadd.f32 %v2033, %v2049
  %v2091 = vadd.f32 %v2034, %v2049
  %v2092 = vadd.f32 %v2035, %v2049
  %v2093 = vadd.f32 %v2036, %v2049
  %v2094 = vadd.f32 %v2037, %v2049
  %v2095 = vadd.f32 %v2038, %v2049
  %v2096 = vadd.f32 %v2039, %v2049
  %v2097 = vadd.f32 %v2040, %v2049
  %v2098 = vadd.f32 %v2041, %v2049
  %v2099 = vadd.f32 %v2042, %v2049
  %v2100 = vadd.f32 %v2043, %v2049
  %v2101 = vmax.f32 %v2051, 0.0
  %v2102 = vmax.f32 %v2052, 0.0
  %v2103 = vmax.f32 %v2053, 0.0
  %v2104 = vmax.f32 %v2054, 0.0
  %v2105 = vmax.f32 %v2055, 0.0
  %v2106 = vmax.f32 %v2056, 0.0
  %v2107 = vmax.f32 %v2057, 0.0
  %v2108 = vmax.f32 %v2058, 0.0
  %v2109 = vmax.f32 %v2059, 0.0
  %v2110 = vmax.f32 %v2060, 0.0
  %v2111 = vmax.f32 %v2061, 0.0
  %v2112 = vmax.f32 %v2062, 0.0
  %v2113 = vmax.f32 %v2063, 0.0
  %v2114 = vmax.f32 %v2064, 0.0
  %v2115 = vmax.f32 %v2065, 0.0
  %v2116 = vmax.f32 %v2066, 0.0
  %v2117 = vmax.f32 %v2067, 0.0
  %v2118 = vmax.f32 %v2068, 0.0
  %v2119 = vmax.f32 %v2069, 0.0
  %v2120 = vmax.f32 %v2070, 0.0
  %v2121 = vmax.f32 %v2071, 0.0
  %v2122 = vmax.f32 %v2072, 0.0
  %v2123 = vmax.f32 %v2073, 0.0
  %v2124 = vmax.f32 %v2074, 0.0
  %v2125 = vmax.f32 %v2075, 0.0
  %v2126 = vmax.f32 %v2076, 0.0
  %v2127 = vmax.f32 %v2077, 0.0
  %v2128 = vmax.f32 %v2078, 0.0
  %v2129 = vmax.f32 %v2079, 0.0
  %v2130 = vmax.f32 %v2080, 0.0
  %v2131 = vmax.f32 %v2081, 0.0
  %v2132 = vmax.f32 %v2082, 0.0
  %v2133 = vmax.f32 %v2083, 0.0
  %v2134 = vmax.f32 %v2084, 0.0
  %v2135 = vmax.f32 %v2085, 0.0
  %v2136 = vmax.f32 %v2086, 0.0
  %v2137 = vmax.f32 %v2087, 0.0
  %v2138 = vmax.f32 %v2088, 0.0
  %v2139 = vmax.f32 %v2089, 0.0
  %v2140 = vmax.f32 %v2090, 0.0
  %v2141 = vmax.f32 %v2091, 0.0
  %v2142 = vmax.f32 %v2092, 0.0
  %v2143 = vmax.f32 %v2093, 0.0
  %v2144 = vmax.f32 %v2094, 0.0
  %v2145 = vmax.f32 %v2095, 0.0
  %v2146 = vmax.f32 %v2096, 0.0
  %v2147 = vmax.f32 %v2097, 0.0
  %v2148 = vmax.f32 %v2098, 0.0
  %v2149 = vmax.f32 %v2099, 0.0
  %v2150 = vmax.f32 %v2100, 0.0
  %vm2151 = vcmask 523264
  %2152 = vst.msk [vmem:[%s3] sm:$0xff] %vm2151, %v2101
  %2153 = vst.msk [vmem:[%s3 + $0x8] sm:$0xff] %vm2151, %v2102
  %2154 = vst.msk [vmem:[%s3 + $0x10] sm:$0xff] %vm2151, %v2103
  %2155 = vst.msk [vmem:[%s3 + $0x18] sm:$0xff] %vm2151, %v2104
  %2156 = vst.msk [vmem:[%s3 + $0x20] sm:$0xff] %vm2151, %v2105
  %2157 = vst.msk [vmem:[%s3 + $0x28] sm:$0xff] %vm2151, %v2106
  %2158 = vst.msk [vmem:[%s3 + $0x30] sm:$0xff] %vm2151, %v2107
  %2159 = vst.msk [vmem:[%s3 + $0x38] sm:$0xff] %vm2151, %v2108
  %2160 = vst.msk [vmem:[%s3 + $0x40] sm:$0xff] %vm2151, %v2109
  %2161 = vst.msk [vmem:[%s3 + $0x48] sm:$0xff] %vm2151, %v2110
  %2162 = vst.msk [vmem:[%s3 + $0x50] sm:$0xff] %vm2151, %v2111
  %2163 = vst.msk [vmem:[%s3 + $0x58] sm:$0xff] %vm2151, %v2112
  %2164 = vst.msk [vmem:[%s3 + $0x60] sm:$0xff] %vm2151, %v2113
  %2165 = vst.msk [vmem:[%s3 + $0x68] sm:$0xff] %vm2151, %v2114
  %2166 = vst.msk [vmem:[%s3 + $0x70] sm:$0xff] %vm2151, %v2115
  %2167 = vst.msk [vmem:[%s3 + $0x78] sm:$0xff] %vm2151, %v2116
  %2168 = vst.msk [vmem:[%s3 + $0x80] sm:$0xff] %vm2151, %v2117
  %2169 = vst.msk [vmem:[%s3 + $0x88] sm:$0xff] %vm2151, %v2118
  %2170 = vst.msk [vmem:[%s3 + $0x90] sm:$0xff] %vm2151, %v2119
  %2171 = vst.msk [vmem:[%s3 + $0x98] sm:$0xff] %vm2151, %v2120
  %2172 = vst.msk [vmem:[%s3 + $0xa0] sm:$0xff] %vm2151, %v2121
  %2173 = vst.msk [vmem:[%s3 + $0xa8] sm:$0xff] %vm2151, %v2122
  %2174 = vst.msk [vmem:[%s3 + $0xb0] sm:$0xff] %vm2151, %v2123
  %2175 = vst.msk [vmem:[%s3 + $0xb8] sm:$0xff] %vm2151, %v2124
  %2176 = vst.msk [vmem:[%s3 + $0xc0] sm:$0xff] %vm2151, %v2125
  %2177 = vst.msk [vmem:[%s3 + $0xc8] sm:$0xff] %vm2151, %v2126
  %2178 = vst.msk [vmem:[%s3 + $0xd0] sm:$0xff] %vm2151, %v2127
  %2179 = vst.msk [vmem:[%s3 + $0xd8] sm:$0xff] %vm2151, %v2128
  %2180 = vst.msk [vmem:[%s3 + $0xe0] sm:$0xff] %vm2151, %v2129
  %2181 = vst.msk [vmem:[%s3 + $0xe8] sm:$0xff] %vm2151, %v2130
  %2182 = vst.msk [vmem:[%s3 + $0xf0] sm:$0xff] %vm2151, %v2131
  %2183 = vst.msk [vmem:[%s3 + $0xf8] sm:$0xff] %vm2151, %v2132
  %2184 = vst.msk [vmem:[%s3 + $0x100] sm:$0xff] %vm2151, %v2133
  %2185 = vst.msk [vmem:[%s3 + $0x108] sm:$0xff] %vm2151, %v2134
  %2186 = vst.msk [vmem:[%s3 + $0x110] sm:$0xff] %vm2151, %v2135
  %2187 = vst.msk [vmem:[%s3 + $0x118] sm:$0xff] %vm2151, %v2136
  %2188 = vst.msk [vmem:[%s3 + $0x120] sm:$0xff] %vm2151, %v2137
  %2189 = vst.msk [vmem:[%s3 + $0x128] sm:$0xff] %vm2151, %v2138
  %2190 = vst.msk [vmem:[%s3 + $0x130] sm:$0xff] %vm2151, %v2139
  %2191 = vst.msk [vmem:[%s3 + $0x138] sm:$0xff] %vm2151, %v2140
  %2192 = vst.msk [vmem:[%s3 + $0x140] sm:$0xff] %vm2151, %v2141
  %2193 = vst.msk [vmem:[%s3 + $0x148] sm:$0xff] %vm2151, %v2142
  %2194 = vst.msk [vmem:[%s3 + $0x150] sm:$0xff] %vm2151, %v2143
  %2195 = vst.msk [vmem:[%s3 + $0x158] sm:$0xff] %vm2151, %v2144
  %2196 = vst.msk [vmem:[%s3 + $0x160] sm:$0xff] %vm2151, %v2145
  %2197 = vst.msk [vmem:[%s3 + $0x168] sm:$0xff] %vm2151, %v2146
  %2198 = vst.msk [vmem:[%s3 + $0x170] sm:$0xff] %vm2151, %v2147
  %2199 = vst.msk [vmem:[%s3 + $0x178] sm:$0xff] %vm2151, %v2148
  %2200 = vst.msk [vmem:[%s3 + $0x180] sm:$0xff] %vm2151, %v2149
  %2201 = vst.msk [vmem:[%s3 + $0x188] sm:$0xff] %vm2151, %v2150
  // Predicated region
  $region14: #{_lambda_.3} parent=0 // pred_check
    _
  $region15: #{_lambda_.3} parent=0 // pred_check_branch
    %2203 = sbr.rel (0) target = $region17
  $region16: #{_lambda_.3} parent=0 // pred_region
    _
  $region17: #{_lambda_.3} parent=0 // pred_fallthru
    _
  // Predicated region
  $region18: #{_lambda_.3} parent=0 // pred_check
    _
  $region19: #{_lambda_.3} parent=0 // pred_check_branch
    %2205 = sbr.rel (0) target = $region21
  $region20: #{_lambda_.3} parent=0 // pred_region
    _
  $region21: #{_lambda_.3} parent=0 // pred_fallthru
    _

// kernel: _lambda_.4
$region0: #{_lambda_.4}
  #allocation0 [shape = 'u32[]', space=smem, size = 0x4, offset = 0x4, fixed_abs, tag = 'smem constant byte address 0x4 - core index']
  #allocation1 [shape = 'u32[144,128]{1,0:T(1,128)}', space=vmem, size = 0x12000, scoped, tag = 'internal scratch']
  %s0 = inlined_call_operand.vmem [shape: f32[2,4,32,1600], index: 0, kind: input, shape index: {}]
  %s1 = inlined_call_operand.vmem [shape: f32[1600,64], index: 1, kind: input, shape index: {}]
  %s2 = inlined_call_operand.vmem [shape: f32[1,64], index: 2, kind: input, shape index: {}]
  %s3 = inlined_call_operand.vmem [shape: f32[2,32,64], index: 3, kind: output, shape index: {}]
  %s4 = sld [smem:[#allocation0]]
  $region22: #{_lambda_.4} parent=0
    _
  %s6 = ssub.s32 1, %s4
  %s7 = scalar_select 0, %s6, %s4
  // Predicated region
  $region2: #{_lambda_.4} parent=0 // pred_check
    _
  $region3: #{_lambda_.4} parent=0 // pred_check_branch
    %9 = sbr.rel (0) target = $region5
  $region4: #{_lambda_.4} parent=0 // pred_region
    _
  $region5: #{_lambda_.4} parent=0 // pred_fallthru
    _
  // Predicated region
  $region6: #{_lambda_.4} parent=0 // pred_check
    _
  $region7: #{_lambda_.4} parent=0 // pred_check_branch
    %11 = sbr.rel (0) target = $region9
  $region8: #{_lambda_.4} parent=0 // pred_region
    _
  $region9: #{_lambda_.4} parent=0 // pred_fallthru
    _
  // Predicated region
  $region10: #{_lambda_.4} parent=0 // pred_check
    _
  $region11: #{_lambda_.4} parent=0 // pred_check_branch
    %13 = sbr.rel (0) target = $region13
  $region12: #{_lambda_.4} parent=0 // pred_region
    _
  $region13: #{_lambda_.4} parent=0 // pred_fallthru
    _
  %v14 = vld [vmem:[%s0] sm:$0xff]
  %v15 = vld [vmem:[%s0 + $0x8] sm:$0xff]
  %v16 = vld [vmem:[%s0 + $0x10] sm:$0xff]
  %v17 = vld [vmem:[%s0 + $0x18] sm:$0xff]
  %v18 = vld [vmem:[%s0 + $0x20] sm:$0xff]
  %v19 = vld [vmem:[%s0 + $0x28] sm:$0xff]
  %v20 = vld [vmem:[%s0 + $0x30] sm:$0xff]
  %v21 = vld [vmem:[%s0 + $0x38] sm:$0xff]
  %v22 = vld [vmem:[%s0 + $0x40] sm:$0xff]
  %v23 = vld [vmem:[%s0 + $0x48] sm:$0xff]
  %v24 = vld [vmem:[%s0 + $0x50] sm:$0xff]
  %v25 = vld [vmem:[%s0 + $0x58] sm:$0xff]
  %v26 = vld [vmem:[%s0 + $0x60] sm:$0xff]
  %v27 = vld [vmem:[%s0 + $0x68] sm:$0xff]
  %v28 = vld [vmem:[%s0 + $0x70] sm:$0xff]
  %v29 = vld [vmem:[%s0 + $0x78] sm:$0xff]
  %v30 = vld [vmem:[%s0 + $0x80] sm:$0xff]
  %v31 = vld [vmem:[%s0 + $0x88] sm:$0xff]
  %v32 = vld [vmem:[%s0 + $0x90] sm:$0xff]
  %v33 = vld [vmem:[%s0 + $0x98] sm:$0xff]
  %v34 = vld [vmem:[%s0 + $0xa0] sm:$0xff]
  %v35 = vld [vmem:[%s0 + $0xa8] sm:$0xff]
  %v36 = vld [vmem:[%s0 + $0xb0] sm:$0xff]
  %v37 = vld [vmem:[%s0 + $0xb8] sm:$0xff]
  %v38 = vld [vmem:[%s0 + $0xc0] sm:$0xff]
  %v39 = vld [vmem:[%s0 + $0xc8] sm:$0xff]
  %v40 = vld [vmem:[%s0 + $0xd0] sm:$0xff]
  %v41 = vld [vmem:[%s0 + $0xd8] sm:$0xff]
  %v42 = vld [vmem:[%s0 + $0xe0] sm:$0xff]
  %v43 = vld [vmem:[%s0 + $0xe8] sm:$0xff]
  %v44 = vld [vmem:[%s0 + $0xf0] sm:$0xff]
  %v45 = vld [vmem:[%s0 + $0xf8] sm:$0xff]
  %v46 = vld [vmem:[%s0 + $0x100] sm:$0xff]
  %v47 = vld [vmem:[%s0 + $0x108] sm:$0xff]
  %v48 = vld [vmem:[%s0 + $0x110] sm:$0xff]
  %v49 = vld [vmem:[%s0 + $0x118] sm:$0xff]
  %v50 = vld [vmem:[%s0 + $0x120] sm:$0xff]
  %v51 = vld [vmem:[%s0 + $0x128] sm:$0xff]
  %v52 = vld [vmem:[%s0 + $0x130] sm:$0xff]
  %v53 = vld [vmem:[%s0 + $0x138] sm:$0xff]
  %v54 = vld [vmem:[%s0 + $0x140] sm:$0xff]
  %v55 = vld [vmem:[%s0 + $0x148] sm:$0xff]
  %v56 = vld [vmem:[%s0 + $0x150] sm:$0xff]
  %v57 = vld [vmem:[%s0 + $0x158] sm:$0xff]
  %v58 = vld [vmem:[%s0 + $0x160] sm:$0xff]
  %v59 = vld [vmem:[%s0 + $0x168] sm:$0xff]
  %v60 = vld [vmem:[%s0 + $0x170] sm:$0xff]
  %v61 = vld [vmem:[%s0 + $0x178] sm:$0xff]
  %v62 = vld [vmem:[%s0 + $0x180] sm:$0xff]
  %v63 = vld [vmem:[%s0 + $0x188] sm:$0xff]
  %v64 = vld [vmem:[%s0 + $0x190] sm:$0xff]
  %v65 = vld [vmem:[%s0 + $0x198] sm:$0xff]
  %v66 = vld [vmem:[%s0 + $0x1a0] sm:$0xff]
  %v67 = vld [vmem:[%s0 + $0x1a8] sm:$0xff]
  %v68 = vld [vmem:[%s0 + $0x1b0] sm:$0xff]
  %v69 = vld [vmem:[%s0 + $0x1b8] sm:$0xff]
  %v70 = vld [vmem:[%s0 + $0x1c0] sm:$0xff]
  %v71 = vld [vmem:[%s0 + $0x1c8] sm:$0xff]
  %v72 = vld [vmem:[%s0 + $0x1d0] sm:$0xff]
  %v73 = vld [vmem:[%s0 + $0x1d8] sm:$0xff]
  %v74 = vld [vmem:[%s0 + $0x1e0] sm:$0xff]
  %v75 = vld [vmem:[%s0 + $0x1e8] sm:$0xff]
  %v76 = vld [vmem:[%s0 + $0x1f0] sm:$0xff]
  %v77 = vld [vmem:[%s0 + $0x1f8] sm:$0xff]
  %v78 = vld [vmem:[%s0 + $0x200] sm:$0xff]
  %v79 = vld [vmem:[%s0 + $0x208] sm:$0xff]
  %v80 = vld [vmem:[%s0 + $0x210] sm:$0xff]
  %v81 = vld [vmem:[%s0 + $0x218] sm:$0xff]
  %v82 = vld [vmem:[%s0 + $0x220] sm:$0xff]
  %v83 = vld [vmem:[%s0 + $0x228] sm:$0xff]
  %v84 = vld [vmem:[%s0 + $0x230] sm:$0xff]
  %v85 = vld [vmem:[%s0 + $0x238] sm:$0xff]
  %v86 = vld [vmem:[%s0 + $0x240] sm:$0xff]
  %v87 = vld [vmem:[%s0 + $0x248] sm:$0xff]
  %v88 = vld [vmem:[%s0 + $0x250] sm:$0xff]
  %v89 = vld [vmem:[%s0 + $0x258] sm:$0xff]
  %v90 = vld [vmem:[%s0 + $0x260] sm:$0xff]
  %v91 = vld [vmem:[%s0 + $0x268] sm:$0xff]
  %v92 = vld [vmem:[%s0 + $0x270] sm:$0xff]
  %v93 = vld [vmem:[%s0 + $0x278] sm:$0xff]
  %v94 = vld [vmem:[%s0 + $0x280] sm:$0xff]
  %v95 = vld [vmem:[%s0 + $0x288] sm:$0xff]
  %v96 = vld [vmem:[%s0 + $0x290] sm:$0xff]
  %v97 = vld [vmem:[%s0 + $0x298] sm:$0xff]
  %v98 = vld [vmem:[%s0 + $0x2a0] sm:$0xff]
  %v99 = vld [vmem:[%s0 + $0x2a8] sm:$0xff]
  %v100 = vld [vmem:[%s0 + $0x2b0] sm:$0xff]
  %v101 = vld [vmem:[%s0 + $0x2b8] sm:$0xff]
  %v102 = vld [vmem:[%s0 + $0x2c0] sm:$0xff]
  %v103 = vld [vmem:[%s0 + $0x2c8] sm:$0xff]
  %v104 = vld [vmem:[%s0 + $0x2d0] sm:$0xff]
  %v105 = vld [vmem:[%s0 + $0x2d8] sm:$0xff]
  %v106 = vld [vmem:[%s0 + $0x2e0] sm:$0xff]
  %v107 = vld [vmem:[%s0 + $0x2e8] sm:$0xff]
  %v108 = vld [vmem:[%s0 + $0x2f0] sm:$0xff]
  %v109 = vld [vmem:[%s0 + $0x2f8] sm:$0xff]
  %v110 = vld [vmem:[%s0 + $0x300] sm:$0xff]
  %v111 = vld [vmem:[%s0 + $0x308] sm:$0xff]
  %v112 = vld [vmem:[%s0 + $0x310] sm:$0xff]
  %v113 = vld [vmem:[%s0 + $0x318] sm:$0xff]
  %v114 = vld [vmem:[%s0 + $0x320] sm:$0xff]
  %v115 = vld [vmem:[%s0 + $0x328] sm:$0xff]
  %v116 = vld [vmem:[%s0 + $0x330] sm:$0xff]
  %v117 = vld [vmem:[%s0 + $0x338] sm:$0xff]
  %v118 = vld [vmem:[%s0 + $0x340] sm:$0xff]
  %v119 = vld [vmem:[%s0 + $0x348] sm:$0xff]
  %v120 = vld [vmem:[%s0 + $0x350] sm:$0xff]
  %v121 = vld [vmem:[%s0 + $0x358] sm:$0xff]
  %v122 = vld [vmem:[%s0 + $0x360] sm:$0xff]
  %v123 = vld [vmem:[%s0 + $0x368] sm:$0xff]
  %v124 = vld [vmem:[%s0 + $0x370] sm:$0xff]
  %v125 = vld [vmem:[%s0 + $0x378] sm:$0xff]
  %v126 = vld [vmem:[%s0 + $0x380] sm:$0xff]
  %v127 = vld [vmem:[%s0 + $0x388] sm:$0xff]
  %v128 = vld [vmem:[%s0 + $0x390] sm:$0xff]
  %v129 = vld [vmem:[%s0 + $0x398] sm:$0xff]
  %v130 = vld [vmem:[%s0 + $0x3a0] sm:$0xff]
  %v131 = vld [vmem:[%s0 + $0x3a8] sm:$0xff]
  %v132 = vld [vmem:[%s0 + $0x3b0] sm:$0xff]
  %v133 = vld [vmem:[%s0 + $0x3b8] sm:$0xff]
  %v134 = vld [vmem:[%s0 + $0x3c0] sm:$0xff]
  %v135 = vld [vmem:[%s0 + $0x3c8] sm:$0xff]
  %v136 = vld [vmem:[%s0 + $0x3d0] sm:$0xff]
  %v137 = vld [vmem:[%s0 + $0x3d8] sm:$0xff]
  %v138 = vld [vmem:[%s0 + $0x3e0] sm:$0xff]
  %v139 = vld [vmem:[%s0 + $0x3e8] sm:$0xff]
  %v140 = vld [vmem:[%s0 + $0x3f0] sm:$0xff]
  %v141 = vld [vmem:[%s0 + $0x3f8] sm:$0xff]
  %v142 = vld [vmem:[%s0 + $0x400] sm:$0xff]
  %v143 = vld [vmem:[%s0 + $0x408] sm:$0xff]
  %v144 = vld [vmem:[%s0 + $0x410] sm:$0xff]
  %v145 = vld [vmem:[%s0 + $0x418] sm:$0xff]
  %v146 = vld [vmem:[%s0 + $0x420] sm:$0xff]
  %v147 = vld [vmem:[%s0 + $0x428] sm:$0xff]
  %v148 = vld [vmem:[%s0 + $0x430] sm:$0xff]
  %v149 = vld [vmem:[%s0 + $0x438] sm:$0xff]
  %v150 = vld [vmem:[%s0 + $0x440] sm:$0xff]
  %v151 = vld [vmem:[%s0 + $0x448] sm:$0xff]
  %v152 = vld [vmem:[%s0 + $0x450] sm:$0xff]
  %v153 = vld [vmem:[%s0 + $0x458] sm:$0xff]
  %v154 = vld [vmem:[%s0 + $0x460] sm:$0xff]
  %v155 = vld [vmem:[%s0 + $0x468] sm:$0xff]
  %v156 = vld [vmem:[%s0 + $0x470] sm:$0xff]
  %v157 = vld [vmem:[%s0 + $0x478] sm:$0xff]
  %v158 = vld [vmem:[%s0 + $0x480] sm:$0xff]
  %v159 = vld [vmem:[%s0 + $0x488] sm:$0xff]
  %v160 = vld [vmem:[%s0 + $0x490] sm:$0xff]
  %v161 = vld [vmem:[%s0 + $0x498] sm:$0xff]
  %v162 = vld [vmem:[%s0 + $0x4a0] sm:$0xff]
  %v163 = vld [vmem:[%s0 + $0x4a8] sm:$0xff]
  %v164 = vld [vmem:[%s0 + $0x4b0] sm:$0xff]
  %v165 = vld [vmem:[%s0 + $0x4b8] sm:$0xff]
  %v166 = vld [vmem:[%s0 + $0x4c0] sm:$0xff]
  %v167 = vld [vmem:[%s0 + $0x4c8] sm:$0xff]
  %v168 = vld [vmem:[%s0 + $0x4d0] sm:$0xff]
  %v169 = vld [vmem:[%s0 + $0x4d8] sm:$0xff]
  %v170 = vld [vmem:[%s0 + $0x4e0] sm:$0xff]
  %v171 = vld [vmem:[%s0 + $0x4e8] sm:$0xff]
  %v172 = vld [vmem:[%s0 + $0x4f0] sm:$0xff]
  %v173 = vld [vmem:[%s0 + $0x4f8] sm:$0xff]
  %v174 = vld [vmem:[%s0 + $0x500] sm:$0xff]
  %v175 = vld [vmem:[%s0 + $0x508] sm:$0xff]
  %v176 = vld [vmem:[%s0 + $0x510] sm:$0xff]
  %v177 = vld [vmem:[%s0 + $0x518] sm:$0xff]
  %v178 = vld [vmem:[%s0 + $0x520] sm:$0xff]
  %v179 = vld [vmem:[%s0 + $0x528] sm:$0xff]
  %v180 = vld [vmem:[%s0 + $0x530] sm:$0xff]
  %v181 = vld [vmem:[%s0 + $0x538] sm:$0xff]
  %v182 = vld [vmem:[%s0 + $0x540] sm:$0xff]
  %v183 = vld [vmem:[%s0 + $0x548] sm:$0xff]
  %v184 = vld [vmem:[%s0 + $0x550] sm:$0xff]
  %v185 = vld [vmem:[%s0 + $0x558] sm:$0xff]
  %v186 = vld [vmem:[%s0 + $0x560] sm:$0xff]
  %v187 = vld [vmem:[%s0 + $0x568] sm:$0xff]
  %v188 = vld [vmem:[%s0 + $0x570] sm:$0xff]
  %v189 = vld [vmem:[%s0 + $0x578] sm:$0xff]
  %v190 = vld [vmem:[%s0 + $0x580] sm:$0xff]
  %v191 = vld [vmem:[%s0 + $0x588] sm:$0xff]
  %v192 = vld [vmem:[%s0 + $0x590] sm:$0xff]
  %v193 = vld [vmem:[%s0 + $0x598] sm:$0xff]
  %v194 = vld [vmem:[%s0 + $0x5a0] sm:$0xff]
  %v195 = vld [vmem:[%s0 + $0x5a8] sm:$0xff]
  %v196 = vld [vmem:[%s0 + $0x5b0] sm:$0xff]
  %v197 = vld [vmem:[%s0 + $0x5b8] sm:$0xff]
  %v198 = vld [vmem:[%s0 + $0x5c0] sm:$0xff]
  %v199 = vld [vmem:[%s0 + $0x5c8] sm:$0xff]
  %v200 = vld [vmem:[%s0 + $0x5d0] sm:$0xff]
  %v201 = vld [vmem:[%s0 + $0x5d8] sm:$0xff]
  %v202 = vld [vmem:[%s0 + $0x5e0] sm:$0xff]
  %v203 = vld [vmem:[%s0 + $0x5e8] sm:$0xff]
  %v204 = vld [vmem:[%s0 + $0x5f0] sm:$0xff]
  %v205 = vld [vmem:[%s0 + $0x5f8] sm:$0xff]
  %v206 = vld [vmem:[%s0 + $0x600] sm:$0xff]
  %v207 = vld [vmem:[%s0 + $0x608] sm:$0xff]
  %v208 = vld [vmem:[%s0 + $0x610] sm:$0xff]
  %v209 = vld [vmem:[%s0 + $0x618] sm:$0xff]
  %v210 = vld [vmem:[%s0 + $0x620] sm:$0xff]
  %v211 = vld [vmem:[%s0 + $0x628] sm:$0xff]
  %v212 = vld [vmem:[%s0 + $0x630] sm:$0xff]
  %v213 = vld [vmem:[%s0 + $0x638] sm:$0xff]
  %v214 = vld [vmem:[%s0 + $0x640] sm:$0xff]
  %v215 = vld [vmem:[%s0 + $0x648] sm:$0xff]
  %v216 = vld [vmem:[%s0 + $0x650] sm:$0xff]
  %v217 = vld [vmem:[%s0 + $0x658] sm:$0xff]
  %v218 = vld [vmem:[%s0 + $0x660] sm:$0xff]
  %v219 = vld [vmem:[%s0 + $0x668] sm:$0xff]
  %v220 = vld [vmem:[%s0 + $0x670] sm:$0xff]
  %v221 = vld [vmem:[%s0 + $0x678] sm:$0xff]
  %v222 = vld [vmem:[%s0 + $0x680] sm:$0xff]
  %v223 = vld [vmem:[%s0 + $0x688] sm:$0xff]
  %v224 = vld [vmem:[%s0 + $0x690] sm:$0xff]
  %v225 = vld [vmem:[%s0 + $0x698] sm:$0xff]
  %v226 = vld [vmem:[%s0 + $0x6a0] sm:$0xff]
  %v227 = vld [vmem:[%s0 + $0x6a8] sm:$0xff]
  %v228 = vld [vmem:[%s0 + $0x6b0] sm:$0xff]
  %v229 = vld [vmem:[%s0 + $0x6b8] sm:$0xff]
  %v230 = vld [vmem:[%s0 + $0x6c0] sm:$0xff]
  %v231 = vld [vmem:[%s0 + $0x6c8] sm:$0xff]
  %v232 = vld [vmem:[%s0 + $0x6d0] sm:$0xff]
  %v233 = vld [vmem:[%s0 + $0x6d8] sm:$0xff]
  %v234 = vld [vmem:[%s0 + $0x6e0] sm:$0xff]
  %v235 = vld [vmem:[%s0 + $0x6e8] sm:$0xff]
  %v236 = vld [vmem:[%s0 + $0x6f0] sm:$0xff]
  %v237 = vld [vmem:[%s0 + $0x6f8] sm:$0xff]
  %v238 = vld [vmem:[%s0 + $0x700] sm:$0xff]
  %v239 = vld [vmem:[%s0 + $0x708] sm:$0xff]
  %v240 = vld [vmem:[%s0 + $0x710] sm:$0xff]
  %v241 = vld [vmem:[%s0 + $0x718] sm:$0xff]
  %v242 = vld [vmem:[%s0 + $0x720] sm:$0xff]
  %v243 = vld [vmem:[%s0 + $0x728] sm:$0xff]
  %v244 = vld [vmem:[%s0 + $0x730] sm:$0xff]
  %v245 = vld [vmem:[%s0 + $0x738] sm:$0xff]
  %v246 = vld [vmem:[%s0 + $0x740] sm:$0xff]
  %v247 = vld [vmem:[%s0 + $0x748] sm:$0xff]
  %v248 = vld [vmem:[%s0 + $0x750] sm:$0xff]
  %v249 = vld [vmem:[%s0 + $0x758] sm:$0xff]
  %v250 = vld [vmem:[%s0 + $0x760] sm:$0xff]
  %v251 = vld [vmem:[%s0 + $0x768] sm:$0xff]
  %v252 = vld [vmem:[%s0 + $0x770] sm:$0xff]
  %v253 = vld [vmem:[%s0 + $0x778] sm:$0xff]
  %v254 = vld [vmem:[%s0 + $0x780] sm:$0xff]
  %v255 = vld [vmem:[%s0 + $0x788] sm:$0xff]
  %v256 = vld [vmem:[%s0 + $0x790] sm:$0xff]
  %v257 = vld [vmem:[%s0 + $0x798] sm:$0xff]
  %v258 = vld [vmem:[%s0 + $0x7a0] sm:$0xff]
  %v259 = vld [vmem:[%s0 + $0x7a8] sm:$0xff]
  %v260 = vld [vmem:[%s0 + $0x7b0] sm:$0xff]
  %v261 = vld [vmem:[%s0 + $0x7b8] sm:$0xff]
  %v262 = vld [vmem:[%s0 + $0x7c0] sm:$0xff]
  %v263 = vld [vmem:[%s0 + $0x7c8] sm:$0xff]
  %v264 = vld [vmem:[%s0 + $0x7d0] sm:$0xff]
  %v265 = vld [vmem:[%s0 + $0x7d8] sm:$0xff]
  %v266 = vld [vmem:[%s0 + $0x7e0] sm:$0xff]
  %v267 = vld [vmem:[%s0 + $0x7e8] sm:$0xff]
  %v268 = vld [vmem:[%s0 + $0x7f0] sm:$0xff]
  %v269 = vld [vmem:[%s0 + $0x7f8] sm:$0xff]
  %v270 = vld [vmem:[%s0 + $0x800] sm:$0xff]
  %v271 = vld [vmem:[%s0 + $0x808] sm:$0xff]
  %v272 = vld [vmem:[%s0 + $0x810] sm:$0xff]
  %v273 = vld [vmem:[%s0 + $0x818] sm:$0xff]
  %v274 = vld [vmem:[%s0 + $0x820] sm:$0xff]
  %v275 = vld [vmem:[%s0 + $0x828] sm:$0xff]
  %v276 = vld [vmem:[%s0 + $0x830] sm:$0xff]
  %v277 = vld [vmem:[%s0 + $0x838] sm:$0xff]
  %v278 = vld [vmem:[%s0 + $0x840] sm:$0xff]
  %v279 = vld [vmem:[%s0 + $0x848] sm:$0xff]
  %v280 = vld [vmem:[%s0 + $0x850] sm:$0xff]
  %v281 = vld [vmem:[%s0 + $0x858] sm:$0xff]
  %v282 = vld [vmem:[%s0 + $0x860] sm:$0xff]
  %v283 = vld [vmem:[%s0 + $0x868] sm:$0xff]
  %v284 = vld [vmem:[%s0 + $0x870] sm:$0xff]
  %v285 = vld [vmem:[%s0 + $0x878] sm:$0xff]
  %v286 = vld [vmem:[%s0 + $0x880] sm:$0xff]
  %v287 = vld [vmem:[%s0 + $0x888] sm:$0xff]
  %v288 = vld [vmem:[%s0 + $0x890] sm:$0xff]
  %v289 = vld [vmem:[%s0 + $0x898] sm:$0xff]
  %v290 = vld [vmem:[%s0 + $0x8a0] sm:$0xff]
  %v291 = vld [vmem:[%s0 + $0x8a8] sm:$0xff]
  %v292 = vld [vmem:[%s0 + $0x8b0] sm:$0xff]
  %v293 = vld [vmem:[%s0 + $0x8b8] sm:$0xff]
  %v294 = vld [vmem:[%s0 + $0x8c0] sm:$0xff]
  %v295 = vld [vmem:[%s0 + $0x8c8] sm:$0xff]
  %v296 = vld [vmem:[%s0 + $0x8d0] sm:$0xff]
  %v297 = vld [vmem:[%s0 + $0x8d8] sm:$0xff]
  %v298 = vld [vmem:[%s0 + $0x8e0] sm:$0xff]
  %v299 = vld [vmem:[%s0 + $0x8e8] sm:$0xff]
  %v300 = vld [vmem:[%s0 + $0x8f0] sm:$0xff]
  %v301 = vld [vmem:[%s0 + $0x8f8] sm:$0xff]
  %v302 = vld [vmem:[%s0 + $0x900] sm:$0xff]
  %v303 = vld [vmem:[%s0 + $0x908] sm:$0xff]
  %v304 = vld [vmem:[%s0 + $0x910] sm:$0xff]
  %v305 = vld [vmem:[%s0 + $0x918] sm:$0xff]
  %v306 = vld [vmem:[%s0 + $0x920] sm:$0xff]
  %v307 = vld [vmem:[%s0 + $0x928] sm:$0xff]
  %v308 = vld [vmem:[%s0 + $0x930] sm:$0xff]
  %v309 = vld [vmem:[%s0 + $0x938] sm:$0xff]
  %v310 = vld [vmem:[%s0 + $0x940] sm:$0xff]
  %v311 = vld [vmem:[%s0 + $0x948] sm:$0xff]
  %v312 = vld [vmem:[%s0 + $0x950] sm:$0xff]
  %v313 = vld [vmem:[%s0 + $0x958] sm:$0xff]
  %v314 = vld [vmem:[%s0 + $0x960] sm:$0xff]
  %v315 = vld [vmem:[%s0 + $0x968] sm:$0xff]
  %v316 = vld [vmem:[%s0 + $0x970] sm:$0xff]
  %v317 = vld [vmem:[%s0 + $0x978] sm:$0xff]
  %v318 = vld [vmem:[%s0 + $0x980] sm:$0xff]
  %v319 = vld [vmem:[%s0 + $0x988] sm:$0xff]
  %v320 = vld [vmem:[%s0 + $0x990] sm:$0xff]
  %v321 = vld [vmem:[%s0 + $0x998] sm:$0xff]
  %v322 = vld [vmem:[%s0 + $0x9a0] sm:$0xff]
  %v323 = vld [vmem:[%s0 + $0x9a8] sm:$0xff]
  %v324 = vld [vmem:[%s0 + $0x9b0] sm:$0xff]
  %v325 = vld [vmem:[%s0 + $0x9b8] sm:$0xff]
  %v326 = vld [vmem:[%s0 + $0x9c0] sm:$0xff]
  %v327 = vld [vmem:[%s0 + $0x9c8] sm:$0xff]
  %v328 = vld [vmem:[%s0 + $0x9d0] sm:$0xff]
  %v329 = vld [vmem:[%s0 + $0x9d8] sm:$0xff]
  %v330 = vld [vmem:[%s0 + $0x9e0] sm:$0xff]
  %v331 = vld [vmem:[%s0 + $0x9e8] sm:$0xff]
  %v332 = vld [vmem:[%s0 + $0x9f0] sm:$0xff]
  %v333 = vld [vmem:[%s0 + $0x9f8] sm:$0xff]
  %v334 = vld [vmem:[%s0 + $0xa00] sm:$0xff]
  %v335 = vld [vmem:[%s0 + $0xa08] sm:$0xff]
  %v336 = vld [vmem:[%s0 + $0xa10] sm:$0xff]
  %v337 = vld [vmem:[%s0 + $0xa18] sm:$0xff]
  %v338 = vld [vmem:[%s0 + $0xa20] sm:$0xff]
  %v339 = vld [vmem:[%s0 + $0xa28] sm:$0xff]
  %v340 = vld [vmem:[%s0 + $0xa30] sm:$0xff]
  %v341 = vld [vmem:[%s0 + $0xa38] sm:$0xff]
  %v342 = vld [vmem:[%s0 + $0xa40] sm:$0xff]
  %v343 = vld [vmem:[%s0 + $0xa48] sm:$0xff]
  %v344 = vld [vmem:[%s0 + $0xa50] sm:$0xff]
  %v345 = vld [vmem:[%s0 + $0xa58] sm:$0xff]
  %v346 = vld [vmem:[%s0 + $0xa60] sm:$0xff]
  %v347 = vld [vmem:[%s0 + $0xa68] sm:$0xff]
  %v348 = vld [vmem:[%s0 + $0xa70] sm:$0xff]
  %v349 = vld [vmem:[%s0 + $0xa78] sm:$0xff]
  %v350 = vld [vmem:[%s0 + $0xa80] sm:$0xff]
  %v351 = vld [vmem:[%s0 + $0xa88] sm:$0xff]
  %v352 = vld [vmem:[%s0 + $0xa90] sm:$0xff]
  %v353 = vld [vmem:[%s0 + $0xa98] sm:$0xff]
  %v354 = vld [vmem:[%s0 + $0xaa0] sm:$0xff]
  %v355 = vld [vmem:[%s0 + $0xaa8] sm:$0xff]
  %v356 = vld [vmem:[%s0 + $0xab0] sm:$0xff]
  %v357 = vld [vmem:[%s0 + $0xab8] sm:$0xff]
  %v358 = vld [vmem:[%s0 + $0xac0] sm:$0xff]
  %v359 = vld [vmem:[%s0 + $0xac8] sm:$0xff]
  %v360 = vld [vmem:[%s0 + $0xad0] sm:$0xff]
  %v361 = vld [vmem:[%s0 + $0xad8] sm:$0xff]
  %v362 = vld [vmem:[%s0 + $0xae0] sm:$0xff]
  %v363 = vld [vmem:[%s0 + $0xae8] sm:$0xff]
  %v364 = vld [vmem:[%s0 + $0xaf0] sm:$0xff]
  %v365 = vld [vmem:[%s0 + $0xaf8] sm:$0xff]
  %v366 = vld [vmem:[%s0 + $0xb00] sm:$0xff]
  %v367 = vld [vmem:[%s0 + $0xb08] sm:$0xff]
  %v368 = vld [vmem:[%s0 + $0xb10] sm:$0xff]
  %v369 = vld [vmem:[%s0 + $0xb18] sm:$0xff]
  %v370 = vld [vmem:[%s0 + $0xb20] sm:$0xff]
  %v371 = vld [vmem:[%s0 + $0xb28] sm:$0xff]
  %v372 = vld [vmem:[%s0 + $0xb30] sm:$0xff]
  %v373 = vld [vmem:[%s0 + $0xb38] sm:$0xff]
  %v374 = vld [vmem:[%s0 + $0xb40] sm:$0xff]
  %v375 = vld [vmem:[%s0 + $0xb48] sm:$0xff]
  %v376 = vld [vmem:[%s0 + $0xb50] sm:$0xff]
  %v377 = vld [vmem:[%s0 + $0xb58] sm:$0xff]
  %v378 = vld [vmem:[%s0 + $0xb60] sm:$0xff]
  %v379 = vld [vmem:[%s0 + $0xb68] sm:$0xff]
  %v380 = vld [vmem:[%s0 + $0xb70] sm:$0xff]
  %v381 = vld [vmem:[%s0 + $0xb78] sm:$0xff]
  %v382 = vld [vmem:[%s0 + $0xb80] sm:$0xff]
  %v383 = vld [vmem:[%s0 + $0xb88] sm:$0xff]
  %v384 = vld [vmem:[%s0 + $0xb90] sm:$0xff]
  %v385 = vld [vmem:[%s0 + $0xb98] sm:$0xff]
  %v386 = vld [vmem:[%s0 + $0xba0] sm:$0xff]
  %v387 = vld [vmem:[%s0 + $0xba8] sm:$0xff]
  %v388 = vld [vmem:[%s0 + $0xbb0] sm:$0xff]
  %v389 = vld [vmem:[%s0 + $0xbb8] sm:$0xff]
  %v390 = vld [vmem:[%s0 + $0xbc0] sm:$0xff]
  %v391 = vld [vmem:[%s0 + $0xbc8] sm:$0xff]
  %v392 = vld [vmem:[%s0 + $0xbd0] sm:$0xff]
  %v393 = vld [vmem:[%s0 + $0xbd8] sm:$0xff]
  %v394 = vld [vmem:[%s0 + $0xbe0] sm:$0xff]
  %v395 = vld [vmem:[%s0 + $0xbe8] sm:$0xff]
  %v396 = vld [vmem:[%s0 + $0xbf0] sm:$0xff]
  %v397 = vld [vmem:[%s0 + $0xbf8] sm:$0xff]
  %v398 = vld [vmem:[%s0 + $0xc00] sm:$0xff]
  %v399 = vld [vmem:[%s0 + $0xc08] sm:$0xff]
  %v400 = vld [vmem:[%s0 + $0xc10] sm:$0xff]
  %v401 = vld [vmem:[%s0 + $0xc18] sm:$0xff]
  %v402 = vld [vmem:[%s0 + $0xc20] sm:$0xff]
  %v403 = vld [vmem:[%s0 + $0xc28] sm:$0xff]
  %v404 = vld [vmem:[%s0 + $0xc30] sm:$0xff]
  %v405 = vld [vmem:[%s0 + $0xc38] sm:$0xff]
  %v406 = vld [vmem:[%s0 + $0xc40] sm:$0xff]
  %v407 = vld [vmem:[%s0 + $0xc48] sm:$0xff]
  %v408 = vld [vmem:[%s0 + $0xc50] sm:$0xff]
  %v409 = vld [vmem:[%s0 + $0xc58] sm:$0xff]
  %v410 = vld [vmem:[%s0 + $0xc60] sm:$0xff]
  %v411 = vld [vmem:[%s0 + $0xc68] sm:$0xff]
  %v412 = vld [vmem:[%s0 + $0xc70] sm:$0xff]
  %v413 = vld [vmem:[%s0 + $0xc78] sm:$0xff]
  %v414 = vld [vmem:[%s0 + $0xc80] sm:$0xff]
  %v415 = vld [vmem:[%s0 + $0xc88] sm:$0xff]
  %v416 = vld [vmem:[%s0 + $0xc90] sm:$0xff]
  %v417 = vld [vmem:[%s0 + $0xc98] sm:$0xff]
  %v418 = vld [vmem:[%s0 + $0xca0] sm:$0xff]
  %v419 = vld [vmem:[%s0 + $0xca8] sm:$0xff]
  %v420 = vld [vmem:[%s0 + $0xcb0] sm:$0xff]
  %v421 = vld [vmem:[%s0 + $0xcb8] sm:$0xff]
  %v422 = vld [vmem:[%s0 + $0xcc0] sm:$0xff]
  %v423 = vld [vmem:[%s0 + $0xcc8] sm:$0xff]
  %v424 = vld [vmem:[%s0 + $0xcd0] sm:$0xff]
  %v425 = vld [vmem:[%s0 + $0xcd8] sm:$0xff]
  %v426 = vld [vmem:[%s0 + $0xce0] sm:$0xff]
  %v427 = vld [vmem:[%s0 + $0xce8] sm:$0xff]
  %v428 = vld [vmem:[%s0 + $0xcf0] sm:$0xff]
  %v429 = vld [vmem:[%s0 + $0xcf8] sm:$0xff]
  %v430 = vld [vmem:[%s1] sm:$0xff]
  %v431 = vld [vmem:[%s1 + $0x8] sm:$0xff]
  %v432 = vld [vmem:[%s1 + $0x10] sm:$0xff]
  %v433 = vld [vmem:[%s1 + $0x18] sm:$0xff]
  %v434 = vld [vmem:[%s1 + $0x20] sm:$0xff]
  %v435 = vld [vmem:[%s1 + $0x28] sm:$0xff]
  %v436 = vld [vmem:[%s1 + $0x30] sm:$0xff]
  %v437 = vld [vmem:[%s1 + $0x38] sm:$0xff]
  %v438 = vld [vmem:[%s1 + $0x40] sm:$0xff]
  %v439 = vld [vmem:[%s1 + $0x48] sm:$0xff]
  %v440 = vld [vmem:[%s1 + $0x50] sm:$0xff]
  %v441 = vld [vmem:[%s1 + $0x58] sm:$0xff]
  %v442 = vld [vmem:[%s1 + $0x60] sm:$0xff]
  %v443 = vld [vmem:[%s1 + $0x68] sm:$0xff]
  %v444 = vld [vmem:[%s1 + $0x70] sm:$0xff]
  %v445 = vld [vmem:[%s1 + $0x78] sm:$0xff]
  %v446 = vld [vmem:[%s1 + $0x80] sm:$0xff]
  %v447 = vld [vmem:[%s1 + $0x88] sm:$0xff]
  %v448 = vld [vmem:[%s1 + $0x90] sm:$0xff]
  %v449 = vld [vmem:[%s1 + $0x98] sm:$0xff]
  %v450 = vld [vmem:[%s1 + $0xa0] sm:$0xff]
  %v451 = vld [vmem:[%s1 + $0xa8] sm:$0xff]
  %v452 = vld [vmem:[%s1 + $0xb0] sm:$0xff]
  %v453 = vld [vmem:[%s1 + $0xb8] sm:$0xff]
  %v454 = vld [vmem:[%s1 + $0xc0] sm:$0xff]
  %v455 = vld [vmem:[%s1 + $0xc8] sm:$0xff]
  %v456 = vld [vmem:[%s1 + $0xd0] sm:$0xff]
  %v457 = vld [vmem:[%s1 + $0xd8] sm:$0xff]
  %v458 = vld [vmem:[%s1 + $0xe0] sm:$0xff]
  %v459 = vld [vmem:[%s1 + $0xe8] sm:$0xff]
  %v460 = vld [vmem:[%s1 + $0xf0] sm:$0xff]
  %v461 = vld [vmem:[%s1 + $0xf8] sm:$0xff]
  %v462 = vld [vmem:[%s1 + $0x100] sm:$0xff]
  %v463 = vld [vmem:[%s1 + $0x108] sm:$0xff]
  %v464 = vld [vmem:[%s1 + $0x110] sm:$0xff]
  %v465 = vld [vmem:[%s1 + $0x118] sm:$0xff]
  %v466 = vld [vmem:[%s1 + $0x120] sm:$0xff]
  %v467 = vld [vmem:[%s1 + $0x128] sm:$0xff]
  %v468 = vld [vmem:[%s1 + $0x130] sm:$0xff]
  %v469 = vld [vmem:[%s1 + $0x138] sm:$0xff]
  %v470 = vld [vmem:[%s1 + $0x140] sm:$0xff]
  %v471 = vld [vmem:[%s1 + $0x148] sm:$0xff]
  %v472 = vld [vmem:[%s1 + $0x150] sm:$0xff]
  %v473 = vld [vmem:[%s1 + $0x158] sm:$0xff]
  %v474 = vld [vmem:[%s1 + $0x160] sm:$0xff]
  %v475 = vld [vmem:[%s1 + $0x168] sm:$0xff]
  %v476 = vld [vmem:[%s1 + $0x170] sm:$0xff]
  %v477 = vld [vmem:[%s1 + $0x178] sm:$0xff]
  %v478 = vld [vmem:[%s1 + $0x180] sm:$0xff]
  %v479 = vld [vmem:[%s1 + $0x188] sm:$0xff]
  %v480 = vld [vmem:[%s1 + $0x190] sm:$0xff]
  %v481 = vld [vmem:[%s1 + $0x198] sm:$0xff]
  %v482 = vld [vmem:[%s1 + $0x1a0] sm:$0xff]
  %v483 = vld [vmem:[%s1 + $0x1a8] sm:$0xff]
  %v484 = vld [vmem:[%s1 + $0x1b0] sm:$0xff]
  %v485 = vld [vmem:[%s1 + $0x1b8] sm:$0xff]
  %v486 = vld [vmem:[%s1 + $0x1c0] sm:$0xff]
  %v487 = vld [vmem:[%s1 + $0x1c8] sm:$0xff]
  %v488 = vld [vmem:[%s1 + $0x1d0] sm:$0xff]
  %v489 = vld [vmem:[%s1 + $0x1d8] sm:$0xff]
  %v490 = vld [vmem:[%s1 + $0x1e0] sm:$0xff]
  %v491 = vld [vmem:[%s1 + $0x1e8] sm:$0xff]
  %v492 = vld [vmem:[%s1 + $0x1f0] sm:$0xff]
  %v493 = vld [vmem:[%s1 + $0x1f8] sm:$0xff]
  %v494 = vld [vmem:[%s1 + $0x200] sm:$0xff]
  %v495 = vld [vmem:[%s1 + $0x208] sm:$0xff]
  %v496 = vld [vmem:[%s1 + $0x210] sm:$0xff]
  %v497 = vld [vmem:[%s1 + $0x218] sm:$0xff]
  %v498 = vld [vmem:[%s1 + $0x220] sm:$0xff]
  %v499 = vld [vmem:[%s1 + $0x228] sm:$0xff]
  %v500 = vld [vmem:[%s1 + $0x230] sm:$0xff]
  %v501 = vld [vmem:[%s1 + $0x238] sm:$0xff]
  %v502 = vld [vmem:[%s1 + $0x240] sm:$0xff]
  %v503 = vld [vmem:[%s1 + $0x248] sm:$0xff]
  %v504 = vld [vmem:[%s1 + $0x250] sm:$0xff]
  %v505 = vld [vmem:[%s1 + $0x258] sm:$0xff]
  %v506 = vld [vmem:[%s1 + $0x260] sm:$0xff]
  %v507 = vld [vmem:[%s1 + $0x268] sm:$0xff]
  %v508 = vld [vmem:[%s1 + $0x270] sm:$0xff]
  %v509 = vld [vmem:[%s1 + $0x278] sm:$0xff]
  %v510 = vld [vmem:[%s1 + $0x280] sm:$0xff]
  %v511 = vld [vmem:[%s1 + $0x288] sm:$0xff]
  %v512 = vld [vmem:[%s1 + $0x290] sm:$0xff]
  %v513 = vld [vmem:[%s1 + $0x298] sm:$0xff]
  %v514 = vld [vmem:[%s1 + $0x2a0] sm:$0xff]
  %v515 = vld [vmem:[%s1 + $0x2a8] sm:$0xff]
  %v516 = vld [vmem:[%s1 + $0x2b0] sm:$0xff]
  %v517 = vld [vmem:[%s1 + $0x2b8] sm:$0xff]
  %v518 = vld [vmem:[%s1 + $0x2c0] sm:$0xff]
  %v519 = vld [vmem:[%s1 + $0x2c8] sm:$0xff]
  %v520 = vld [vmem:[%s1 + $0x2d0] sm:$0xff]
  %v521 = vld [vmem:[%s1 + $0x2d8] sm:$0xff]
  %v522 = vld [vmem:[%s1 + $0x2e0] sm:$0xff]
  %v523 = vld [vmem:[%s1 + $0x2e8] sm:$0xff]
  %v524 = vld [vmem:[%s1 + $0x2f0] sm:$0xff]
  %v525 = vld [vmem:[%s1 + $0x2f8] sm:$0xff]
  %v526 = vld [vmem:[%s1 + $0x300] sm:$0xff]
  %v527 = vld [vmem:[%s1 + $0x308] sm:$0xff]
  %v528 = vld [vmem:[%s1 + $0x310] sm:$0xff]
  %v529 = vld [vmem:[%s1 + $0x318] sm:$0xff]
  %v530 = vld [vmem:[%s1 + $0x320] sm:$0xff]
  %v531 = vld [vmem:[%s1 + $0x328] sm:$0xff]
  %v532 = vld [vmem:[%s1 + $0x330] sm:$0xff]
  %v533 = vld [vmem:[%s1 + $0x338] sm:$0xff]
  %v534 = vld [vmem:[%s1 + $0x340] sm:$0xff]
  %v535 = vld [vmem:[%s1 + $0x348] sm:$0xff]
  %v536 = vld [vmem:[%s1 + $0x350] sm:$0xff]
  %v537 = vld [vmem:[%s1 + $0x358] sm:$0xff]
  %v538 = vld [vmem:[%s1 + $0x360] sm:$0xff]
  %v539 = vld [vmem:[%s1 + $0x368] sm:$0xff]
  %v540 = vld [vmem:[%s1 + $0x370] sm:$0xff]
  %v541 = vld [vmem:[%s1 + $0x378] sm:$0xff]
  %v542 = vld [vmem:[%s1 + $0x380] sm:$0xff]
  %v543 = vld [vmem:[%s1 + $0x388] sm:$0xff]
  %v544 = vld [vmem:[%s1 + $0x390] sm:$0xff]
  %v545 = vld [vmem:[%s1 + $0x398] sm:$0xff]
  %v546 = vld [vmem:[%s1 + $0x3a0] sm:$0xff]
  %v547 = vld [vmem:[%s1 + $0x3a8] sm:$0xff]
  %v548 = vld [vmem:[%s1 + $0x3b0] sm:$0xff]
  %v549 = vld [vmem:[%s1 + $0x3b8] sm:$0xff]
  %v550 = vld [vmem:[%s1 + $0x3c0] sm:$0xff]
  %v551 = vld [vmem:[%s1 + $0x3c8] sm:$0xff]
  %v552 = vld [vmem:[%s1 + $0x3d0] sm:$0xff]
  %v553 = vld [vmem:[%s1 + $0x3d8] sm:$0xff]
  %v554 = vld [vmem:[%s1 + $0x3e0] sm:$0xff]
  %v555 = vld [vmem:[%s1 + $0x3e8] sm:$0xff]
  %v556 = vld [vmem:[%s1 + $0x3f0] sm:$0xff]
  %v557 = vld [vmem:[%s1 + $0x3f8] sm:$0xff]
  %v558 = vld [vmem:[%s1 + $0x400] sm:$0xff]
  %v559 = vld [vmem:[%s1 + $0x408] sm:$0xff]
  %v560 = vld [vmem:[%s1 + $0x410] sm:$0xff]
  %v561 = vld [vmem:[%s1 + $0x418] sm:$0xff]
  %v562 = vld [vmem:[%s1 + $0x420] sm:$0xff]
  %v563 = vld [vmem:[%s1 + $0x428] sm:$0xff]
  %v564 = vld [vmem:[%s1 + $0x430] sm:$0xff]
  %v565 = vld [vmem:[%s1 + $0x438] sm:$0xff]
  %v566 = vld [vmem:[%s1 + $0x440] sm:$0xff]
  %v567 = vld [vmem:[%s1 + $0x448] sm:$0xff]
  %v568 = vld [vmem:[%s1 + $0x450] sm:$0xff]
  %v569 = vld [vmem:[%s1 + $0x458] sm:$0xff]
  %v570 = vld [vmem:[%s1 + $0x460] sm:$0xff]
  %v571 = vld [vmem:[%s1 + $0x468] sm:$0xff]
  %v572 = vld [vmem:[%s1 + $0x470] sm:$0xff]
  %v573 = vld [vmem:[%s1 + $0x478] sm:$0xff]
  %v574 = vld [vmem:[%s1 + $0x480] sm:$0xff]
  %v575 = vld [vmem:[%s1 + $0x488] sm:$0xff]
  %v576 = vld [vmem:[%s1 + $0x490] sm:$0xff]
  %v577 = vld [vmem:[%s1 + $0x498] sm:$0xff]
  %v578 = vld [vmem:[%s1 + $0x4a0] sm:$0xff]
  %v579 = vld [vmem:[%s1 + $0x4a8] sm:$0xff]
  %v580 = vld [vmem:[%s1 + $0x4b0] sm:$0xff]
  %v581 = vld [vmem:[%s1 + $0x4b8] sm:$0xff]
  %v582 = vld [vmem:[%s1 + $0x4c0] sm:$0xff]
  %v583 = vld [vmem:[%s1 + $0x4c8] sm:$0xff]
  %v584 = vld [vmem:[%s1 + $0x4d0] sm:$0xff]
  %v585 = vld [vmem:[%s1 + $0x4d8] sm:$0xff]
  %v586 = vld [vmem:[%s1 + $0x4e0] sm:$0xff]
  %v587 = vld [vmem:[%s1 + $0x4e8] sm:$0xff]
  %v588 = vld [vmem:[%s1 + $0x4f0] sm:$0xff]
  %v589 = vld [vmem:[%s1 + $0x4f8] sm:$0xff]
  %v590 = vld [vmem:[%s1 + $0x500] sm:$0xff]
  %v591 = vld [vmem:[%s1 + $0x508] sm:$0xff]
  %v592 = vld [vmem:[%s1 + $0x510] sm:$0xff]
  %v593 = vld [vmem:[%s1 + $0x518] sm:$0xff]
  %v594 = vld [vmem:[%s1 + $0x520] sm:$0xff]
  %v595 = vld [vmem:[%s1 + $0x528] sm:$0xff]
  %v596 = vld [vmem:[%s1 + $0x530] sm:$0xff]
  %v597 = vld [vmem:[%s1 + $0x538] sm:$0xff]
  %v598 = vld [vmem:[%s1 + $0x540] sm:$0xff]
  %v599 = vld [vmem:[%s1 + $0x548] sm:$0xff]
  %v600 = vld [vmem:[%s1 + $0x550] sm:$0xff]
  %v601 = vld [vmem:[%s1 + $0x558] sm:$0xff]
  %v602 = vld [vmem:[%s1 + $0x560] sm:$0xff]
  %v603 = vld [vmem:[%s1 + $0x568] sm:$0xff]
  %v604 = vld [vmem:[%s1 + $0x570] sm:$0xff]
  %v605 = vld [vmem:[%s1 + $0x578] sm:$0xff]
  %v606 = vld [vmem:[%s1 + $0x580] sm:$0xff]
  %v607 = vld [vmem:[%s1 + $0x588] sm:$0xff]
  %v608 = vld [vmem:[%s1 + $0x590] sm:$0xff]
  %v609 = vld [vmem:[%s1 + $0x598] sm:$0xff]
  %v610 = vld [vmem:[%s1 + $0x5a0] sm:$0xff]
  %v611 = vld [vmem:[%s1 + $0x5a8] sm:$0xff]
  %v612 = vld [vmem:[%s1 + $0x5b0] sm:$0xff]
  %v613 = vld [vmem:[%s1 + $0x5b8] sm:$0xff]
  %v614 = vld [vmem:[%s1 + $0x5c0] sm:$0xff]
  %v615 = vld [vmem:[%s1 + $0x5c8] sm:$0xff]
  %v616 = vld [vmem:[%s1 + $0x5d0] sm:$0xff]
  %v617 = vld [vmem:[%s1 + $0x5d8] sm:$0xff]
  %v618 = vld [vmem:[%s1 + $0x5e0] sm:$0xff]
  %v619 = vld [vmem:[%s1 + $0x5e8] sm:$0xff]
  %v620 = vld [vmem:[%s1 + $0x5f0] sm:$0xff]
  %v621 = vld [vmem:[%s1 + $0x5f8] sm:$0xff]
  %v622 = vld [vmem:[%s1 + $0x600] sm:$0xff]
  %v623 = vld [vmem:[%s1 + $0x608] sm:$0xff]
  %v624 = vld [vmem:[%s1 + $0x610] sm:$0xff]
  %v625 = vld [vmem:[%s1 + $0x618] sm:$0xff]
  %v626 = vld [vmem:[%s1 + $0x620] sm:$0xff]
  %v627 = vld [vmem:[%s1 + $0x628] sm:$0xff]
  %v628 = vld [vmem:[%s1 + $0x630] sm:$0xff]
  %v629 = vld [vmem:[%s1 + $0x638] sm:$0xff]
  %vm630 = vcmask 523264
  %v632 = vsel %vm630, %v26, 0
  %v635 = vsel %vm630, %v39, 0
  %v638 = vsel %vm630, %v52, 0
  %v641 = vsel %vm630, %v65, 0
  %v644 = vsel %vm630, %v78, 0
  %v647 = vsel %vm630, %v91, 0
  %v650 = vsel %vm630, %v104, 0
  %v653 = vsel %vm630, %v117, 0
  %v656 = vsel %vm630, %v130, 0
  %v659 = vsel %vm630, %v143, 0
  %v662 = vsel %vm630, %v156, 0
  %v665 = vsel %vm630, %v169, 0
  %v668 = vsel %vm630, %v182, 0
  %v671 = vsel %vm630, %v195, 0
  %v674 = vsel %vm630, %v208, 0
  %v677 = vsel %vm630, %v221, 0
  %v680 = vsel %vm630, %v234, 0
  %v683 = vsel %vm630, %v247, 0
  %v686 = vsel %vm630, %v260, 0
  %v689 = vsel %vm630, %v273, 0
  %v692 = vsel %vm630, %v286, 0
  %v695 = vsel %vm630, %v299, 0
  %v698 = vsel %vm630, %v312, 0
  %v701 = vsel %vm630, %v325, 0
  %v704 = vsel %vm630, %v338, 0
  %v707 = vsel %vm630, %v351, 0
  %v710 = vsel %vm630, %v364, 0
  %v713 = vsel %vm630, %v377, 0
  %v716 = vsel %vm630, %v390, 0
  %v719 = vsel %vm630, %v403, 0
  %v722 = vsel %vm630, %v416, 0
  %v725 = vsel %vm630, %v429, 0
  %727 = vmatprep.subr.mxu0 0.0
  %728 = vmatpush1.msra.mxu0 %v430
  %729 = vmatprep.subr.mxu0 0.0
  %730 = vmatpush1.msra.mxu0 %v431
  %731 = vmatprep.subr.mxu0 0.0
  %732 = vmatpush1.msra.mxu0 %v432
  %733 = vmatprep.subr.mxu0 0.0
  %734 = vmatpush1.msra.mxu0 %v433
  %735 = vmatprep.subr.mxu0 0.0
  %736 = vmatpush1.msra.mxu0 %v434
  %737 = vmatprep.subr.mxu0 0.0
  %738 = vmatpush1.msra.mxu0 %v435
  %739 = vmatprep.subr.mxu0 0.0
  %740 = vmatpush1.msra.mxu0 %v436
  %741 = vmatprep.subr.mxu0 0.0
  %742 = vmatpush1.msra.mxu0 %v437
  %743 = vmatprep.subr.mxu0 0.0
  %744 = vmatpush1.msra.mxu0 %v438
  %745 = vmatprep.subr.mxu0 0.0
  %746 = vmatpush1.msra.mxu0 %v439
  %747 = vmatprep.subr.mxu0 0.0
  %748 = vmatpush1.msra.mxu0 %v440
  %749 = vmatprep.subr.mxu0 0.0
  %750 = vmatpush1.msra.mxu0 %v441
  %751 = vmatprep.subr.mxu0 0.0
  %752 = vmatpush1.msra.mxu0 %v442
  %753 = vmatprep.subr.mxu0 0.0
  %754 = vmatpush1.msra.mxu0 %v443
  %755 = vmatprep.subr.mxu0 0.0
  %756 = vmatpush1.msra.mxu0 %v444
  %757 = vmatprep.subr.mxu0 0.0
  %758 = vmatpush1.msra.mxu0 %v445
  %759 = vmatprep.subr.mxu0 0.0
  %760 = vmatpush1.msra.mxu0 %v446
  %761 = vmatprep.subr.mxu0 0.0
  %762 = vmatpush1.msra.mxu0 %v447
  %763 = vmatprep.subr.mxu0 0.0
  %764 = vmatpush1.msra.mxu0 %v448
  %765 = vmatprep.subr.mxu0 0.0
  %766 = vmatpush1.msra.mxu0 %v449
  %767 = vmatprep.subr.mxu0 0.0
  %768 = vmatpush1.msra.mxu0 %v450
  %769 = vmatprep.subr.mxu0 0.0
  %770 = vmatpush1.msra.mxu0 %v451
  %771 = vmatprep.subr.mxu0 0.0
  %772 = vmatpush1.msra.mxu0 %v452
  %773 = vmatprep.subr.mxu0 0.0
  %774 = vmatpush1.msra.mxu0 %v453
  %775 = vmatprep.subr.mxu0 0.0
  %776 = vmatpush1.msra.mxu0 %v454
  %777 = vmatprep.subr.mxu0 0.0
  %778 = vmatpush1.msra.mxu0 %v455
  %779 = vmatprep.subr.mxu0 0.0
  %780 = vmatpush1.msra.mxu0 %v456
  %781 = vmatprep.subr.mxu0 0.0
  %782 = vmatpush1.msra.mxu0 %v457
  %783 = vmatprep.subr.mxu0 0.0
  %784 = vmatpush1.msra.mxu0 %v458
  %785 = vmatprep.subr.mxu0 0.0
  %786 = vmatpush1.msra.mxu0 %v459
  %787 = vmatprep.subr.mxu0 0.0
  %788 = vmatpush1.msra.mxu0 %v460
  %789 = vmatprep.subr.mxu0 0.0
  %790 = vmatpush1.msra.mxu0 %v461
  %791 = vmatprep.mubr.f32.mxu0 %v15
  %792 = vmatmul.mubr.f32.gmra.mrb[0].mxu0 %v14
  %v793 = vpop.f32.mrb[0].mxu0
  %v794 = vadd.f32 0.0, %v793
  %v795 = vpop.f32.mrb[0].mxu0
  %796 = vmatprep.mubr.f32.mxu0 %v28
  %797 = vmatmul.mubr.f32.gmra.mrb[0].mxu0 %v27
  %v798 = vpop.f32.mrb[0].mxu0
  %v799 = vadd.f32 0.0, %v798
  %v800 = vpop.f32.mrb[0].mxu0
  %801 = vmatprep.mubr.f32.mxu0 %v41
  %802 = vmatmul.mubr.f32.gmra.mrb[0].mxu0 %v40
  %v803 = vpop.f32.mrb[0].mxu0
  %v804 = vadd.f32 0.0, %v803
  %v805 = vpop.f32.mrb[0].mxu0
  %806 = vmatprep.mubr.f32.mxu0 %v54
  %807 = vmatmul.mubr.f32.gmra.mrb[0].mxu0 %v53
  %v808 = vpop.f32.mrb[0].mxu0
  %v809 = vadd.f32 0.0, %v808
  %v810 = vpop.f32.mrb[0].mxu0
  %811 = vmatprep.mubr.f32.mxu0 %v67
  %812 = vmatmul.mubr.f32.gmra.mrb[0].mxu0 %v66
  %v813 = vpop.f32.mrb[0].mxu0
  %v814 = vadd.f32 0.0, %v813
  %v815 = vpop.f32.mrb[0].mxu0
  %816 = vmatprep.mubr.f32.mxu0 %v80
  %817 = vmatmul.mubr.f32.gmra.mrb[0].mxu0 %v79
  %v818 = vpop.f32.mrb[0].mxu0
  %v819 = vadd.f32 0.0, %v818
  %v820 = vpop.f32.mrb[0].mxu0
  %821 = vmatprep.mubr.f32.mxu0 %v93
  %822 = vmatmul.mubr.f32.gmra.mrb[0].mxu0 %v92
  %v823 = vpop.f32.mrb[0].mxu0
  %v824 = vadd.f32 0.0, %v823
  %v825 = vpop.f32.mrb[0].mxu0
  %826 = vmatprep.mubr.f32.mxu0 %v106
  %827 = vmatmul.mubr.f32.gmra.mrb[0].mxu0 %v105
  %v828 = vpop.f32.mrb[0].mxu0
  %v829 = vadd.f32 0.0, %v828
  %v830 = vpop.f32.mrb[0].mxu0
  %831 = vmatprep.mubr.f32.mxu0 %v119
  %832 = vmatmul.mubr.f32.gmra.mrb[0].mxu0 %v118
  %v833 = vpop.f32.mrb[0].mxu0
  %v834 = vadd.f32 0.0, %v833
  %v835 = vpop.f32.mrb[0].mxu0
  %836 = vmatprep.mubr.f32.mxu0 %v132
  %837 = vmatmul.mubr.f32.gmra.mrb[0].mxu0 %v131
  %v838 = vpop.f32.mrb[0].mxu0
  %v839 = vadd.f32 0.0, %v838
  %v840 = vpop.f32.mrb[0].mxu0
  %841 = vmatprep.mubr.f32.mxu0 %v145
  %842 = vmatmul.mubr.f32.gmra.mrb[0].mxu0 %v144
  %v843 = vpop.f32.mrb[0].mxu0
  %v844 = vadd.f32 0.0, %v843
  %v845 = vpop.f32.mrb[0].mxu0
  %846 = vmatprep.mubr.f32.mxu0 %v158
  %847 = vmatmul.mubr.f32.gmra.mrb[0].mxu0 %v157
  %v848 = vpop.f32.mrb[0].mxu0
  %v849 = vadd.f32 0.0, %v848
  %v850 = vpop.f32.mrb[0].mxu0
  %851 = vmatprep.mubr.f32.mxu0 %v171
  %852 = vmatmul.mubr.f32.gmra.mrb[0].mxu0 %v170
  %v853 = vpop.f32.mrb[0].mxu0
  %v854 = vadd.f32 0.0, %v853
  %v855 = vpop.f32.mrb[0].mxu0
  %856 = vmatprep.mubr.f32.mxu0 %v184
  %857 = vmatmul.mubr.f32.gmra.mrb[0].mxu0 %v183
  %v858 = vpop.f32.mrb[0].mxu0
  %v859 = vadd.f32 0.0, %v858
  %v860 = vpop.f32.mrb[0].mxu0
  %861 = vmatprep.mubr.f32.mxu0 %v197
  %862 = vmatmul.mubr.f32.gmra.mrb[0].mxu0 %v196
  %v863 = vpop.f32.mrb[0].mxu0
  %v864 = vadd.f32 0.0, %v863
  %v865 = vpop.f32.mrb[0].mxu0
  %866 = vmatprep.mubr.f32.mxu0 %v210
  %867 = vmatmul.mubr.f32.gmra.mrb[0].mxu0 %v209
  %v868 = vpop.f32.mrb[0].mxu0
  %v869 = vadd.f32 0.0, %v868
  %v870 = vpop.f32.mrb[0].mxu0
  %871 = vmatprep.mubr.f32.mxu0 %v223
  %872 = vmatmul.mubr.f32.gmra.mrb[0].mxu0 %v222
  %v873 = vpop.f32.mrb[0].mxu0
  %v874 = vadd.f32 0.0, %v873
  %v875 = vpop.f32.mrb[0].mxu0
  %876 = vmatprep.mubr.f32.mxu0 %v236
  %877 = vmatmul.mubr.f32.gmra.mrb[0].mxu0 %v235
  %v878 = vpop.f32.mrb[0].mxu0
  %v879 = vadd.f32 0.0, %v878
  %v880 = vpop.f32.mrb[0].mxu0
  %881 = vmatprep.mubr.f32.mxu0 %v249
  %882 = vmatmul.mubr.f32.gmra.mrb[0].mxu0 %v248
  %v883 = vpop.f32.mrb[0].mxu0
  %v884 = vadd.f32 0.0, %v883
  %v885 = vpop.f32.mrb[0].mxu0
  %886 = vmatprep.mubr.f32.mxu0 %v262
  %887 = vmatmul.mubr.f32.gmra.mrb[0].mxu0 %v261
  %v888 = vpop.f32.mrb[0].mxu0
  %v889 = vadd.f32 0.0, %v888
  %v890 = vpop.f32.mrb[0].mxu0
  %891 = vmatprep.mubr.f32.mxu0 %v275
  %892 = vmatmul.mubr.f32.gmra.mrb[0].mxu0 %v274
  %v893 = vpop.f32.mrb[0].mxu0
  %v894 = vadd.f32 0.0, %v893
  %v895 = vpop.f32.mrb[0].mxu0
  %896 = vmatprep.mubr.f32.mxu0 %v288
  %897 = vmatmul.mubr.f32.gmra.mrb[0].mxu0 %v287
  %v898 = vpop.f32.mrb[0].mxu0
  %v899 = vadd.f32 0.0, %v898
  %v900 = vpop.f32.mrb[0].mxu0
  %901 = vmatprep.mubr.f32.mxu0 %v301
  %902 = vmatmul.mubr.f32.gmra.mrb[0].mxu0 %v300
  %v903 = vpop.f32.mrb[0].mxu0
  %v904 = vadd.f32 0.0, %v903
  %v905 = vpop.f32.mrb[0].mxu0
  %906 = vmatprep.mubr.f32.mxu0 %v314
  %907 = vmatmul.mubr.f32.gmra.mrb[0].mxu0 %v313
  %v908 = vpop.f32.mrb[0].mxu0
  %v909 = vadd.f32 0.0, %v908
  %v910 = vpop.f32.mrb[0].mxu0
  %911 = vmatprep.mubr.f32.mxu0 %v327
  %912 = vmatmul.mubr.f32.gmra.mrb[0].mxu0 %v326
  %v913 = vpop.f32.mrb[0].mxu0
  %v914 = vadd.f32 0.0, %v913
  %v915 = vpop.f32.mrb[0].mxu0
  %916 = vmatprep.mubr.f32.mxu0 %v340
  %917 = vmatmul.mubr.f32.gmra.mrb[0].mxu0 %v339
  %v918 = vpop.f32.mrb[0].mxu0
  %v919 = vadd.f32 0.0, %v918
  %v920 = vpop.f32.mrb[0].mxu0
  %921 = vmatprep.mubr.f32.mxu0 %v353
  %922 = vmatmul.mubr.f32.gmra.mrb[0].mxu0 %v352
  %v923 = vpop.f32.mrb[0].mxu0
  %v924 = vadd.f32 0.0, %v923
  %v925 = vpop.f32.mrb[0].mxu0
  %926 = vmatprep.mubr.f32.mxu0 %v366
  %927 = vmatmul.mubr.f32.gmra.mrb[0].mxu0 %v365
  %v928 = vpop.f32.mrb[0].mxu0
  %v929 = vadd.f32 0.0, %v928
  %v930 = vpop.f32.mrb[0].mxu0
  %931 = vmatprep.mubr.f32.mxu0 %v379
  %932 = vmatmul.mubr.f32.gmra.mrb[0].mxu0 %v378
  %v933 = vpop.f32.mrb[0].mxu0
  %v934 = vadd.f32 0.0, %v933
  %v935 = vpop.f32.mrb[0].mxu0
  %936 = vmatprep.mubr.f32.mxu0 %v392
  %937 = vmatmul.mubr.f32.gmra.mrb[0].mxu0 %v391
  %v938 = vpop.f32.mrb[0].mxu0
  %v939 = vadd.f32 0.0, %v938
  %v940 = vpop.f32.mrb[0].mxu0
  %941 = vmatprep.mubr.f32.mxu0 %v405
  %942 = vmatmul.mubr.f32.gmra.mrb[0].mxu0 %v404
  %v943 = vpop.f32.mrb[0].mxu0
  %v944 = vadd.f32 0.0, %v943
  %v945 = vpop.f32.mrb[0].mxu0
  %946 = vmatprep.mubr.f32.mxu0 %v418
  %947 = vmatmul.mubr.f32.gmra.mrb[0].mxu0 %v417
  %v948 = vpop.f32.mrb[0].mxu0
  %v949 = vadd.f32 0.0, %v948
  %v950 = vpop.f32.mrb[0].mxu0
  %951 = vdwg.mxu0
  %952 = vmatprep.subr.mxu0 0.0
  %953 = vmatpush1.msra.mxu0 %v462
  %954 = vmatprep.subr.mxu0 0.0
  %955 = vmatpush1.msra.mxu0 %v463
  %956 = vmatprep.subr.mxu0 0.0
  %957 = vmatpush1.msra.mxu0 %v464
  %958 = vmatprep.subr.mxu0 0.0
  %959 = vmatpush1.msra.mxu0 %v465
  %960 = vmatprep.subr.mxu0 0.0
  %961 = vmatpush1.msra.mxu0 %v466
  %962 = vmatprep.subr.mxu0 0.0
  %963 = vmatpush1.msra.mxu0 %v467
  %964 = vmatprep.subr.mxu0 0.0
  %965 = vmatpush1.msra.mxu0 %v468
  %966 = vmatprep.subr.mxu0 0.0
  %967 = vmatpush1.msra.mxu0 %v469
  %968 = vmatprep.subr.mxu0 0.0
  %969 = vmatpush1.msra.mxu0 %v470
  %970 = vmatprep.subr.mxu0 0.0
  %971 = vmatpush1.msra.mxu0 %v471
  %972 = vmatprep.subr.mxu0 0.0
  %973 = vmatpush1.msra.mxu0 %v472
  %974 = vmatprep.subr.mxu0 0.0
  %975 = vmatpush1.msra.mxu0 %v473
  %976 = vmatprep.subr.mxu0 0.0
  %977 = vmatpush1.msra.mxu0 %v474
  %978 = vmatprep.subr.mxu0 0.0
  %979 = vmatpush1.msra.mxu0 %v475
  %980 = vmatprep.subr.mxu0 0.0
  %981 = vmatpush1.msra.mxu0 %v476
  %982 = vmatprep.subr.mxu0 0.0
  %983 = vmatpush1.msra.mxu0 %v477
  %984 = vmatprep.subr.mxu0 0.0
  %985 = vmatpush1.msra.mxu0 %v478
  %986 = vmatprep.subr.mxu0 0.0
  %987 = vmatpush1.msra.mxu0 %v479
  %988 = vmatprep.subr.mxu0 0.0
  %989 = vmatpush1.msra.mxu0 %v480
  %990 = vmatprep.subr.mxu0 0.0
  %991 = vmatpush1.msra.mxu0 %v481
  %992 = vmatprep.subr.mxu0 0.0
  %993 = vmatpush1.msra.mxu0 %v482
  %994 = vmatprep.subr.mxu0 0.0
  %995 = vmatpush1.msra.mxu0 %v483
  %996 = vmatprep.subr.mxu0 0.0
  %997 = vmatpush1.msra.mxu0 %v484
  %998 = vmatprep.subr.mxu0 0.0
  %999 = vmatpush1.msra.mxu0 %v485
  %1000 = vmatprep.subr.mxu0 0.0
  %1001 = vmatpush1.msra.mxu0 %v486
  %1002 = vmatprep.subr.mxu0 0.0
  %1003 = vmatpush1.msra.mxu0 %v487
  %1004 = vmatprep.subr.mxu0 0.0
  %1005 = vmatpush1.msra.mxu0 %v488
  %1006 = vmatprep.subr.mxu0 0.0
  %1007 = vmatpush1.msra.mxu0 %v489
  %1008 = vmatprep.subr.mxu0 0.0
  %1009 = vmatpush1.msra.mxu0 %v490
  %1010 = vmatprep.subr.mxu0 0.0
  %1011 = vmatpush1.msra.mxu0 %v491
  %1012 = vmatprep.subr.mxu0 0.0
  %1013 = vmatpush1.msra.mxu0 %v492
  %1014 = vmatprep.subr.mxu0 0.0
  %1015 = vmatpush1.msra.mxu0 %v493
  %1016 = vmatprep.mubr.f32.mxu0 %v17
  %1017 = vmatmul.mubr.f32.gmra.mrb[0].mxu0 %v16
  %v1018 = vpop.f32.mrb[0].mxu0
  %v1019 = vadd.f32 %v794, %v1018
  %v1020 = vpop.f32.mrb[0].mxu0
  %1021 = vmatprep.mubr.f32.mxu0 %v30
  %1022 = vmatmul.mubr.f32.gmra.mrb[0].mxu0 %v29
  %v1023 = vpop.f32.mrb[0].mxu0
  %v1024 = vadd.f32 %v799, %v1023
  %v1025 = vpop.f32.mrb[0].mxu0
  %1026 = vmatprep.mubr.f32.mxu0 %v43
  %1027 = vmatmul.mubr.f32.gmra.mrb[0].mxu0 %v42
  %v1028 = vpop.f32.mrb[0].mxu0
  %v1029 = vadd.f32 %v804, %v1028
  %v1030 = vpop.f32.mrb[0].mxu0
  %1031 = vmatprep.mubr.f32.mxu0 %v56
  %1032 = vmatmul.mubr.f32.gmra.mrb[0].mxu0 %v55
  %v1033 = vpop.f32.mrb[0].mxu0
  %v1034 = vadd.f32 %v809, %v1033
  %v1035 = vpop.f32.mrb[0].mxu0
  %1036 = vmatprep.mubr.f32.mxu0 %v69
  %1037 = vmatmul.mubr.f32.gmra.mrb[0].mxu0 %v68
  %v1038 = vpop.f32.mrb[0].mxu0
  %v1039 = vadd.f32 %v814, %v1038
  %v1040 = vpop.f32.mrb[0].mxu0
  %1041 = vmatprep.mubr.f32.mxu0 %v82
  %1042 = vmatmul.mubr.f32.gmra.mrb[0].mxu0 %v81
  %v1043 = vpop.f32.mrb[0].mxu0
  %v1044 = vadd.f32 %v819, %v1043
  %v1045 = vpop.f32.mrb[0].mxu0
  %1046 = vmatprep.mubr.f32.mxu0 %v95
  %1047 = vmatmul.mubr.f32.gmra.mrb[0].mxu0 %v94
  %v1048 = vpop.f32.mrb[0].mxu0
  %v1049 = vadd.f32 %v824, %v1048
  %v1050 = vpop.f32.mrb[0].mxu0
  %1051 = vmatprep.mubr.f32.mxu0 %v108
  %1052 = vmatmul.mubr.f32.gmra.mrb[0].mxu0 %v107
  %v1053 = vpop.f32.mrb[0].mxu0
  %v1054 = vadd.f32 %v829, %v1053
  %v1055 = vpop.f32.mrb[0].mxu0
  %1056 = vmatprep.mubr.f32.mxu0 %v121
  %1057 = vmatmul.mubr.f32.gmra.mrb[0].mxu0 %v120
  %v1058 = vpop.f32.mrb[0].mxu0
  %v1059 = vadd.f32 %v834, %v1058
  %v1060 = vpop.f32.mrb[0].mxu0
  %1061 = vmatprep.mubr.f32.mxu0 %v134
  %1062 = vmatmul.mubr.f32.gmra.mrb[0].mxu0 %v133
  %v1063 = vpop.f32.mrb[0].mxu0
  %v1064 = vadd.f32 %v839, %v1063
  %v1065 = vpop.f32.mrb[0].mxu0
  %1066 = vmatprep.mubr.f32.mxu0 %v147
  %1067 = vmatmul.mubr.f32.gmra.mrb[0].mxu0 %v146
  %v1068 = vpop.f32.mrb[0].mxu0
  %v1069 = vadd.f32 %v844, %v1068
  %v1070 = vpop.f32.mrb[0].mxu0
  %1071 = vmatprep.mubr.f32.mxu0 %v160
  %1072 = vmatmul.mubr.f32.gmra.mrb[0].mxu0 %v159
  %v1073 = vpop.f32.mrb[0].mxu0
  %v1074 = vadd.f32 %v849, %v1073
  %v1075 = vpop.f32.mrb[0].mxu0
  %1076 = vmatprep.mubr.f32.mxu0 %v173
  %1077 = vmatmul.mubr.f32.gmra.mrb[0].mxu0 %v172
  %v1078 = vpop.f32.mrb[0].mxu0
  %v1079 = vadd.f32 %v854, %v1078
  %v1080 = vpop.f32.mrb[0].mxu0
  %1081 = vmatprep.mubr.f32.mxu0 %v186
  %1082 = vmatmul.mubr.f32.gmra.mrb[0].mxu0 %v185
  %v1083 = vpop.f32.mrb[0].mxu0
  %v1084 = vadd.f32 %v859, %v1083
  %v1085 = vpop.f32.mrb[0].mxu0
  %1086 = vmatprep.mubr.f32.mxu0 %v199
  %1087 = vmatmul.mubr.f32.gmra.mrb[0].mxu0 %v198
  %v1088 = vpop.f32.mrb[0].mxu0
  %v1089 = vadd.f32 %v864, %v1088
  %v1090 = vpop.f32.mrb[0].mxu0
  %1091 = vmatprep.mubr.f32.mxu0 %v212
  %1092 = vmatmul.mubr.f32.gmra.mrb[0].mxu0 %v211
  %v1093 = vpop.f32.mrb[0].mxu0
  %v1094 = vadd.f32 %v869, %v1093
  %v1095 = vpop.f32.mrb[0].mxu0
  %1096 = vmatprep.mubr.f32.mxu0 %v225
  %1097 = vmatmul.mubr.f32.gmra.mrb[0].mxu0 %v224
  %v1098 = vpop.f32.mrb[0].mxu0
  %v1099 = vadd.f32 %v874, %v1098
  %v1100 = vpop.f32.mrb[0].mxu0
  %1101 = vmatprep.mubr.f32.mxu0 %v238
  %1102 = vmatmul.mubr.f32.gmra.mrb[0].mxu0 %v237
  %v1103 = vpop.f32.mrb[0].mxu0
  %v1104 = vadd.f32 %v879, %v1103
  %v1105 = vpop.f32.mrb[0].mxu0
  %1106 = vmatprep.mubr.f32.mxu0 %v251
  %1107 = vmatmul.mubr.f32.gmra.mrb[0].mxu0 %v250
  %v1108 = vpop.f32.mrb[0].mxu0
  %v1109 = vadd.f32 %v884, %v1108
  %v1110 = vpop.f32.mrb[0].mxu0
  %1111 = vmatprep.mubr.f32.mxu0 %v264
  %1112 = vmatmul.mubr.f32.gmra.mrb[0].mxu0 %v263
  %v1113 = vpop.f32.mrb[0].mxu0
  %v1114 = vadd.f32 %v889, %v1113
  %v1115 = vpop.f32.mrb[0].mxu0
  %1116 = vmatprep.mubr.f32.mxu0 %v277
  %1117 = vmatmul.mubr.f32.gmra.mrb[0].mxu0 %v276
  %v1118 = vpop.f32.mrb[0].mxu0
  %v1119 = vadd.f32 %v894, %v1118
  %v1120 = vpop.f32.mrb[0].mxu0
  %1121 = vmatprep.mubr.f32.mxu0 %v290
  %1122 = vmatmul.mubr.f32.gmra.mrb[0].mxu0 %v289
  %v1123 = vpop.f32.mrb[0].mxu0
  %v1124 = vadd.f32 %v899, %v1123
  %v1125 = vpop.f32.mrb[0].mxu0
  %1126 = vmatprep.mubr.f32.mxu0 %v303
  %1127 = vmatmul.mubr.f32.gmra.mrb[0].mxu0 %v302
  %v1128 = vpop.f32.mrb[0].mxu0
  %v1129 = vadd.f32 %v904, %v1128
  %v1130 = vpop.f32.mrb[0].mxu0
  %1131 = vmatprep.mubr.f32.mxu0 %v316
  %1132 = vmatmul.mubr.f32.gmra.mrb[0].mxu0 %v315
  %v1133 = vpop.f32.mrb[0].mxu0
  %v1134 = vadd.f32 %v909, %v1133
  %v1135 = vpop.f32.mrb[0].mxu0
  %1136 = vmatprep.mubr.f32.mxu0 %v329
  %1137 = vmatmul.mubr.f32.gmra.mrb[0].mxu0 %v328
  %v1138 = vpop.f32.mrb[0].mxu0
  %v1139 = vadd.f32 %v914, %v1138
  %v1140 = vpop.f32.mrb[0].mxu0
  %1141 = vmatprep.mubr.f32.mxu0 %v342
  %1142 = vmatmul.mubr.f32.gmra.mrb[0].mxu0 %v341
  %v1143 = vpop.f32.mrb[0].mxu0
  %v1144 = vadd.f32 %v919, %v1143
  %v1145 = vpop.f32.mrb[0].mxu0
  %1146 = vmatprep.mubr.f32.mxu0 %v355
  %1147 = vmatmul.mubr.f32.gmra.mrb[0].mxu0 %v354
  %v1148 = vpop.f32.mrb[0].mxu0
  %v1149 = vadd.f32 %v924, %v1148
  %v1150 = vpop.f32.mrb[0].mxu0
  %1151 = vmatprep.mubr.f32.mxu0 %v368
  %1152 = vmatmul.mubr.f32.gmra.mrb[0].mxu0 %v367
  %v1153 = vpop.f32.mrb[0].mxu0
  %v1154 = vadd.f32 %v929, %v1153
  %v1155 = vpop.f32.mrb[0].mxu0
  %1156 = vmatprep.mubr.f32.mxu0 %v381
  %1157 = vmatmul.mubr.f32.gmra.mrb[0].mxu0 %v380
  %v1158 = vpop.f32.mrb[0].mxu0
  %v1159 = vadd.f32 %v934, %v1158
  %v1160 = vpop.f32.mrb[0].mxu0
  %1161 = vmatprep.mubr.f32.mxu0 %v394
  %1162 = vmatmul.mubr.f32.gmra.mrb[0].mxu0 %v393
  %v1163 = vpop.f32.mrb[0].mxu0
  %v1164 = vadd.f32 %v939, %v1163
  %v1165 = vpop.f32.mrb[0].mxu0
  %1166 = vmatprep.mubr.f32.mxu0 %v407
  %1167 = vmatmul.mubr.f32.gmra.mrb[0].mxu0 %v406
  %v1168 = vpop.f32.mrb[0].mxu0
  %v1169 = vadd.f32 %v944, %v1168
  %v1170 = vpop.f32.mrb[0].mxu0
  %1171 = vmatprep.mubr.f32.mxu0 %v420
  %1172 = vmatmul.mubr.f32.gmra.mrb[0].mxu0 %v419
  %v1173 = vpop.f32.mrb[0].mxu0
  %v1174 = vadd.f32 %v949, %v1173
  %v1175 = vpop.f32.mrb[0].mxu0
  %1176 = vdwg.mxu0
  %1177 = vmatprep.subr.mxu0 0.0
  %1178 = vmatpush1.msra.mxu0 %v494
  %1179 = vmatprep.subr.mxu0 0.0
  %1180 = vmatpush1.msra.mxu0 %v495
  %1181 = vmatprep.subr.mxu0 0.0
  %1182 = vmatpush1.msra.mxu0 %v496
  %1183 = vmatprep.subr.mxu0 0.0
  %1184 = vmatpush1.msra.mxu0 %v497
  %1185 = vmatprep.subr.mxu0 0.0
  %1186 = vmatpush1.msra.mxu0 %v498
  %1187 = vmatprep.subr.mxu0 0.0
  %1188 = vmatpush1.msra.mxu0 %v499
  %1189 = vmatprep.subr.mxu0 0.0
  %1190 = vmatpush1.msra.mxu0 %v500
  %1191 = vmatprep.subr.mxu0 0.0
  %1192 = vmatpush1.msra.mxu0 %v501
  %1193 = vmatprep.subr.mxu0 0.0
  %1194 = vmatpush1.msra.mxu0 %v502
  %1195 = vmatprep.subr.mxu0 0.0
  %1196 = vmatpush1.msra.mxu0 %v503
  %1197 = vmatprep.subr.mxu0 0.0
  %1198 = vmatpush1.msra.mxu0 %v504
  %1199 = vmatprep.subr.mxu0 0.0
  %1200 = vmatpush1.msra.mxu0 %v505
  %1201 = vmatprep.subr.mxu0 0.0
  %1202 = vmatpush1.msra.mxu0 %v506
  %1203 = vmatprep.subr.mxu0 0.0
  %1204 = vmatpush1.msra.mxu0 %v507
  %1205 = vmatprep.subr.mxu0 0.0
  %1206 = vmatpush1.msra.mxu0 %v508
  %1207 = vmatprep.subr.mxu0 0.0
  %1208 = vmatpush1.msra.mxu0 %v509
  %1209 = vmatprep.subr.mxu0 0.0
  %1210 = vmatpush1.msra.mxu0 %v510
  %1211 = vmatprep.subr.mxu0 0.0
  %1212 = vmatpush1.msra.mxu0 %v511
  %1213 = vmatprep.subr.mxu0 0.0
  %1214 = vmatpush1.msra.mxu0 %v512
  %1215 = vmatprep.subr.mxu0 0.0
  %1216 = vmatpush1.msra.mxu0 %v513
  %1217 = vmatprep.subr.mxu0 0.0
  %1218 = vmatpush1.msra.mxu0 %v514
  %1219 = vmatprep.subr.mxu0 0.0
  %1220 = vmatpush1.msra.mxu0 %v515
  %1221 = vmatprep.subr.mxu0 0.0
  %1222 = vmatpush1.msra.mxu0 %v516
  %1223 = vmatprep.subr.mxu0 0.0
  %1224 = vmatpush1.msra.mxu0 %v517
  %1225 = vmatprep.subr.mxu0 0.0
  %1226 = vmatpush1.msra.mxu0 %v518
  %1227 = vmatprep.subr.mxu0 0.0
  %1228 = vmatpush1.msra.mxu0 %v519
  %1229 = vmatprep.subr.mxu0 0.0
  %1230 = vmatpush1.msra.mxu0 %v520
  %1231 = vmatprep.subr.mxu0 0.0
  %1232 = vmatpush1.msra.mxu0 %v521
  %1233 = vmatprep.subr.mxu0 0.0
  %1234 = vmatpush1.msra.mxu0 %v522
  %1235 = vmatprep.subr.mxu0 0.0
  %1236 = vmatpush1.msra.mxu0 %v523
  %1237 = vmatprep.subr.mxu0 0.0
  %1238 = vmatpush1.msra.mxu0 %v524
  %1239 = vmatprep.subr.mxu0 0.0
  %1240 = vmatpush1.msra.mxu0 %v525
  %1241 = vmatprep.mubr.f32.mxu0 %v19
  %1242 = vmatmul.mubr.f32.gmra.mrb[0].mxu0 %v18
  %v1243 = vpop.f32.mrb[0].mxu0
  %v1244 = vadd.f32 %v1019, %v1243
  %v1245 = vpop.f32.mrb[0].mxu0
  %1246 = vmatprep.mubr.f32.mxu0 %v32
  %1247 = vmatmul.mubr.f32.gmra.mrb[0].mxu0 %v31
  %v1248 = vpop.f32.mrb[0].mxu0
  %v1249 = vadd.f32 %v1024, %v1248
  %v1250 = vpop.f32.mrb[0].mxu0
  %1251 = vmatprep.mubr.f32.mxu0 %v45
  %1252 = vmatmul.mubr.f32.gmra.mrb[0].mxu0 %v44
  %v1253 = vpop.f32.mrb[0].mxu0
  %v1254 = vadd.f32 %v1029, %v1253
  %v1255 = vpop.f32.mrb[0].mxu0
  %1256 = vmatprep.mubr.f32.mxu0 %v58
  %1257 = vmatmul.mubr.f32.gmra.mrb[0].mxu0 %v57
  %v1258 = vpop.f32.mrb[0].mxu0
  %v1259 = vadd.f32 %v1034, %v1258
  %v1260 = vpop.f32.mrb[0].mxu0
  %1261 = vmatprep.mubr.f32.mxu0 %v71
  %1262 = vmatmul.mubr.f32.gmra.mrb[0].mxu0 %v70
  %v1263 = vpop.f32.mrb[0].mxu0
  %v1264 = vadd.f32 %v1039, %v1263
  %v1265 = vpop.f32.mrb[0].mxu0
  %1266 = vmatprep.mubr.f32.mxu0 %v84
  %1267 = vmatmul.mubr.f32.gmra.mrb[0].mxu0 %v83
  %v1268 = vpop.f32.mrb[0].mxu0
  %v1269 = vadd.f32 %v1044, %v1268
  %v1270 = vpop.f32.mrb[0].mxu0
  %1271 = vmatprep.mubr.f32.mxu0 %v97
  %1272 = vmatmul.mubr.f32.gmra.mrb[0].mxu0 %v96
  %v1273 = vpop.f32.mrb[0].mxu0
  %v1274 = vadd.f32 %v1049, %v1273
  %v1275 = vpop.f32.mrb[0].mxu0
  %1276 = vmatprep.mubr.f32.mxu0 %v110
  %1277 = vmatmul.mubr.f32.gmra.mrb[0].mxu0 %v109
  %v1278 = vpop.f32.mrb[0].mxu0
  %v1279 = vadd.f32 %v1054, %v1278
  %v1280 = vpop.f32.mrb[0].mxu0
  %1281 = vmatprep.mubr.f32.mxu0 %v123
  %1282 = vmatmul.mubr.f32.gmra.mrb[0].mxu0 %v122
  %v1283 = vpop.f32.mrb[0].mxu0
  %v1284 = vadd.f32 %v1059, %v1283
  %v1285 = vpop.f32.mrb[0].mxu0
  %1286 = vmatprep.mubr.f32.mxu0 %v136
  %1287 = vmatmul.mubr.f32.gmra.mrb[0].mxu0 %v135
  %v1288 = vpop.f32.mrb[0].mxu0
  %v1289 = vadd.f32 %v1064, %v1288
  %v1290 = vpop.f32.mrb[0].mxu0
  %1291 = vmatprep.mubr.f32.mxu0 %v149
  %1292 = vmatmul.mubr.f32.gmra.mrb[0].mxu0 %v148
  %v1293 = vpop.f32.mrb[0].mxu0
  %v1294 = vadd.f32 %v1069, %v1293
  %v1295 = vpop.f32.mrb[0].mxu0
  %1296 = vmatprep.mubr.f32.mxu0 %v162
  %1297 = vmatmul.mubr.f32.gmra.mrb[0].mxu0 %v161
  %v1298 = vpop.f32.mrb[0].mxu0
  %v1299 = vadd.f32 %v1074, %v1298
  %v1300 = vpop.f32.mrb[0].mxu0
  %1301 = vmatprep.mubr.f32.mxu0 %v175
  %1302 = vmatmul.mubr.f32.gmra.mrb[0].mxu0 %v174
  %v1303 = vpop.f32.mrb[0].mxu0
  %v1304 = vadd.f32 %v1079, %v1303
  %v1305 = vpop.f32.mrb[0].mxu0
  %1306 = vmatprep.mubr.f32.mxu0 %v188
  %1307 = vmatmul.mubr.f32.gmra.mrb[0].mxu0 %v187
  %v1308 = vpop.f32.mrb[0].mxu0
  %v1309 = vadd.f32 %v1084, %v1308
  %v1310 = vpop.f32.mrb[0].mxu0
  %1311 = vmatprep.mubr.f32.mxu0 %v201
  %1312 = vmatmul.mubr.f32.gmra.mrb[0].mxu0 %v200
  %v1313 = vpop.f32.mrb[0].mxu0
  %v1314 = vadd.f32 %v1089, %v1313
  %v1315 = vpop.f32.mrb[0].mxu0
  %1316 = vmatprep.mubr.f32.mxu0 %v214
  %1317 = vmatmul.mubr.f32.gmra.mrb[0].mxu0 %v213
  %v1318 = vpop.f32.mrb[0].mxu0
  %v1319 = vadd.f32 %v1094, %v1318
  %v1320 = vpop.f32.mrb[0].mxu0
  %1321 = vmatprep.mubr.f32.mxu0 %v227
  %1322 = vmatmul.mubr.f32.gmra.mrb[0].mxu0 %v226
  %v1323 = vpop.f32.mrb[0].mxu0
  %v1324 = vadd.f32 %v1099, %v1323
  %v1325 = vpop.f32.mrb[0].mxu0
  %1326 = vmatprep.mubr.f32.mxu0 %v240
  %1327 = vmatmul.mubr.f32.gmra.mrb[0].mxu0 %v239
  %v1328 = vpop.f32.mrb[0].mxu0
  %v1329 = vadd.f32 %v1104, %v1328
  %v1330 = vpop.f32.mrb[0].mxu0
  %1331 = vmatprep.mubr.f32.mxu0 %v253
  %1332 = vmatmul.mubr.f32.gmra.mrb[0].mxu0 %v252
  %v1333 = vpop.f32.mrb[0].mxu0
  %v1334 = vadd.f32 %v1109, %v1333
  %v1335 = vpop.f32.mrb[0].mxu0
  %1336 = vmatprep.mubr.f32.mxu0 %v266
  %1337 = vmatmul.mubr.f32.gmra.mrb[0].mxu0 %v265
  %v1338 = vpop.f32.mrb[0].mxu0
  %v1339 = vadd.f32 %v1114, %v1338
  %v1340 = vpop.f32.mrb[0].mxu0
  %1341 = vmatprep.mubr.f32.mxu0 %v279
  %1342 = vmatmul.mubr.f32.gmra.mrb[0].mxu0 %v278
  %v1343 = vpop.f32.mrb[0].mxu0
  %v1344 = vadd.f32 %v1119, %v1343
  %v1345 = vpop.f32.mrb[0].mxu0
  %1346 = vmatprep.mubr.f32.mxu0 %v292
  %1347 = vmatmul.mubr.f32.gmra.mrb[0].mxu0 %v291
  %v1348 = vpop.f32.mrb[0].mxu0
  %v1349 = vadd.f32 %v1124, %v1348
  %v1350 = vpop.f32.mrb[0].mxu0
  %1351 = vmatprep.mubr.f32.mxu0 %v305
  %1352 = vmatmul.mubr.f32.gmra.mrb[0].mxu0 %v304
  %v1353 = vpop.f32.mrb[0].mxu0
  %v1354 = vadd.f32 %v1129, %v1353
  %v1355 = vpop.f32.mrb[0].mxu0
  %1356 = vmatprep.mubr.f32.mxu0 %v318
  %1357 = vmatmul.mubr.f32.gmra.mrb[0].mxu0 %v317
  %v1358 = vpop.f32.mrb[0].mxu0
  %v1359 = vadd.f32 %v1134, %v1358
  %v1360 = vpop.f32.mrb[0].mxu0
  %1361 = vmatprep.mubr.f32.mxu0 %v331
  %1362 = vmatmul.mubr.f32.gmra.mrb[0].mxu0 %v330
  %v1363 = vpop.f32.mrb[0].mxu0
  %v1364 = vadd.f32 %v1139, %v1363
  %v1365 = vpop.f32.mrb[0].mxu0
  %1366 = vmatprep.mubr.f32.mxu0 %v344
  %1367 = vmatmul.mubr.f32.gmra.mrb[0].mxu0 %v343
  %v1368 = vpop.f32.mrb[0].mxu0
  %v1369 = vadd.f32 %v1144, %v1368
  %v1370 = vpop.f32.mrb[0].mxu0
  %1371 = vmatprep.mubr.f32.mxu0 %v357
  %1372 = vmatmul.mubr.f32.gmra.mrb[0].mxu0 %v356
  %v1373 = vpop.f32.mrb[0].mxu0
  %v1374 = vadd.f32 %v1149, %v1373
  %v1375 = vpop.f32.mrb[0].mxu0
  %1376 = vmatprep.mubr.f32.mxu0 %v370
  %1377 = vmatmul.mubr.f32.gmra.mrb[0].mxu0 %v369
  %v1378 = vpop.f32.mrb[0].mxu0
  %v1379 = vadd.f32 %v1154, %v1378
  %v1380 = vpop.f32.mrb[0].mxu0
  %1381 = vmatprep.mubr.f32.mxu0 %v383
  %1382 = vmatmul.mubr.f32.gmra.mrb[0].mxu0 %v382
  %v1383 = vpop.f32.mrb[0].mxu0
  %v1384 = vadd.f32 %v1159, %v1383
  %v1385 = vpop.f32.mrb[0].mxu0
  %1386 = vmatprep.mubr.f32.mxu0 %v396
  %1387 = vmatmul.mubr.f32.gmra.mrb[0].mxu0 %v395
  %v1388 = vpop.f32.mrb[0].mxu0
  %v1389 = vadd.f32 %v1164, %v1388
  %v1390 = vpop.f32.mrb[0].mxu0
  %1391 = vmatprep.mubr.f32.mxu0 %v409
  %1392 = vmatmul.mubr.f32.gmra.mrb[0].mxu0 %v408
  %v1393 = vpop.f32.mrb[0].mxu0
  %v1394 = vadd.f32 %v1169, %v1393
  %v1395 = vpop.f32.mrb[0].mxu0
  %1396 = vmatprep.mubr.f32.mxu0 %v422
  %1397 = vmatmul.mubr.f32.gmra.mrb[0].mxu0 %v421
  %v1398 = vpop.f32.mrb[0].mxu0
  %v1399 = vadd.f32 %v1174, %v1398
  %v1400 = vpop.f32.mrb[0].mxu0
  %1401 = vdwg.mxu0
  %1402 = vmatprep.subr.mxu0 0.0
  %1403 = vmatpush1.msra.mxu0 %v526
  %1404 = vmatprep.subr.mxu0 0.0
  %1405 = vmatpush1.msra.mxu0 %v527
  %1406 = vmatprep.subr.mxu0 0.0
  %1407 = vmatpush1.msra.mxu0 %v528
  %1408 = vmatprep.subr.mxu0 0.0
  %1409 = vmatpush1.msra.mxu0 %v529
  %1410 = vmatprep.subr.mxu0 0.0
  %1411 = vmatpush1.msra.mxu0 %v530
  %1412 = vmatprep.subr.mxu0 0.0
  %1413 = vmatpush1.msra.mxu0 %v531
  %1414 = vmatprep.subr.mxu0 0.0
  %1415 = vmatpush1.msra.mxu0 %v532
  %1416 = vmatprep.subr.mxu0 0.0
  %1417 = vmatpush1.msra.mxu0 %v533
  %1418 = vmatprep.subr.mxu0 0.0
  %1419 = vmatpush1.msra.mxu0 %v534
  %1420 = vmatprep.subr.mxu0 0.0
  %1421 = vmatpush1.msra.mxu0 %v535
  %1422 = vmatprep.subr.mxu0 0.0
  %1423 = vmatpush1.msra.mxu0 %v536
  %1424 = vmatprep.subr.mxu0 0.0
  %1425 = vmatpush1.msra.mxu0 %v537
  %1426 = vmatprep.subr.mxu0 0.0
  %1427 = vmatpush1.msra.mxu0 %v538
  %1428 = vmatprep.subr.mxu0 0.0
  %1429 = vmatpush1.msra.mxu0 %v539
  %1430 = vmatprep.subr.mxu0 0.0
  %1431 = vmatpush1.msra.mxu0 %v540
  %1432 = vmatprep.subr.mxu0 0.0
  %1433 = vmatpush1.msra.mxu0 %v541
  %1434 = vmatprep.subr.mxu0 0.0
  %1435 = vmatpush1.msra.mxu0 %v542
  %1436 = vmatprep.subr.mxu0 0.0
  %1437 = vmatpush1.msra.mxu0 %v543
  %1438 = vmatprep.subr.mxu0 0.0
  %1439 = vmatpush1.msra.mxu0 %v544
  %1440 = vmatprep.subr.mxu0 0.0
  %1441 = vmatpush1.msra.mxu0 %v545
  %1442 = vmatprep.subr.mxu0 0.0
  %1443 = vmatpush1.msra.mxu0 %v546
  %1444 = vmatprep.subr.mxu0 0.0
  %1445 = vmatpush1.msra.mxu0 %v547
  %1446 = vmatprep.subr.mxu0 0.0
  %1447 = vmatpush1.msra.mxu0 %v548
  %1448 = vmatprep.subr.mxu0 0.0
  %1449 = vmatpush1.msra.mxu0 %v549
  %1450 = vmatprep.subr.mxu0 0.0
  %1451 = vmatpush1.msra.mxu0 %v550
  %1452 = vmatprep.subr.mxu0 0.0
  %1453 = vmatpush1.msra.mxu0 %v551
  %1454 = vmatprep.subr.mxu0 0.0
  %1455 = vmatpush1.msra.mxu0 %v552
  %1456 = vmatprep.subr.mxu0 0.0
  %1457 = vmatpush1.msra.mxu0 %v553
  %1458 = vmatprep.subr.mxu0 0.0
  %1459 = vmatpush1.msra.mxu0 %v554
  %1460 = vmatprep.subr.mxu0 0.0
  %1461 = vmatpush1.msra.mxu0 %v555
  %1462 = vmatprep.subr.mxu0 0.0
  %1463 = vmatpush1.msra.mxu0 %v556
  %1464 = vmatprep.subr.mxu0 0.0
  %1465 = vmatpush1.msra.mxu0 %v557
  %1466 = vmatprep.mubr.f32.mxu0 %v21
  %1467 = vmatmul.mubr.f32.gmra.mrb[0].mxu0 %v20
  %v1468 = vpop.f32.mrb[0].mxu0
  %v1469 = vadd.f32 %v1244, %v1468
  %v1470 = vpop.f32.mrb[0].mxu0
  %1471 = vmatprep.mubr.f32.mxu0 %v34
  %1472 = vmatmul.mubr.f32.gmra.mrb[0].mxu0 %v33
  %v1473 = vpop.f32.mrb[0].mxu0
  %v1474 = vadd.f32 %v1249, %v1473
  %v1475 = vpop.f32.mrb[0].mxu0
  %1476 = vmatprep.mubr.f32.mxu0 %v47
  %1477 = vmatmul.mubr.f32.gmra.mrb[0].mxu0 %v46
  %v1478 = vpop.f32.mrb[0].mxu0
  %v1479 = vadd.f32 %v1254, %v1478
  %v1480 = vpop.f32.mrb[0].mxu0
  %1481 = vmatprep.mubr.f32.mxu0 %v60
  %1482 = vmatmul.mubr.f32.gmra.mrb[0].mxu0 %v59
  %v1483 = vpop.f32.mrb[0].mxu0
  %v1484 = vadd.f32 %v1259, %v1483
  %v1485 = vpop.f32.mrb[0].mxu0
  %1486 = vmatprep.mubr.f32.mxu0 %v73
  %1487 = vmatmul.mubr.f32.gmra.mrb[0].mxu0 %v72
  %v1488 = vpop.f32.mrb[0].mxu0
  %v1489 = vadd.f32 %v1264, %v1488
  %v1490 = vpop.f32.mrb[0].mxu0
  %1491 = vmatprep.mubr.f32.mxu0 %v86
  %1492 = vmatmul.mubr.f32.gmra.mrb[0].mxu0 %v85
  %v1493 = vpop.f32.mrb[0].mxu0
  %v1494 = vadd.f32 %v1269, %v1493
  %v1495 = vpop.f32.mrb[0].mxu0
  %1496 = vmatprep.mubr.f32.mxu0 %v99
  %1497 = vmatmul.mubr.f32.gmra.mrb[0].mxu0 %v98
  %v1498 = vpop.f32.mrb[0].mxu0
  %v1499 = vadd.f32 %v1274, %v1498
  %v1500 = vpop.f32.mrb[0].mxu0
  %1501 = vmatprep.mubr.f32.mxu0 %v112
  %1502 = vmatmul.mubr.f32.gmra.mrb[0].mxu0 %v111
  %v1503 = vpop.f32.mrb[0].mxu0
  %v1504 = vadd.f32 %v1279, %v1503
  %v1505 = vpop.f32.mrb[0].mxu0
  %1506 = vmatprep.mubr.f32.mxu0 %v125
  %1507 = vmatmul.mubr.f32.gmra.mrb[0].mxu0 %v124
  %v1508 = vpop.f32.mrb[0].mxu0
  %v1509 = vadd.f32 %v1284, %v1508
  %v1510 = vpop.f32.mrb[0].mxu0
  %1511 = vmatprep.mubr.f32.mxu0 %v138
  %1512 = vmatmul.mubr.f32.gmra.mrb[0].mxu0 %v137
  %v1513 = vpop.f32.mrb[0].mxu0
  %v1514 = vadd.f32 %v1289, %v1513
  %v1515 = vpop.f32.mrb[0].mxu0
  %1516 = vmatprep.mubr.f32.mxu0 %v151
  %1517 = vmatmul.mubr.f32.gmra.mrb[0].mxu0 %v150
  %v1518 = vpop.f32.mrb[0].mxu0
  %v1519 = vadd.f32 %v1294, %v1518
  %v1520 = vpop.f32.mrb[0].mxu0
  %1521 = vmatprep.mubr.f32.mxu0 %v164
  %1522 = vmatmul.mubr.f32.gmra.mrb[0].mxu0 %v163
  %v1523 = vpop.f32.mrb[0].mxu0
  %v1524 = vadd.f32 %v1299, %v1523
  %v1525 = vpop.f32.mrb[0].mxu0
  %1526 = vmatprep.mubr.f32.mxu0 %v177
  %1527 = vmatmul.mubr.f32.gmra.mrb[0].mxu0 %v176
  %v1528 = vpop.f32.mrb[0].mxu0
  %v1529 = vadd.f32 %v1304, %v1528
  %v1530 = vpop.f32.mrb[0].mxu0
  %1531 = vmatprep.mubr.f32.mxu0 %v190
  %1532 = vmatmul.mubr.f32.gmra.mrb[0].mxu0 %v189
  %v1533 = vpop.f32.mrb[0].mxu0
  %v1534 = vadd.f32 %v1309, %v1533
  %v1535 = vpop.f32.mrb[0].mxu0
  %1536 = vmatprep.mubr.f32.mxu0 %v203
  %1537 = vmatmul.mubr.f32.gmra.mrb[0].mxu0 %v202
  %v1538 = vpop.f32.mrb[0].mxu0
  %v1539 = vadd.f32 %v1314, %v1538
  %v1540 = vpop.f32.mrb[0].mxu0
  %1541 = vmatprep.mubr.f32.mxu0 %v216
  %1542 = vmatmul.mubr.f32.gmra.mrb[0].mxu0 %v215
  %v1543 = vpop.f32.mrb[0].mxu0
  %v1544 = vadd.f32 %v1319, %v1543
  %v1545 = vpop.f32.mrb[0].mxu0
  %1546 = vmatprep.mubr.f32.mxu0 %v229
  %1547 = vmatmul.mubr.f32.gmra.mrb[0].mxu0 %v228
  %v1548 = vpop.f32.mrb[0].mxu0
  %v1549 = vadd.f32 %v1324, %v1548
  %v1550 = vpop.f32.mrb[0].mxu0
  %1551 = vmatprep.mubr.f32.mxu0 %v242
  %1552 = vmatmul.mubr.f32.gmra.mrb[0].mxu0 %v241
  %v1553 = vpop.f32.mrb[0].mxu0
  %v1554 = vadd.f32 %v1329, %v1553
  %v1555 = vpop.f32.mrb[0].mxu0
  %1556 = vmatprep.mubr.f32.mxu0 %v255
  %1557 = vmatmul.mubr.f32.gmra.mrb[0].mxu0 %v254
  %v1558 = vpop.f32.mrb[0].mxu0
  %v1559 = vadd.f32 %v1334, %v1558
  %v1560 = vpop.f32.mrb[0].mxu0
  %1561 = vmatprep.mubr.f32.mxu0 %v268
  %1562 = vmatmul.mubr.f32.gmra.mrb[0].mxu0 %v267
  %v1563 = vpop.f32.mrb[0].mxu0
  %v1564 = vadd.f32 %v1339, %v1563
  %v1565 = vpop.f32.mrb[0].mxu0
  %1566 = vmatprep.mubr.f32.mxu0 %v281
  %1567 = vmatmul.mubr.f32.gmra.mrb[0].mxu0 %v280
  %v1568 = vpop.f32.mrb[0].mxu0
  %v1569 = vadd.f32 %v1344, %v1568
  %v1570 = vpop.f32.mrb[0].mxu0
  %1571 = vmatprep.mubr.f32.mxu0 %v294
  %1572 = vmatmul.mubr.f32.gmra.mrb[0].mxu0 %v293
  %v1573 = vpop.f32.mrb[0].mxu0
  %v1574 = vadd.f32 %v1349, %v1573
  %v1575 = vpop.f32.mrb[0].mxu0
  %1576 = vmatprep.mubr.f32.mxu0 %v307
  %1577 = vmatmul.mubr.f32.gmra.mrb[0].mxu0 %v306
  %v1578 = vpop.f32.mrb[0].mxu0
  %v1579 = vadd.f32 %v1354, %v1578
  %v1580 = vpop.f32.mrb[0].mxu0
  %1581 = vmatprep.mubr.f32.mxu0 %v320
  %1582 = vmatmul.mubr.f32.gmra.mrb[0].mxu0 %v319
  %v1583 = vpop.f32.mrb[0].mxu0
  %v1584 = vadd.f32 %v1359, %v1583
  %v1585 = vpop.f32.mrb[0].mxu0
  %1586 = vmatprep.mubr.f32.mxu0 %v333
  %1587 = vmatmul.mubr.f32.gmra.mrb[0].mxu0 %v332
  %v1588 = vpop.f32.mrb[0].mxu0
  %v1589 = vadd.f32 %v1364, %v1588
  %v1590 = vpop.f32.mrb[0].mxu0
  %1591 = vmatprep.mubr.f32.mxu0 %v346
  %1592 = vmatmul.mubr.f32.gmra.mrb[0].mxu0 %v345
  %v1593 = vpop.f32.mrb[0].mxu0
  %v1594 = vadd.f32 %v1369, %v1593
  %v1595 = vpop.f32.mrb[0].mxu0
  %1596 = vmatprep.mubr.f32.mxu0 %v359
  %1597 = vmatmul.mubr.f32.gmra.mrb[0].mxu0 %v358
  %v1598 = vpop.f32.mrb[0].mxu0
  %v1599 = vadd.f32 %v1374, %v1598
  %v1600 = vpop.f32.mrb[0].mxu0
  %1601 = vmatprep.mubr.f32.mxu0 %v372
  %1602 = vmatmul.mubr.f32.gmra.mrb[0].mxu0 %v371
  %v1603 = vpop.f32.mrb[0].mxu0
  %v1604 = vadd.f32 %v1379, %v1603
  %v1605 = vpop.f32.mrb[0].mxu0
  %1606 = vmatprep.mubr.f32.mxu0 %v385
  %1607 = vmatmul.mubr.f32.gmra.mrb[0].mxu0 %v384
  %v1608 = vpop.f32.mrb[0].mxu0
  %v1609 = vadd.f32 %v1384, %v1608
  %v1610 = vpop.f32.mrb[0].mxu0
  %1611 = vmatprep.mubr.f32.mxu0 %v398
  %1612 = vmatmul.mubr.f32.gmra.mrb[0].mxu0 %v397
  %v1613 = vpop.f32.mrb[0].mxu0
  %v1614 = vadd.f32 %v1389, %v1613
  %v1615 = vpop.f32.mrb[0].mxu0
  %1616 = vmatprep.mubr.f32.mxu0 %v411
  %1617 = vmatmul.mubr.f32.gmra.mrb[0].mxu0 %v410
  %v1618 = vpop.f32.mrb[0].mxu0
  %v1619 = vadd.f32 %v1394, %v1618
  %v1620 = vpop.f32.mrb[0].mxu0
  %1621 = vmatprep.mubr.f32.mxu0 %v424
  %1622 = vmatmul.mubr.f32.gmra.mrb[0].mxu0 %v423
  %v1623 = vpop.f32.mrb[0].mxu0
  %v1624 = vadd.f32 %v1399, %v1623
  %v1625 = vpop.f32.mrb[0].mxu0
  %1626 = vdwg.mxu0
  %1627 = vmatprep.subr.mxu0 0.0
  %1628 = vmatpush1.msra.mxu0 %v558
  %1629 = vmatprep.subr.mxu0 0.0
  %1630 = vmatpush1.msra.mxu0 %v559
  %1631 = vmatprep.subr.mxu0 0.0
  %1632 = vmatpush1.msra.mxu0 %v560
  %1633 = vmatprep.subr.mxu0 0.0
  %1634 = vmatpush1.msra.mxu0 %v561
  %1635 = vmatprep.subr.mxu0 0.0
  %1636 = vmatpush1.msra.mxu0 %v562
  %1637 = vmatprep.subr.mxu0 0.0
  %1638 = vmatpush1.msra.mxu0 %v563
  %1639 = vmatprep.subr.mxu0 0.0
  %1640 = vmatpush1.msra.mxu0 %v564
  %1641 = vmatprep.subr.mxu0 0.0
  %1642 = vmatpush1.msra.mxu0 %v565
  %1643 = vmatprep.subr.mxu0 0.0
  %1644 = vmatpush1.msra.mxu0 %v566
  %1645 = vmatprep.subr.mxu0 0.0
  %1646 = vmatpush1.msra.mxu0 %v567
  %1647 = vmatprep.subr.mxu0 0.0
  %1648 = vmatpush1.msra.mxu0 %v568
  %1649 = vmatprep.subr.mxu0 0.0
  %1650 = vmatpush1.msra.mxu0 %v569
  %1651 = vmatprep.subr.mxu0 0.0
  %1652 = vmatpush1.msra.mxu0 %v570
  %1653 = vmatprep.subr.mxu0 0.0
  %1654 = vmatpush1.msra.mxu0 %v571
  %1655 = vmatprep.subr.mxu0 0.0
  %1656 = vmatpush1.msra.mxu0 %v572
  %1657 = vmatprep.subr.mxu0 0.0
  %1658 = vmatpush1.msra.mxu0 %v573
  %1659 = vmatprep.subr.mxu0 0.0
  %1660 = vmatpush1.msra.mxu0 %v574
  %1661 = vmatprep.subr.mxu0 0.0
  %1662 = vmatpush1.msra.mxu0 %v575
  %1663 = vmatprep.subr.mxu0 0.0
  %1664 = vmatpush1.msra.mxu0 %v576
  %1665 = vmatprep.subr.mxu0 0.0
  %1666 = vmatpush1.msra.mxu0 %v577
  %1667 = vmatprep.subr.mxu0 0.0
  %1668 = vmatpush1.msra.mxu0 %v578
  %1669 = vmatprep.subr.mxu0 0.0
  %1670 = vmatpush1.msra.mxu0 %v579
  %1671 = vmatprep.subr.mxu0 0.0
  %1672 = vmatpush1.msra.mxu0 %v580
  %1673 = vmatprep.subr.mxu0 0.0
  %1674 = vmatpush1.msra.mxu0 %v581
  %1675 = vmatprep.subr.mxu0 0.0
  %1676 = vmatpush1.msra.mxu0 %v582
  %1677 = vmatprep.subr.mxu0 0.0
  %1678 = vmatpush1.msra.mxu0 %v583
  %1679 = vmatprep.subr.mxu0 0.0
  %1680 = vmatpush1.msra.mxu0 %v584
  %1681 = vmatprep.subr.mxu0 0.0
  %1682 = vmatpush1.msra.mxu0 %v585
  %1683 = vmatprep.subr.mxu0 0.0
  %1684 = vmatpush1.msra.mxu0 %v586
  %1685 = vmatprep.subr.mxu0 0.0
  %1686 = vmatpush1.msra.mxu0 %v587
  %1687 = vmatprep.subr.mxu0 0.0
  %1688 = vmatpush1.msra.mxu0 %v588
  %1689 = vmatprep.subr.mxu0 0.0
  %1690 = vmatpush1.msra.mxu0 %v589
  %1691 = vmatprep.mubr.f32.mxu0 %v23
  %1692 = vmatmul.mubr.f32.gmra.mrb[0].mxu0 %v22
  %v1693 = vpop.f32.mrb[0].mxu0
  %v1694 = vadd.f32 %v1469, %v1693
  %v1695 = vpop.f32.mrb[0].mxu0
  %1696 = vmatprep.mubr.f32.mxu0 %v36
  %1697 = vmatmul.mubr.f32.gmra.mrb[0].mxu0 %v35
  %v1698 = vpop.f32.mrb[0].mxu0
  %v1699 = vadd.f32 %v1474, %v1698
  %v1700 = vpop.f32.mrb[0].mxu0
  %1701 = vmatprep.mubr.f32.mxu0 %v49
  %1702 = vmatmul.mubr.f32.gmra.mrb[0].mxu0 %v48
  %v1703 = vpop.f32.mrb[0].mxu0
  %v1704 = vadd.f32 %v1479, %v1703
  %v1705 = vpop.f32.mrb[0].mxu0
  %1706 = vmatprep.mubr.f32.mxu0 %v62
  %1707 = vmatmul.mubr.f32.gmra.mrb[0].mxu0 %v61
  %v1708 = vpop.f32.mrb[0].mxu0
  %v1709 = vadd.f32 %v1484, %v1708
  %v1710 = vpop.f32.mrb[0].mxu0
  %1711 = vmatprep.mubr.f32.mxu0 %v75
  %1712 = vmatmul.mubr.f32.gmra.mrb[0].mxu0 %v74
  %v1713 = vpop.f32.mrb[0].mxu0
  %v1714 = vadd.f32 %v1489, %v1713
  %v1715 = vpop.f32.mrb[0].mxu0
  %1716 = vmatprep.mubr.f32.mxu0 %v88
  %1717 = vmatmul.mubr.f32.gmra.mrb[0].mxu0 %v87
  %v1718 = vpop.f32.mrb[0].mxu0
  %v1719 = vadd.f32 %v1494, %v1718
  %v1720 = vpop.f32.mrb[0].mxu0
  %1721 = vmatprep.mubr.f32.mxu0 %v101
  %1722 = vmatmul.mubr.f32.gmra.mrb[0].mxu0 %v100
  %v1723 = vpop.f32.mrb[0].mxu0
  %v1724 = vadd.f32 %v1499, %v1723
  %v1725 = vpop.f32.mrb[0].mxu0
  %1726 = vmatprep.mubr.f32.mxu0 %v114
  %1727 = vmatmul.mubr.f32.gmra.mrb[0].mxu0 %v113
  %v1728 = vpop.f32.mrb[0].mxu0
  %v1729 = vadd.f32 %v1504, %v1728
  %v1730 = vpop.f32.mrb[0].mxu0
  %1731 = vmatprep.mubr.f32.mxu0 %v127
  %1732 = vmatmul.mubr.f32.gmra.mrb[0].mxu0 %v126
  %v1733 = vpop.f32.mrb[0].mxu0
  %v1734 = vadd.f32 %v1509, %v1733
  %v1735 = vpop.f32.mrb[0].mxu0
  %1736 = vmatprep.mubr.f32.mxu0 %v140
  %1737 = vmatmul.mubr.f32.gmra.mrb[0].mxu0 %v139
  %v1738 = vpop.f32.mrb[0].mxu0
  %v1739 = vadd.f32 %v1514, %v1738
  %v1740 = vpop.f32.mrb[0].mxu0
  %1741 = vmatprep.mubr.f32.mxu0 %v153
  %1742 = vmatmul.mubr.f32.gmra.mrb[0].mxu0 %v152
  %v1743 = vpop.f32.mrb[0].mxu0
  %v1744 = vadd.f32 %v1519, %v1743
  %v1745 = vpop.f32.mrb[0].mxu0
  %1746 = vmatprep.mubr.f32.mxu0 %v166
  %1747 = vmatmul.mubr.f32.gmra.mrb[0].mxu0 %v165
  %v1748 = vpop.f32.mrb[0].mxu0
  %v1749 = vadd.f32 %v1524, %v1748
  %v1750 = vpop.f32.mrb[0].mxu0
  %1751 = vmatprep.mubr.f32.mxu0 %v179
  %1752 = vmatmul.mubr.f32.gmra.mrb[0].mxu0 %v178
  %v1753 = vpop.f32.mrb[0].mxu0
  %v1754 = vadd.f32 %v1529, %v1753
  %v1755 = vpop.f32.mrb[0].mxu0
  %1756 = vmatprep.mubr.f32.mxu0 %v192
  %1757 = vmatmul.mubr.f32.gmra.mrb[0].mxu0 %v191
  %v1758 = vpop.f32.mrb[0].mxu0
  %v1759 = vadd.f32 %v1534, %v1758
  %v1760 = vpop.f32.mrb[0].mxu0
  %1761 = vmatprep.mubr.f32.mxu0 %v205
  %1762 = vmatmul.mubr.f32.gmra.mrb[0].mxu0 %v204
  %v1763 = vpop.f32.mrb[0].mxu0
  %v1764 = vadd.f32 %v1539, %v1763
  %v1765 = vpop.f32.mrb[0].mxu0
  %1766 = vmatprep.mubr.f32.mxu0 %v218
  %1767 = vmatmul.mubr.f32.gmra.mrb[0].mxu0 %v217
  %v1768 = vpop.f32.mrb[0].mxu0
  %v1769 = vadd.f32 %v1544, %v1768
  %v1770 = vpop.f32.mrb[0].mxu0
  %1771 = vmatprep.mubr.f32.mxu0 %v231
  %1772 = vmatmul.mubr.f32.gmra.mrb[0].mxu0 %v230
  %v1773 = vpop.f32.mrb[0].mxu0
  %v1774 = vadd.f32 %v1549, %v1773
  %v1775 = vpop.f32.mrb[0].mxu0
  %1776 = vmatprep.mubr.f32.mxu0 %v244
  %1777 = vmatmul.mubr.f32.gmra.mrb[0].mxu0 %v243
  %v1778 = vpop.f32.mrb[0].mxu0
  %v1779 = vadd.f32 %v1554, %v1778
  %v1780 = vpop.f32.mrb[0].mxu0
  %1781 = vmatprep.mubr.f32.mxu0 %v257
  %1782 = vmatmul.mubr.f32.gmra.mrb[0].mxu0 %v256
  %v1783 = vpop.f32.mrb[0].mxu0
  %v1784 = vadd.f32 %v1559, %v1783
  %v1785 = vpop.f32.mrb[0].mxu0
  %1786 = vmatprep.mubr.f32.mxu0 %v270
  %1787 = vmatmul.mubr.f32.gmra.mrb[0].mxu0 %v269
  %v1788 = vpop.f32.mrb[0].mxu0
  %v1789 = vadd.f32 %v1564, %v1788
  %v1790 = vpop.f32.mrb[0].mxu0
  %1791 = vmatprep.mubr.f32.mxu0 %v283
  %1792 = vmatmul.mubr.f32.gmra.mrb[0].mxu0 %v282
  %v1793 = vpop.f32.mrb[0].mxu0
  %v1794 = vadd.f32 %v1569, %v1793
  %v1795 = vpop.f32.mrb[0].mxu0
  %1796 = vmatprep.mubr.f32.mxu0 %v296
  %1797 = vmatmul.mubr.f32.gmra.mrb[0].mxu0 %v295
  %v1798 = vpop.f32.mrb[0].mxu0
  %v1799 = vadd.f32 %v1574, %v1798
  %v1800 = vpop.f32.mrb[0].mxu0
  %1801 = vmatprep.mubr.f32.mxu0 %v309
  %1802 = vmatmul.mubr.f32.gmra.mrb[0].mxu0 %v308
  %v1803 = vpop.f32.mrb[0].mxu0
  %v1804 = vadd.f32 %v1579, %v1803
  %v1805 = vpop.f32.mrb[0].mxu0
  %1806 = vmatprep.mubr.f32.mxu0 %v322
  %1807 = vmatmul.mubr.f32.gmra.mrb[0].mxu0 %v321
  %v1808 = vpop.f32.mrb[0].mxu0
  %v1809 = vadd.f32 %v1584, %v1808
  %v1810 = vpop.f32.mrb[0].mxu0
  %1811 = vmatprep.mubr.f32.mxu0 %v335
  %1812 = vmatmul.mubr.f32.gmra.mrb[0].mxu0 %v334
  %v1813 = vpop.f32.mrb[0].mxu0
  %v1814 = vadd.f32 %v1589, %v1813
  %v1815 = vpop.f32.mrb[0].mxu0
  %1816 = vmatprep.mubr.f32.mxu0 %v348
  %1817 = vmatmul.mubr.f32.gmra.mrb[0].mxu0 %v347
  %v1818 = vpop.f32.mrb[0].mxu0
  %v1819 = vadd.f32 %v1594, %v1818
  %v1820 = vpop.f32.mrb[0].mxu0
  %1821 = vmatprep.mubr.f32.mxu0 %v361
  %1822 = vmatmul.mubr.f32.gmra.mrb[0].mxu0 %v360
  %v1823 = vpop.f32.mrb[0].mxu0
  %v1824 = vadd.f32 %v1599, %v1823
  %v1825 = vpop.f32.mrb[0].mxu0
  %1826 = vmatprep.mubr.f32.mxu0 %v374
  %1827 = vmatmul.mubr.f32.gmra.mrb[0].mxu0 %v373
  %v1828 = vpop.f32.mrb[0].mxu0
  %v1829 = vadd.f32 %v1604, %v1828
  %v1830 = vpop.f32.mrb[0].mxu0
  %1831 = vmatprep.mubr.f32.mxu0 %v387
  %1832 = vmatmul.mubr.f32.gmra.mrb[0].mxu0 %v386
  %v1833 = vpop.f32.mrb[0].mxu0
  %v1834 = vadd.f32 %v1609, %v1833
  %v1835 = vpop.f32.mrb[0].mxu0
  %1836 = vmatprep.mubr.f32.mxu0 %v400
  %1837 = vmatmul.mubr.f32.gmra.mrb[0].mxu0 %v399
  %v1838 = vpop.f32.mrb[0].mxu0
  %v1839 = vadd.f32 %v1614, %v1838
  %v1840 = vpop.f32.mrb[0].mxu0
  %1841 = vmatprep.mubr.f32.mxu0 %v413
  %1842 = vmatmul.mubr.f32.gmra.mrb[0].mxu0 %v412
  %v1843 = vpop.f32.mrb[0].mxu0
  %v1844 = vadd.f32 %v1619, %v1843
  %v1845 = vpop.f32.mrb[0].mxu0
  %1846 = vmatprep.mubr.f32.mxu0 %v426
  %1847 = vmatmul.mubr.f32.gmra.mrb[0].mxu0 %v425
  %v1848 = vpop.f32.mrb[0].mxu0
  %v1849 = vadd.f32 %v1624, %v1848
  %v1850 = vpop.f32.mrb[0].mxu0
  %1851 = vdwg.mxu0
  %1852 = vmatprep.subr.mxu0 0.0
  %1853 = vmatpush1.msra.mxu0 %v590
  %1854 = vmatprep.subr.mxu0 0.0
  %1855 = vmatpush1.msra.mxu0 %v591
  %1856 = vmatprep.subr.mxu0 0.0
  %1857 = vmatpush1.msra.mxu0 %v592
  %1858 = vmatprep.subr.mxu0 0.0
  %1859 = vmatpush1.msra.mxu0 %v593
  %1860 = vmatprep.subr.mxu0 0.0
  %1861 = vmatpush1.msra.mxu0 %v594
  %1862 = vmatprep.subr.mxu0 0.0
  %1863 = vmatpush1.msra.mxu0 %v595
  %1864 = vmatprep.subr.mxu0 0.0
  %1865 = vmatpush1.msra.mxu0 %v596
  %1866 = vmatprep.subr.mxu0 0.0
  %1867 = vmatpush1.msra.mxu0 %v597
  %1868 = vmatprep.subr.mxu0 0.0
  %1869 = vmatpush1.msra.mxu0 %v598
  %1870 = vmatprep.subr.mxu0 0.0
  %1871 = vmatpush1.msra.mxu0 %v599
  %1872 = vmatprep.subr.mxu0 0.0
  %1873 = vmatpush1.msra.mxu0 %v600
  %1874 = vmatprep.subr.mxu0 0.0
  %1875 = vmatpush1.msra.mxu0 %v601
  %1876 = vmatprep.subr.mxu0 0.0
  %1877 = vmatpush1.msra.mxu0 %v602
  %1878 = vmatprep.subr.mxu0 0.0
  %1879 = vmatpush1.msra.mxu0 %v603
  %1880 = vmatprep.subr.mxu0 0.0
  %1881 = vmatpush1.msra.mxu0 %v604
  %1882 = vmatprep.subr.mxu0 0.0
  %1883 = vmatpush1.msra.mxu0 %v605
  %1884 = vmatprep.subr.mxu0 0.0
  %1885 = vmatpush1.msra.mxu0 %v606
  %1886 = vmatprep.subr.mxu0 0.0
  %1887 = vmatpush1.msra.mxu0 %v607
  %1888 = vmatprep.subr.mxu0 0.0
  %1889 = vmatpush1.msra.mxu0 %v608
  %1890 = vmatprep.subr.mxu0 0.0
  %1891 = vmatpush1.msra.mxu0 %v609
  %1892 = vmatprep.subr.mxu0 0.0
  %1893 = vmatpush1.msra.mxu0 %v610
  %1894 = vmatprep.subr.mxu0 0.0
  %1895 = vmatpush1.msra.mxu0 %v611
  %1896 = vmatprep.subr.mxu0 0.0
  %1897 = vmatpush1.msra.mxu0 %v612
  %1898 = vmatprep.subr.mxu0 0.0
  %1899 = vmatpush1.msra.mxu0 %v613
  %1900 = vmatprep.subr.mxu0 0.0
  %1901 = vmatpush1.msra.mxu0 %v614
  %1902 = vmatprep.subr.mxu0 0.0
  %1903 = vmatpush1.msra.mxu0 %v615
  %1904 = vmatprep.subr.mxu0 0.0
  %1905 = vmatpush1.msra.mxu0 %v616
  %1906 = vmatprep.subr.mxu0 0.0
  %1907 = vmatpush1.msra.mxu0 %v617
  %1908 = vmatprep.subr.mxu0 0.0
  %1909 = vmatpush1.msra.mxu0 %v618
  %1910 = vmatprep.subr.mxu0 0.0
  %1911 = vmatpush1.msra.mxu0 %v619
  %1912 = vmatprep.subr.mxu0 0.0
  %1913 = vmatpush1.msra.mxu0 %v620
  %1914 = vmatprep.subr.mxu0 0.0
  %1915 = vmatpush1.msra.mxu0 %v621
  %1916 = vmatprep.mubr.f32.mxu0 %v25
  %1917 = vmatmul.mubr.f32.gmra.mrb[0].mxu0 %v24
  %v1918 = vpop.f32.mrb[0].mxu0
  %v1919 = vadd.f32 %v1694, %v1918
  %v1920 = vpop.f32.mrb[0].mxu0
  %1921 = vmatprep.mubr.f32.mxu0 %v38
  %1922 = vmatmul.mubr.f32.gmra.mrb[0].mxu0 %v37
  %v1923 = vpop.f32.mrb[0].mxu0
  %v1924 = vadd.f32 %v1699, %v1923
  %v1925 = vpop.f32.mrb[0].mxu0
  %1926 = vmatprep.mubr.f32.mxu0 %v51
  %1927 = vmatmul.mubr.f32.gmra.mrb[0].mxu0 %v50
  %v1928 = vpop.f32.mrb[0].mxu0
  %v1929 = vadd.f32 %v1704, %v1928
  %v1930 = vpop.f32.mrb[0].mxu0
  %1931 = vmatprep.mubr.f32.mxu0 %v64
  %1932 = vmatmul.mubr.f32.gmra.mrb[0].mxu0 %v63
  %v1933 = vpop.f32.mrb[0].mxu0
  %v1934 = vadd.f32 %v1709, %v1933
  %v1935 = vpop.f32.mrb[0].mxu0
  %1936 = vmatprep.mubr.f32.mxu0 %v77
  %1937 = vmatmul.mubr.f32.gmra.mrb[0].mxu0 %v76
  %v1938 = vpop.f32.mrb[0].mxu0
  %v1939 = vadd.f32 %v1714, %v1938
  %v1940 = vpop.f32.mrb[0].mxu0
  %1941 = vmatprep.mubr.f32.mxu0 %v90
  %1942 = vmatmul.mubr.f32.gmra.mrb[0].mxu0 %v89
  %v1943 = vpop.f32.mrb[0].mxu0
  %v1944 = vadd.f32 %v1719, %v1943
  %v1945 = vpop.f32.mrb[0].mxu0
  %1946 = vmatprep.mubr.f32.mxu0 %v103
  %1947 = vmatmul.mubr.f32.gmra.mrb[0].mxu0 %v102
  %v1948 = vpop.f32.mrb[0].mxu0
  %v1949 = vadd.f32 %v1724, %v1948
  %v1950 = vpop.f32.mrb[0].mxu0
  %1951 = vmatprep.mubr.f32.mxu0 %v116
  %1952 = vmatmul.mubr.f32.gmra.mrb[0].mxu0 %v115
  %v1953 = vpop.f32.mrb[0].mxu0
  %v1954 = vadd.f32 %v1729, %v1953
  %v1955 = vpop.f32.mrb[0].mxu0
  %1956 = vmatprep.mubr.f32.mxu0 %v129
  %1957 = vmatmul.mubr.f32.gmra.mrb[0].mxu0 %v128
  %v1958 = vpop.f32.mrb[0].mxu0
  %v1959 = vadd.f32 %v1734, %v1958
  %v1960 = vpop.f32.mrb[0].mxu0
  %1961 = vmatprep.mubr.f32.mxu0 %v142
  %1962 = vmatmul.mubr.f32.gmra.mrb[0].mxu0 %v141
  %v1963 = vpop.f32.mrb[0].mxu0
  %v1964 = vadd.f32 %v1739, %v1963
  %v1965 = vpop.f32.mrb[0].mxu0
  %1966 = vmatprep.mubr.f32.mxu0 %v155
  %1967 = vmatmul.mubr.f32.gmra.mrb[0].mxu0 %v154
  %v1968 = vpop.f32.mrb[0].mxu0
  %v1969 = vadd.f32 %v1744, %v1968
  %v1970 = vpop.f32.mrb[0].mxu0
  %1971 = vmatprep.mubr.f32.mxu0 %v168
  %1972 = vmatmul.mubr.f32.gmra.mrb[0].mxu0 %v167
  %v1973 = vpop.f32.mrb[0].mxu0
  %v1974 = vadd.f32 %v1749, %v1973
  %v1975 = vpop.f32.mrb[0].mxu0
  %1976 = vmatprep.mubr.f32.mxu0 %v181
  %1977 = vmatmul.mubr.f32.gmra.mrb[0].mxu0 %v180
  %v1978 = vpop.f32.mrb[0].mxu0
  %v1979 = vadd.f32 %v1754, %v1978
  %v1980 = vpop.f32.mrb[0].mxu0
  %1981 = vmatprep.mubr.f32.mxu0 %v194
  %1982 = vmatmul.mubr.f32.gmra.mrb[0].mxu0 %v193
  %v1983 = vpop.f32.mrb[0].mxu0
  %v1984 = vadd.f32 %v1759, %v1983
  %v1985 = vpop.f32.mrb[0].mxu0
  %1986 = vmatprep.mubr.f32.mxu0 %v207
  %1987 = vmatmul.mubr.f32.gmra.mrb[0].mxu0 %v206
  %v1988 = vpop.f32.mrb[0].mxu0
  %v1989 = vadd.f32 %v1764, %v1988
  %v1990 = vpop.f32.mrb[0].mxu0
  %1991 = vmatprep.mubr.f32.mxu0 %v220
  %1992 = vmatmul.mubr.f32.gmra.mrb[0].mxu0 %v219
  %v1993 = vpop.f32.mrb[0].mxu0
  %v1994 = vadd.f32 %v1769, %v1993
  %v1995 = vpop.f32.mrb[0].mxu0
  %1996 = vmatprep.mubr.f32.mxu0 %v233
  %1997 = vmatmul.mubr.f32.gmra.mrb[0].mxu0 %v232
  %v1998 = vpop.f32.mrb[0].mxu0
  %v1999 = vadd.f32 %v1774, %v1998
  %v2000 = vpop.f32.mrb[0].mxu0
  %2001 = vmatprep.mubr.f32.mxu0 %v246
  %2002 = vmatmul.mubr.f32.gmra.mrb[0].mxu0 %v245
  %v2003 = vpop.f32.mrb[0].mxu0
  %v2004 = vadd.f32 %v1779, %v2003
  %v2005 = vpop.f32.mrb[0].mxu0
  %2006 = vmatprep.mubr.f32.mxu0 %v259
  %2007 = vmatmul.mubr.f32.gmra.mrb[0].mxu0 %v258
  %v2008 = vpop.f32.mrb[0].mxu0
  %v2009 = vadd.f32 %v1784, %v2008
  %v2010 = vpop.f32.mrb[0].mxu0
  %2011 = vmatprep.mubr.f32.mxu0 %v272
  %2012 = vmatmul.mubr.f32.gmra.mrb[0].mxu0 %v271
  %v2013 = vpop.f32.mrb[0].mxu0
  %v2014 = vadd.f32 %v1789, %v2013
  %v2015 = vpop.f32.mrb[0].mxu0
  %2016 = vmatprep.mubr.f32.mxu0 %v285
  %2017 = vmatmul.mubr.f32.gmra.mrb[0].mxu0 %v284
  %v2018 = vpop.f32.mrb[0].mxu0
  %v2019 = vadd.f32 %v1794, %v2018
  %v2020 = vpop.f32.mrb[0].mxu0
  %2021 = vmatprep.mubr.f32.mxu0 %v298
  %2022 = vmatmul.mubr.f32.gmra.mrb[0].mxu0 %v297
  %v2023 = vpop.f32.mrb[0].mxu0
  %v2024 = vadd.f32 %v1799, %v2023
  %v2025 = vpop.f32.mrb[0].mxu0
  %2026 = vmatprep.mubr.f32.mxu0 %v311
  %2027 = vmatmul.mubr.f32.gmra.mrb[0].mxu0 %v310
  %v2028 = vpop.f32.mrb[0].mxu0
  %v2029 = vadd.f32 %v1804, %v2028
  %v2030 = vpop.f32.mrb[0].mxu0
  %2031 = vmatprep.mubr.f32.mxu0 %v324
  %2032 = vmatmul.mubr.f32.gmra.mrb[0].mxu0 %v323
  %v2033 = vpop.f32.mrb[0].mxu0
  %v2034 = vadd.f32 %v1809, %v2033
  %v2035 = vpop.f32.mrb[0].mxu0
  %2036 = vmatprep.mubr.f32.mxu0 %v337
  %2037 = vmatmul.mubr.f32.gmra.mrb[0].mxu0 %v336
  %v2038 = vpop.f32.mrb[0].mxu0
  %v2039 = vadd.f32 %v1814, %v2038
  %v2040 = vpop.f32.mrb[0].mxu0
  %2041 = vmatprep.mubr.f32.mxu0 %v350
  %2042 = vmatmul.mubr.f32.gmra.mrb[0].mxu0 %v349
  %v2043 = vpop.f32.mrb[0].mxu0
  %v2044 = vadd.f32 %v1819, %v2043
  %v2045 = vpop.f32.mrb[0].mxu0
  %2046 = vmatprep.mubr.f32.mxu0 %v363
  %2047 = vmatmul.mubr.f32.gmra.mrb[0].mxu0 %v362
  %v2048 = vpop.f32.mrb[0].mxu0
  %v2049 = vadd.f32 %v1824, %v2048
  %v2050 = vpop.f32.mrb[0].mxu0
  %2051 = vmatprep.mubr.f32.mxu0 %v376
  %2052 = vmatmul.mubr.f32.gmra.mrb[0].mxu0 %v375
  %v2053 = vpop.f32.mrb[0].mxu0
  %v2054 = vadd.f32 %v1829, %v2053
  %v2055 = vpop.f32.mrb[0].mxu0
  %2056 = vmatprep.mubr.f32.mxu0 %v389
  %2057 = vmatmul.mubr.f32.gmra.mrb[0].mxu0 %v388
  %v2058 = vpop.f32.mrb[0].mxu0
  %v2059 = vadd.f32 %v1834, %v2058
  %v2060 = vpop.f32.mrb[0].mxu0
  %2061 = vmatprep.mubr.f32.mxu0 %v402
  %2062 = vmatmul.mubr.f32.gmra.mrb[0].mxu0 %v401
  %v2063 = vpop.f32.mrb[0].mxu0
  %v2064 = vadd.f32 %v1839, %v2063
  %v2065 = vpop.f32.mrb[0].mxu0
  %2066 = vmatprep.mubr.f32.mxu0 %v415
  %2067 = vmatmul.mubr.f32.gmra.mrb[0].mxu0 %v414
  %v2068 = vpop.f32.mrb[0].mxu0
  %v2069 = vadd.f32 %v1844, %v2068
  %v2070 = vpop.f32.mrb[0].mxu0
  %2071 = vmatprep.mubr.f32.mxu0 %v428
  %2072 = vmatmul.mubr.f32.gmra.mrb[0].mxu0 %v427
  %v2073 = vpop.f32.mrb[0].mxu0
  %v2074 = vadd.f32 %v1849, %v2073
  %v2075 = vpop.f32.mrb[0].mxu0
  %2076 = vdwg.mxu0
  %2077 = vmatprep.subr.mxu0 0.0
  %2078 = vmatpush1.msra.mxu0 %v622
  %2079 = vmatprep.subr.mxu0 0.0
  %2080 = vmatpush1.msra.mxu0 %v623
  %2081 = vmatprep.subr.mxu0 0.0
  %2082 = vmatpush1.msra.mxu0 %v624
  %2083 = vmatprep.subr.mxu0 0.0
  %2084 = vmatpush1.msra.mxu0 %v625
  %2085 = vmatprep.subr.mxu0 0.0
  %2086 = vmatpush1.msra.mxu0 %v626
  %2087 = vmatprep.subr.mxu0 0.0
  %2088 = vmatpush1.msra.mxu0 %v627
  %2089 = vmatprep.subr.mxu0 0.0
  %2090 = vmatpush1.msra.mxu0 %v628
  %2091 = vmatprep.subr.mxu0 0.0
  %2092 = vmatpush1.msra.mxu0 %v629
  %2093 = vmatprep.subr.mxu0 0.0
  %2094 = vmatpush1.msra.mxu0 0.0
  %2095 = vmatprep.subr.mxu0 0.0
  %2096 = vmatpush1.msra.mxu0 0.0
  %2097 = vmatprep.subr.mxu0 0.0
  %2098 = vmatpush1.msra.mxu0 0.0
  %2099 = vmatprep.subr.mxu0 0.0
  %2100 = vmatpush1.msra.mxu0 0.0
  %2101 = vmatprep.subr.mxu0 0.0
  %2102 = vmatpush1.msra.mxu0 0.0
  %2103 = vmatprep.subr.mxu0 0.0
  %2104 = vmatpush1.msra.mxu0 0.0
  %2105 = vmatprep.subr.mxu0 0.0
  %2106 = vmatpush1.msra.mxu0 0.0
  %2107 = vmatprep.subr.mxu0 0.0
  %2108 = vmatpush1.msra.mxu0 0.0
  %2109 = vmatprep.subr.mxu0 0.0
  %2110 = vmatpush1.msra.mxu0 0.0
  %2111 = vmatprep.subr.mxu0 0.0
  %2112 = vmatpush1.msra.mxu0 0.0
  %2113 = vmatprep.subr.mxu0 0.0
  %2114 = vmatpush1.msra.mxu0 0.0
  %2115 = vmatprep.subr.mxu0 0.0
  %2116 = vmatpush1.msra.mxu0 0.0
  %2117 = vmatprep.subr.mxu0 0.0
  %2118 = vmatpush1.msra.mxu0 0.0
  %2119 = vmatprep.subr.mxu0 0.0
  %2120 = vmatpush1.msra.mxu0 0.0
  %2121 = vmatprep.subr.mxu0 0.0
  %2122 = vmatpush1.msra.mxu0 0.0
  %2123 = vmatprep.subr.mxu0 0.0
  %2124 = vmatpush1.msra.mxu0 0.0
  %2125 = vmatprep.subr.mxu0 0.0
  %2126 = vmatpush1.msra.mxu0 0.0
  %2127 = vmatprep.subr.mxu0 0.0
  %2128 = vmatpush1.msra.mxu0 0.0
  %2129 = vmatprep.subr.mxu0 0.0
  %2130 = vmatpush1.msra.mxu0 0.0
  %2131 = vmatprep.subr.mxu0 0.0
  %2132 = vmatpush1.msra.mxu0 0.0
  %2133 = vmatprep.subr.mxu0 0.0
  %2134 = vmatpush1.msra.mxu0 0.0
  %2135 = vmatprep.subr.mxu0 0.0
  %2136 = vmatpush1.msra.mxu0 0.0
  %2137 = vmatprep.subr.mxu0 0.0
  %2138 = vmatpush1.msra.mxu0 0.0
  %2139 = vmatprep.subr.mxu0 0.0
  %2140 = vmatpush1.msra.mxu0 0.0
  %2141 = vmatprep.mubr.f32.mxu0 0.0
  %2142 = vmatmul.mubr.f32.gmra.mrb[0].mxu0 %v632
  %v2143 = vpop.f32.mrb[0].mxu0
  %v2144 = vadd.f32 %v1919, %v2143
  %v2145 = vpop.f32.mrb[0].mxu0
  %2146 = vmatprep.mubr.f32.mxu0 0.0
  %2147 = vmatmul.mubr.f32.gmra.mrb[0].mxu0 %v635
  %v2148 = vpop.f32.mrb[0].mxu0
  %v2149 = vadd.f32 %v1924, %v2148
  %v2150 = vpop.f32.mrb[0].mxu0
  %2151 = vmatprep.mubr.f32.mxu0 0.0
  %2152 = vmatmul.mubr.f32.gmra.mrb[0].mxu0 %v638
  %v2153 = vpop.f32.mrb[0].mxu0
  %v2154 = vadd.f32 %v1929, %v2153
  %v2155 = vpop.f32.mrb[0].mxu0
  %2156 = vmatprep.mubr.f32.mxu0 0.0
  %2157 = vmatmul.mubr.f32.gmra.mrb[0].mxu0 %v641
  %v2158 = vpop.f32.mrb[0].mxu0
  %v2159 = vadd.f32 %v1934, %v2158
  %v2160 = vpop.f32.mrb[0].mxu0
  %2161 = vmatprep.mubr.f32.mxu0 0.0
  %2162 = vmatmul.mubr.f32.gmra.mrb[0].mxu0 %v644
  %v2163 = vpop.f32.mrb[0].mxu0
  %v2164 = vadd.f32 %v1939, %v2163
  %v2165 = vpop.f32.mrb[0].mxu0
  %2166 = vmatprep.mubr.f32.mxu0 0.0
  %2167 = vmatmul.mubr.f32.gmra.mrb[0].mxu0 %v647
  %v2168 = vpop.f32.mrb[0].mxu0
  %v2169 = vadd.f32 %v1944, %v2168
  %v2170 = vpop.f32.mrb[0].mxu0
  %2171 = vmatprep.mubr.f32.mxu0 0.0
  %2172 = vmatmul.mubr.f32.gmra.mrb[0].mxu0 %v650
  %v2173 = vpop.f32.mrb[0].mxu0
  %v2174 = vadd.f32 %v1949, %v2173
  %v2175 = vpop.f32.mrb[0].mxu0
  %2176 = vmatprep.mubr.f32.mxu0 0.0
  %2177 = vmatmul.mubr.f32.gmra.mrb[0].mxu0 %v653
  %v2178 = vpop.f32.mrb[0].mxu0
  %v2179 = vadd.f32 %v1954, %v2178
  %v2180 = vpop.f32.mrb[0].mxu0
  %2181 = vmatprep.mubr.f32.mxu0 0.0
  %2182 = vmatmul.mubr.f32.gmra.mrb[0].mxu0 %v656
  %v2183 = vpop.f32.mrb[0].mxu0
  %v2184 = vadd.f32 %v1959, %v2183
  %v2185 = vpop.f32.mrb[0].mxu0
  %2186 = vmatprep.mubr.f32.mxu0 0.0
  %2187 = vmatmul.mubr.f32.gmra.mrb[0].mxu0 %v659
  %v2188 = vpop.f32.mrb[0].mxu0
  %v2189 = vadd.f32 %v1964, %v2188
  %v2190 = vpop.f32.mrb[0].mxu0
  %2191 = vmatprep.mubr.f32.mxu0 0.0
  %2192 = vmatmul.mubr.f32.gmra.mrb[0].mxu0 %v662
  %v2193 = vpop.f32.mrb[0].mxu0
  %v2194 = vadd.f32 %v1969, %v2193
  %v2195 = vpop.f32.mrb[0].mxu0
  %2196 = vmatprep.mubr.f32.mxu0 0.0
  %2197 = vmatmul.mubr.f32.gmra.mrb[0].mxu0 %v665
  %v2198 = vpop.f32.mrb[0].mxu0
  %v2199 = vadd.f32 %v1974, %v2198
  %v2200 = vpop.f32.mrb[0].mxu0
  %2201 = vmatprep.mubr.f32.mxu0 0.0
  %2202 = vmatmul.mubr.f32.gmra.mrb[0].mxu0 %v668
  %v2203 = vpop.f32.mrb[0].mxu0
  %v2204 = vadd.f32 %v1979, %v2203
  %v2205 = vpop.f32.mrb[0].mxu0
  %2206 = vmatprep.mubr.f32.mxu0 0.0
  %2207 = vmatmul.mubr.f32.gmra.mrb[0].mxu0 %v671
  %v2208 = vpop.f32.mrb[0].mxu0
  %v2209 = vadd.f32 %v1984, %v2208
  %v2210 = vpop.f32.mrb[0].mxu0
  %2211 = vmatprep.mubr.f32.mxu0 0.0
  %2212 = vmatmul.mubr.f32.gmra.mrb[0].mxu0 %v674
  %v2213 = vpop.f32.mrb[0].mxu0
  %v2214 = vadd.f32 %v1989, %v2213
  %v2215 = vpop.f32.mrb[0].mxu0
  %2216 = vmatprep.mubr.f32.mxu0 0.0
  %2217 = vmatmul.mubr.f32.gmra.mrb[0].mxu0 %v677
  %v2218 = vpop.f32.mrb[0].mxu0
  %v2219 = vadd.f32 %v1994, %v2218
  %v2220 = vpop.f32.mrb[0].mxu0
  %2221 = vmatprep.mubr.f32.mxu0 0.0
  %2222 = vmatmul.mubr.f32.gmra.mrb[0].mxu0 %v680
  %v2223 = vpop.f32.mrb[0].mxu0
  %v2224 = vadd.f32 %v1999, %v2223
  %v2225 = vpop.f32.mrb[0].mxu0
  %2226 = vmatprep.mubr.f32.mxu0 0.0
  %2227 = vmatmul.mubr.f32.gmra.mrb[0].mxu0 %v683
  %v2228 = vpop.f32.mrb[0].mxu0
  %v2229 = vadd.f32 %v2004, %v2228
  %v2230 = vpop.f32.mrb[0].mxu0
  %2231 = vmatprep.mubr.f32.mxu0 0.0
  %2232 = vmatmul.mubr.f32.gmra.mrb[0].mxu0 %v686
  %v2233 = vpop.f32.mrb[0].mxu0
  %v2234 = vadd.f32 %v2009, %v2233
  %v2235 = vpop.f32.mrb[0].mxu0
  %2236 = vmatprep.mubr.f32.mxu0 0.0
  %2237 = vmatmul.mubr.f32.gmra.mrb[0].mxu0 %v689
  %v2238 = vpop.f32.mrb[0].mxu0
  %v2239 = vadd.f32 %v2014, %v2238
  %v2240 = vpop.f32.mrb[0].mxu0
  %2241 = vmatprep.mubr.f32.mxu0 0.0
  %2242 = vmatmul.mubr.f32.gmra.mrb[0].mxu0 %v692
  %v2243 = vpop.f32.mrb[0].mxu0
  %v2244 = vadd.f32 %v2019, %v2243
  %v2245 = vpop.f32.mrb[0].mxu0
  %2246 = vmatprep.mubr.f32.mxu0 0.0
  %2247 = vmatmul.mubr.f32.gmra.mrb[0].mxu0 %v695
  %v2248 = vpop.f32.mrb[0].mxu0
  %v2249 = vadd.f32 %v2024, %v2248
  %v2250 = vpop.f32.mrb[0].mxu0
  %2251 = vmatprep.mubr.f32.mxu0 0.0
  %2252 = vmatmul.mubr.f32.gmra.mrb[0].mxu0 %v698
  %v2253 = vpop.f32.mrb[0].mxu0
  %v2254 = vadd.f32 %v2029, %v2253
  %v2255 = vpop.f32.mrb[0].mxu0
  %2256 = vmatprep.mubr.f32.mxu0 0.0
  %2257 = vmatmul.mubr.f32.gmra.mrb[0].mxu0 %v701
  %v2258 = vpop.f32.mrb[0].mxu0
  %v2259 = vadd.f32 %v2034, %v2258
  %v2260 = vpop.f32.mrb[0].mxu0
  %2261 = vmatprep.mubr.f32.mxu0 0.0
  %2262 = vmatmul.mubr.f32.gmra.mrb[0].mxu0 %v704
  %v2263 = vpop.f32.mrb[0].mxu0
  %v2264 = vadd.f32 %v2039, %v2263
  %v2265 = vpop.f32.mrb[0].mxu0
  %2266 = vmatprep.mubr.f32.mxu0 0.0
  %2267 = vmatmul.mubr.f32.gmra.mrb[0].mxu0 %v707
  %v2268 = vpop.f32.mrb[0].mxu0
  %v2269 = vadd.f32 %v2044, %v2268
  %v2270 = vpop.f32.mrb[0].mxu0
  %2271 = vmatprep.mubr.f32.mxu0 0.0
  %2272 = vmatmul.mubr.f32.gmra.mrb[0].mxu0 %v710
  %v2273 = vpop.f32.mrb[0].mxu0
  %v2274 = vadd.f32 %v2049, %v2273
  %v2275 = vpop.f32.mrb[0].mxu0
  %2276 = vmatprep.mubr.f32.mxu0 0.0
  %2277 = vmatmul.mubr.f32.gmra.mrb[0].mxu0 %v713
  %v2278 = vpop.f32.mrb[0].mxu0
  %v2279 = vadd.f32 %v2054, %v2278
  %v2280 = vpop.f32.mrb[0].mxu0
  %2281 = vmatprep.mubr.f32.mxu0 0.0
  %2282 = vmatmul.mubr.f32.gmra.mrb[0].mxu0 %v716
  %v2283 = vpop.f32.mrb[0].mxu0
  %v2284 = vadd.f32 %v2059, %v2283
  %v2285 = vpop.f32.mrb[0].mxu0
  %2286 = vmatprep.mubr.f32.mxu0 0.0
  %2287 = vmatmul.mubr.f32.gmra.mrb[0].mxu0 %v719
  %v2288 = vpop.f32.mrb[0].mxu0
  %v2289 = vadd.f32 %v2064, %v2288
  %v2290 = vpop.f32.mrb[0].mxu0
  %2291 = vmatprep.mubr.f32.mxu0 0.0
  %2292 = vmatmul.mubr.f32.gmra.mrb[0].mxu0 %v722
  %v2293 = vpop.f32.mrb[0].mxu0
  %v2294 = vadd.f32 %v2069, %v2293
  %v2295 = vpop.f32.mrb[0].mxu0
  %2296 = vmatprep.mubr.f32.mxu0 0.0
  %2297 = vmatmul.mubr.f32.gmra.mrb[0].mxu0 %v725
  %v2298 = vpop.f32.mrb[0].mxu0
  %v2299 = vadd.f32 %v2074, %v2298
  %v2300 = vpop.f32.mrb[0].mxu0
  %2301 = vdwg.mxu0
  %v2302 = vmax.f32 %v2144, %v2164
  %v2303 = vmax.f32 %v2149, %v2169
  %v2304 = vmax.f32 %v2154, %v2174
  %v2305 = vmax.f32 %v2159, %v2179
  %v2306 = vmax.f32 %v2224, %v2244
  %v2307 = vmax.f32 %v2229, %v2249
  %v2308 = vmax.f32 %v2234, %v2254
  %v2309 = vmax.f32 %v2239, %v2259
  %v2310 = vmax.f32 %v2184, %v2204
  %v2311 = vmax.f32 %v2189, %v2209
  %v2312 = vmax.f32 %v2194, %v2214
  %v2313 = vmax.f32 %v2199, %v2219
  %v2314 = vmax.f32 %v2264, %v2284
  %v2315 = vmax.f32 %v2269, %v2289
  %v2316 = vmax.f32 %v2274, %v2294
  %v2317 = vmax.f32 %v2279, %v2299
  %v2318 = vmax.f32 %v2302, %v2310
  %v2319 = vmax.f32 %v2303, %v2311
  %v2320 = vmax.f32 %v2304, %v2312
  %v2321 = vmax.f32 %v2305, %v2313
  %v2322 = vmax.f32 %v2306, %v2314
  %v2323 = vmax.f32 %v2307, %v2315
  %v2324 = vmax.f32 %v2308, %v2316
  %v2325 = vmax.f32 %v2309, %v2317
  %v2326 = vld [vmem:[%s2] sm:$0x1]
  %v2328 = vlaneseq
  %v2329 = vshrl.u32 %v2328, 7
  %v2330 = vsub.s32 0, %v2329
  %v2331 = vrot.slane %v2326, %v2330
  %v2333 = vadd.f32 %v2318, %v2331
  %v2334 = vadd.f32 %v2319, %v2331
  %v2335 = vadd.f32 %v2320, %v2331
  %v2336 = vadd.f32 %v2321, %v2331
  %v2337 = vadd.f32 %v2322, %v2331
  %v2338 = vadd.f32 %v2323, %v2331
  %v2339 = vadd.f32 %v2324, %v2331
  %v2340 = vadd.f32 %v2325, %v2331
  %v2341 = vmax.f32 %v2333, 0.0
  %v2342 = vmax.f32 %v2334, 0.0
  %v2343 = vmax.f32 %v2335, 0.0
  %v2344 = vmax.f32 %v2336, 0.0
  %v2345 = vmax.f32 %v2337, 0.0
  %v2346 = vmax.f32 %v2338, 0.0
  %v2347 = vmax.f32 %v2339, 0.0
  %v2348 = vmax.f32 %v2340, 0.0
  %2349 = vst.msk [vmem:[%s3] sm:$0xff] %vm630, %v2341
  %2350 = vst.msk [vmem:[%s3 + $0x8] sm:$0xff] %vm630, %v2342
  %2351 = vst.msk [vmem:[%s3 + $0x10] sm:$0xff] %vm630, %v2343
  %2352 = vst.msk [vmem:[%s3 + $0x18] sm:$0xff] %vm630, %v2344
  %2353 = vst.msk [vmem:[%s3 + $0x20] sm:$0xff] %vm630, %v2345
  %2354 = vst.msk [vmem:[%s3 + $0x28] sm:$0xff] %vm630, %v2346
  %2355 = vst.msk [vmem:[%s3 + $0x30] sm:$0xff] %vm630, %v2347
  %2356 = vst.msk [vmem:[%s3 + $0x38] sm:$0xff] %vm630, %v2348
  // Predicated region
  $region14: #{_lambda_.4} parent=0 // pred_check
    _
  $region15: #{_lambda_.4} parent=0 // pred_check_branch
    %2358 = sbr.rel (0) target = $region17
  $region16: #{_lambda_.4} parent=0 // pred_region
    _
  $region17: #{_lambda_.4} parent=0 // pred_fallthru
    _
  // Predicated region
  $region18: #{_lambda_.4} parent=0 // pred_check
    _
  $region19: #{_lambda_.4} parent=0 // pred_check_branch
    %2360 = sbr.rel (0) target = $region21
  $region20: #{_lambda_.4} parent=0 // pred_region
    _
  $region21: #{_lambda_.4} parent=0 // pred_fallthru
    _

// kernel: _lambda_.5
$region0: #{_lambda_.5}
  #allocation0 [shape = 'u32[]', space=smem, size = 0x4, offset = 0x4, fixed_abs, tag = 'smem constant byte address 0x4 - core index']
  #allocation1 [shape = 'u32[144,128]{1,0:T(1,128)}', space=vmem, size = 0x12000, scoped, tag = 'internal scratch']
  %s0 = inlined_call_operand.vmem [shape: f32[2,1600], index: 0, kind: input, shape index: {}]
  %s1 = inlined_call_operand.vmem [shape: f32[1600,384], index: 1, kind: input, shape index: {}]
  %s2 = inlined_call_operand.vmem [shape: f32[1,384], index: 2, kind: input, shape index: {}]
  %s3 = inlined_call_operand.vmem [shape: f32[384,256], index: 3, kind: input, shape index: {}]
  %s4 = inlined_call_operand.vmem [shape: f32[1,256], index: 4, kind: input, shape index: {}]
  %s5 = inlined_call_operand.vmem [shape: f32[256,128], index: 5, kind: input, shape index: {}]
  %s6 = inlined_call_operand.vmem [shape: f32[1,128], index: 6, kind: input, shape index: {}]
  %s7 = inlined_call_operand.hbm [shape: f32[2,256], index: 7, kind: output, shape index: {0}]
  %s8 = inlined_call_operand.hbm [shape: f32[2,128], index: 8, kind: output, shape index: {1}]
  %9 = xla_tuple %s7, %s8
  %s10 = sld [smem:[#allocation0]]
  $region46: #{_lambda_.5} parent=0
    _
  %s12 = ssub.s32 1, %s10
  %s13 = scalar_select 0, %s12, %s10
  $region1: #{_lambda_.5} parent=0
    #allocation2 [shape = 'u8[2048]{0}', space=vmem, size = 0x800, scoped, tag = 'output window, operand 0, single buffered']
    #allocation3 [shape = 's32[1]{0}', space=sflag, size = 0x4, scoped, tag = 'scoped memory for _lambda_.5']
    #allocation4 [shape = 'u8[1024]{0}', space=vmem, size = 0x400, scoped, tag = 'output window, operand 1, single buffered']
    #allocation5 [shape = 's32[1]{0}', space=sflag, size = 0x4, scoped, tag = 'scoped memory for _lambda_.5']
    %14 = vsyncpa [#allocation3], 0
    %15 = vsyncpa [#allocation5], 0
    // Predicated region
    $region2: #{_lambda_.5} parent=1 // pred_check
      _
    $region3: #{_lambda_.5} parent=1 // pred_check_branch
      %17 = sbr.rel (0) target = $region5
    $region4: #{_lambda_.5} parent=1 // pred_region
      _
    $region5: #{_lambda_.5} parent=1 // pred_fallthru
      _
    // Predicated region
    $region6: #{_lambda_.5} parent=1 // pred_check
      _
    $region7: #{_lambda_.5} parent=1 // pred_check_branch
      %19 = sbr.rel (0) target = $region9
    $region8: #{_lambda_.5} parent=1 // pred_region
      _
    $region9: #{_lambda_.5} parent=1 // pred_fallthru
      _
    // Predicated region
    $region10: #{_lambda_.5} parent=1 // pred_check
      _
    $region11: #{_lambda_.5} parent=1 // pred_check_branch
      %21 = sbr.rel (0) target = $region13
    $region12: #{_lambda_.5} parent=1 // pred_region
      _
    $region13: #{_lambda_.5} parent=1 // pred_fallthru
      _
    // Predicated region
    $region14: #{_lambda_.5} parent=1 // pred_check
      _
    $region15: #{_lambda_.5} parent=1 // pred_check_branch
      %23 = sbr.rel (0) target = $region17
    $region16: #{_lambda_.5} parent=1 // pred_region
      _
    $region17: #{_lambda_.5} parent=1 // pred_fallthru
      _
    // Predicated region
    $region18: #{_lambda_.5} parent=1 // pred_check
      _
    $region19: #{_lambda_.5} parent=1 // pred_check_branch
      %25 = sbr.rel (0) target = $region21
    $region20: #{_lambda_.5} parent=1 // pred_region
      _
    $region21: #{_lambda_.5} parent=1 // pred_fallthru
      _
    // Predicated region
    $region22: #{_lambda_.5} parent=1 // pred_check
      _
    $region23: #{_lambda_.5} parent=1 // pred_check_branch
      %27 = sbr.rel (0) target = $region25
    $region24: #{_lambda_.5} parent=1 // pred_region
      _
    $region25: #{_lambda_.5} parent=1 // pred_fallthru
      _
    // Predicated region
    $region26: #{_lambda_.5} parent=1 // pred_check
      _
    $region27: #{_lambda_.5} parent=1 // pred_check_branch
      %29 = sbr.rel (0) target = $region29
    $region28: #{_lambda_.5} parent=1 // pred_region
      _
    $region29: #{_lambda_.5} parent=1 // pred_fallthru
      _
    %v30 = vld [vmem:[%s0] sm:$0xff]
    %v31 = vld [vmem:[%s0 + $0x8] sm:$0xff]
    %v32 = vld [vmem:[%s0 + $0x10] sm:$0xff]
    %v33 = vld [vmem:[%s0 + $0x18] sm:$0x3]
    %v34 = vld [vmem:[%s1] sm:$0xff]
    %v35 = vld [vmem:[%s1 + $0x8] sm:$0xff]
    %v36 = vld [vmem:[%s1 + $0x10] sm:$0xff]
    %v37 = vld [vmem:[%s1 + $0x18] sm:$0xff]
    %v38 = vld [vmem:[%s1 + $0x20] sm:$0xff]
    %v39 = vld [vmem:[%s1 + $0x28] sm:$0xff]
    %v40 = vld [vmem:[%s1 + $0x30] sm:$0xff]
    %v41 = vld [vmem:[%s1 + $0x38] sm:$0xff]
    %v42 = vld [vmem:[%s1 + $0x40] sm:$0xff]
    %v43 = vld [vmem:[%s1 + $0x48] sm:$0xff]
    %v44 = vld [vmem:[%s1 + $0x50] sm:$0xff]
    %v45 = vld [vmem:[%s1 + $0x58] sm:$0xff]
    %v46 = vld [vmem:[%s1 + $0x60] sm:$0xff]
    %v47 = vld [vmem:[%s1 + $0x68] sm:$0xff]
    %v48 = vld [vmem:[%s1 + $0x70] sm:$0xff]
    %v49 = vld [vmem:[%s1 + $0x78] sm:$0xff]
    %v50 = vld [vmem:[%s1 + $0x80] sm:$0xff]
    %v51 = vld [vmem:[%s1 + $0x88] sm:$0xff]
    %v52 = vld [vmem:[%s1 + $0x90] sm:$0xff]
    %v53 = vld [vmem:[%s1 + $0x98] sm:$0xff]
    %v54 = vld [vmem:[%s1 + $0xa0] sm:$0xff]
    %v55 = vld [vmem:[%s1 + $0xa8] sm:$0xff]
    %v56 = vld [vmem:[%s1 + $0xb0] sm:$0xff]
    %v57 = vld [vmem:[%s1 + $0xb8] sm:$0xff]
    %v58 = vld [vmem:[%s1 + $0xc0] sm:$0xff]
    %v59 = vld [vmem:[%s1 + $0xc8] sm:$0xff]
    %v60 = vld [vmem:[%s1 + $0xd0] sm:$0xff]
    %v61 = vld [vmem:[%s1 + $0xd8] sm:$0xff]
    %v62 = vld [vmem:[%s1 + $0xe0] sm:$0xff]
    %v63 = vld [vmem:[%s1 + $0xe8] sm:$0xff]
    %v64 = vld [vmem:[%s1 + $0xf0] sm:$0xff]
    %v65 = vld [vmem:[%s1 + $0xf8] sm:$0xff]
    %v66 = vld [vmem:[%s1 + $0x100] sm:$0xff]
    %v67 = vld [vmem:[%s1 + $0x108] sm:$0xff]
    %v68 = vld [vmem:[%s1 + $0x110] sm:$0xff]
    %v69 = vld [vmem:[%s1 + $0x118] sm:$0xff]
    %v70 = vld [vmem:[%s1 + $0x120] sm:$0xff]
    %v71 = vld [vmem:[%s1 + $0x128] sm:$0xff]
    %v72 = vld [vmem:[%s1 + $0x130] sm:$0xff]
    %v73 = vld [vmem:[%s1 + $0x138] sm:$0xff]
    %v74 = vld [vmem:[%s1 + $0x140] sm:$0xff]
    %v75 = vld [vmem:[%s1 + $0x148] sm:$0xff]
    %v76 = vld [vmem:[%s1 + $0x150] sm:$0xff]
    %v77 = vld [vmem:[%s1 + $0x158] sm:$0xff]
    %v78 = vld [vmem:[%s1 + $0x160] sm:$0xff]
    %v79 = vld [vmem:[%s1 + $0x168] sm:$0xff]
    %v80 = vld [vmem:[%s1 + $0x170] sm:$0xff]
    %v81 = vld [vmem:[%s1 + $0x178] sm:$0xff]
    %v82 = vld [vmem:[%s1 + $0x180] sm:$0xff]
    %v83 = vld [vmem:[%s1 + $0x188] sm:$0xff]
    %v84 = vld [vmem:[%s1 + $0x190] sm:$0xff]
    %v85 = vld [vmem:[%s1 + $0x198] sm:$0xff]
    %v86 = vld [vmem:[%s1 + $0x1a0] sm:$0xff]
    %v87 = vld [vmem:[%s1 + $0x1a8] sm:$0xff]
    %v88 = vld [vmem:[%s1 + $0x1b0] sm:$0xff]
    %v89 = vld [vmem:[%s1 + $0x1b8] sm:$0xff]
    %v90 = vld [vmem:[%s1 + $0x1c0] sm:$0xff]
    %v91 = vld [vmem:[%s1 + $0x1c8] sm:$0xff]
    %v92 = vld [vmem:[%s1 + $0x1d0] sm:$0xff]
    %v93 = vld [vmem:[%s1 + $0x1d8] sm:$0xff]
    %v94 = vld [vmem:[%s1 + $0x1e0] sm:$0xff]
    %v95 = vld [vmem:[%s1 + $0x1e8] sm:$0xff]
    %v96 = vld [vmem:[%s1 + $0x1f0] sm:$0xff]
    %v97 = vld [vmem:[%s1 + $0x1f8] sm:$0xff]
    %v98 = vld [vmem:[%s1 + $0x200] sm:$0xff]
    %v99 = vld [vmem:[%s1 + $0x208] sm:$0xff]
    %v100 = vld [vmem:[%s1 + $0x210] sm:$0xff]
    %v101 = vld [vmem:[%s1 + $0x218] sm:$0xff]
    %v102 = vld [vmem:[%s1 + $0x220] sm:$0xff]
    %v103 = vld [vmem:[%s1 + $0x228] sm:$0xff]
    %v104 = vld [vmem:[%s1 + $0x230] sm:$0xff]
    %v105 = vld [vmem:[%s1 + $0x238] sm:$0xff]
    %v106 = vld [vmem:[%s1 + $0x240] sm:$0xff]
    %v107 = vld [vmem:[%s1 + $0x248] sm:$0xff]
    %v108 = vld [vmem:[%s1 + $0x250] sm:$0xff]
    %v109 = vld [vmem:[%s1 + $0x258] sm:$0xff]
    %v110 = vld [vmem:[%s1 + $0x260] sm:$0xff]
    %v111 = vld [vmem:[%s1 + $0x268] sm:$0xff]
    %v112 = vld [vmem:[%s1 + $0x270] sm:$0xff]
    %v113 = vld [vmem:[%s1 + $0x278] sm:$0xff]
    %v114 = vld [vmem:[%s1 + $0x280] sm:$0xff]
    %v115 = vld [vmem:[%s1 + $0x288] sm:$0xff]
    %v116 = vld [vmem:[%s1 + $0x290] sm:$0xff]
    %v117 = vld [vmem:[%s1 + $0x298] sm:$0xff]
    %v118 = vld [vmem:[%s1 + $0x2a0] sm:$0xff]
    %v119 = vld [vmem:[%s1 + $0x2a8] sm:$0xff]
    %v120 = vld [vmem:[%s1 + $0x2b0] sm:$0xff]
    %v121 = vld [vmem:[%s1 + $0x2b8] sm:$0xff]
    %v122 = vld [vmem:[%s1 + $0x2c0] sm:$0xff]
    %v123 = vld [vmem:[%s1 + $0x2c8] sm:$0xff]
    %v124 = vld [vmem:[%s1 + $0x2d0] sm:$0xff]
    %v125 = vld [vmem:[%s1 + $0x2d8] sm:$0xff]
    %v126 = vld [vmem:[%s1 + $0x2e0] sm:$0xff]
    %v127 = vld [vmem:[%s1 + $0x2e8] sm:$0xff]
    %v128 = vld [vmem:[%s1 + $0x2f0] sm:$0xff]
    %v129 = vld [vmem:[%s1 + $0x2f8] sm:$0xff]
    %v130 = vld [vmem:[%s1 + $0x300] sm:$0xff]
    %v131 = vld [vmem:[%s1 + $0x308] sm:$0xff]
    %v132 = vld [vmem:[%s1 + $0x310] sm:$0xff]
    %v133 = vld [vmem:[%s1 + $0x318] sm:$0xff]
    %v134 = vld [vmem:[%s1 + $0x320] sm:$0xff]
    %v135 = vld [vmem:[%s1 + $0x328] sm:$0xff]
    %v136 = vld [vmem:[%s1 + $0x330] sm:$0xff]
    %v137 = vld [vmem:[%s1 + $0x338] sm:$0xff]
    %v138 = vld [vmem:[%s1 + $0x340] sm:$0xff]
    %v139 = vld [vmem:[%s1 + $0x348] sm:$0xff]
    %v140 = vld [vmem:[%s1 + $0x350] sm:$0xff]
    %v141 = vld [vmem:[%s1 + $0x358] sm:$0xff]
    %v142 = vld [vmem:[%s1 + $0x360] sm:$0xff]
    %v143 = vld [vmem:[%s1 + $0x368] sm:$0xff]
    %v144 = vld [vmem:[%s1 + $0x370] sm:$0xff]
    %v145 = vld [vmem:[%s1 + $0x378] sm:$0xff]
    %v146 = vld [vmem:[%s1 + $0x380] sm:$0xff]
    %v147 = vld [vmem:[%s1 + $0x388] sm:$0xff]
    %v148 = vld [vmem:[%s1 + $0x390] sm:$0xff]
    %v149 = vld [vmem:[%s1 + $0x398] sm:$0xff]
    %v150 = vld [vmem:[%s1 + $0x3a0] sm:$0xff]
    %v151 = vld [vmem:[%s1 + $0x3a8] sm:$0xff]
    %v152 = vld [vmem:[%s1 + $0x3b0] sm:$0xff]
    %v153 = vld [vmem:[%s1 + $0x3b8] sm:$0xff]
    %v154 = vld [vmem:[%s1 + $0x3c0] sm:$0xff]
    %v155 = vld [vmem:[%s1 + $0x3c8] sm:$0xff]
    %v156 = vld [vmem:[%s1 + $0x3d0] sm:$0xff]
    %v157 = vld [vmem:[%s1 + $0x3d8] sm:$0xff]
    %v158 = vld [vmem:[%s1 + $0x3e0] sm:$0xff]
    %v159 = vld [vmem:[%s1 + $0x3e8] sm:$0xff]
    %v160 = vld [vmem:[%s1 + $0x3f0] sm:$0xff]
    %v161 = vld [vmem:[%s1 + $0x3f8] sm:$0xff]
    %v162 = vld [vmem:[%s1 + $0x400] sm:$0xff]
    %v163 = vld [vmem:[%s1 + $0x408] sm:$0xff]
    %v164 = vld [vmem:[%s1 + $0x410] sm:$0xff]
    %v165 = vld [vmem:[%s1 + $0x418] sm:$0xff]
    %v166 = vld [vmem:[%s1 + $0x420] sm:$0xff]
    %v167 = vld [vmem:[%s1 + $0x428] sm:$0xff]
    %v168 = vld [vmem:[%s1 + $0x430] sm:$0xff]
    %v169 = vld [vmem:[%s1 + $0x438] sm:$0xff]
    %v170 = vld [vmem:[%s1 + $0x440] sm:$0xff]
    %v171 = vld [vmem:[%s1 + $0x448] sm:$0xff]
    %v172 = vld [vmem:[%s1 + $0x450] sm:$0xff]
    %v173 = vld [vmem:[%s1 + $0x458] sm:$0xff]
    %v174 = vld [vmem:[%s1 + $0x460] sm:$0xff]
    %v175 = vld [vmem:[%s1 + $0x468] sm:$0xff]
    %v176 = vld [vmem:[%s1 + $0x470] sm:$0xff]
    %v177 = vld [vmem:[%s1 + $0x478] sm:$0xff]
    %v178 = vld [vmem:[%s1 + $0x480] sm:$0xff]
    %v179 = vld [vmem:[%s1 + $0x488] sm:$0xff]
    %v180 = vld [vmem:[%s1 + $0x490] sm:$0xff]
    %v181 = vld [vmem:[%s1 + $0x498] sm:$0xff]
    %v182 = vld [vmem:[%s1 + $0x4a0] sm:$0xff]
    %v183 = vld [vmem:[%s1 + $0x4a8] sm:$0xff]
    %v184 = vld [vmem:[%s1 + $0x4b0] sm:$0xff]
    %v185 = vld [vmem:[%s1 + $0x4b8] sm:$0xff]
    %v186 = vld [vmem:[%s1 + $0x4c0] sm:$0xff]
    %v187 = vld [vmem:[%s1 + $0x4c8] sm:$0xff]
    %v188 = vld [vmem:[%s1 + $0x4d0] sm:$0xff]
    %v189 = vld [vmem:[%s1 + $0x4d8] sm:$0xff]
    %v190 = vld [vmem:[%s1 + $0x4e0] sm:$0xff]
    %v191 = vld [vmem:[%s1 + $0x4e8] sm:$0xff]
    %v192 = vld [vmem:[%s1 + $0x4f0] sm:$0xff]
    %v193 = vld [vmem:[%s1 + $0x4f8] sm:$0xff]
    %v194 = vld [vmem:[%s1 + $0x500] sm:$0xff]
    %v195 = vld [vmem:[%s1 + $0x508] sm:$0xff]
    %v196 = vld [vmem:[%s1 + $0x510] sm:$0xff]
    %v197 = vld [vmem:[%s1 + $0x518] sm:$0xff]
    %v198 = vld [vmem:[%s1 + $0x520] sm:$0xff]
    %v199 = vld [vmem:[%s1 + $0x528] sm:$0xff]
    %v200 = vld [vmem:[%s1 + $0x530] sm:$0xff]
    %v201 = vld [vmem:[%s1 + $0x538] sm:$0xff]
    %v202 = vld [vmem:[%s1 + $0x540] sm:$0xff]
    %v203 = vld [vmem:[%s1 + $0x548] sm:$0xff]
    %v204 = vld [vmem:[%s1 + $0x550] sm:$0xff]
    %v205 = vld [vmem:[%s1 + $0x558] sm:$0xff]
    %v206 = vld [vmem:[%s1 + $0x560] sm:$0xff]
    %v207 = vld [vmem:[%s1 + $0x568] sm:$0xff]
    %v208 = vld [vmem:[%s1 + $0x570] sm:$0xff]
    %v209 = vld [vmem:[%s1 + $0x578] sm:$0xff]
    %v210 = vld [vmem:[%s1 + $0x580] sm:$0xff]
    %v211 = vld [vmem:[%s1 + $0x588] sm:$0xff]
    %v212 = vld [vmem:[%s1 + $0x590] sm:$0xff]
    %v213 = vld [vmem:[%s1 + $0x598] sm:$0xff]
    %v214 = vld [vmem:[%s1 + $0x5a0] sm:$0xff]
    %v215 = vld [vmem:[%s1 + $0x5a8] sm:$0xff]
    %v216 = vld [vmem:[%s1 + $0x5b0] sm:$0xff]
    %v217 = vld [vmem:[%s1 + $0x5b8] sm:$0xff]
    %v218 = vld [vmem:[%s1 + $0x5c0] sm:$0xff]
    %v219 = vld [vmem:[%s1 + $0x5c8] sm:$0xff]
    %v220 = vld [vmem:[%s1 + $0x5d0] sm:$0xff]
    %v221 = vld [vmem:[%s1 + $0x5d8] sm:$0xff]
    %v222 = vld [vmem:[%s1 + $0x5e0] sm:$0xff]
    %v223 = vld [vmem:[%s1 + $0x5e8] sm:$0xff]
    %v224 = vld [vmem:[%s1 + $0x5f0] sm:$0xff]
    %v225 = vld [vmem:[%s1 + $0x5f8] sm:$0xff]
    %v226 = vld [vmem:[%s1 + $0x600] sm:$0xff]
    %v227 = vld [vmem:[%s1 + $0x608] sm:$0xff]
    %v228 = vld [vmem:[%s1 + $0x610] sm:$0xff]
    %v229 = vld [vmem:[%s1 + $0x618] sm:$0xff]
    %v230 = vld [vmem:[%s1 + $0x620] sm:$0xff]
    %v231 = vld [vmem:[%s1 + $0x628] sm:$0xff]
    %v232 = vld [vmem:[%s1 + $0x630] sm:$0xff]
    %v233 = vld [vmem:[%s1 + $0x638] sm:$0xff]
    %v234 = vld [vmem:[%s1 + $0x640] sm:$0xff]
    %v235 = vld [vmem:[%s1 + $0x648] sm:$0xff]
    %v236 = vld [vmem:[%s1 + $0x650] sm:$0xff]
    %v237 = vld [vmem:[%s1 + $0x658] sm:$0xff]
    %v238 = vld [vmem:[%s1 + $0x660] sm:$0xff]
    %v239 = vld [vmem:[%s1 + $0x668] sm:$0xff]
    %v240 = vld [vmem:[%s1 + $0x670] sm:$0xff]
    %v241 = vld [vmem:[%s1 + $0x678] sm:$0xff]
    %v242 = vld [vmem:[%s1 + $0x680] sm:$0xff]
    %v243 = vld [vmem:[%s1 + $0x688] sm:$0xff]
    %v244 = vld [vmem:[%s1 + $0x690] sm:$0xff]
    %v245 = vld [vmem:[%s1 + $0x698] sm:$0xff]
    %v246 = vld [vmem:[%s1 + $0x6a0] sm:$0xff]
    %v247 = vld [vmem:[%s1 + $0x6a8] sm:$0xff]
    %v248 = vld [vmem:[%s1 + $0x6b0] sm:$0xff]
    %v249 = vld [vmem:[%s1 + $0x6b8] sm:$0xff]
    %v250 = vld [vmem:[%s1 + $0x6c0] sm:$0xff]
    %v251 = vld [vmem:[%s1 + $0x6c8] sm:$0xff]
    %v252 = vld [vmem:[%s1 + $0x6d0] sm:$0xff]
    %v253 = vld [vmem:[%s1 + $0x6d8] sm:$0xff]
    %v254 = vld [vmem:[%s1 + $0x6e0] sm:$0xff]
    %v255 = vld [vmem:[%s1 + $0x6e8] sm:$0xff]
    %v256 = vld [vmem:[%s1 + $0x6f0] sm:$0xff]
    %v257 = vld [vmem:[%s1 + $0x6f8] sm:$0xff]
    %v258 = vld [vmem:[%s1 + $0x700] sm:$0xff]
    %v259 = vld [vmem:[%s1 + $0x708] sm:$0xff]
    %v260 = vld [vmem:[%s1 + $0x710] sm:$0xff]
    %v261 = vld [vmem:[%s1 + $0x718] sm:$0xff]
    %v262 = vld [vmem:[%s1 + $0x720] sm:$0xff]
    %v263 = vld [vmem:[%s1 + $0x728] sm:$0xff]
    %v264 = vld [vmem:[%s1 + $0x730] sm:$0xff]
    %v265 = vld [vmem:[%s1 + $0x738] sm:$0xff]
    %v266 = vld [vmem:[%s1 + $0x740] sm:$0xff]
    %v267 = vld [vmem:[%s1 + $0x748] sm:$0xff]
    %v268 = vld [vmem:[%s1 + $0x750] sm:$0xff]
    %v269 = vld [vmem:[%s1 + $0x758] sm:$0xff]
    %v270 = vld [vmem:[%s1 + $0x760] sm:$0xff]
    %v271 = vld [vmem:[%s1 + $0x768] sm:$0xff]
    %v272 = vld [vmem:[%s1 + $0x770] sm:$0xff]
    %v273 = vld [vmem:[%s1 + $0x778] sm:$0xff]
    %v274 = vld [vmem:[%s1 + $0x780] sm:$0xff]
    %v275 = vld [vmem:[%s1 + $0x788] sm:$0xff]
    %v276 = vld [vmem:[%s1 + $0x790] sm:$0xff]
    %v277 = vld [vmem:[%s1 + $0x798] sm:$0xff]
    %v278 = vld [vmem:[%s1 + $0x7a0] sm:$0xff]
    %v279 = vld [vmem:[%s1 + $0x7a8] sm:$0xff]
    %v280 = vld [vmem:[%s1 + $0x7b0] sm:$0xff]
    %v281 = vld [vmem:[%s1 + $0x7b8] sm:$0xff]
    %v282 = vld [vmem:[%s1 + $0x7c0] sm:$0xff]
    %v283 = vld [vmem:[%s1 + $0x7c8] sm:$0xff]
    %v284 = vld [vmem:[%s1 + $0x7d0] sm:$0xff]
    %v285 = vld [vmem:[%s1 + $0x7d8] sm:$0xff]
    %v286 = vld [vmem:[%s1 + $0x7e0] sm:$0xff]
    %v287 = vld [vmem:[%s1 + $0x7e8] sm:$0xff]
    %v288 = vld [vmem:[%s1 + $0x7f0] sm:$0xff]
    %v289 = vld [vmem:[%s1 + $0x7f8] sm:$0xff]
    %v290 = vld [vmem:[%s1 + $0x800] sm:$0xff]
    %v291 = vld [vmem:[%s1 + $0x808] sm:$0xff]
    %v292 = vld [vmem:[%s1 + $0x810] sm:$0xff]
    %v293 = vld [vmem:[%s1 + $0x818] sm:$0xff]
    %v294 = vld [vmem:[%s1 + $0x820] sm:$0xff]
    %v295 = vld [vmem:[%s1 + $0x828] sm:$0xff]
    %v296 = vld [vmem:[%s1 + $0x830] sm:$0xff]
    %v297 = vld [vmem:[%s1 + $0x838] sm:$0xff]
    %v298 = vld [vmem:[%s1 + $0x840] sm:$0xff]
    %v299 = vld [vmem:[%s1 + $0x848] sm:$0xff]
    %v300 = vld [vmem:[%s1 + $0x850] sm:$0xff]
    %v301 = vld [vmem:[%s1 + $0x858] sm:$0xff]
    %v302 = vld [vmem:[%s1 + $0x860] sm:$0xff]
    %v303 = vld [vmem:[%s1 + $0x868] sm:$0xff]
    %v304 = vld [vmem:[%s1 + $0x870] sm:$0xff]
    %v305 = vld [vmem:[%s1 + $0x878] sm:$0xff]
    %v306 = vld [vmem:[%s1 + $0x880] sm:$0xff]
    %v307 = vld [vmem:[%s1 + $0x888] sm:$0xff]
    %v308 = vld [vmem:[%s1 + $0x890] sm:$0xff]
    %v309 = vld [vmem:[%s1 + $0x898] sm:$0xff]
    %v310 = vld [vmem:[%s1 + $0x8a0] sm:$0xff]
    %v311 = vld [vmem:[%s1 + $0x8a8] sm:$0xff]
    %v312 = vld [vmem:[%s1 + $0x8b0] sm:$0xff]
    %v313 = vld [vmem:[%s1 + $0x8b8] sm:$0xff]
    %v314 = vld [vmem:[%s1 + $0x8c0] sm:$0xff]
    %v315 = vld [vmem:[%s1 + $0x8c8] sm:$0xff]
    %v316 = vld [vmem:[%s1 + $0x8d0] sm:$0xff]
    %v317 = vld [vmem:[%s1 + $0x8d8] sm:$0xff]
    %v318 = vld [vmem:[%s1 + $0x8e0] sm:$0xff]
    %v319 = vld [vmem:[%s1 + $0x8e8] sm:$0xff]
    %v320 = vld [vmem:[%s1 + $0x8f0] sm:$0xff]
    %v321 = vld [vmem:[%s1 + $0x8f8] sm:$0xff]
    %v322 = vld [vmem:[%s1 + $0x900] sm:$0xff]
    %v323 = vld [vmem:[%s1 + $0x908] sm:$0xff]
    %v324 = vld [vmem:[%s1 + $0x910] sm:$0xff]
    %v325 = vld [vmem:[%s1 + $0x918] sm:$0xff]
    %v326 = vld [vmem:[%s1 + $0x920] sm:$0xff]
    %v327 = vld [vmem:[%s1 + $0x928] sm:$0xff]
    %v328 = vld [vmem:[%s1 + $0x930] sm:$0xff]
    %v329 = vld [vmem:[%s1 + $0x938] sm:$0xff]
    %v330 = vld [vmem:[%s1 + $0x940] sm:$0xff]
    %v331 = vld [vmem:[%s1 + $0x948] sm:$0xff]
    %v332 = vld [vmem:[%s1 + $0x950] sm:$0xff]
    %v333 = vld [vmem:[%s1 + $0x958] sm:$0xff]
    %v334 = vld [vmem:[%s1 + $0x960] sm:$0xff]
    %v335 = vld [vmem:[%s1 + $0x968] sm:$0xff]
    %v336 = vld [vmem:[%s1 + $0x970] sm:$0xff]
    %v337 = vld [vmem:[%s1 + $0x978] sm:$0xff]
    %v338 = vld [vmem:[%s1 + $0x980] sm:$0xff]
    %v339 = vld [vmem:[%s1 + $0x988] sm:$0xff]
    %v340 = vld [vmem:[%s1 + $0x990] sm:$0xff]
    %v341 = vld [vmem:[%s1 + $0x998] sm:$0xff]
    %v342 = vld [vmem:[%s1 + $0x9a0] sm:$0xff]
    %v343 = vld [vmem:[%s1 + $0x9a8] sm:$0xff]
    %v344 = vld [vmem:[%s1 + $0x9b0] sm:$0xff]
    %v345 = vld [vmem:[%s1 + $0x9b8] sm:$0xff]
    %v346 = vld [vmem:[%s1 + $0x9c0] sm:$0xff]
    %v347 = vld [vmem:[%s1 + $0x9c8] sm:$0xff]
    %v348 = vld [vmem:[%s1 + $0x9d0] sm:$0xff]
    %v349 = vld [vmem:[%s1 + $0x9d8] sm:$0xff]
    %v350 = vld [vmem:[%s1 + $0x9e0] sm:$0xff]
    %v351 = vld [vmem:[%s1 + $0x9e8] sm:$0xff]
    %v352 = vld [vmem:[%s1 + $0x9f0] sm:$0xff]
    %v353 = vld [vmem:[%s1 + $0x9f8] sm:$0xff]
    %v354 = vld [vmem:[%s1 + $0xa00] sm:$0xff]
    %v355 = vld [vmem:[%s1 + $0xa08] sm:$0xff]
    %v356 = vld [vmem:[%s1 + $0xa10] sm:$0xff]
    %v357 = vld [vmem:[%s1 + $0xa18] sm:$0xff]
    %v358 = vld [vmem:[%s1 + $0xa20] sm:$0xff]
    %v359 = vld [vmem:[%s1 + $0xa28] sm:$0xff]
    %v360 = vld [vmem:[%s1 + $0xa30] sm:$0xff]
    %v361 = vld [vmem:[%s1 + $0xa38] sm:$0xff]
    %v362 = vld [vmem:[%s1 + $0xa40] sm:$0xff]
    %v363 = vld [vmem:[%s1 + $0xa48] sm:$0xff]
    %v364 = vld [vmem:[%s1 + $0xa50] sm:$0xff]
    %v365 = vld [vmem:[%s1 + $0xa58] sm:$0xff]
    %v366 = vld [vmem:[%s1 + $0xa60] sm:$0xff]
    %v367 = vld [vmem:[%s1 + $0xa68] sm:$0xff]
    %v368 = vld [vmem:[%s1 + $0xa70] sm:$0xff]
    %v369 = vld [vmem:[%s1 + $0xa78] sm:$0xff]
    %v370 = vld [vmem:[%s1 + $0xa80] sm:$0xff]
    %v371 = vld [vmem:[%s1 + $0xa88] sm:$0xff]
    %v372 = vld [vmem:[%s1 + $0xa90] sm:$0xff]
    %v373 = vld [vmem:[%s1 + $0xa98] sm:$0xff]
    %v374 = vld [vmem:[%s1 + $0xaa0] sm:$0xff]
    %v375 = vld [vmem:[%s1 + $0xaa8] sm:$0xff]
    %v376 = vld [vmem:[%s1 + $0xab0] sm:$0xff]
    %v377 = vld [vmem:[%s1 + $0xab8] sm:$0xff]
    %v378 = vld [vmem:[%s1 + $0xac0] sm:$0xff]
    %v379 = vld [vmem:[%s1 + $0xac8] sm:$0xff]
    %v380 = vld [vmem:[%s1 + $0xad0] sm:$0xff]
    %v381 = vld [vmem:[%s1 + $0xad8] sm:$0xff]
    %v382 = vld [vmem:[%s1 + $0xae0] sm:$0xff]
    %v383 = vld [vmem:[%s1 + $0xae8] sm:$0xff]
    %v384 = vld [vmem:[%s1 + $0xaf0] sm:$0xff]
    %v385 = vld [vmem:[%s1 + $0xaf8] sm:$0xff]
    %v386 = vld [vmem:[%s1 + $0xb00] sm:$0xff]
    %v387 = vld [vmem:[%s1 + $0xb08] sm:$0xff]
    %v388 = vld [vmem:[%s1 + $0xb10] sm:$0xff]
    %v389 = vld [vmem:[%s1 + $0xb18] sm:$0xff]
    %v390 = vld [vmem:[%s1 + $0xb20] sm:$0xff]
    %v391 = vld [vmem:[%s1 + $0xb28] sm:$0xff]
    %v392 = vld [vmem:[%s1 + $0xb30] sm:$0xff]
    %v393 = vld [vmem:[%s1 + $0xb38] sm:$0xff]
    %v394 = vld [vmem:[%s1 + $0xb40] sm:$0xff]
    %v395 = vld [vmem:[%s1 + $0xb48] sm:$0xff]
    %v396 = vld [vmem:[%s1 + $0xb50] sm:$0xff]
    %v397 = vld [vmem:[%s1 + $0xb58] sm:$0xff]
    %v398 = vld [vmem:[%s1 + $0xb60] sm:$0xff]
    %v399 = vld [vmem:[%s1 + $0xb68] sm:$0xff]
    %v400 = vld [vmem:[%s1 + $0xb70] sm:$0xff]
    %v401 = vld [vmem:[%s1 + $0xb78] sm:$0xff]
    %v402 = vld [vmem:[%s1 + $0xb80] sm:$0xff]
    %v403 = vld [vmem:[%s1 + $0xb88] sm:$0xff]
    %v404 = vld [vmem:[%s1 + $0xb90] sm:$0xff]
    %v405 = vld [vmem:[%s1 + $0xb98] sm:$0xff]
    %v406 = vld [vmem:[%s1 + $0xba0] sm:$0xff]
    %v407 = vld [vmem:[%s1 + $0xba8] sm:$0xff]
    %v408 = vld [vmem:[%s1 + $0xbb0] sm:$0xff]
    %v409 = vld [vmem:[%s1 + $0xbb8] sm:$0xff]
    %v410 = vld [vmem:[%s1 + $0xbc0] sm:$0xff]
    %v411 = vld [vmem:[%s1 + $0xbc8] sm:$0xff]
    %v412 = vld [vmem:[%s1 + $0xbd0] sm:$0xff]
    %v413 = vld [vmem:[%s1 + $0xbd8] sm:$0xff]
    %v414 = vld [vmem:[%s1 + $0xbe0] sm:$0xff]
    %v415 = vld [vmem:[%s1 + $0xbe8] sm:$0xff]
    %v416 = vld [vmem:[%s1 + $0xbf0] sm:$0xff]
    %v417 = vld [vmem:[%s1 + $0xbf8] sm:$0xff]
    %v418 = vld [vmem:[%s1 + $0xc00] sm:$0xff]
    %v419 = vld [vmem:[%s1 + $0xc08] sm:$0xff]
    %v420 = vld [vmem:[%s1 + $0xc10] sm:$0xff]
    %v421 = vld [vmem:[%s1 + $0xc18] sm:$0xff]
    %v422 = vld [vmem:[%s1 + $0xc20] sm:$0xff]
    %v423 = vld [vmem:[%s1 + $0xc28] sm:$0xff]
    %v424 = vld [vmem:[%s1 + $0xc30] sm:$0xff]
    %v425 = vld [vmem:[%s1 + $0xc38] sm:$0xff]
    %v426 = vld [vmem:[%s1 + $0xc40] sm:$0xff]
    %v427 = vld [vmem:[%s1 + $0xc48] sm:$0xff]
    %v428 = vld [vmem:[%s1 + $0xc50] sm:$0xff]
    %v429 = vld [vmem:[%s1 + $0xc58] sm:$0xff]
    %v430 = vld [vmem:[%s1 + $0xc60] sm:$0xff]
    %v431 = vld [vmem:[%s1 + $0xc68] sm:$0xff]
    %v432 = vld [vmem:[%s1 + $0xc70] sm:$0xff]
    %v433 = vld [vmem:[%s1 + $0xc78] sm:$0xff]
    %v434 = vld [vmem:[%s1 + $0xc80] sm:$0xff]
    %v435 = vld [vmem:[%s1 + $0xc88] sm:$0xff]
    %v436 = vld [vmem:[%s1 + $0xc90] sm:$0xff]
    %v437 = vld [vmem:[%s1 + $0xc98] sm:$0xff]
    %v438 = vld [vmem:[%s1 + $0xca0] sm:$0xff]
    %v439 = vld [vmem:[%s1 + $0xca8] sm:$0xff]
    %v440 = vld [vmem:[%s1 + $0xcb0] sm:$0xff]
    %v441 = vld [vmem:[%s1 + $0xcb8] sm:$0xff]
    %v442 = vld [vmem:[%s1 + $0xcc0] sm:$0xff]
    %v443 = vld [vmem:[%s1 + $0xcc8] sm:$0xff]
    %v444 = vld [vmem:[%s1 + $0xcd0] sm:$0xff]
    %v445 = vld [vmem:[%s1 + $0xcd8] sm:$0xff]
    %v446 = vld [vmem:[%s1 + $0xce0] sm:$0xff]
    %v447 = vld [vmem:[%s1 + $0xce8] sm:$0xff]
    %v448 = vld [vmem:[%s1 + $0xcf0] sm:$0xff]
    %v449 = vld [vmem:[%s1 + $0xcf8] sm:$0xff]
    %v450 = vld [vmem:[%s1 + $0xd00] sm:$0xff]
    %v451 = vld [vmem:[%s1 + $0xd08] sm:$0xff]
    %v452 = vld [vmem:[%s1 + $0xd10] sm:$0xff]
    %v453 = vld [vmem:[%s1 + $0xd18] sm:$0xff]
    %v454 = vld [vmem:[%s1 + $0xd20] sm:$0xff]
    %v455 = vld [vmem:[%s1 + $0xd28] sm:$0xff]
    %v456 = vld [vmem:[%s1 + $0xd30] sm:$0xff]
    %v457 = vld [vmem:[%s1 + $0xd38] sm:$0xff]
    %v458 = vld [vmem:[%s1 + $0xd40] sm:$0xff]
    %v459 = vld [vmem:[%s1 + $0xd48] sm:$0xff]
    %v460 = vld [vmem:[%s1 + $0xd50] sm:$0xff]
    %v461 = vld [vmem:[%s1 + $0xd58] sm:$0xff]
    %v462 = vld [vmem:[%s1 + $0xd60] sm:$0xff]
    %v463 = vld [vmem:[%s1 + $0xd68] sm:$0xff]
    %v464 = vld [vmem:[%s1 + $0xd70] sm:$0xff]
    %v465 = vld [vmem:[%s1 + $0xd78] sm:$0xff]
    %v466 = vld [vmem:[%s1 + $0xd80] sm:$0xff]
    %v467 = vld [vmem:[%s1 + $0xd88] sm:$0xff]
    %v468 = vld [vmem:[%s1 + $0xd90] sm:$0xff]
    %v469 = vld [vmem:[%s1 + $0xd98] sm:$0xff]
    %v470 = vld [vmem:[%s1 + $0xda0] sm:$0xff]
    %v471 = vld [vmem:[%s1 + $0xda8] sm:$0xff]
    %v472 = vld [vmem:[%s1 + $0xdb0] sm:$0xff]
    %v473 = vld [vmem:[%s1 + $0xdb8] sm:$0xff]
    %v474 = vld [vmem:[%s1 + $0xdc0] sm:$0xff]
    %v475 = vld [vmem:[%s1 + $0xdc8] sm:$0xff]
    %v476 = vld [vmem:[%s1 + $0xdd0] sm:$0xff]
    %v477 = vld [vmem:[%s1 + $0xdd8] sm:$0xff]
    %v478 = vld [vmem:[%s1 + $0xde0] sm:$0xff]
    %v479 = vld [vmem:[%s1 + $0xde8] sm:$0xff]
    %v480 = vld [vmem:[%s1 + $0xdf0] sm:$0xff]
    %v481 = vld [vmem:[%s1 + $0xdf8] sm:$0xff]
    %v482 = vld [vmem:[%s1 + $0xe00] sm:$0xff]
    %v483 = vld [vmem:[%s1 + $0xe08] sm:$0xff]
    %v484 = vld [vmem:[%s1 + $0xe10] sm:$0xff]
    %v485 = vld [vmem:[%s1 + $0xe18] sm:$0xff]
    %v486 = vld [vmem:[%s1 + $0xe20] sm:$0xff]
    %v487 = vld [vmem:[%s1 + $0xe28] sm:$0xff]
    %v488 = vld [vmem:[%s1 + $0xe30] sm:$0xff]
    %v489 = vld [vmem:[%s1 + $0xe38] sm:$0xff]
    %v490 = vld [vmem:[%s1 + $0xe40] sm:$0xff]
    %v491 = vld [vmem:[%s1 + $0xe48] sm:$0xff]
    %v492 = vld [vmem:[%s1 + $0xe50] sm:$0xff]
    %v493 = vld [vmem:[%s1 + $0xe58] sm:$0xff]
    %v494 = vld [vmem:[%s1 + $0xe60] sm:$0xff]
    %v495 = vld [vmem:[%s1 + $0xe68] sm:$0xff]
    %v496 = vld [vmem:[%s1 + $0xe70] sm:$0xff]
    %v497 = vld [vmem:[%s1 + $0xe78] sm:$0xff]
    %v498 = vld [vmem:[%s1 + $0xe80] sm:$0xff]
    %v499 = vld [vmem:[%s1 + $0xe88] sm:$0xff]
    %v500 = vld [vmem:[%s1 + $0xe90] sm:$0xff]
    %v501 = vld [vmem:[%s1 + $0xe98] sm:$0xff]
    %v502 = vld [vmem:[%s1 + $0xea0] sm:$0xff]
    %v503 = vld [vmem:[%s1 + $0xea8] sm:$0xff]
    %v504 = vld [vmem:[%s1 + $0xeb0] sm:$0xff]
    %v505 = vld [vmem:[%s1 + $0xeb8] sm:$0xff]
    %v506 = vld [vmem:[%s1 + $0xec0] sm:$0xff]
    %v507 = vld [vmem:[%s1 + $0xec8] sm:$0xff]
    %v508 = vld [vmem:[%s1 + $0xed0] sm:$0xff]
    %v509 = vld [vmem:[%s1 + $0xed8] sm:$0xff]
    %v510 = vld [vmem:[%s1 + $0xee0] sm:$0xff]
    %v511 = vld [vmem:[%s1 + $0xee8] sm:$0xff]
    %v512 = vld [vmem:[%s1 + $0xef0] sm:$0xff]
    %v513 = vld [vmem:[%s1 + $0xef8] sm:$0xff]
    %v514 = vld [vmem:[%s1 + $0xf00] sm:$0xff]
    %v515 = vld [vmem:[%s1 + $0xf08] sm:$0xff]
    %v516 = vld [vmem:[%s1 + $0xf10] sm:$0xff]
    %v517 = vld [vmem:[%s1 + $0xf18] sm:$0xff]
    %v518 = vld [vmem:[%s1 + $0xf20] sm:$0xff]
    %v519 = vld [vmem:[%s1 + $0xf28] sm:$0xff]
    %v520 = vld [vmem:[%s1 + $0xf30] sm:$0xff]
    %v521 = vld [vmem:[%s1 + $0xf38] sm:$0xff]
    %v522 = vld [vmem:[%s1 + $0xf40] sm:$0xff]
    %v523 = vld [vmem:[%s1 + $0xf48] sm:$0xff]
    %v524 = vld [vmem:[%s1 + $0xf50] sm:$0xff]
    %v525 = vld [vmem:[%s1 + $0xf58] sm:$0xff]
    %v526 = vld [vmem:[%s1 + $0xf60] sm:$0xff]
    %v527 = vld [vmem:[%s1 + $0xf68] sm:$0xff]
    %v528 = vld [vmem:[%s1 + $0xf70] sm:$0xff]
    %v529 = vld [vmem:[%s1 + $0xf78] sm:$0xff]
    %v530 = vld [vmem:[%s1 + $0xf80] sm:$0xff]
    %v531 = vld [vmem:[%s1 + $0xf88] sm:$0xff]
    %v532 = vld [vmem:[%s1 + $0xf90] sm:$0xff]
    %v533 = vld [vmem:[%s1 + $0xf98] sm:$0xff]
    %v534 = vld [vmem:[%s1 + $0xfa0] sm:$0xff]
    %v535 = vld [vmem:[%s1 + $0xfa8] sm:$0xff]
    %v536 = vld [vmem:[%s1 + $0xfb0] sm:$0xff]
    %v537 = vld [vmem:[%s1 + $0xfb8] sm:$0xff]
    %v538 = vld [vmem:[%s1 + $0xfc0] sm:$0xff]
    %v539 = vld [vmem:[%s1 + $0xfc8] sm:$0xff]
    %v540 = vld [vmem:[%s1 + $0xfd0] sm:$0xff]
    %v541 = vld [vmem:[%s1 + $0xfd8] sm:$0xff]
    %v542 = vld [vmem:[%s1 + $0xfe0] sm:$0xff]
    %v543 = vld [vmem:[%s1 + $0xfe8] sm:$0xff]
    %v544 = vld [vmem:[%s1 + $0xff0] sm:$0xff]
    %v545 = vld [vmem:[%s1 + $0xff8] sm:$0xff]
    %v546 = vld [vmem:[%s1 + $0x1000] sm:$0xff]
    %v547 = vld [vmem:[%s1 + $0x1008] sm:$0xff]
    %v548 = vld [vmem:[%s1 + $0x1010] sm:$0xff]
    %v549 = vld [vmem:[%s1 + $0x1018] sm:$0xff]
    %v550 = vld [vmem:[%s1 + $0x1020] sm:$0xff]
    %v551 = vld [vmem:[%s1 + $0x1028] sm:$0xff]
    %v552 = vld [vmem:[%s1 + $0x1030] sm:$0xff]
    %v553 = vld [vmem:[%s1 + $0x1038] sm:$0xff]
    %v554 = vld [vmem:[%s1 + $0x1040] sm:$0xff]
    %v555 = vld [vmem:[%s1 + $0x1048] sm:$0xff]
    %v556 = vld [vmem:[%s1 + $0x1050] sm:$0xff]
    %v557 = vld [vmem:[%s1 + $0x1058] sm:$0xff]
    %v558 = vld [vmem:[%s1 + $0x1060] sm:$0xff]
    %v559 = vld [vmem:[%s1 + $0x1068] sm:$0xff]
    %v560 = vld [vmem:[%s1 + $0x1070] sm:$0xff]
    %v561 = vld [vmem:[%s1 + $0x1078] sm:$0xff]
    %v562 = vld [vmem:[%s1 + $0x1080] sm:$0xff]
    %v563 = vld [vmem:[%s1 + $0x1088] sm:$0xff]
    %v564 = vld [vmem:[%s1 + $0x1090] sm:$0xff]
    %v565 = vld [vmem:[%s1 + $0x1098] sm:$0xff]
    %v566 = vld [vmem:[%s1 + $0x10a0] sm:$0xff]
    %v567 = vld [vmem:[%s1 + $0x10a8] sm:$0xff]
    %v568 = vld [vmem:[%s1 + $0x10b0] sm:$0xff]
    %v569 = vld [vmem:[%s1 + $0x10b8] sm:$0xff]
    %v570 = vld [vmem:[%s1 + $0x10c0] sm:$0xff]
    %v571 = vld [vmem:[%s1 + $0x10c8] sm:$0xff]
    %v572 = vld [vmem:[%s1 + $0x10d0] sm:$0xff]
    %v573 = vld [vmem:[%s1 + $0x10d8] sm:$0xff]
    %v574 = vld [vmem:[%s1 + $0x10e0] sm:$0xff]
    %v575 = vld [vmem:[%s1 + $0x10e8] sm:$0xff]
    %v576 = vld [vmem:[%s1 + $0x10f0] sm:$0xff]
    %v577 = vld [vmem:[%s1 + $0x10f8] sm:$0xff]
    %v578 = vld [vmem:[%s1 + $0x1100] sm:$0xff]
    %v579 = vld [vmem:[%s1 + $0x1108] sm:$0xff]
    %v580 = vld [vmem:[%s1 + $0x1110] sm:$0xff]
    %v581 = vld [vmem:[%s1 + $0x1118] sm:$0xff]
    %v582 = vld [vmem:[%s1 + $0x1120] sm:$0xff]
    %v583 = vld [vmem:[%s1 + $0x1128] sm:$0xff]
    %v584 = vld [vmem:[%s1 + $0x1130] sm:$0xff]
    %v585 = vld [vmem:[%s1 + $0x1138] sm:$0xff]
    %v586 = vld [vmem:[%s1 + $0x1140] sm:$0xff]
    %v587 = vld [vmem:[%s1 + $0x1148] sm:$0xff]
    %v588 = vld [vmem:[%s1 + $0x1150] sm:$0xff]
    %v589 = vld [vmem:[%s1 + $0x1158] sm:$0xff]
    %v590 = vld [vmem:[%s1 + $0x1160] sm:$0xff]
    %v591 = vld [vmem:[%s1 + $0x1168] sm:$0xff]
    %v592 = vld [vmem:[%s1 + $0x1170] sm:$0xff]
    %v593 = vld [vmem:[%s1 + $0x1178] sm:$0xff]
    %v594 = vld [vmem:[%s1 + $0x1180] sm:$0xff]
    %v595 = vld [vmem:[%s1 + $0x1188] sm:$0xff]
    %v596 = vld [vmem:[%s1 + $0x1190] sm:$0xff]
    %v597 = vld [vmem:[%s1 + $0x1198] sm:$0xff]
    %v598 = vld [vmem:[%s1 + $0x11a0] sm:$0xff]
    %v599 = vld [vmem:[%s1 + $0x11a8] sm:$0xff]
    %v600 = vld [vmem:[%s1 + $0x11b0] sm:$0xff]
    %v601 = vld [vmem:[%s1 + $0x11b8] sm:$0xff]
    %v602 = vld [vmem:[%s1 + $0x11c0] sm:$0xff]
    %v603 = vld [vmem:[%s1 + $0x11c8] sm:$0xff]
    %v604 = vld [vmem:[%s1 + $0x11d0] sm:$0xff]
    %v605 = vld [vmem:[%s1 + $0x11d8] sm:$0xff]
    %v606 = vld [vmem:[%s1 + $0x11e0] sm:$0xff]
    %v607 = vld [vmem:[%s1 + $0x11e8] sm:$0xff]
    %v608 = vld [vmem:[%s1 + $0x11f0] sm:$0xff]
    %v609 = vld [vmem:[%s1 + $0x11f8] sm:$0xff]
    %v610 = vld [vmem:[%s1 + $0x1200] sm:$0xff]
    %v611 = vld [vmem:[%s1 + $0x1208] sm:$0xff]
    %v612 = vld [vmem:[%s1 + $0x1210] sm:$0xff]
    %v613 = vld [vmem:[%s1 + $0x1218] sm:$0xff]
    %v614 = vld [vmem:[%s1 + $0x1220] sm:$0xff]
    %v615 = vld [vmem:[%s1 + $0x1228] sm:$0xff]
    %v616 = vld [vmem:[%s1 + $0x1230] sm:$0xff]
    %v617 = vld [vmem:[%s1 + $0x1238] sm:$0xff]
    %v618 = vld [vmem:[%s1 + $0x1240] sm:$0xff]
    %v619 = vld [vmem:[%s1 + $0x1248] sm:$0xff]
    %v620 = vld [vmem:[%s1 + $0x1250] sm:$0xff]
    %v621 = vld [vmem:[%s1 + $0x1258] sm:$0xff]
    %v622 = vld [vmem:[%s1 + $0x1260] sm:$0xff]
    %v623 = vld [vmem:[%s1 + $0x1268] sm:$0xff]
    %v624 = vld [vmem:[%s1 + $0x1270] sm:$0xff]
    %v625 = vld [vmem:[%s1 + $0x1278] sm:$0xff]
    %v626 = vld [vmem:[%s1 + $0x1280] sm:$0xff]
    %v627 = vld [vmem:[%s1 + $0x1288] sm:$0xff]
    %v628 = vld [vmem:[%s1 + $0x1290] sm:$0xff]
    %v629 = vld [vmem:[%s1 + $0x1298] sm:$0xff]
    %v630 = vld [vmem:[%s1 + $0x12a0] sm:$0xff]
    %v631 = vld [vmem:[%s1 + $0x12a8] sm:$0xff]
    %v632 = vld [vmem:[%s1 + $0x12b0] sm:$0xff]
    %v633 = vld [vmem:[%s1 + $0x12b8] sm:$0xff]
    %v634 = vld [vmem:[%s2] sm:$0x7]
    %v636 = vlaneseq
    %v637 = vshrl.u32 %v636, 7
    %v638 = vsub.s32 0, %v637
    %v639 = vrot.slane %v634, %v638
    %v640 = vlaneseq
    %v641 = vshrl.u32 %v640, 7
    %v642 = vsub.s32 1, %v641
    %v643 = vrot.slane %v634, %v642
    %v644 = vlaneseq
    %v645 = vshrl.u32 %v644, 7
    %v646 = vsub.s32 2, %v645
    %v647 = vrot.slane %v634, %v646
    %v655 = vcombine.high %v30, %v30
    %v657 = vunpack.c.l.s4 1983009808
    %v658 = vunpack.c.0.s8 %v657
    %v659 = vlaneseq
    %v660 = vshrl.u32 %v659, 7
    %v661 = vsub.s32 %v658, %v660
    %v662 = vrot.slane %v30, %v661
    %v664 = vunpack.c.l.s4 1983009808
    %v665 = vunpack.c.0.s8 %v664
    %v666 = vlaneseq
    %v667 = vshrl.u32 %v666, 7
    %v668 = vsub.s32 %v665, %v667
    %v669 = vrot.slane %v655, %v668
    %v670 = vcombine.high %v662, %v662
    %v671 = vcombine.high %v669, %v669
    %v672 = vcombine.high %v31, %v31
    %v674 = vunpack.c.l.s4 1983009808
    %v675 = vunpack.c.0.s8 %v674
    %v676 = vlaneseq
    %v677 = vshrl.u32 %v676, 7
    %v678 = vsub.s32 %v675, %v677
    %v679 = vrot.slane %v31, %v678
    %v681 = vunpack.c.l.s4 1983009808
    %v682 = vunpack.c.0.s8 %v681
    %v683 = vlaneseq
    %v684 = vshrl.u32 %v683, 7
    %v685 = vsub.s32 %v682, %v684
    %v686 = vrot.slane %v672, %v685
    %v687 = vcombine.high %v679, %v679
    %v688 = vcombine.high %v686, %v686
    %v689 = vcombine.high %v32, %v32
    %v691 = vunpack.c.l.s4 1983009808
    %v692 = vunpack.c.0.s8 %v691
    %v693 = vlaneseq
    %v694 = vshrl.u32 %v693, 7
    %v695 = vsub.s32 %v692, %v694
    %v696 = vrot.slane %v32, %v695
    %v698 = vunpack.c.l.s4 1983009808
    %v699 = vunpack.c.0.s8 %v698
    %v700 = vlaneseq
    %v701 = vshrl.u32 %v700, 7
    %v702 = vsub.s32 %v699, %v701
    %v703 = vrot.slane %v689, %v702
    %v704 = vcombine.high %v696, %v696
    %v705 = vcombine.high %v703, %v703
    %v707 = vunpack.c.l.s4 1983009808
    %v708 = vunpack.c.0.s8 %v707
    %v709 = vlaneseq
    %v710 = vshrl.u32 %v709, 7
    %v711 = vsub.s32 %v708, %v710
    %v712 = vrot.slane %v33, %v711
    %vm725 = vcmask 523264
    %v726 = vsel %vm725, %v712, 0
    %728 = vmatprep.subr.mxu0 %v35
    %729 = vmatpush1.msra.mxu0 %v34
    %730 = vmatprep.subr.mxu0 %v38
    %731 = vmatpush1.msra.mxu0 %v37
    %732 = vmatprep.subr.mxu0 %v41
    %733 = vmatpush1.msra.mxu0 %v40
    %734 = vmatprep.subr.mxu0 %v44
    %735 = vmatpush1.msra.mxu0 %v43
    %736 = vmatprep.subr.mxu0 %v47
    %737 = vmatpush1.msra.mxu0 %v46
    %738 = vmatprep.subr.mxu0 %v50
    %739 = vmatpush1.msra.mxu0 %v49
    %740 = vmatprep.subr.mxu0 %v53
    %741 = vmatpush1.msra.mxu0 %v52
    %742 = vmatprep.subr.mxu0 %v56
    %743 = vmatpush1.msra.mxu0 %v55
    %744 = vmatprep.subr.mxu0 %v59
    %745 = vmatpush1.msra.mxu0 %v58
    %746 = vmatprep.subr.mxu0 %v62
    %747 = vmatpush1.msra.mxu0 %v61
    %748 = vmatprep.subr.mxu0 %v65
    %749 = vmatpush1.msra.mxu0 %v64
    %750 = vmatprep.subr.mxu0 %v68
    %751 = vmatpush1.msra.mxu0 %v67
    %752 = vmatprep.subr.mxu0 %v71
    %753 = vmatpush1.msra.mxu0 %v70
    %754 = vmatprep.subr.mxu0 %v74
    %755 = vmatpush1.msra.mxu0 %v73
    %756 = vmatprep.subr.mxu0 %v77
    %757 = vmatpush1.msra.mxu0 %v76
    %758 = vmatprep.subr.mxu0 %v80
    %759 = vmatpush1.msra.mxu0 %v79
    %760 = vmatprep.subr.mxu0 %v83
    %761 = vmatpush1.msra.mxu0 %v82
    %762 = vmatprep.subr.mxu0 %v86
    %763 = vmatpush1.msra.mxu0 %v85
    %764 = vmatprep.subr.mxu0 %v89
    %765 = vmatpush1.msra.mxu0 %v88
    %766 = vmatprep.subr.mxu0 %v92
    %767 = vmatpush1.msra.mxu0 %v91
    %768 = vmatprep.subr.mxu0 %v95
    %769 = vmatpush1.msra.mxu0 %v94
    %770 = vmatprep.subr.mxu0 %v98
    %771 = vmatpush1.msra.mxu0 %v97
    %772 = vmatprep.subr.mxu0 %v101
    %773 = vmatpush1.msra.mxu0 %v100
    %774 = vmatprep.subr.mxu0 %v104
    %775 = vmatpush1.msra.mxu0 %v103
    %776 = vmatprep.subr.mxu0 %v107
    %777 = vmatpush1.msra.mxu0 %v106
    %778 = vmatprep.subr.mxu0 %v110
    %779 = vmatpush1.msra.mxu0 %v109
    %780 = vmatprep.subr.mxu0 %v113
    %781 = vmatpush1.msra.mxu0 %v112
    %782 = vmatprep.subr.mxu0 %v116
    %783 = vmatpush1.msra.mxu0 %v115
    %784 = vmatprep.subr.mxu0 %v119
    %785 = vmatpush1.msra.mxu0 %v118
    %786 = vmatprep.subr.mxu0 %v122
    %787 = vmatpush1.msra.mxu0 %v121
    %788 = vmatprep.subr.mxu0 %v125
    %789 = vmatpush1.msra.mxu0 %v124
    %790 = vmatprep.subr.mxu0 %v128
    %791 = vmatpush1.msra.mxu0 %v127
    %792 = vmatprep.mubr.f32.mxu0 %v670
    %793 = vmatmul.mubr.f32.gmra.mrb[0].mxu0 %v662
    %v794 = vpop.f32.mrb[0].mxu0
    %v795 = vadd.f32 %v639, %v794
    %v796 = vpop.f32.mrb[0].mxu0
    %v797 = vadd.f32 %v643, %v796
    %798 = vdwg.mxu0
    %799 = vmatprep.subr.mxu0 %v131
    %800 = vmatpush1.msra.mxu0 %v130
    %801 = vmatprep.subr.mxu0 %v134
    %802 = vmatpush1.msra.mxu0 %v133
    %803 = vmatprep.subr.mxu0 %v137
    %804 = vmatpush1.msra.mxu0 %v136
    %805 = vmatprep.subr.mxu0 %v140
    %806 = vmatpush1.msra.mxu0 %v139
    %807 = vmatprep.subr.mxu0 %v143
    %808 = vmatpush1.msra.mxu0 %v142
    %809 = vmatprep.subr.mxu0 %v146
    %810 = vmatpush1.msra.mxu0 %v145
    %811 = vmatprep.subr.mxu0 %v149
    %812 = vmatpush1.msra.mxu0 %v148
    %813 = vmatprep.subr.mxu0 %v152
    %814 = vmatpush1.msra.mxu0 %v151
    %815 = vmatprep.subr.mxu0 %v155
    %816 = vmatpush1.msra.mxu0 %v154
    %817 = vmatprep.subr.mxu0 %v158
    %818 = vmatpush1.msra.mxu0 %v157
    %819 = vmatprep.subr.mxu0 %v161
    %820 = vmatpush1.msra.mxu0 %v160
    %821 = vmatprep.subr.mxu0 %v164
    %822 = vmatpush1.msra.mxu0 %v163
    %823 = vmatprep.subr.mxu0 %v167
    %824 = vmatpush1.msra.mxu0 %v166
    %825 = vmatprep.subr.mxu0 %v170
    %826 = vmatpush1.msra.mxu0 %v169
    %827 = vmatprep.subr.mxu0 %v173
    %828 = vmatpush1.msra.mxu0 %v172
    %829 = vmatprep.subr.mxu0 %v176
    %830 = vmatpush1.msra.mxu0 %v175
    %831 = vmatprep.subr.mxu0 %v179
    %832 = vmatpush1.msra.mxu0 %v178
    %833 = vmatprep.subr.mxu0 %v182
    %834 = vmatpush1.msra.mxu0 %v181
    %835 = vmatprep.subr.mxu0 %v185
    %836 = vmatpush1.msra.mxu0 %v184
    %837 = vmatprep.subr.mxu0 %v188
    %838 = vmatpush1.msra.mxu0 %v187
    %839 = vmatprep.subr.mxu0 %v191
    %840 = vmatpush1.msra.mxu0 %v190
    %841 = vmatprep.subr.mxu0 %v194
    %842 = vmatpush1.msra.mxu0 %v193
    %843 = vmatprep.subr.mxu0 %v197
    %844 = vmatpush1.msra.mxu0 %v196
    %845 = vmatprep.subr.mxu0 %v200
    %846 = vmatpush1.msra.mxu0 %v199
    %847 = vmatprep.subr.mxu0 %v203
    %848 = vmatpush1.msra.mxu0 %v202
    %849 = vmatprep.subr.mxu0 %v206
    %850 = vmatpush1.msra.mxu0 %v205
    %851 = vmatprep.subr.mxu0 %v209
    %852 = vmatpush1.msra.mxu0 %v208
    %853 = vmatprep.subr.mxu0 %v212
    %854 = vmatpush1.msra.mxu0 %v211
    %855 = vmatprep.subr.mxu0 %v215
    %856 = vmatpush1.msra.mxu0 %v214
    %857 = vmatprep.subr.mxu0 %v218
    %858 = vmatpush1.msra.mxu0 %v217
    %859 = vmatprep.subr.mxu0 %v221
    %860 = vmatpush1.msra.mxu0 %v220
    %861 = vmatprep.subr.mxu0 %v224
    %862 = vmatpush1.msra.mxu0 %v223
    %863 = vmatprep.mubr.f32.mxu0 %v671
    %864 = vmatmul.mubr.f32.gmra.mrb[0].mxu0 %v669
    %v865 = vpop.f32.mrb[0].mxu0
    %v866 = vadd.f32 %v795, %v865
    %v867 = vpop.f32.mrb[0].mxu0
    %v868 = vadd.f32 %v797, %v867
    %869 = vdwg.mxu0
    %870 = vmatprep.subr.mxu0 %v227
    %871 = vmatpush1.msra.mxu0 %v226
    %872 = vmatprep.subr.mxu0 %v230
    %873 = vmatpush1.msra.mxu0 %v229
    %874 = vmatprep.subr.mxu0 %v233
    %875 = vmatpush1.msra.mxu0 %v232
    %876 = vmatprep.subr.mxu0 %v236
    %877 = vmatpush1.msra.mxu0 %v235
    %878 = vmatprep.subr.mxu0 %v239
    %879 = vmatpush1.msra.mxu0 %v238
    %880 = vmatprep.subr.mxu0 %v242
    %881 = vmatpush1.msra.mxu0 %v241
    %882 = vmatprep.subr.mxu0 %v245
    %883 = vmatpush1.msra.mxu0 %v244
    %884 = vmatprep.subr.mxu0 %v248
    %885 = vmatpush1.msra.mxu0 %v247
    %886 = vmatprep.subr.mxu0 %v251
    %887 = vmatpush1.msra.mxu0 %v250
    %888 = vmatprep.subr.mxu0 %v254
    %889 = vmatpush1.msra.mxu0 %v253
    %890 = vmatprep.subr.mxu0 %v257
    %891 = vmatpush1.msra.mxu0 %v256
    %892 = vmatprep.subr.mxu0 %v260
    %893 = vmatpush1.msra.mxu0 %v259
    %894 = vmatprep.subr.mxu0 %v263
    %895 = vmatpush1.msra.mxu0 %v262
    %896 = vmatprep.subr.mxu0 %v266
    %897 = vmatpush1.msra.mxu0 %v265
    %898 = vmatprep.subr.mxu0 %v269
    %899 = vmatpush1.msra.mxu0 %v268
    %900 = vmatprep.subr.mxu0 %v272
    %901 = vmatpush1.msra.mxu0 %v271
    %902 = vmatprep.subr.mxu0 %v275
    %903 = vmatpush1.msra.mxu0 %v274
    %904 = vmatprep.subr.mxu0 %v278
    %905 = vmatpush1.msra.mxu0 %v277
    %906 = vmatprep.subr.mxu0 %v281
    %907 = vmatpush1.msra.mxu0 %v280
    %908 = vmatprep.subr.mxu0 %v284
    %909 = vmatpush1.msra.mxu0 %v283
    %910 = vmatprep.subr.mxu0 %v287
    %911 = vmatpush1.msra.mxu0 %v286
    %912 = vmatprep.subr.mxu0 %v290
    %913 = vmatpush1.msra.mxu0 %v289
    %914 = vmatprep.subr.mxu0 %v293
    %915 = vmatpush1.msra.mxu0 %v292
    %916 = vmatprep.subr.mxu0 %v296
    %917 = vmatpush1.msra.mxu0 %v295
    %918 = vmatprep.subr.mxu0 %v299
    %919 = vmatpush1.msra.mxu0 %v298
    %920 = vmatprep.subr.mxu0 %v302
    %921 = vmatpush1.msra.mxu0 %v301
    %922 = vmatprep.subr.mxu0 %v305
    %923 = vmatpush1.msra.mxu0 %v304
    %924 = vmatprep.subr.mxu0 %v308
    %925 = vmatpush1.msra.mxu0 %v307
    %926 = vmatprep.subr.mxu0 %v311
    %927 = vmatpush1.msra.mxu0 %v310
    %928 = vmatprep.subr.mxu0 %v314
    %929 = vmatpush1.msra.mxu0 %v313
    %930 = vmatprep.subr.mxu0 %v317
    %931 = vmatpush1.msra.mxu0 %v316
    %932 = vmatprep.subr.mxu0 %v320
    %933 = vmatpush1.msra.mxu0 %v319
    %934 = vmatprep.mubr.f32.mxu0 %v687
    %935 = vmatmul.mubr.f32.gmra.mrb[0].mxu0 %v679
    %v936 = vpop.f32.mrb[0].mxu0
    %v937 = vadd.f32 %v866, %v936
    %v938 = vpop.f32.mrb[0].mxu0
    %v939 = vadd.f32 %v868, %v938
    %940 = vdwg.mxu0
    %941 = vmatprep.subr.mxu0 %v323
    %942 = vmatpush1.msra.mxu0 %v322
    %943 = vmatprep.subr.mxu0 %v326
    %944 = vmatpush1.msra.mxu0 %v325
    %945 = vmatprep.subr.mxu0 %v329
    %946 = vmatpush1.msra.mxu0 %v328
    %947 = vmatprep.subr.mxu0 %v332
    %948 = vmatpush1.msra.mxu0 %v331
    %949 = vmatprep.subr.mxu0 %v335
    %950 = vmatpush1.msra.mxu0 %v334
    %951 = vmatprep.subr.mxu0 %v338
    %952 = vmatpush1.msra.mxu0 %v337
    %953 = vmatprep.subr.mxu0 %v341
    %954 = vmatpush1.msra.mxu0 %v340
    %955 = vmatprep.subr.mxu0 %v344
    %956 = vmatpush1.msra.mxu0 %v343
    %957 = vmatprep.subr.mxu0 %v347
    %958 = vmatpush1.msra.mxu0 %v346
    %959 = vmatprep.subr.mxu0 %v350
    %960 = vmatpush1.msra.mxu0 %v349
    %961 = vmatprep.subr.mxu0 %v353
    %962 = vmatpush1.msra.mxu0 %v352
    %963 = vmatprep.subr.mxu0 %v356
    %964 = vmatpush1.msra.mxu0 %v355
    %965 = vmatprep.subr.mxu0 %v359
    %966 = vmatpush1.msra.mxu0 %v358
    %967 = vmatprep.subr.mxu0 %v362
    %968 = vmatpush1.msra.mxu0 %v361
    %969 = vmatprep.subr.mxu0 %v365
    %970 = vmatpush1.msra.mxu0 %v364
    %971 = vmatprep.subr.mxu0 %v368
    %972 = vmatpush1.msra.mxu0 %v367
    %973 = vmatprep.subr.mxu0 %v371
    %974 = vmatpush1.msra.mxu0 %v370
    %975 = vmatprep.subr.mxu0 %v374
    %976 = vmatpush1.msra.mxu0 %v373
    %977 = vmatprep.subr.mxu0 %v377
    %978 = vmatpush1.msra.mxu0 %v376
    %979 = vmatprep.subr.mxu0 %v380
    %980 = vmatpush1.msra.mxu0 %v379
    %981 = vmatprep.subr.mxu0 %v383
    %982 = vmatpush1.msra.mxu0 %v382
    %983 = vmatprep.subr.mxu0 %v386
    %984 = vmatpush1.msra.mxu0 %v385
    %985 = vmatprep.subr.mxu0 %v389
    %986 = vmatpush1.msra.mxu0 %v388
    %987 = vmatprep.subr.mxu0 %v392
    %988 = vmatpush1.msra.mxu0 %v391
    %989 = vmatprep.subr.mxu0 %v395
    %990 = vmatpush1.msra.mxu0 %v394
    %991 = vmatprep.subr.mxu0 %v398
    %992 = vmatpush1.msra.mxu0 %v397
    %993 = vmatprep.subr.mxu0 %v401
    %994 = vmatpush1.msra.mxu0 %v400
    %995 = vmatprep.subr.mxu0 %v404
    %996 = vmatpush1.msra.mxu0 %v403
    %997 = vmatprep.subr.mxu0 %v407
    %998 = vmatpush1.msra.mxu0 %v406
    %999 = vmatprep.subr.mxu0 %v410
    %1000 = vmatpush1.msra.mxu0 %v409
    %1001 = vmatprep.subr.mxu0 %v413
    %1002 = vmatpush1.msra.mxu0 %v412
    %1003 = vmatprep.subr.mxu0 %v416
    %1004 = vmatpush1.msra.mxu0 %v415
    %1005 = vmatprep.mubr.f32.mxu0 %v688
    %1006 = vmatmul.mubr.f32.gmra.mrb[0].mxu0 %v686
    %v1007 = vpop.f32.mrb[0].mxu0
    %v1008 = vadd.f32 %v937, %v1007
    %v1009 = vpop.f32.mrb[0].mxu0
    %v1010 = vadd.f32 %v939, %v1009
    %1011 = vdwg.mxu0
    %1012 = vmatprep.subr.mxu0 %v419
    %1013 = vmatpush1.msra.mxu0 %v418
    %1014 = vmatprep.subr.mxu0 %v422
    %1015 = vmatpush1.msra.mxu0 %v421
    %1016 = vmatprep.subr.mxu0 %v425
    %1017 = vmatpush1.msra.mxu0 %v424
    %1018 = vmatprep.subr.mxu0 %v428
    %1019 = vmatpush1.msra.mxu0 %v427
    %1020 = vmatprep.subr.mxu0 %v431
    %1021 = vmatpush1.msra.mxu0 %v430
    %1022 = vmatprep.subr.mxu0 %v434
    %1023 = vmatpush1.msra.mxu0 %v433
    %1024 = vmatprep.subr.mxu0 %v437
    %1025 = vmatpush1.msra.mxu0 %v436
    %1026 = vmatprep.subr.mxu0 %v440
    %1027 = vmatpush1.msra.mxu0 %v439
    %1028 = vmatprep.subr.mxu0 %v443
    %1029 = vmatpush1.msra.mxu0 %v442
    %1030 = vmatprep.subr.mxu0 %v446
    %1031 = vmatpush1.msra.mxu0 %v445
    %1032 = vmatprep.subr.mxu0 %v449
    %1033 = vmatpush1.msra.mxu0 %v448
    %1034 = vmatprep.subr.mxu0 %v452
    %1035 = vmatpush1.msra.mxu0 %v451
    %1036 = vmatprep.subr.mxu0 %v455
    %1037 = vmatpush1.msra.mxu0 %v454
    %1038 = vmatprep.subr.mxu0 %v458
    %1039 = vmatpush1.msra.mxu0 %v457
    %1040 = vmatprep.subr.mxu0 %v461
    %1041 = vmatpush1.msra.mxu0 %v460
    %1042 = vmatprep.subr.mxu0 %v464
    %1043 = vmatpush1.msra.mxu0 %v463
    %1044 = vmatprep.subr.mxu0 %v467
    %1045 = vmatpush1.msra.mxu0 %v466
    %1046 = vmatprep.subr.mxu0 %v470
    %1047 = vmatpush1.msra.mxu0 %v469
    %1048 = vmatprep.subr.mxu0 %v473
    %1049 = vmatpush1.msra.mxu0 %v472
    %1050 = vmatprep.subr.mxu0 %v476
    %1051 = vmatpush1.msra.mxu0 %v475
    %1052 = vmatprep.subr.mxu0 %v479
    %1053 = vmatpush1.msra.mxu0 %v478
    %1054 = vmatprep.subr.mxu0 %v482
    %1055 = vmatpush1.msra.mxu0 %v481
    %1056 = vmatprep.subr.mxu0 %v485
    %1057 = vmatpush1.msra.mxu0 %v484
    %1058 = vmatprep.subr.mxu0 %v488
    %1059 = vmatpush1.msra.mxu0 %v487
    %1060 = vmatprep.subr.mxu0 %v491
    %1061 = vmatpush1.msra.mxu0 %v490
    %1062 = vmatprep.subr.mxu0 %v494
    %1063 = vmatpush1.msra.mxu0 %v493
    %1064 = vmatprep.subr.mxu0 %v497
    %1065 = vmatpush1.msra.mxu0 %v496
    %1066 = vmatprep.subr.mxu0 %v500
    %1067 = vmatpush1.msra.mxu0 %v499
    %1068 = vmatprep.subr.mxu0 %v503
    %1069 = vmatpush1.msra.mxu0 %v502
    %1070 = vmatprep.subr.mxu0 %v506
    %1071 = vmatpush1.msra.mxu0 %v505
    %1072 = vmatprep.subr.mxu0 %v509
    %1073 = vmatpush1.msra.mxu0 %v508
    %1074 = vmatprep.subr.mxu0 %v512
    %1075 = vmatpush1.msra.mxu0 %v511
    %1076 = vmatprep.mubr.f32.mxu0 %v704
    %1077 = vmatmul.mubr.f32.gmra.mrb[0].mxu0 %v696
    %v1078 = vpop.f32.mrb[0].mxu0
    %v1079 = vadd.f32 %v1008, %v1078
    %v1080 = vpop.f32.mrb[0].mxu0
    %v1081 = vadd.f32 %v1010, %v1080
    %1082 = vdwg.mxu0
    %1083 = vmatprep.subr.mxu0 %v515
    %1084 = vmatpush1.msra.mxu0 %v514
    %1085 = vmatprep.subr.mxu0 %v518
    %1086 = vmatpush1.msra.mxu0 %v517
    %1087 = vmatprep.subr.mxu0 %v521
    %1088 = vmatpush1.msra.mxu0 %v520
    %1089 = vmatprep.subr.mxu0 %v524
    %1090 = vmatpush1.msra.mxu0 %v523
    %1091 = vmatprep.subr.mxu0 %v527
    %1092 = vmatpush1.msra.mxu0 %v526
    %1093 = vmatprep.subr.mxu0 %v530
    %1094 = vmatpush1.msra.mxu0 %v529
    %1095 = vmatprep.subr.mxu0 %v533
    %1096 = vmatpush1.msra.mxu0 %v532
    %1097 = vmatprep.subr.mxu0 %v536
    %1098 = vmatpush1.msra.mxu0 %v535
    %1099 = vmatprep.subr.mxu0 %v539
    %1100 = vmatpush1.msra.mxu0 %v538
    %1101 = vmatprep.subr.mxu0 %v542
    %1102 = vmatpush1.msra.mxu0 %v541
    %1103 = vmatprep.subr.mxu0 %v545
    %1104 = vmatpush1.msra.mxu0 %v544
    %1105 = vmatprep.subr.mxu0 %v548
    %1106 = vmatpush1.msra.mxu0 %v547
    %1107 = vmatprep.subr.mxu0 %v551
    %1108 = vmatpush1.msra.mxu0 %v550
    %1109 = vmatprep.subr.mxu0 %v554
    %1110 = vmatpush1.msra.mxu0 %v553
    %1111 = vmatprep.subr.mxu0 %v557
    %1112 = vmatpush1.msra.mxu0 %v556
    %1113 = vmatprep.subr.mxu0 %v560
    %1114 = vmatpush1.msra.mxu0 %v559
    %1115 = vmatprep.subr.mxu0 %v563
    %1116 = vmatpush1.msra.mxu0 %v562
    %1117 = vmatprep.subr.mxu0 %v566
    %1118 = vmatpush1.msra.mxu0 %v565
    %1119 = vmatprep.subr.mxu0 %v569
    %1120 = vmatpush1.msra.mxu0 %v568
    %1121 = vmatprep.subr.mxu0 %v572
    %1122 = vmatpush1.msra.mxu0 %v571
    %1123 = vmatprep.subr.mxu0 %v575
    %1124 = vmatpush1.msra.mxu0 %v574
    %1125 = vmatprep.subr.mxu0 %v578
    %1126 = vmatpush1.msra.mxu0 %v577
    %1127 = vmatprep.subr.mxu0 %v581
    %1128 = vmatpush1.msra.mxu0 %v580
    %1129 = vmatprep.subr.mxu0 %v584
    %1130 = vmatpush1.msra.mxu0 %v583
    %1131 = vmatprep.subr.mxu0 %v587
    %1132 = vmatpush1.msra.mxu0 %v586
    %1133 = vmatprep.subr.mxu0 %v590
    %1134 = vmatpush1.msra.mxu0 %v589
    %1135 = vmatprep.subr.mxu0 %v593
    %1136 = vmatpush1.msra.mxu0 %v592
    %1137 = vmatprep.subr.mxu0 %v596
    %1138 = vmatpush1.msra.mxu0 %v595
    %1139 = vmatprep.subr.mxu0 %v599
    %1140 = vmatpush1.msra.mxu0 %v598
    %1141 = vmatprep.subr.mxu0 %v602
    %1142 = vmatpush1.msra.mxu0 %v601
    %1143 = vmatprep.subr.mxu0 %v605
    %1144 = vmatpush1.msra.mxu0 %v604
    %1145 = vmatprep.subr.mxu0 %v608
    %1146 = vmatpush1.msra.mxu0 %v607
    %1147 = vmatprep.mubr.f32.mxu0 %v705
    %1148 = vmatmul.mubr.f32.gmra.mrb[0].mxu0 %v703
    %v1149 = vpop.f32.mrb[0].mxu0
    %v1150 = vadd.f32 %v1079, %v1149
    %v1151 = vpop.f32.mrb[0].mxu0
    %v1152 = vadd.f32 %v1081, %v1151
    %1153 = vdwg.mxu0
    %1154 = vmatprep.subr.mxu0 %v611
    %1155 = vmatpush1.msra.mxu0 %v610
    %1156 = vmatprep.subr.mxu0 %v614
    %1157 = vmatpush1.msra.mxu0 %v613
    %1158 = vmatprep.subr.mxu0 %v617
    %1159 = vmatpush1.msra.mxu0 %v616
    %1160 = vmatprep.subr.mxu0 %v620
    %1161 = vmatpush1.msra.mxu0 %v619
    %1162 = vmatprep.subr.mxu0 %v623
    %1163 = vmatpush1.msra.mxu0 %v622
    %1164 = vmatprep.subr.mxu0 %v626
    %1165 = vmatpush1.msra.mxu0 %v625
    %1166 = vmatprep.subr.mxu0 %v629
    %1167 = vmatpush1.msra.mxu0 %v628
    %1168 = vmatprep.subr.mxu0 %v632
    %1169 = vmatpush1.msra.mxu0 %v631
    %1170 = vmatprep.subr.mxu0 0.0
    %1171 = vmatpush1.msra.mxu0 0.0
    %1172 = vmatprep.subr.mxu0 0.0
    %1173 = vmatpush1.msra.mxu0 0.0
    %1174 = vmatprep.subr.mxu0 0.0
    %1175 = vmatpush1.msra.mxu0 0.0
    %1176 = vmatprep.subr.mxu0 0.0
    %1177 = vmatpush1.msra.mxu0 0.0
    %1178 = vmatprep.subr.mxu0 0.0
    %1179 = vmatpush1.msra.mxu0 0.0
    %1180 = vmatprep.subr.mxu0 0.0
    %1181 = vmatpush1.msra.mxu0 0.0
    %1182 = vmatprep.subr.mxu0 0.0
    %1183 = vmatpush1.msra.mxu0 0.0
    %1184 = vmatprep.subr.mxu0 0.0
    %1185 = vmatpush1.msra.mxu0 0.0
    %1186 = vmatprep.subr.mxu0 0.0
    %1187 = vmatpush1.msra.mxu0 0.0
    %1188 = vmatprep.subr.mxu0 0.0
    %1189 = vmatpush1.msra.mxu0 0.0
    %1190 = vmatprep.subr.mxu0 0.0
    %1191 = vmatpush1.msra.mxu0 0.0
    %1192 = vmatprep.subr.mxu0 0.0
    %1193 = vmatpush1.msra.mxu0 0.0
    %1194 = vmatprep.subr.mxu0 0.0
    %1195 = vmatpush1.msra.mxu0 0.0
    %1196 = vmatprep.subr.mxu0 0.0
    %1197 = vmatpush1.msra.mxu0 0.0
    %1198 = vmatprep.subr.mxu0 0.0
    %1199 = vmatpush1.msra.mxu0 0.0
    %1200 = vmatprep.subr.mxu0 0.0
    %1201 = vmatpush1.msra.mxu0 0.0
    %1202 = vmatprep.subr.mxu0 0.0
    %1203 = vmatpush1.msra.mxu0 0.0
    %1204 = vmatprep.subr.mxu0 0.0
    %1205 = vmatpush1.msra.mxu0 0.0
    %1206 = vmatprep.subr.mxu0 0.0
    %1207 = vmatpush1.msra.mxu0 0.0
    %1208 = vmatprep.subr.mxu0 0.0
    %1209 = vmatpush1.msra.mxu0 0.0
    %1210 = vmatprep.subr.mxu0 0.0
    %1211 = vmatpush1.msra.mxu0 0.0
    %1212 = vmatprep.subr.mxu0 0.0
    %1213 = vmatpush1.msra.mxu0 0.0
    %1214 = vmatprep.subr.mxu0 0.0
    %1215 = vmatpush1.msra.mxu0 0.0
    %1216 = vmatprep.subr.mxu0 0.0
    %1217 = vmatpush1.msra.mxu0 0.0
    %1218 = vmatprep.mubr.f32.mxu0 0.0
    %1219 = vmatmul.mubr.f32.gmra.mrb[0].mxu0 %v726
    %v1220 = vpop.f32.mrb[0].mxu0
    %v1221 = vadd.f32 %v1150, %v1220
    %v1222 = vpop.f32.mrb[0].mxu0
    %v1223 = vadd.f32 %v1152, %v1222
    %1224 = vdwg.mxu0
    %1225 = vmatprep.subr.mxu0 0.0
    %1226 = vmatpush1.msra.mxu0 %v36
    %1227 = vmatprep.subr.mxu0 0.0
    %1228 = vmatpush1.msra.mxu0 %v39
    %1229 = vmatprep.subr.mxu0 0.0
    %1230 = vmatpush1.msra.mxu0 %v42
    %1231 = vmatprep.subr.mxu0 0.0
    %1232 = vmatpush1.msra.mxu0 %v45
    %1233 = vmatprep.subr.mxu0 0.0
    %1234 = vmatpush1.msra.mxu0 %v48
    %1235 = vmatprep.subr.mxu0 0.0
    %1236 = vmatpush1.msra.mxu0 %v51
    %1237 = vmatprep.subr.mxu0 0.0
    %1238 = vmatpush1.msra.mxu0 %v54
    %1239 = vmatprep.subr.mxu0 0.0
    %1240 = vmatpush1.msra.mxu0 %v57
    %1241 = vmatprep.subr.mxu0 0.0
    %1242 = vmatpush1.msra.mxu0 %v60
    %1243 = vmatprep.subr.mxu0 0.0
    %1244 = vmatpush1.msra.mxu0 %v63
    %1245 = vmatprep.subr.mxu0 0.0
    %1246 = vmatpush1.msra.mxu0 %v66
    %1247 = vmatprep.subr.mxu0 0.0
    %1248 = vmatpush1.msra.mxu0 %v69
    %1249 = vmatprep.subr.mxu0 0.0
    %1250 = vmatpush1.msra.mxu0 %v72
    %1251 = vmatprep.subr.mxu0 0.0
    %1252 = vmatpush1.msra.mxu0 %v75
    %1253 = vmatprep.subr.mxu0 0.0
    %1254 = vmatpush1.msra.mxu0 %v78
    %1255 = vmatprep.subr.mxu0 0.0
    %1256 = vmatpush1.msra.mxu0 %v81
    %1257 = vmatprep.subr.mxu0 0.0
    %1258 = vmatpush1.msra.mxu0 %v84
    %1259 = vmatprep.subr.mxu0 0.0
    %1260 = vmatpush1.msra.mxu0 %v87
    %1261 = vmatprep.subr.mxu0 0.0
    %1262 = vmatpush1.msra.mxu0 %v90
    %1263 = vmatprep.subr.mxu0 0.0
    %1264 = vmatpush1.msra.mxu0 %v93
    %1265 = vmatprep.subr.mxu0 0.0
    %1266 = vmatpush1.msra.mxu0 %v96
    %1267 = vmatprep.subr.mxu0 0.0
    %1268 = vmatpush1.msra.mxu0 %v99
    %1269 = vmatprep.subr.mxu0 0.0
    %1270 = vmatpush1.msra.mxu0 %v102
    %1271 = vmatprep.subr.mxu0 0.0
    %1272 = vmatpush1.msra.mxu0 %v105
    %1273 = vmatprep.subr.mxu0 0.0
    %1274 = vmatpush1.msra.mxu0 %v108
    %1275 = vmatprep.subr.mxu0 0.0
    %1276 = vmatpush1.msra.mxu0 %v111
    %1277 = vmatprep.subr.mxu0 0.0
    %1278 = vmatpush1.msra.mxu0 %v114
    %1279 = vmatprep.subr.mxu0 0.0
    %1280 = vmatpush1.msra.mxu0 %v117
    %1281 = vmatprep.subr.mxu0 0.0
    %1282 = vmatpush1.msra.mxu0 %v120
    %1283 = vmatprep.subr.mxu0 0.0
    %1284 = vmatpush1.msra.mxu0 %v123
    %1285 = vmatprep.subr.mxu0 0.0
    %1286 = vmatpush1.msra.mxu0 %v126
    %1287 = vmatprep.subr.mxu0 0.0
    %1288 = vmatpush1.msra.mxu0 %v129
    %1289 = vmatprep.mubr.f32.mxu0 %v670
    %1290 = vmatmul.mubr.f32.gmra.mrb[0].mxu0 %v662
    %v1291 = vpop.f32.mrb[0].mxu0
    %v1292 = vadd.f32 %v647, %v1291
    %v1293 = vpop.f32.mrb[0].mxu0
    %1294 = vdwg.mxu0
    %1295 = vmatprep.subr.mxu0 0.0
    %1296 = vmatpush1.msra.mxu0 %v132
    %1297 = vmatprep.subr.mxu0 0.0
    %1298 = vmatpush1.msra.mxu0 %v135
    %1299 = vmatprep.subr.mxu0 0.0
    %1300 = vmatpush1.msra.mxu0 %v138
    %1301 = vmatprep.subr.mxu0 0.0
    %1302 = vmatpush1.msra.mxu0 %v141
    %1303 = vmatprep.subr.mxu0 0.0
    %1304 = vmatpush1.msra.mxu0 %v144
    %1305 = vmatprep.subr.mxu0 0.0
    %1306 = vmatpush1.msra.mxu0 %v147
    %1307 = vmatprep.subr.mxu0 0.0
    %1308 = vmatpush1.msra.mxu0 %v150
    %1309 = vmatprep.subr.mxu0 0.0
    %1310 = vmatpush1.msra.mxu0 %v153
    %1311 = vmatprep.subr.mxu0 0.0
    %1312 = vmatpush1.msra.mxu0 %v156
    %1313 = vmatprep.subr.mxu0 0.0
    %1314 = vmatpush1.msra.mxu0 %v159
    %1315 = vmatprep.subr.mxu0 0.0
    %1316 = vmatpush1.msra.mxu0 %v162
    %1317 = vmatprep.subr.mxu0 0.0
    %1318 = vmatpush1.msra.mxu0 %v165
    %1319 = vmatprep.subr.mxu0 0.0
    %1320 = vmatpush1.msra.mxu0 %v168
    %1321 = vmatprep.subr.mxu0 0.0
    %1322 = vmatpush1.msra.mxu0 %v171
    %1323 = vmatprep.subr.mxu0 0.0
    %1324 = vmatpush1.msra.mxu0 %v174
    %1325 = vmatprep.subr.mxu0 0.0
    %1326 = vmatpush1.msra.mxu0 %v177
    %1327 = vmatprep.subr.mxu0 0.0
    %1328 = vmatpush1.msra.mxu0 %v180
    %1329 = vmatprep.subr.mxu0 0.0
    %1330 = vmatpush1.msra.mxu0 %v183
    %1331 = vmatprep.subr.mxu0 0.0
    %1332 = vmatpush1.msra.mxu0 %v186
    %1333 = vmatprep.subr.mxu0 0.0
    %1334 = vmatpush1.msra.mxu0 %v189
    %1335 = vmatprep.subr.mxu0 0.0
    %1336 = vmatpush1.msra.mxu0 %v192
    %1337 = vmatprep.subr.mxu0 0.0
    %1338 = vmatpush1.msra.mxu0 %v195
    %1339 = vmatprep.subr.mxu0 0.0
    %1340 = vmatpush1.msra.mxu0 %v198
    %1341 = vmatprep.subr.mxu0 0.0
    %1342 = vmatpush1.msra.mxu0 %v201
    %1343 = vmatprep.subr.mxu0 0.0
    %1344 = vmatpush1.msra.mxu0 %v204
    %1345 = vmatprep.subr.mxu0 0.0
    %1346 = vmatpush1.msra.mxu0 %v207
    %1347 = vmatprep.subr.mxu0 0.0
    %1348 = vmatpush1.msra.mxu0 %v210
    %1349 = vmatprep.subr.mxu0 0.0
    %1350 = vmatpush1.msra.mxu0 %v213
    %1351 = vmatprep.subr.mxu0 0.0
    %1352 = vmatpush1.msra.mxu0 %v216
    %1353 = vmatprep.subr.mxu0 0.0
    %1354 = vmatpush1.msra.mxu0 %v219
    %1355 = vmatprep.subr.mxu0 0.0
    %1356 = vmatpush1.msra.mxu0 %v222
    %1357 = vmatprep.subr.mxu0 0.0
    %1358 = vmatpush1.msra.mxu0 %v225
    %1359 = vmatprep.mubr.f32.mxu0 %v671
    %1360 = vmatmul.mubr.f32.gmra.mrb[0].mxu0 %v669
    %v1361 = vpop.f32.mrb[0].mxu0
    %v1362 = vadd.f32 %v1292, %v1361
    %v1363 = vpop.f32.mrb[0].mxu0
    %1364 = vdwg.mxu0
    %1365 = vmatprep.subr.mxu0 0.0
    %1366 = vmatpush1.msra.mxu0 %v228
    %1367 = vmatprep.subr.mxu0 0.0
    %1368 = vmatpush1.msra.mxu0 %v231
    %1369 = vmatprep.subr.mxu0 0.0
    %1370 = vmatpush1.msra.mxu0 %v234
    %1371 = vmatprep.subr.mxu0 0.0
    %1372 = vmatpush1.msra.mxu0 %v237
    %1373 = vmatprep.subr.mxu0 0.0
    %1374 = vmatpush1.msra.mxu0 %v240
    %1375 = vmatprep.subr.mxu0 0.0
    %1376 = vmatpush1.msra.mxu0 %v243
    %1377 = vmatprep.subr.mxu0 0.0
    %1378 = vmatpush1.msra.mxu0 %v246
    %1379 = vmatprep.subr.mxu0 0.0
    %1380 = vmatpush1.msra.mxu0 %v249
    %1381 = vmatprep.subr.mxu0 0.0
    %1382 = vmatpush1.msra.mxu0 %v252
    %1383 = vmatprep.subr.mxu0 0.0
    %1384 = vmatpush1.msra.mxu0 %v255
    %1385 = vmatprep.subr.mxu0 0.0
    %1386 = vmatpush1.msra.mxu0 %v258
    %1387 = vmatprep.subr.mxu0 0.0
    %1388 = vmatpush1.msra.mxu0 %v261
    %1389 = vmatprep.subr.mxu0 0.0
    %1390 = vmatpush1.msra.mxu0 %v264
    %1391 = vmatprep.subr.mxu0 0.0
    %1392 = vmatpush1.msra.mxu0 %v267
    %1393 = vmatprep.subr.mxu0 0.0
    %1394 = vmatpush1.msra.mxu0 %v270
    %1395 = vmatprep.subr.mxu0 0.0
    %1396 = vmatpush1.msra.mxu0 %v273
    %1397 = vmatprep.subr.mxu0 0.0
    %1398 = vmatpush1.msra.mxu0 %v276
    %1399 = vmatprep.subr.mxu0 0.0
    %1400 = vmatpush1.msra.mxu0 %v279
    %1401 = vmatprep.subr.mxu0 0.0
    %1402 = vmatpush1.msra.mxu0 %v282
    %1403 = vmatprep.subr.mxu0 0.0
    %1404 = vmatpush1.msra.mxu0 %v285
    %1405 = vmatprep.subr.mxu0 0.0
    %1406 = vmatpush1.msra.mxu0 %v288
    %1407 = vmatprep.subr.mxu0 0.0
    %1408 = vmatpush1.msra.mxu0 %v291
    %1409 = vmatprep.subr.mxu0 0.0
    %1410 = vmatpush1.msra.mxu0 %v294
    %1411 = vmatprep.subr.mxu0 0.0
    %1412 = vmatpush1.msra.mxu0 %v297
    %1413 = vmatprep.subr.mxu0 0.0
    %1414 = vmatpush1.msra.mxu0 %v300
    %1415 = vmatprep.subr.mxu0 0.0
    %1416 = vmatpush1.msra.mxu0 %v303
    %1417 = vmatprep.subr.mxu0 0.0
    %1418 = vmatpush1.msra.mxu0 %v306
    %1419 = vmatprep.subr.mxu0 0.0
    %1420 = vmatpush1.msra.mxu0 %v309
    %1421 = vmatprep.subr.mxu0 0.0
    %1422 = vmatpush1.msra.mxu0 %v312
    %1423 = vmatprep.subr.mxu0 0.0
    %1424 = vmatpush1.msra.mxu0 %v315
    %1425 = vmatprep.subr.mxu0 0.0
    %1426 = vmatpush1.msra.mxu0 %v318
    %1427 = vmatprep.subr.mxu0 0.0
    %1428 = vmatpush1.msra.mxu0 %v321
    %1429 = vmatprep.mubr.f32.mxu0 %v687
    %1430 = vmatmul.mubr.f32.gmra.mrb[0].mxu0 %v679
    %v1431 = vpop.f32.mrb[0].mxu0
    %v1432 = vadd.f32 %v1362, %v1431
    %v1433 = vpop.f32.mrb[0].mxu0
    %1434 = vdwg.mxu0
    %1435 = vmatprep.subr.mxu0 0.0
    %1436 = vmatpush1.msra.mxu0 %v324
    %1437 = vmatprep.subr.mxu0 0.0
    %1438 = vmatpush1.msra.mxu0 %v327
    %1439 = vmatprep.subr.mxu0 0.0
    %1440 = vmatpush1.msra.mxu0 %v330
    %1441 = vmatprep.subr.mxu0 0.0
    %1442 = vmatpush1.msra.mxu0 %v333
    %1443 = vmatprep.subr.mxu0 0.0
    %1444 = vmatpush1.msra.mxu0 %v336
    %1445 = vmatprep.subr.mxu0 0.0
    %1446 = vmatpush1.msra.mxu0 %v339
    %1447 = vmatprep.subr.mxu0 0.0
    %1448 = vmatpush1.msra.mxu0 %v342
    %1449 = vmatprep.subr.mxu0 0.0
    %1450 = vmatpush1.msra.mxu0 %v345
    %1451 = vmatprep.subr.mxu0 0.0
    %1452 = vmatpush1.msra.mxu0 %v348
    %1453 = vmatprep.subr.mxu0 0.0
    %1454 = vmatpush1.msra.mxu0 %v351
    %1455 = vmatprep.subr.mxu0 0.0
    %1456 = vmatpush1.msra.mxu0 %v354
    %1457 = vmatprep.subr.mxu0 0.0
    %1458 = vmatpush1.msra.mxu0 %v357
    %1459 = vmatprep.subr.mxu0 0.0
    %1460 = vmatpush1.msra.mxu0 %v360
    %1461 = vmatprep.subr.mxu0 0.0
    %1462 = vmatpush1.msra.mxu0 %v363
    %1463 = vmatprep.subr.mxu0 0.0
    %1464 = vmatpush1.msra.mxu0 %v366
    %1465 = vmatprep.subr.mxu0 0.0
    %1466 = vmatpush1.msra.mxu0 %v369
    %1467 = vmatprep.subr.mxu0 0.0
    %1468 = vmatpush1.msra.mxu0 %v372
    %1469 = vmatprep.subr.mxu0 0.0
    %1470 = vmatpush1.msra.mxu0 %v375
    %1471 = vmatprep.subr.mxu0 0.0
    %1472 = vmatpush1.msra.mxu0 %v378
    %1473 = vmatprep.subr.mxu0 0.0
    %1474 = vmatpush1.msra.mxu0 %v381
    %1475 = vmatprep.subr.mxu0 0.0
    %1476 = vmatpush1.msra.mxu0 %v384
    %1477 = vmatprep.subr.mxu0 0.0
    %1478 = vmatpush1.msra.mxu0 %v387
    %1479 = vmatprep.subr.mxu0 0.0
    %1480 = vmatpush1.msra.mxu0 %v390
    %1481 = vmatprep.subr.mxu0 0.0
    %1482 = vmatpush1.msra.mxu0 %v393
    %1483 = vmatprep.subr.mxu0 0.0
    %1484 = vmatpush1.msra.mxu0 %v396
    %1485 = vmatprep.subr.mxu0 0.0
    %1486 = vmatpush1.msra.mxu0 %v399
    %1487 = vmatprep.subr.mxu0 0.0
    %1488 = vmatpush1.msra.mxu0 %v402
    %1489 = vmatprep.subr.mxu0 0.0
    %1490 = vmatpush1.msra.mxu0 %v405
    %1491 = vmatprep.subr.mxu0 0.0
    %1492 = vmatpush1.msra.mxu0 %v408
    %1493 = vmatprep.subr.mxu0 0.0
    %1494 = vmatpush1.msra.mxu0 %v411
    %1495 = vmatprep.subr.mxu0 0.0
    %1496 = vmatpush1.msra.mxu0 %v414
    %1497 = vmatprep.subr.mxu0 0.0
    %1498 = vmatpush1.msra.mxu0 %v417
    %1499 = vmatprep.mubr.f32.mxu0 %v688
    %1500 = vmatmul.mubr.f32.gmra.mrb[0].mxu0 %v686
    %v1501 = vpop.f32.mrb[0].mxu0
    %v1502 = vadd.f32 %v1432, %v1501
    %v1503 = vpop.f32.mrb[0].mxu0
    %1504 = vdwg.mxu0
    %1505 = vmatprep.subr.mxu0 0.0
    %1506 = vmatpush1.msra.mxu0 %v420
    %1507 = vmatprep.subr.mxu0 0.0
    %1508 = vmatpush1.msra.mxu0 %v423
    %1509 = vmatprep.subr.mxu0 0.0
    %1510 = vmatpush1.msra.mxu0 %v426
    %1511 = vmatprep.subr.mxu0 0.0
    %1512 = vmatpush1.msra.mxu0 %v429
    %1513 = vmatprep.subr.mxu0 0.0
    %1514 = vmatpush1.msra.mxu0 %v432
    %1515 = vmatprep.subr.mxu0 0.0
    %1516 = vmatpush1.msra.mxu0 %v435
    %1517 = vmatprep.subr.mxu0 0.0
    %1518 = vmatpush1.msra.mxu0 %v438
    %1519 = vmatprep.subr.mxu0 0.0
    %1520 = vmatpush1.msra.mxu0 %v441
    %1521 = vmatprep.subr.mxu0 0.0
    %1522 = vmatpush1.msra.mxu0 %v444
    %1523 = vmatprep.subr.mxu0 0.0
    %1524 = vmatpush1.msra.mxu0 %v447
    %1525 = vmatprep.subr.mxu0 0.0
    %1526 = vmatpush1.msra.mxu0 %v450
    %1527 = vmatprep.subr.mxu0 0.0
    %1528 = vmatpush1.msra.mxu0 %v453
    %1529 = vmatprep.subr.mxu0 0.0
    %1530 = vmatpush1.msra.mxu0 %v456
    %1531 = vmatprep.subr.mxu0 0.0
    %1532 = vmatpush1.msra.mxu0 %v459
    %1533 = vmatprep.subr.mxu0 0.0
    %1534 = vmatpush1.msra.mxu0 %v462
    %1535 = vmatprep.subr.mxu0 0.0
    %1536 = vmatpush1.msra.mxu0 %v465
    %1537 = vmatprep.subr.mxu0 0.0
    %1538 = vmatpush1.msra.mxu0 %v468
    %1539 = vmatprep.subr.mxu0 0.0
    %1540 = vmatpush1.msra.mxu0 %v471
    %1541 = vmatprep.subr.mxu0 0.0
    %1542 = vmatpush1.msra.mxu0 %v474
    %1543 = vmatprep.subr.mxu0 0.0
    %1544 = vmatpush1.msra.mxu0 %v477
    %1545 = vmatprep.subr.mxu0 0.0
    %1546 = vmatpush1.msra.mxu0 %v480
    %1547 = vmatprep.subr.mxu0 0.0
    %1548 = vmatpush1.msra.mxu0 %v483
    %1549 = vmatprep.subr.mxu0 0.0
    %1550 = vmatpush1.msra.mxu0 %v486
    %1551 = vmatprep.subr.mxu0 0.0
    %1552 = vmatpush1.msra.mxu0 %v489
    %1553 = vmatprep.subr.mxu0 0.0
    %1554 = vmatpush1.msra.mxu0 %v492
    %1555 = vmatprep.subr.mxu0 0.0
    %1556 = vmatpush1.msra.mxu0 %v495
    %1557 = vmatprep.subr.mxu0 0.0
    %1558 = vmatpush1.msra.mxu0 %v498
    %1559 = vmatprep.subr.mxu0 0.0
    %1560 = vmatpush1.msra.mxu0 %v501
    %1561 = vmatprep.subr.mxu0 0.0
    %1562 = vmatpush1.msra.mxu0 %v504
    %1563 = vmatprep.subr.mxu0 0.0
    %1564 = vmatpush1.msra.mxu0 %v507
    %1565 = vmatprep.subr.mxu0 0.0
    %1566 = vmatpush1.msra.mxu0 %v510
    %1567 = vmatprep.subr.mxu0 0.0
    %1568 = vmatpush1.msra.mxu0 %v513
    %1569 = vmatprep.mubr.f32.mxu0 %v704
    %1570 = vmatmul.mubr.f32.gmra.mrb[0].mxu0 %v696
    %v1571 = vpop.f32.mrb[0].mxu0
    %v1572 = vadd.f32 %v1502, %v1571
    %v1573 = vpop.f32.mrb[0].mxu0
    %1574 = vdwg.mxu0
    %1575 = vmatprep.subr.mxu0 0.0
    %1576 = vmatpush1.msra.mxu0 %v516
    %1577 = vmatprep.subr.mxu0 0.0
    %1578 = vmatpush1.msra.mxu0 %v519
    %1579 = vmatprep.subr.mxu0 0.0
    %1580 = vmatpush1.msra.mxu0 %v522
    %1581 = vmatprep.subr.mxu0 0.0
    %1582 = vmatpush1.msra.mxu0 %v525
    %1583 = vmatprep.subr.mxu0 0.0
    %1584 = vmatpush1.msra.mxu0 %v528
    %1585 = vmatprep.subr.mxu0 0.0
    %1586 = vmatpush1.msra.mxu0 %v531
    %1587 = vmatprep.subr.mxu0 0.0
    %1588 = vmatpush1.msra.mxu0 %v534
    %1589 = vmatprep.subr.mxu0 0.0
    %1590 = vmatpush1.msra.mxu0 %v537
    %1591 = vmatprep.subr.mxu0 0.0
    %1592 = vmatpush1.msra.mxu0 %v540
    %1593 = vmatprep.subr.mxu0 0.0
    %1594 = vmatpush1.msra.mxu0 %v543
    %1595 = vmatprep.subr.mxu0 0.0
    %1596 = vmatpush1.msra.mxu0 %v546
    %1597 = vmatprep.subr.mxu0 0.0
    %1598 = vmatpush1.msra.mxu0 %v549
    %1599 = vmatprep.subr.mxu0 0.0
    %1600 = vmatpush1.msra.mxu0 %v552
    %1601 = vmatprep.subr.mxu0 0.0
    %1602 = vmatpush1.msra.mxu0 %v555
    %1603 = vmatprep.subr.mxu0 0.0
    %1604 = vmatpush1.msra.mxu0 %v558
    %1605 = vmatprep.subr.mxu0 0.0
    %1606 = vmatpush1.msra.mxu0 %v561
    %1607 = vmatprep.subr.mxu0 0.0
    %1608 = vmatpush1.msra.mxu0 %v564
    %1609 = vmatprep.subr.mxu0 0.0
    %1610 = vmatpush1.msra.mxu0 %v567
    %1611 = vmatprep.subr.mxu0 0.0
    %1612 = vmatpush1.msra.mxu0 %v570
    %1613 = vmatprep.subr.mxu0 0.0
    %1614 = vmatpush1.msra.mxu0 %v573
    %1615 = vmatprep.subr.mxu0 0.0
    %1616 = vmatpush1.msra.mxu0 %v576
    %1617 = vmatprep.subr.mxu0 0.0
    %1618 = vmatpush1.msra.mxu0 %v579
    %1619 = vmatprep.subr.mxu0 0.0
    %1620 = vmatpush1.msra.mxu0 %v582
    %1621 = vmatprep.subr.mxu0 0.0
    %1622 = vmatpush1.msra.mxu0 %v585
    %1623 = vmatprep.subr.mxu0 0.0
    %1624 = vmatpush1.msra.mxu0 %v588
    %1625 = vmatprep.subr.mxu0 0.0
    %1626 = vmatpush1.msra.mxu0 %v591
    %1627 = vmatprep.subr.mxu0 0.0
    %1628 = vmatpush1.msra.mxu0 %v594
    %1629 = vmatprep.subr.mxu0 0.0
    %1630 = vmatpush1.msra.mxu0 %v597
    %1631 = vmatprep.subr.mxu0 0.0
    %1632 = vmatpush1.msra.mxu0 %v600
    %1633 = vmatprep.subr.mxu0 0.0
    %1634 = vmatpush1.msra.mxu0 %v603
    %1635 = vmatprep.subr.mxu0 0.0
    %1636 = vmatpush1.msra.mxu0 %v606
    %1637 = vmatprep.subr.mxu0 0.0
    %1638 = vmatpush1.msra.mxu0 %v609
    %1639 = vmatprep.mubr.f32.mxu0 %v705
    %1640 = vmatmul.mubr.f32.gmra.mrb[0].mxu0 %v703
    %v1641 = vpop.f32.mrb[0].mxu0
    %v1642 = vadd.f32 %v1572, %v1641
    %v1643 = vpop.f32.mrb[0].mxu0
    %1644 = vdwg.mxu0
    %1645 = vmatprep.subr.mxu0 0.0
    %1646 = vmatpush1.msra.mxu0 %v612
    %1647 = vmatprep.subr.mxu0 0.0
    %1648 = vmatpush1.msra.mxu0 %v615
    %1649 = vmatprep.subr.mxu0 0.0
    %1650 = vmatpush1.msra.mxu0 %v618
    %1651 = vmatprep.subr.mxu0 0.0
    %1652 = vmatpush1.msra.mxu0 %v621
    %1653 = vmatprep.subr.mxu0 0.0
    %1654 = vmatpush1.msra.mxu0 %v624
    %1655 = vmatprep.subr.mxu0 0.0
    %1656 = vmatpush1.msra.mxu0 %v627
    %1657 = vmatprep.subr.mxu0 0.0
    %1658 = vmatpush1.msra.mxu0 %v630
    %1659 = vmatprep.subr.mxu0 0.0
    %1660 = vmatpush1.msra.mxu0 %v633
    %1661 = vmatprep.subr.mxu0 0.0
    %1662 = vmatpush1.msra.mxu0 0.0
    %1663 = vmatprep.subr.mxu0 0.0
    %1664 = vmatpush1.msra.mxu0 0.0
    %1665 = vmatprep.subr.mxu0 0.0
    %1666 = vmatpush1.msra.mxu0 0.0
    %1667 = vmatprep.subr.mxu0 0.0
    %1668 = vmatpush1.msra.mxu0 0.0
    %1669 = vmatprep.subr.mxu0 0.0
    %1670 = vmatpush1.msra.mxu0 0.0
    %1671 = vmatprep.subr.mxu0 0.0
    %1672 = vmatpush1.msra.mxu0 0.0
    %1673 = vmatprep.subr.mxu0 0.0
    %1674 = vmatpush1.msra.mxu0 0.0
    %1675 = vmatprep.subr.mxu0 0.0
    %1676 = vmatpush1.msra.mxu0 0.0
    %1677 = vmatprep.subr.mxu0 0.0
    %1678 = vmatpush1.msra.mxu0 0.0
    %1679 = vmatprep.subr.mxu0 0.0
    %1680 = vmatpush1.msra.mxu0 0.0
    %1681 = vmatprep.subr.mxu0 0.0
    %1682 = vmatpush1.msra.mxu0 0.0
    %1683 = vmatprep.subr.mxu0 0.0
    %1684 = vmatpush1.msra.mxu0 0.0
    %1685 = vmatprep.subr.mxu0 0.0
    %1686 = vmatpush1.msra.mxu0 0.0
    %1687 = vmatprep.subr.mxu0 0.0
    %1688 = vmatpush1.msra.mxu0 0.0
    %1689 = vmatprep.subr.mxu0 0.0
    %1690 = vmatpush1.msra.mxu0 0.0
    %1691 = vmatprep.subr.mxu0 0.0
    %1692 = vmatpush1.msra.mxu0 0.0
    %1693 = vmatprep.subr.mxu0 0.0
    %1694 = vmatpush1.msra.mxu0 0.0
    %1695 = vmatprep.subr.mxu0 0.0
    %1696 = vmatpush1.msra.mxu0 0.0
    %1697 = vmatprep.subr.mxu0 0.0
    %1698 = vmatpush1.msra.mxu0 0.0
    %1699 = vmatprep.subr.mxu0 0.0
    %1700 = vmatpush1.msra.mxu0 0.0
    %1701 = vmatprep.subr.mxu0 0.0
    %1702 = vmatpush1.msra.mxu0 0.0
    %1703 = vmatprep.subr.mxu0 0.0
    %1704 = vmatpush1.msra.mxu0 0.0
    %1705 = vmatprep.subr.mxu0 0.0
    %1706 = vmatpush1.msra.mxu0 0.0
    %1707 = vmatprep.subr.mxu0 0.0
    %1708 = vmatpush1.msra.mxu0 0.0
    %1709 = vmatprep.mubr.f32.mxu0 0.0
    %1710 = vmatmul.mubr.f32.gmra.mrb[0].mxu0 %v726
    %v1711 = vpop.f32.mrb[0].mxu0
    %v1712 = vadd.f32 %v1642, %v1711
    %v1713 = vpop.f32.mrb[0].mxu0
    %1714 = vdwg.mxu0
    %v1715 = vmax.f32 %v1221, 0.0
    %v1716 = vmax.f32 %v1223, 0.0
    %v1717 = vmax.f32 %v1712, 0.0
    %v1718 = vld [vmem:[%s3] sm:$0xff]
    %v1719 = vld [vmem:[%s3 + $0x8] sm:$0xff]
    %v1720 = vld [vmem:[%s3 + $0x10] sm:$0xff]
    %v1721 = vld [vmem:[%s3 + $0x18] sm:$0xff]
    %v1722 = vld [vmem:[%s3 + $0x20] sm:$0xff]
    %v1723 = vld [vmem:[%s3 + $0x28] sm:$0xff]
    %v1724 = vld [vmem:[%s3 + $0x30] sm:$0xff]
    %v1725 = vld [vmem:[%s3 + $0x38] sm:$0xff]
    %v1726 = vld [vmem:[%s3 + $0x40] sm:$0xff]
    %v1727 = vld [vmem:[%s3 + $0x48] sm:$0xff]
    %v1728 = vld [vmem:[%s3 + $0x50] sm:$0xff]
    %v1729 = vld [vmem:[%s3 + $0x58] sm:$0xff]
    %v1730 = vld [vmem:[%s3 + $0x60] sm:$0xff]
    %v1731 = vld [vmem:[%s3 + $0x68] sm:$0xff]
    %v1732 = vld [vmem:[%s3 + $0x70] sm:$0xff]
    %v1733 = vld [vmem:[%s3 + $0x78] sm:$0xff]
    %v1734 = vld [vmem:[%s3 + $0x80] sm:$0xff]
    %v1735 = vld [vmem:[%s3 + $0x88] sm:$0xff]
    %v1736 = vld [vmem:[%s3 + $0x90] sm:$0xff]
    %v1737 = vld [vmem:[%s3 + $0x98] sm:$0xff]
    %v1738 = vld [vmem:[%s3 + $0xa0] sm:$0xff]
    %v1739 = vld [vmem:[%s3 + $0xa8] sm:$0xff]
    %v1740 = vld [vmem:[%s3 + $0xb0] sm:$0xff]
    %v1741 = vld [vmem:[%s3 + $0xb8] sm:$0xff]
    %v1742 = vld [vmem:[%s3 + $0xc0] sm:$0xff]
    %v1743 = vld [vmem:[%s3 + $0xc8] sm:$0xff]
    %v1744 = vld [vmem:[%s3 + $0xd0] sm:$0xff]
    %v1745 = vld [vmem:[%s3 + $0xd8] sm:$0xff]
    %v1746 = vld [vmem:[%s3 + $0xe0] sm:$0xff]
    %v1747 = vld [vmem:[%s3 + $0xe8] sm:$0xff]
    %v1748 = vld [vmem:[%s3 + $0xf0] sm:$0xff]
    %v1749 = vld [vmem:[%s3 + $0xf8] sm:$0xff]
    %v1750 = vld [vmem:[%s3 + $0x100] sm:$0xff]
    %v1751 = vld [vmem:[%s3 + $0x108] sm:$0xff]
    %v1752 = vld [vmem:[%s3 + $0x110] sm:$0xff]
    %v1753 = vld [vmem:[%s3 + $0x118] sm:$0xff]
    %v1754 = vld [vmem:[%s3 + $0x120] sm:$0xff]
    %v1755 = vld [vmem:[%s3 + $0x128] sm:$0xff]
    %v1756 = vld [vmem:[%s3 + $0x130] sm:$0xff]
    %v1757 = vld [vmem:[%s3 + $0x138] sm:$0xff]
    %v1758 = vld [vmem:[%s3 + $0x140] sm:$0xff]
    %v1759 = vld [vmem:[%s3 + $0x148] sm:$0xff]
    %v1760 = vld [vmem:[%s3 + $0x150] sm:$0xff]
    %v1761 = vld [vmem:[%s3 + $0x158] sm:$0xff]
    %v1762 = vld [vmem:[%s3 + $0x160] sm:$0xff]
    %v1763 = vld [vmem:[%s3 + $0x168] sm:$0xff]
    %v1764 = vld [vmem:[%s3 + $0x170] sm:$0xff]
    %v1765 = vld [vmem:[%s3 + $0x178] sm:$0xff]
    %v1766 = vld [vmem:[%s3 + $0x180] sm:$0xff]
    %v1767 = vld [vmem:[%s3 + $0x188] sm:$0xff]
    %v1768 = vld [vmem:[%s3 + $0x190] sm:$0xff]
    %v1769 = vld [vmem:[%s3 + $0x198] sm:$0xff]
    %v1770 = vld [vmem:[%s3 + $0x1a0] sm:$0xff]
    %v1771 = vld [vmem:[%s3 + $0x1a8] sm:$0xff]
    %v1772 = vld [vmem:[%s3 + $0x1b0] sm:$0xff]
    %v1773 = vld [vmem:[%s3 + $0x1b8] sm:$0xff]
    %v1774 = vld [vmem:[%s3 + $0x1c0] sm:$0xff]
    %v1775 = vld [vmem:[%s3 + $0x1c8] sm:$0xff]
    %v1776 = vld [vmem:[%s3 + $0x1d0] sm:$0xff]
    %v1777 = vld [vmem:[%s3 + $0x1d8] sm:$0xff]
    %v1778 = vld [vmem:[%s3 + $0x1e0] sm:$0xff]
    %v1779 = vld [vmem:[%s3 + $0x1e8] sm:$0xff]
    %v1780 = vld [vmem:[%s3 + $0x1f0] sm:$0xff]
    %v1781 = vld [vmem:[%s3 + $0x1f8] sm:$0xff]
    %v1782 = vld [vmem:[%s3 + $0x200] sm:$0xff]
    %v1783 = vld [vmem:[%s3 + $0x208] sm:$0xff]
    %v1784 = vld [vmem:[%s3 + $0x210] sm:$0xff]
    %v1785 = vld [vmem:[%s3 + $0x218] sm:$0xff]
    %v1786 = vld [vmem:[%s3 + $0x220] sm:$0xff]
    %v1787 = vld [vmem:[%s3 + $0x228] sm:$0xff]
    %v1788 = vld [vmem:[%s3 + $0x230] sm:$0xff]
    %v1789 = vld [vmem:[%s3 + $0x238] sm:$0xff]
    %v1790 = vld [vmem:[%s3 + $0x240] sm:$0xff]
    %v1791 = vld [vmem:[%s3 + $0x248] sm:$0xff]
    %v1792 = vld [vmem:[%s3 + $0x250] sm:$0xff]
    %v1793 = vld [vmem:[%s3 + $0x258] sm:$0xff]
    %v1794 = vld [vmem:[%s3 + $0x260] sm:$0xff]
    %v1795 = vld [vmem:[%s3 + $0x268] sm:$0xff]
    %v1796 = vld [vmem:[%s3 + $0x270] sm:$0xff]
    %v1797 = vld [vmem:[%s3 + $0x278] sm:$0xff]
    %v1798 = vld [vmem:[%s3 + $0x280] sm:$0xff]
    %v1799 = vld [vmem:[%s3 + $0x288] sm:$0xff]
    %v1800 = vld [vmem:[%s3 + $0x290] sm:$0xff]
    %v1801 = vld [vmem:[%s3 + $0x298] sm:$0xff]
    %v1802 = vld [vmem:[%s3 + $0x2a0] sm:$0xff]
    %v1803 = vld [vmem:[%s3 + $0x2a8] sm:$0xff]
    %v1804 = vld [vmem:[%s3 + $0x2b0] sm:$0xff]
    %v1805 = vld [vmem:[%s3 + $0x2b8] sm:$0xff]
    %v1806 = vld [vmem:[%s3 + $0x2c0] sm:$0xff]
    %v1807 = vld [vmem:[%s3 + $0x2c8] sm:$0xff]
    %v1808 = vld [vmem:[%s3 + $0x2d0] sm:$0xff]
    %v1809 = vld [vmem:[%s3 + $0x2d8] sm:$0xff]
    %v1810 = vld [vmem:[%s3 + $0x2e0] sm:$0xff]
    %v1811 = vld [vmem:[%s3 + $0x2e8] sm:$0xff]
    %v1812 = vld [vmem:[%s3 + $0x2f0] sm:$0xff]
    %v1813 = vld [vmem:[%s3 + $0x2f8] sm:$0xff]
    %v1814 = vld [vmem:[%s4] sm:$0x3]
    %v1816 = vlaneseq
    %v1817 = vshrl.u32 %v1816, 7
    %v1818 = vsub.s32 0, %v1817
    %v1819 = vrot.slane %v1814, %v1818
    %v1820 = vlaneseq
    %v1821 = vshrl.u32 %v1820, 7
    %v1822 = vsub.s32 1, %v1821
    %v1823 = vrot.slane %v1814, %v1822
    %1826 = vmatprep.subr.mxu0 %v1719
    %1827 = vmatpush1.msra.mxu0 %v1718
    %1828 = vmatprep.subr.mxu0 %v1721
    %1829 = vmatpush1.msra.mxu0 %v1720
    %1830 = vmatprep.subr.mxu0 %v1723
    %1831 = vmatpush1.msra.mxu0 %v1722
    %1832 = vmatprep.subr.mxu0 %v1725
    %1833 = vmatpush1.msra.mxu0 %v1724
    %1834 = vmatprep.subr.mxu0 %v1727
    %1835 = vmatpush1.msra.mxu0 %v1726
    %1836 = vmatprep.subr.mxu0 %v1729
    %1837 = vmatpush1.msra.mxu0 %v1728
    %1838 = vmatprep.subr.mxu0 %v1731
    %1839 = vmatpush1.msra.mxu0 %v1730
    %1840 = vmatprep.subr.mxu0 %v1733
    %1841 = vmatpush1.msra.mxu0 %v1732
    %1842 = vmatprep.subr.mxu0 %v1735
    %1843 = vmatpush1.msra.mxu0 %v1734
    %1844 = vmatprep.subr.mxu0 %v1737
    %1845 = vmatpush1.msra.mxu0 %v1736
    %1846 = vmatprep.subr.mxu0 %v1739
    %1847 = vmatpush1.msra.mxu0 %v1738
    %1848 = vmatprep.subr.mxu0 %v1741
    %1849 = vmatpush1.msra.mxu0 %v1740
    %1850 = vmatprep.subr.mxu0 %v1743
    %1851 = vmatpush1.msra.mxu0 %v1742
    %1852 = vmatprep.subr.mxu0 %v1745
    %1853 = vmatpush1.msra.mxu0 %v1744
    %1854 = vmatprep.subr.mxu0 %v1747
    %1855 = vmatpush1.msra.mxu0 %v1746
    %1856 = vmatprep.subr.mxu0 %v1749
    %1857 = vmatpush1.msra.mxu0 %v1748
    %1858 = vmatprep.subr.mxu0 %v1751
    %1859 = vmatpush1.msra.mxu0 %v1750
    %1860 = vmatprep.subr.mxu0 %v1753
    %1861 = vmatpush1.msra.mxu0 %v1752
    %1862 = vmatprep.subr.mxu0 %v1755
    %1863 = vmatpush1.msra.mxu0 %v1754
    %1864 = vmatprep.subr.mxu0 %v1757
    %1865 = vmatpush1.msra.mxu0 %v1756
    %1866 = vmatprep.subr.mxu0 %v1759
    %1867 = vmatpush1.msra.mxu0 %v1758
    %1868 = vmatprep.subr.mxu0 %v1761
    %1869 = vmatpush1.msra.mxu0 %v1760
    %1870 = vmatprep.subr.mxu0 %v1763
    %1871 = vmatpush1.msra.mxu0 %v1762
    %1872 = vmatprep.subr.mxu0 %v1765
    %1873 = vmatpush1.msra.mxu0 %v1764
    %1874 = vmatprep.subr.mxu0 %v1767
    %1875 = vmatpush1.msra.mxu0 %v1766
    %1876 = vmatprep.subr.mxu0 %v1769
    %1877 = vmatpush1.msra.mxu0 %v1768
    %1878 = vmatprep.subr.mxu0 %v1771
    %1879 = vmatpush1.msra.mxu0 %v1770
    %1880 = vmatprep.subr.mxu0 %v1773
    %1881 = vmatpush1.msra.mxu0 %v1772
    %1882 = vmatprep.subr.mxu0 %v1775
    %1883 = vmatpush1.msra.mxu0 %v1774
    %1884 = vmatprep.subr.mxu0 %v1777
    %1885 = vmatpush1.msra.mxu0 %v1776
    %1886 = vmatprep.subr.mxu0 %v1779
    %1887 = vmatpush1.msra.mxu0 %v1778
    %1888 = vmatprep.subr.mxu0 %v1781
    %1889 = vmatpush1.msra.mxu0 %v1780
    %1890 = vmatprep.mubr.f32.mxu0 %v1716
    %1891 = vmatmul.mubr.f32.gmra.mrb[0].mxu0 %v1715
    %v1892 = vpop.f32.mrb[0].mxu0
    %v1893 = vadd.f32 %v1819, %v1892
    %v1894 = vpop.f32.mrb[0].mxu0
    %v1895 = vadd.f32 %v1823, %v1894
    %1896 = vdwg.mxu0
    %1897 = vmatprep.subr.mxu0 %v1783
    %1898 = vmatpush1.msra.mxu0 %v1782
    %1899 = vmatprep.subr.mxu0 %v1785
    %1900 = vmatpush1.msra.mxu0 %v1784
    %1901 = vmatprep.subr.mxu0 %v1787
    %1902 = vmatpush1.msra.mxu0 %v1786
    %1903 = vmatprep.subr.mxu0 %v1789
    %1904 = vmatpush1.msra.mxu0 %v1788
    %1905 = vmatprep.subr.mxu0 %v1791
    %1906 = vmatpush1.msra.mxu0 %v1790
    %1907 = vmatprep.subr.mxu0 %v1793
    %1908 = vmatpush1.msra.mxu0 %v1792
    %1909 = vmatprep.subr.mxu0 %v1795
    %1910 = vmatpush1.msra.mxu0 %v1794
    %1911 = vmatprep.subr.mxu0 %v1797
    %1912 = vmatpush1.msra.mxu0 %v1796
    %1913 = vmatprep.subr.mxu0 %v1799
    %1914 = vmatpush1.msra.mxu0 %v1798
    %1915 = vmatprep.subr.mxu0 %v1801
    %1916 = vmatpush1.msra.mxu0 %v1800
    %1917 = vmatprep.subr.mxu0 %v1803
    %1918 = vmatpush1.msra.mxu0 %v1802
    %1919 = vmatprep.subr.mxu0 %v1805
    %1920 = vmatpush1.msra.mxu0 %v1804
    %1921 = vmatprep.subr.mxu0 %v1807
    %1922 = vmatpush1.msra.mxu0 %v1806
    %1923 = vmatprep.subr.mxu0 %v1809
    %1924 = vmatpush1.msra.mxu0 %v1808
    %1925 = vmatprep.subr.mxu0 %v1811
    %1926 = vmatpush1.msra.mxu0 %v1810
    %1927 = vmatprep.subr.mxu0 %v1813
    %1928 = vmatpush1.msra.mxu0 %v1812
    %1929 = vmatprep.subr.mxu0 0.0
    %1930 = vmatpush1.msra.mxu0 0.0
    %1931 = vmatprep.subr.mxu0 0.0
    %1932 = vmatpush1.msra.mxu0 0.0
    %1933 = vmatprep.subr.mxu0 0.0
    %1934 = vmatpush1.msra.mxu0 0.0
    %1935 = vmatprep.subr.mxu0 0.0
    %1936 = vmatpush1.msra.mxu0 0.0
    %1937 = vmatprep.subr.mxu0 0.0
    %1938 = vmatpush1.msra.mxu0 0.0
    %1939 = vmatprep.subr.mxu0 0.0
    %1940 = vmatpush1.msra.mxu0 0.0
    %1941 = vmatprep.subr.mxu0 0.0
    %1942 = vmatpush1.msra.mxu0 0.0
    %1943 = vmatprep.subr.mxu0 0.0
    %1944 = vmatpush1.msra.mxu0 0.0
    %1945 = vmatprep.subr.mxu0 0.0
    %1946 = vmatpush1.msra.mxu0 0.0
    %1947 = vmatprep.subr.mxu0 0.0
    %1948 = vmatpush1.msra.mxu0 0.0
    %1949 = vmatprep.subr.mxu0 0.0
    %1950 = vmatpush1.msra.mxu0 0.0
    %1951 = vmatprep.subr.mxu0 0.0
    %1952 = vmatpush1.msra.mxu0 0.0
    %1953 = vmatprep.subr.mxu0 0.0
    %1954 = vmatpush1.msra.mxu0 0.0
    %1955 = vmatprep.subr.mxu0 0.0
    %1956 = vmatpush1.msra.mxu0 0.0
    %1957 = vmatprep.subr.mxu0 0.0
    %1958 = vmatpush1.msra.mxu0 0.0
    %1959 = vmatprep.subr.mxu0 0.0
    %1960 = vmatpush1.msra.mxu0 0.0
    %1961 = vmatprep.mubr.f32.mxu0 0.0
    %1962 = vmatmul.mubr.f32.gmra.mrb[0].mxu0 %v1717
    %v1963 = vpop.f32.mrb[0].mxu0
    %v1964 = vadd.f32 %v1893, %v1963
    %v1965 = vpop.f32.mrb[0].mxu0
    %v1966 = vadd.f32 %v1895, %v1965
    %1967 = vdwg.mxu0
    %v1968 = vmax.f32 %v1964, 0.0
    %v1969 = vmax.f32 %v1966, 0.0
    %v1972 = vcombine.low %v1968, %v1969
    %v1974 = vunpack.c.l.s4 1983009808
    %v1975 = vunpack.c.0.s8 %v1974
    %v1976 = vlaneseq
    %v1977 = vshrl.u32 %v1976, 7
    %v1978 = vsub.s32 %v1975, %v1977
    %v1979 = vrot.slane %v1972, %v1978
    %1981 = vst [vmem:[#allocation2] sm:$0xf] %v1979
    %v1982 = vld [vmem:[%s5] sm:$0xff]
    %v1983 = vld [vmem:[%s5 + $0x8] sm:$0xff]
    %v1984 = vld [vmem:[%s5 + $0x10] sm:$0xff]
    %v1985 = vld [vmem:[%s5 + $0x18] sm:$0xff]
    %v1986 = vld [vmem:[%s5 + $0x20] sm:$0xff]
    %v1987 = vld [vmem:[%s5 + $0x28] sm:$0xff]
    %v1988 = vld [vmem:[%s5 + $0x30] sm:$0xff]
    %v1989 = vld [vmem:[%s5 + $0x38] sm:$0xff]
    %v1990 = vld [vmem:[%s5 + $0x40] sm:$0xff]
    %v1991 = vld [vmem:[%s5 + $0x48] sm:$0xff]
    %v1992 = vld [vmem:[%s5 + $0x50] sm:$0xff]
    %v1993 = vld [vmem:[%s5 + $0x58] sm:$0xff]
    %v1994 = vld [vmem:[%s5 + $0x60] sm:$0xff]
    %v1995 = vld [vmem:[%s5 + $0x68] sm:$0xff]
    %v1996 = vld [vmem:[%s5 + $0x70] sm:$0xff]
    %v1997 = vld [vmem:[%s5 + $0x78] sm:$0xff]
    %v1998 = vld [vmem:[%s5 + $0x80] sm:$0xff]
    %v1999 = vld [vmem:[%s5 + $0x88] sm:$0xff]
    %v2000 = vld [vmem:[%s5 + $0x90] sm:$0xff]
    %v2001 = vld [vmem:[%s5 + $0x98] sm:$0xff]
    %v2002 = vld [vmem:[%s5 + $0xa0] sm:$0xff]
    %v2003 = vld [vmem:[%s5 + $0xa8] sm:$0xff]
    %v2004 = vld [vmem:[%s5 + $0xb0] sm:$0xff]
    %v2005 = vld [vmem:[%s5 + $0xb8] sm:$0xff]
    %v2006 = vld [vmem:[%s5 + $0xc0] sm:$0xff]
    %v2007 = vld [vmem:[%s5 + $0xc8] sm:$0xff]
    %v2008 = vld [vmem:[%s5 + $0xd0] sm:$0xff]
    %v2009 = vld [vmem:[%s5 + $0xd8] sm:$0xff]
    %v2010 = vld [vmem:[%s5 + $0xe0] sm:$0xff]
    %v2011 = vld [vmem:[%s5 + $0xe8] sm:$0xff]
    %v2012 = vld [vmem:[%s5 + $0xf0] sm:$0xff]
    %v2013 = vld [vmem:[%s5 + $0xf8] sm:$0xff]
    %v2014 = vld [vmem:[%s6] sm:$0x1]
    %v2016 = vlaneseq
    %v2017 = vshrl.u32 %v2016, 7
    %v2018 = vsub.s32 0, %v2017
    %v2019 = vrot.slane %v2014, %v2018
    %2021 = vmatprep.subr.mxu0 0.0
    %2022 = vmatpush1.msra.mxu0 %v1982
    %2023 = vmatprep.subr.mxu0 0.0
    %2024 = vmatpush1.msra.mxu0 %v1983
    %2025 = vmatprep.subr.mxu0 0.0
    %2026 = vmatpush1.msra.mxu0 %v1984
    %2027 = vmatprep.subr.mxu0 0.0
    %2028 = vmatpush1.msra.mxu0 %v1985
    %2029 = vmatprep.subr.mxu0 0.0
    %2030 = vmatpush1.msra.mxu0 %v1986
    %2031 = vmatprep.subr.mxu0 0.0
    %2032 = vmatpush1.msra.mxu0 %v1987
    %2033 = vmatprep.subr.mxu0 0.0
    %2034 = vmatpush1.msra.mxu0 %v1988
    %2035 = vmatprep.subr.mxu0 0.0
    %2036 = vmatpush1.msra.mxu0 %v1989
    %2037 = vmatprep.subr.mxu0 0.0
    %2038 = vmatpush1.msra.mxu0 %v1990
    %2039 = vmatprep.subr.mxu0 0.0
    %2040 = vmatpush1.msra.mxu0 %v1991
    %2041 = vmatprep.subr.mxu0 0.0
    %2042 = vmatpush1.msra.mxu0 %v1992
    %2043 = vmatprep.subr.mxu0 0.0
    %2044 = vmatpush1.msra.mxu0 %v1993
    %2045 = vmatprep.subr.mxu0 0.0
    %2046 = vmatpush1.msra.mxu0 %v1994
    %2047 = vmatprep.subr.mxu0 0.0
    %2048 = vmatpush1.msra.mxu0 %v1995
    %2049 = vmatprep.subr.mxu0 0.0
    %2050 = vmatpush1.msra.mxu0 %v1996
    %2051 = vmatprep.subr.mxu0 0.0
    %2052 = vmatpush1.msra.mxu0 %v1997
    %2053 = vmatprep.subr.mxu0 0.0
    %2054 = vmatpush1.msra.mxu0 %v1998
    %2055 = vmatprep.subr.mxu0 0.0
    %2056 = vmatpush1.msra.mxu0 %v1999
    %2057 = vmatprep.subr.mxu0 0.0
    %2058 = vmatpush1.msra.mxu0 %v2000
    %2059 = vmatprep.subr.mxu0 0.0
    %2060 = vmatpush1.msra.mxu0 %v2001
    %2061 = vmatprep.subr.mxu0 0.0
    %2062 = vmatpush1.msra.mxu0 %v2002
    %2063 = vmatprep.subr.mxu0 0.0
    %2064 = vmatpush1.msra.mxu0 %v2003
    %2065 = vmatprep.subr.mxu0 0.0
    %2066 = vmatpush1.msra.mxu0 %v2004
    %2067 = vmatprep.subr.mxu0 0.0
    %2068 = vmatpush1.msra.mxu0 %v2005
    %2069 = vmatprep.subr.mxu0 0.0
    %2070 = vmatpush1.msra.mxu0 %v2006
    %2071 = vmatprep.subr.mxu0 0.0
    %2072 = vmatpush1.msra.mxu0 %v2007
    %2073 = vmatprep.subr.mxu0 0.0
    %2074 = vmatpush1.msra.mxu0 %v2008
    %2075 = vmatprep.subr.mxu0 0.0
    %2076 = vmatpush1.msra.mxu0 %v2009
    %2077 = vmatprep.subr.mxu0 0.0
    %2078 = vmatpush1.msra.mxu0 %v2010
    %2079 = vmatprep.subr.mxu0 0.0
    %2080 = vmatpush1.msra.mxu0 %v2011
    %2081 = vmatprep.subr.mxu0 0.0
    %2082 = vmatpush1.msra.mxu0 %v2012
    %2083 = vmatprep.subr.mxu0 0.0
    %2084 = vmatpush1.msra.mxu0 %v2013
    %2085 = vmatprep.mubr.f32.mxu0 %v1969
    %2086 = vmatmul.mubr.f32.gmra.mrb[0].mxu0 %v1968
    %v2087 = vpop.f32.mrb[0].mxu0
    %v2088 = vadd.f32 %v2019, %v2087
    %v2089 = vpop.f32.mrb[0].mxu0
    %2090 = vdwg.mxu0
    %2091 = vst [vmem:[#allocation4] sm:$0x3] %v2088
    // Predicated region
    $region30: #{_lambda_.5} parent=1 // pred_check
      _
    $region31: #{_lambda_.5} parent=1 // pred_check_branch
      %2093 = sbr.rel (0) target = $region33
    $region32: #{_lambda_.5} parent=1 // pred_region
      %s2095 = ssub.s32 64, 64
      %2096 = vsyncadd [#allocation3], %s2095
      %s2098 = sshll.u32 [#allocation2], 4
      %s2099 = int_to_ptr.vmem [resolvable:$true] %s2098
      %2101 = dma.vmem_to_hbm [thread:$0]  %s2099, 64, %s7, [#allocation3]
    $region33: #{_lambda_.5} parent=1 // pred_fallthru
      _
    // Predicated region
    $region34: #{_lambda_.5} parent=1 // pred_check
      _
    $region35: #{_lambda_.5} parent=1 // pred_check_branch
      %2103 = sbr.rel (0) target = $region37
    $region36: #{_lambda_.5} parent=1 // pred_region
      %s2105 = ssub.s32 32, 32
      %2106 = vsyncadd [#allocation5], %s2105
      %s2108 = sshll.u32 [#allocation4], 4
      %s2109 = int_to_ptr.vmem [resolvable:$true] %s2108
      %2111 = dma.vmem_to_hbm [thread:$0]  %s2109, 32, %s8, [#allocation5]
    $region37: #{_lambda_.5} parent=1 // pred_fallthru
      _
    // Predicated region
    $region38: #{_lambda_.5} parent=1 // pred_check
      _
    $region39: #{_lambda_.5} parent=1 // pred_check_branch
      %2113 = sbr.rel (0) target = $region41
    $region40: #{_lambda_.5} parent=1 // pred_region
      %2114 = dma.done [#allocation3], 64
    $region41: #{_lambda_.5} parent=1 // pred_fallthru
      _
    // Predicated region
    $region42: #{_lambda_.5} parent=1 // pred_check
      _
    $region43: #{_lambda_.5} parent=1 // pred_check_branch
      %2116 = sbr.rel (0) target = $region45
    $region44: #{_lambda_.5} parent=1 // pred_region
      %2117 = dma.done [#allocation5], 32
    $region45: #{_lambda_.5} parent=1 // pred_fallthru
      _
    %2118 = vsyncpa [#allocation3], 1
    %2119 = vsyncpa [#allocation5], 1

</llo_original>
